<compile_context>
chip_gen: v6e
topology: v6e:2x2x1
jax: 0.10.0
libtpu: 0.0.40
codegen_flags: <defaults>
</compile_context>

<pallas_src>
import functools

import jax
import jax.numpy as jnp
from jax import lax
from jax.experimental import pallas as pl
from jax.experimental.pallas import tpu as pltpu

F32 = jnp.float32
BF16 = jnp.bfloat16
VMEM_LIMIT = 32 * 1024 * 1024   # explicit scoped-VMEM cap (safe on v5e/v6e/v7x)


def _tile(n, t=128):
    """Row tile: 128 if it divides n, else the full extent (full-dim block)."""
    return t if n % t == 0 else n


def _cparams(semantics):
    return pltpu.CompilerParams(dimension_semantics=semantics,
                                vmem_limit_bytes=VMEM_LIMIT)


# ----------------------------------------------------------------------------
# Kernel 1: node/edge encoder  (Linear -> ReLU -> Linear), row-tiled.
# First matmul contracts over the tiny raw feature dim (kept f32); the second
# is bf16 operands with f32 accumulation.
# ----------------------------------------------------------------------------
def _mlp2_kernel(x_ref, w1_ref, b1_ref, w2_ref, b2_ref, o_ref):
    h = jnp.dot(x_ref[...], w1_ref[...], preferred_element_type=F32) + b1_ref[...]
    h = jnp.maximum(h, 0.0)
    o_ref[...] = (jnp.dot(h.astype(BF16), w2_ref[...],
                          preferred_element_type=F32) + b2_ref[...])


def encoder_forward(x, w1, b1, w2, b2):
    rows, fin = x.shape
    fh = w1.shape[1]
    fo = w2.shape[1]
    t = _tile(rows)
    return pl.pallas_call(
        _mlp2_kernel,
        out_shape=jax.ShapeDtypeStruct((rows, fo), F32),
        grid=(rows // t,),
        in_specs=[pl.BlockSpec((t, fin), lambda i: (i, 0)),
                  pl.BlockSpec((fin, fh), lambda i: (0, 0)),
                  pl.BlockSpec((1, fh), lambda i: (0, 0)),
                  pl.BlockSpec((fh, fo), lambda i: (0, 0)),
                  pl.BlockSpec((1, fo), lambda i: (0, 0))],
        out_specs=pl.BlockSpec((t, fo), lambda i: (i, 0)),
        compiler_params=_cparams(("parallel",)),
    )(x, w1, b1, w2.astype(BF16), b2)


# ----------------------------------------------------------------------------
# Kernel 2: fused node linears  Z = h @ [Wa1|Wa2|Wb1|Wa3|Wb2] + b   (N, 5H)
# ----------------------------------------------------------------------------
def _node_linear_kernel(h_ref, w_ref, b_ref, z_ref):
    z_ref[...] = (jnp.dot(h_ref[...].astype(BF16), w_ref[...],
                          preferred_element_type=F32) + b_ref[...])


def node_linear_forward(h, w5, b5):
    n, hdim = h.shape
    h5 = w5.shape[1]
    t = _tile(n)
    cost = pl.CostEstimate(flops=2 * n * hdim * h5, transcendentals=0,
                           bytes_accessed=4 * n * (hdim + h5) + 2 * hdim * h5)
    return pl.pallas_call(
        _node_linear_kernel,
        out_shape=jax.ShapeDtypeStruct((n, h5), F32),
        grid=(n // t,),
        in_specs=[pl.BlockSpec((t, hdim), lambda i: (i, 0)),
                  pl.BlockSpec((hdim, h5), lambda i: (0, 0)),
                  pl.BlockSpec((1, h5), lambda i: (0, 0))],
        out_specs=pl.BlockSpec((t, h5), lambda i: (i, 0)),
        compiler_params=_cparams(("parallel",)),
        cost_estimate=cost,
    )(h, w5.astype(BF16), b5)


# ----------------------------------------------------------------------------
# Kernel 3: edge pre-pass — e_tmp = B1h[src] + B2h[dst] + B3(e), plus a
# cross-tile one-pass BatchNorm statistics accumulator (sum / sumsq -> mean,
# rstd finalized on the last grid step).
# ----------------------------------------------------------------------------
def _edge_pre_kernel(e_ref, b1s_ref, b2d_ref, w3_ref, b3_ref,
                     etmp_ref, stats_ref, *, n_total):
    i = pl.program_id(0)
    b3e = (jnp.dot(e_ref[...].astype(BF16), w3_ref[...],
                   preferred_element_type=F32) + b3_ref[...])
    e_tmp = b1s_ref[...] + b2d_ref[...] + b3e
    etmp_ref[...] = e_tmp

    @pl.when(i == 0)
    def _init():
        stats_ref[...] = jnp.zeros_like(stats_ref)

    stats_ref[0:1, :] += jnp.sum(e_tmp, axis=0, keepdims=True)
    stats_ref[1:2, :] += jnp.sum(e_tmp * e_tmp, axis=0, keepdims=True)

    @pl.when(i == pl.num_programs(0) - 1)
    def _finalize():
        inv_n = 1.0 / float(n_total)
        s0 = stats_ref[0:1, :]
        s1 = stats_ref[1:2, :]
        mean = s0 * inv_n
        var = s1 * inv_n - mean * mean
        stats_ref[0:1, :] = mean
        stats_ref[1:2, :] = lax.rsqrt(var + 1e-5)


def edge_pre_forward(e, gs, gd, wb3, bb3):
    E, H = e.shape
    t = _tile(E)
    kern = functools.partial(_edge_pre_kernel, n_total=E)
    return pl.pallas_call(
        kern,
        out_shape=(jax.ShapeDtypeStruct((E, H), F32),
                   jax.ShapeDtypeStruct((2, H), F32)),
        grid=(E // t,),
        in_specs=[pl.BlockSpec((t, H), lambda i: (i, 0)),   # e
                  pl.BlockSpec((t, H), lambda i: (i, 1)),   # Gs cols H:2H = B1h[src]
                  pl.BlockSpec((t, H), lambda i: (i, 1)),   # Gd cols H:2H = B2h[dst]
                  pl.BlockSpec((H, H), lambda i: (0, 0)),
                  pl.BlockSpec((1, H), lambda i: (0, 0))],
        out_specs=(pl.BlockSpec((t, H), lambda i: (i, 0)),
                   pl.BlockSpec((2, H), lambda i: (0, 0))),
        compiler_params=_cparams(("arbitrary",)),
    )(e, gs, gd, wb3.astype(BF16), bb3)


# ----------------------------------------------------------------------------
# Kernel 4: edge post-pass — BN apply + ReLU + residual, edge gates sigma,
# and gated messages sigma*A2h[src], sigma*A3h[dst].
# ----------------------------------------------------------------------------
def _edge_post_kernel(etmp_ref, ein_ref, a2s_ref, a3d_ref, stats_ref,
                      g_ref, b_ref, enew_ref, sig_ref, mf_ref, mb_ref):
    mean = stats_ref[0:1, :]
    rstd = stats_ref[1:2, :]
    e_bn = (etmp_ref[...] - mean) * rstd * g_ref[...] + b_ref[...]
    e_new = ein_ref[...] + jnp.maximum(e_bn, 0.0)
    sig = jax.nn.sigmoid(e_new)
    enew_ref[...] = e_new
    sig_ref[...] = sig
    mf_ref[...] = sig * a2s_ref[...]     # sigma * A2h[src]
    mb_ref[...] = sig * a3d_ref[...]     # sigma * A3h[dst]


def edge_post_forward(e_tmp, e_in, gs, gd, stats_e, gamma, beta):
    E, H = e_tmp.shape
    t = _tile(E)
    row = pl.BlockSpec((t, H), lambda i: (i, 0))
    return pl.pallas_call(
        _edge_post_kernel,
        out_shape=tuple(jax.ShapeDtypeStruct((E, H), F32) for _ in range(4)),
        grid=(E // t,),
        in_specs=[row,                                    # e_tmp
                  row,                                    # e_in (residual)
                  pl.BlockSpec((t, H), lambda i: (i, 0)),  # Gs cols 0:H = A2h[src]
                  pl.BlockSpec((t, H), lambda i: (i, 0)),  # Gd cols 0:H = A3h[dst]
                  pl.BlockSpec((2, H), lambda i: (0, 0)),
                  pl.BlockSpec((1, H), lambda i: (0, 0)),
                  pl.BlockSpec((1, H), lambda i: (0, 0))],
        out_specs=tuple(pl.BlockSpec((t, H), lambda i: (i, 0)) for _ in range(4)),
        compiler_params=_cparams(("parallel",)),
    )(e_tmp, e_in, gs, gd, stats_e, gamma, beta)


# ----------------------------------------------------------------------------
# Kernel 5: node pre-pass — gated mean aggregation + A1h, plus cross-tile BN
# statistics accumulator (same pattern as the edge pre-pass).
# ----------------------------------------------------------------------------
def _node_pre_kernel(a1_ref, mf_ref, sf_ref, mb_ref, sb_ref,
                     htmp_ref, stats_ref, *, n_total):
    i = pl.program_id(0)
    h_fwd = mf_ref[...] * pl.reciprocal(sf_ref[...] + 1e-6, approx=True)
    h_bwd = mb_ref[...] * pl.reciprocal(sb_ref[...] + 1e-6, approx=True)
    h_tmp = a1_ref[...] + h_fwd + h_bwd
    htmp_ref[...] = h_tmp

    @pl.when(i == 0)
    def _init():
        stats_ref[...] = jnp.zeros_like(stats_ref)

    stats_ref[0:1, :] += jnp.sum(h_tmp, axis=0, keepdims=True)
    stats_ref[1:2, :] += jnp.sum(h_tmp * h_tmp, axis=0, keepdims=True)

    @pl.when(i == pl.num_programs(0) - 1)
    def _finalize():
        inv_n = 1.0 / float(n_total)
        s0 = stats_ref[0:1, :]
        s1 = stats_ref[1:2, :]
        mean = s0 * inv_n
        var = s1 * inv_n - mean * mean
        stats_ref[0:1, :] = mean
        stats_ref[1:2, :] = lax.rsqrt(var + 1e-5)


def node_pre_forward(z, agg_mf, agg_sf, agg_mb, agg_sb):
    n, h5 = z.shape
    H = h5 // 5
    t = _tile(n)
    kern = functools.partial(_node_pre_kernel, n_total=n)
    row = pl.BlockSpec((t, H), lambda i: (i, 0))
    return pl.pallas_call(
        kern,
        out_shape=(jax.ShapeDtypeStruct((n, H), F32),
                   jax.ShapeDtypeStruct((2, H), F32)),
        grid=(n // t,),
        in_specs=[pl.BlockSpec((t, H), lambda i: (i, 0)),  # Z cols 0:H = A1h
                  row, row, row, row],
        out_specs=(pl.BlockSpec((t, H), lambda i: (i, 0)),
                   pl.BlockSpec((2, H), lambda i: (0, 0))),
        compiler_params=_cparams(("arbitrary",)),
    )(z, agg_mf, agg_sf, agg_mb, agg_sb)


# ----------------------------------------------------------------------------
# Kernel 6: node post-pass — BN apply + ReLU + residual.
# ----------------------------------------------------------------------------
def _node_post_kernel(htmp_ref, hin_ref, stats_ref, g_ref, b_ref, hout_ref):
    mean = stats_ref[0:1, :]
    rstd = stats_ref[1:2, :]
    h_bn = (htmp_ref[...] - mean) * rstd * g_ref[...] + b_ref[...]
    hout_ref[...] = hin_ref[...] + jnp.maximum(h_bn, 0.0)


def node_post_forward(h_tmp, h_in, stats_h, gamma, beta):
    n, H = h_tmp.shape
    t = _tile(n)
    row = pl.BlockSpec((t, H), lambda i: (i, 0))
    return pl.pallas_call(
        _node_post_kernel,
        out_shape=jax.ShapeDtypeStruct((n, H), F32),
        grid=(n // t,),
        in_specs=[row, row,
                  pl.BlockSpec((2, H), lambda i: (0, 0)),
                  pl.BlockSpec((1, H), lambda i: (0, 0)),
                  pl.BlockSpec((1, H), lambda i: (0, 0))],
        out_specs=row,
        compiler_params=_cparams(("parallel",)),
    )(h_tmp, h_in, stats_h, gamma, beta)


# ----------------------------------------------------------------------------
# Kernel 7: ScorePredictor — per edge:  W2(relu(W1([h_src, h_dst, e]))).
# ----------------------------------------------------------------------------
def _score_kernel(cat_ref, w1_ref, b1_ref, w2_ref, b2_ref, o_ref):
    z = (jnp.dot(cat_ref[...].astype(BF16), w1_ref[...],
                 preferred_element_type=F32) + b1_ref[...])
    z = jnp.maximum(z, 0.0)
    o_ref[...] = (jnp.dot(z.astype(BF16), w2_ref[...],
                          preferred_element_type=F32) + b2_ref[...])


def score_forward(cat, w1, b1, w2, b2):
    E, h3 = cat.shape
    hs = w1.shape[1]
    t = _tile(E)
    return pl.pallas_call(
        _score_kernel,
        out_shape=jax.ShapeDtypeStruct((E, 1), F32),
        grid=(E // t,),
        in_specs=[pl.BlockSpec((t, h3), lambda i: (i, 0)),
                  pl.BlockSpec((h3, hs), lambda i: (0, 0)),
                  pl.BlockSpec((1, hs), lambda i: (0, 0)),
                  pl.BlockSpec((hs, 1), lambda i: (0, 0)),
                  pl.BlockSpec((1, 1), lambda i: (0, 0))],
        out_specs=pl.BlockSpec((t, 1), lambda i: (i, 0)),
        compiler_params=_cparams(("parallel",)),
    )(cat, w1.astype(BF16), b1, w2.astype(BF16), b2)


# ----------------------------------------------------------------------------
# Model glue: one SymGatedGCN layer + full forward
# ----------------------------------------------------------------------------
def gcn_layer_forward(h, e, src, dst, p):
    n, H = h.shape
    # Fused A1/A2/B1/A3/B2 linears: Z columns = [A1h | A2h | B1h | A3h | B2h].
    z = node_linear_forward(h, p['w5'], p['b5'])
    # Index-based gathers of exactly the per-edge operand columns (no one-hot).
    gs = jnp.take(z[:, H:3 * H], src, axis=0)        # [A2h[src] | B1h[src]]
    gd = jnp.take(z[:, 3 * H:5 * H], dst, axis=0)    # [A3h[dst] | B2h[dst]]
    # Edge stage: e_tmp + global BN stats, then BN/residual/gates/messages.
    e_tmp, stats_e = edge_pre_forward(e, gs, gd, p['wb3'], p['bb3'])
    e_new, sig, mf, mb = edge_post_forward(e_tmp, e, gs, gd, stats_e,
                                           p['gamma_e'], p['beta_e'])
    # Scatter-add (DGL update_all sum) as index-based segment sums.
    agg_mf = jax.ops.segment_sum(mf, dst, num_segments=n)
    agg_sf = jax.ops.segment_sum(sig, dst, num_segments=n)
    agg_mb = jax.ops.segment_sum(mb, src, num_segments=n)
    agg_sb = jax.ops.segment_sum(sig, src, num_segments=n)
    # Node stage: gated means + A1h + global BN stats, then BN/residual.
    h_tmp, stats_h = node_pre_forward(z, agg_mf, agg_sf, agg_mb, agg_sb)
    h_new = node_post_forward(h_tmp, h, stats_h, p['gamma_h'], p['beta_h'])
    return h_new, e_new


@jax.jit
def model_forward(params, src, dst, x, e):
    x = encoder_forward(x, *params['node_enc'])
    e = encoder_forward(e, *params['edge_enc'])
    for p in params['gnn']:
        x, e = gcn_layer_forward(x, e, src, dst, p)
    hs = jnp.take(x, src, axis=0)
    hd = jnp.take(x, dst, axis=0)
    cat = jnp.concatenate([hs, hd, e], axis=1)
    pp = params['pred']
    return score_forward(cat, pp['w1'], pp['b1'], pp['w2'], pp['b2'])


# ----------------------------------------------------------------------------
# Deterministic parameter init (PyTorch nn.Linear-like uniform bounds).
# Weights stored transposed: (fan_in, fan_out); biases as (1, fan_out).
# ----------------------------------------------------------------------------
def init_params(key, node_f, edge_f, hidden_f, hidden_edge_f,
                num_layers, hidden_edge_scores):
    hidden_node_f = hidden_edge_f   # hidden_node_features = hidden_edge_features
    keys = iter(jax.random.split(key, 256))

    def linear(fan_in, fan_out):
        k1, k2 = jax.random.split(next(keys))
        bound = float(fan_in) ** -0.5
        w = jax.random.uniform(k1, (fan_in, fan_out), F32, -bound, bound)
        b = jax.random.uniform(k2, (1, fan_out), F32, -bound, bound)
        return w, b

    node_enc = (*linear(node_f, hidden_node_f), *linear(hidden_node_f, hidden_f))
    edge_enc = (*linear(edge_f, hidden_edge_f), *linear(hidden_edge_f, hidden_f))

    gnn = []
    for _ in range(num_layers):
        # column order of w5: [A1 | A2 | B1 | A3 | B2]
        ws, bs = zip(*[linear(hidden_f, hidden_f) for _ in range(5)])
        wb3, bb3 = linear(hidden_f, hidden_f)
        gnn.append(dict(
            w5=jnp.concatenate(ws, axis=1), b5=jnp.concatenate(bs, axis=1),
            wb3=wb3, bb3=bb3,
            gamma_h=jnp.ones((1, hidden_f), F32), beta_h=jnp.zeros((1, hidden_f), F32),
            gamma_e=jnp.ones((1, hidden_f), F32), beta_e=jnp.zeros((1, hidden_f), F32)))

    w1, b1 = linear(3 * hidden_f, hidden_edge_scores)
    w2, b2 = linear(hidden_edge_scores, 1)
    pred = dict(w1=w1, b1=b1, w2=w2, b2=b2)
    return dict(node_enc=node_enc, edge_enc=edge_enc, gnn=gnn, pred=pred)


# ----------------------------------------------------------------------------
# Pure-JAX reference (same bf16-operand / f32-accumulate matmul policy).
# ----------------------------------------------------------------------------
def reference_forward(params, src, dst, x, e, num_nodes):
    def mdot(a, b):
        return jnp.dot(a.astype(BF16), b.astype(BF16), preferred_element_type=F32)

    def bn(v, gamma, beta):
        mu = v.mean(0, keepdims=True)
        var = ((v - mu) ** 2).mean(0, keepdims=True)
        return (v - mu) / jnp.sqrt(var + 1e-5) * gamma + beta

    def encoder(v, w1, b1, w2, b2):
        h = jnp.maximum(jnp.dot(v, w1, preferred_element_type=F32) + b1, 0.0)
        return mdot(h, w2) + b2

    x = encoder(x, *params['node_enc'])
    e = encoder(e, *params['edge_enc'])
    H = x.shape[1]

    for p in params['gnn']:
        h_in, e_in = x, e
        z = mdot(x, p['w5']) + p['b5']
        a1h, a2h, b1h, a3h, b2h = (z[:, 0:H], z[:, H:2 * H], z[:, 2 * H:3 * H],
                                   z[:, 3 * H:4 * H], z[:, 4 * H:5 * H])
        b3e = mdot(e, p['wb3']) + p['bb3']
        e_tmp = b1h[src] + b2h[dst] + b3e
        e_new = e_in + jnp.maximum(bn(e_tmp, p['gamma_e'], p['beta_e']), 0.0)
        sigma = jax.nn.sigmoid(e_new)
        h_fwd = (jax.ops.segment_sum(sigma * a2h[src], dst, num_segments=num_nodes)
                 / (jax.ops.segment_sum(sigma, dst, num_segments=num_nodes) + 1e-6))
        h_bwd = (jax.ops.segment_sum(sigma * a3h[dst], src, num_segments=num_nodes)
                 / (jax.ops.segment_sum(sigma, src, num_segments=num_nodes) + 1e-6))
        h_tmp = a1h + h_fwd + h_bwd
        x = h_in + jnp.maximum(bn(h_tmp, p['gamma_h'], p['beta_h']), 0.0)
        e = e_new

    pp = params['pred']
    cat = jnp.concatenate([x[src], x[dst], e], axis=1)
    zz = jnp.maximum(mdot(cat, pp['w1']) + pp['b1'], 0.0)
    return mdot(zz, pp['w2']) + pp['b2']


if __name__ == "__main__":
    # Small synthetic graph, but lane-dense (hidden = 128) and multi-tile so
    # the grids / cross-tile BN accumulators are actually exercised.
    N_NODES, N_EDGES = 256, 512
    NODE_F, EDGE_F = 4, 4
    HIDDEN_F = 128
    HIDDEN_EDGE_F = 128
    NUM_LAYERS = 2
    HIDDEN_EDGE_SCORES = 128

    key = jax.random.PRNGKey(0)
    k_src, k_dst, k_x, k_e, k_p = jax.random.split(key, 5)

    src = jax.random.randint(k_src, (N_EDGES,), 0, N_NODES, dtype=jnp.int32)
    dst = jax.random.randint(k_dst, (N_EDGES,), 0, N_NODES, dtype=jnp.int32)
    x = jax.random.normal(k_x, (N_NODES, NODE_F), F32)
    e = jax.random.normal(k_e, (N_EDGES, EDGE_F), F32)

    params = init_params(k_p, NODE_F, EDGE_F, HIDDEN_F, HIDDEN_EDGE_F,
                         NUM_LAYERS, HIDDEN_EDGE_SCORES)

    scores = jax.block_until_ready(model_forward(params, src, dst, x, e))
    ref = reference_forward(params, src, dst, x, e, N_NODES)

    assert scores.shape == (N_EDGES, 1), scores.shape
    assert bool(jnp.all(jnp.isfinite(scores)))
    max_err = float(jnp.max(jnp.abs(scores - ref)))
    assert bool(jnp.allclose(scores, ref, atol=5e-2, rtol=5e-2)), max_err
    print("KERNEL_OK")
</pallas_src>

<mosaic_0001>
module attributes {stable_mosaic.version = 11 : i64} {
  func.func @_mlp2_kernel(%arg0: i32, %arg1: memref<128x4xf32, #tpu.memory_space<vmem>>, %arg2: memref<4x128xf32, #tpu.memory_space<vmem>>, %arg3: memref<1x128xf32, #tpu.memory_space<vmem>>, %arg4: memref<128x128xbf16, #tpu.memory_space<vmem>>, %arg5: memref<1x128xf32, #tpu.memory_space<vmem>>, %arg6: memref<128x128xf32, #tpu.memory_space<vmem>>) attributes {dimension_semantics = [#tpu.dimension_semantics<parallel>], iteration_bounds = array<i64: 2>, scalar_prefetch = 0 : i64, scratch_operands = 0 : i64, tpu.core_type = #tpu.core_type<tc>, window_params = [{transform_indices = @transform_0, window_bounds = array<i64: 128, 4>}, {pipeline_mode = #tpu.pipeline_mode<synchronous>, transform_indices = @transform_1, window_bounds = array<i64: 4, 128>}, {pipeline_mode = #tpu.pipeline_mode<synchronous>, transform_indices = @transform_2, window_bounds = array<i64: 1, 128>}, {pipeline_mode = #tpu.pipeline_mode<synchronous>, transform_indices = @transform_3, window_bounds = array<i64: 128, 128>}, {pipeline_mode = #tpu.pipeline_mode<synchronous>, transform_indices = @transform_4, window_bounds = array<i64: 1, 128>}, {transform_indices = @transform_5, window_bounds = array<i64: 128, 128>}]} {
    %c0 = arith.constant 0 : index
    %c0_0 = arith.constant 0 : index
    %0 = vector.load %arg1[%c0, %c0_0] : memref<128x4xf32, #tpu.memory_space<vmem>>, vector<128x4xf32>
    %c0_1 = arith.constant 0 : index
    %c0_2 = arith.constant 0 : index
    %1 = vector.load %arg2[%c0_1, %c0_2] : memref<4x128xf32, #tpu.memory_space<vmem>>, vector<4x128xf32>
    %cst = arith.constant dense<0.000000e+00> : vector<128x128xf32>
    %2 = tpu.matmul %0, %1, %cst {dimension_numbers = #tpu.dot_dimension_numbers<[1], [0], [0], [1], [0, 0, 1, 1], [], []>} : vector<128x4xf32>, vector<4x128xf32>, vector<128x128xf32> -> vector<128x128xf32>
    %c0_3 = arith.constant 0 : index
    %c0_4 = arith.constant 0 : index
    %3 = vector.load %arg3[%c0_3, %c0_4] : memref<1x128xf32, #tpu.memory_space<vmem>>, vector<1x128xf32>
    %4 = vector.broadcast %3 : vector<1x128xf32> to vector<128x128xf32>
    %5 = arith.addf %2, %4 : vector<128x128xf32>
    %cst_5 = arith.constant 0.000000e+00 : f32
    %6 = vector.broadcast %cst_5 : f32 to vector<128x128xf32>
    %7 = arith.maximumf %5, %6 : vector<128x128xf32>
    %8 = arith.truncf %7 : vector<128x128xf32> to vector<128x128xbf16>
    %c0_6 = arith.constant 0 : index
    %c0_7 = arith.constant 0 : index
    %9 = vector.load %arg4[%c0_6, %c0_7] : memref<128x128xbf16, #tpu.memory_space<vmem>>, vector<128x128xbf16>
    %cst_8 = arith.constant dense<0.000000e+00> : vector<128x128xf32>
    %10 = tpu.matmul %8, %9, %cst_8 {dimension_numbers = #tpu.dot_dimension_numbers<[1], [0], [0], [1], [0, 0, 1, 1], [], []>} : vector<128x128xbf16>, vector<128x128xbf16>, vector<128x128xf32> -> vector<128x128xf32>
    %c0_9 = arith.constant 0 : index
    %c0_10 = arith.constant 0 : index
    %11 = vector.load %arg5[%c0_9, %c0_10] : memref<1x128xf32, #tpu.memory_space<vmem>>, vector<1x128xf32>
    %12 = vector.broadcast %11 : vector<1x128xf32> to vector<128x128xf32>
    %13 = arith.addf %10, %12 : vector<128x128xf32>
    %c0_11 = arith.constant 0 : index
    %c0_12 = arith.constant 0 : index
    %14 = vector.load %arg6[%c0_11, %c0_12] : memref<128x128xf32, #tpu.memory_space<vmem>>, vector<128x128xf32>
    tpu.vector_store %arg6[%c0_11, %c0_12], %13 {strides = array<i32>} : memref<128x128xf32, #tpu.memory_space<vmem>>, vector<128x128xf32>,
    return
  }
  func.func @transform_0(%arg0: i32) -> (i32, i32) {
    %c0_i32 = arith.constant 0 : i32
    %c0_i32_0 = arith.constant 0 : i32
    return %arg0, %c0_i32 : i32, i32
  }
  func.func @transform_1(%arg0: i32) -> (i32, i32) {
    %c0_i32 = arith.constant 0 : i32
    %c0_i32_0 = arith.constant 0 : i32
    %c0_i32_1 = arith.constant 0 : i32
    return %c0_i32, %c0_i32_0 : i32, i32
  }
  func.func @transform_2(%arg0: i32) -> (i32, i32) {
    %c0_i32 = arith.constant 0 : i32
    %c0_i32_0 = arith.constant 0 : i32
    %c0_i32_1 = arith.constant 0 : i32
    return %c0_i32, %c0_i32_0 : i32, i32
  }
  func.func @transform_3(%arg0: i32) -> (i32, i32) {
    %c0_i32 = arith.constant 0 : i32
    %c0_i32_0 = arith.constant 0 : i32
    %c0_i32_1 = arith.constant 0 : i32
    return %c0_i32, %c0_i32_0 : i32, i32
  }
  func.func @transform_4(%arg0: i32) -> (i32, i32) {
    %c0_i32 = arith.constant 0 : i32
    %c0_i32_0 = arith.constant 0 : i32
    %c0_i32_1 = arith.constant 0 : i32
    return %c0_i32, %c0_i32_0 : i32, i32
  }
  func.func @transform_5(%arg0: i32) -> (i32, i32) {
    %c0_i32 = arith.constant 0 : i32
    %c0_i32_0 = arith.constant 0 : i32
    return %arg0, %c0_i32 : i32, i32
  }
}

module attributes {stable_mosaic.version = 11 : i64} {
  func.func @_node_linear_kernel(%arg0: i32, %arg1: memref<128x128xf32, #tpu.memory_space<vmem>>, %arg2: memref<128x640xbf16, #tpu.memory_space<vmem>>, %arg3: memref<1x640xf32, #tpu.memory_space<vmem>>, %arg4: memref<128x640xf32, #tpu.memory_space<vmem>>) attributes {dimension_semantics = [#tpu.dimension_semantics<parallel>], iteration_bounds = array<i64: 2>, scalar_prefetch = 0 : i64, scratch_operands = 0 : i64, tpu.core_type = #tpu.core_type<tc>, window_params = [{transform_indices = @transform_0, window_bounds = array<i64: 128, 128>}, {pipeline_mode = #tpu.pipeline_mode<synchronous>, transform_indices = @transform_1, window_bounds = array<i64: 128, 640>}, {pipeline_mode = #tpu.pipeline_mode<synchronous>, transform_indices = @transform_2, window_bounds = array<i64: 1, 640>}, {transform_indices = @transform_3, window_bounds = array<i64: 128, 640>}]} {
    %c0 = arith.constant 0 : index
    %c0_0 = arith.constant 0 : index
    %0 = vector.load %arg1[%c0, %c0_0] : memref<128x128xf32, #tpu.memory_space<vmem>>, vector<128x128xf32>
    %1 = arith.truncf %0 : vector<128x128xf32> to vector<128x128xbf16>
    %c0_1 = arith.constant 0 : index
    %c0_2 = arith.constant 0 : index
    %2 = vector.load %arg2[%c0_1, %c0_2] : memref<128x640xbf16, #tpu.memory_space<vmem>>, vector<128x640xbf16>
    %cst = arith.constant dense<0.000000e+00> : vector<128x640xf32>
    %3 = tpu.matmul %1, %2, %cst {dimension_numbers = #tpu.dot_dimension_numbers<[1], [0], [0], [1], [0, 0, 1, 1], [], []>} : vector<128x128xbf16>, vector<128x640xbf16>, vector<128x640xf32> -> vector<128x640xf32>
    %c0_3 = arith.constant 0 : index
    %c0_4 = arith.constant 0 : index
    %4 = vector.load %arg3[%c0_3, %c0_4] : memref<1x640xf32, #tpu.memory_space<vmem>>, vector<1x640xf32>
    %5 = vector.broadcast %4 : vector<1x640xf32> to vector<128x640xf32>
    %6 = arith.addf %3, %5 : vector<128x640xf32>
    %c0_5 = arith.constant 0 : index
    %c0_6 = arith.constant 0 : index
    %7 = vector.load %arg4[%c0_5, %c0_6] : memref<128x640xf32, #tpu.memory_space<vmem>>, vector<128x640xf32>
    tpu.vector_store %arg4[%c0_5, %c0_6], %6 {strides = array<i32>} : memref<128x640xf32, #tpu.memory_space<vmem>>, vector<128x640xf32>,
    return
  }
  func.func @transform_0(%arg0: i32) -> (i32, i32) {
    %c0_i32 = arith.constant 0 : i32
    %c0_i32_0 = arith.constant 0 : i32
    return %arg0, %c0_i32 : i32, i32
  }
  func.func @transform_1(%arg0: i32) -> (i32, i32) {
    %c0_i32 = arith.constant 0 : i32
    %c0_i32_0 = arith.constant 0 : i32
    %c0_i32_1 = arith.constant 0 : i32
    return %c0_i32, %c0_i32_0 : i32, i32
  }
  func.func @transform_2(%arg0: i32) -> (i32, i32) {
    %c0_i32 = arith.constant 0 : i32
    %c0_i32_0 = arith.constant 0 : i32
    %c0_i32_1 = arith.constant 0 : i32
    return %c0_i32, %c0_i32_0 : i32, i32
  }
  func.func @transform_3(%arg0: i32) -> (i32, i32) {
    %c0_i32 = arith.constant 0 : i32
    %c0_i32_0 = arith.constant 0 : i32
    return %arg0, %c0_i32 : i32, i32
  }
}

module attributes {stable_mosaic.version = 11 : i64} {
  func.func @_mlp2_kernel(%arg0: i32, %arg1: memref<128x4xf32, #tpu.memory_space<vmem>>, %arg2: memref<4x128xf32, #tpu.memory_space<vmem>>, %arg3: memref<1x128xf32, #tpu.memory_space<vmem>>, %arg4: memref<128x128xbf16, #tpu.memory_space<vmem>>, %arg5: memref<1x128xf32, #tpu.memory_space<vmem>>, %arg6: memref<128x128xf32, #tpu.memory_space<vmem>>) attributes {dimension_semantics = [#tpu.dimension_semantics<parallel>], iteration_bounds = array<i64: 4>, scalar_prefetch = 0 : i64, scratch_operands = 0 : i64, tpu.core_type = #tpu.core_type<tc>, window_params = [{transform_indices = @transform_0, window_bounds = array<i64: 128, 4>}, {pipeline_mode = #tpu.pipeline_mode<synchronous>, transform_indices = @transform_1, window_bounds = array<i64: 4, 128>}, {pipeline_mode = #tpu.pipeline_mode<synchronous>, transform_indices = @transform_2, window_bounds = array<i64: 1, 128>}, {pipeline_mode = #tpu.pipeline_mode<synchronous>, transform_indices = @transform_3, window_bounds = array<i64: 128, 128>}, {pipeline_mode = #tpu.pipeline_mode<synchronous>, transform_indices = @transform_4, window_bounds = array<i64: 1, 128>}, {transform_indices = @transform_5, window_bounds = array<i64: 128, 128>}]} {
    %c0 = arith.constant 0 : index
    %c0_0 = arith.constant 0 : index
    %0 = vector.load %arg1[%c0, %c0_0] : memref<128x4xf32, #tpu.memory_space<vmem>>, vector<128x4xf32>
    %c0_1 = arith.constant 0 : index
    %c0_2 = arith.constant 0 : index
    %1 = vector.load %arg2[%c0_1, %c0_2] : memref<4x128xf32, #tpu.memory_space<vmem>>, vector<4x128xf32>
    %cst = arith.constant dense<0.000000e+00> : vector<128x128xf32>
    %2 = tpu.matmul %0, %1, %cst {dimension_numbers = #tpu.dot_dimension_numbers<[1], [0], [0], [1], [0, 0, 1, 1], [], []>} : vector<128x4xf32>, vector<4x128xf32>, vector<128x128xf32> -> vector<128x128xf32>
    %c0_3 = arith.constant 0 : index
    %c0_4 = arith.constant 0 : index
    %3 = vector.load %arg3[%c0_3, %c0_4] : memref<1x128xf32, #tpu.memory_space<vmem>>, vector<1x128xf32>
    %4 = vector.broadcast %3 : vector<1x128xf32> to vector<128x128xf32>
    %5 = arith.addf %2, %4 : vector<128x128xf32>
    %cst_5 = arith.constant 0.000000e+00 : f32
    %6 = vector.broadcast %cst_5 : f32 to vector<128x128xf32>
    %7 = arith.maximumf %5, %6 : vector<128x128xf32>
    %8 = arith.truncf %7 : vector<128x128xf32> to vector<128x128xbf16>
    %c0_6 = arith.constant 0 : index
    %c0_7 = arith.constant 0 : index
    %9 = vector.load %arg4[%c0_6, %c0_7] : memref<128x128xbf16, #tpu.memory_space<vmem>>, vector<128x128xbf16>
    %cst_8 = arith.constant dense<0.000000e+00> : vector<128x128xf32>
    %10 = tpu.matmul %8, %9, %cst_8 {dimension_numbers = #tpu.dot_dimension_numbers<[1], [0], [0], [1], [0, 0, 1, 1], [], []>} : vector<128x128xbf16>, vector<128x128xbf16>, vector<128x128xf32> -> vector<128x128xf32>
    %c0_9 = arith.constant 0 : index
    %c0_10 = arith.constant 0 : index
    %11 = vector.load %arg5[%c0_9, %c0_10] : memref<1x128xf32, #tpu.memory_space<vmem>>, vector<1x128xf32>
    %12 = vector.broadcast %11 : vector<1x128xf32> to vector<128x128xf32>
    %13 = arith.addf %10, %12 : vector<128x128xf32>
    %c0_11 = arith.constant 0 : index
    %c0_12 = arith.constant 0 : index
    %14 = vector.load %arg6[%c0_11, %c0_12] : memref<128x128xf32, #tpu.memory_space<vmem>>, vector<128x128xf32>
    tpu.vector_store %arg6[%c0_11, %c0_12], %13 {strides = array<i32>} : memref<128x128xf32, #tpu.memory_space<vmem>>, vector<128x128xf32>,
    return
  }
  func.func @transform_0(%arg0: i32) -> (i32, i32) {
    %c0_i32 = arith.constant 0 : i32
    %c0_i32_0 = arith.constant 0 : i32
    return %arg0, %c0_i32 : i32, i32
  }
  func.func @transform_1(%arg0: i32) -> (i32, i32) {
    %c0_i32 = arith.constant 0 : i32
    %c0_i32_0 = arith.constant 0 : i32
    %c0_i32_1 = arith.constant 0 : i32
    return %c0_i32, %c0_i32_0 : i32, i32
  }
  func.func @transform_2(%arg0: i32) -> (i32, i32) {
    %c0_i32 = arith.constant 0 : i32
    %c0_i32_0 = arith.constant 0 : i32
    %c0_i32_1 = arith.constant 0 : i32
    return %c0_i32, %c0_i32_0 : i32, i32
  }
  func.func @transform_3(%arg0: i32) -> (i32, i32) {
    %c0_i32 = arith.constant 0 : i32
    %c0_i32_0 = arith.constant 0 : i32
    %c0_i32_1 = arith.constant 0 : i32
    return %c0_i32, %c0_i32_0 : i32, i32
  }
  func.func @transform_4(%arg0: i32) -> (i32, i32) {
    %c0_i32 = arith.constant 0 : i32
    %c0_i32_0 = arith.constant 0 : i32
    %c0_i32_1 = arith.constant 0 : i32
    return %c0_i32, %c0_i32_0 : i32, i32
  }
  func.func @transform_5(%arg0: i32) -> (i32, i32) {
    %c0_i32 = arith.constant 0 : i32
    %c0_i32_0 = arith.constant 0 : i32
    return %arg0, %c0_i32 : i32, i32
  }
}

module attributes {stable_mosaic.version = 11 : i64} {
  func.func @_edge_post_kernel(%arg0: i32, %arg1: memref<128x128xf32, #tpu.memory_space<vmem>>, %arg2: memref<128x128xf32, #tpu.memory_space<vmem>>, %arg3: memref<128x128xf32, #tpu.memory_space<vmem>>, %arg4: memref<128x128xf32, #tpu.memory_space<vmem>>, %arg5: memref<2x128xf32, #tpu.memory_space<vmem>>, %arg6: memref<1x128xf32, #tpu.memory_space<vmem>>, %arg7: memref<1x128xf32, #tpu.memory_space<vmem>>, %arg8: memref<128x128xf32, #tpu.memory_space<vmem>>, %arg9: memref<128x128xf32, #tpu.memory_space<vmem>>, %arg10: memref<128x128xf32, #tpu.memory_space<vmem>>, %arg11: memref<128x128xf32, #tpu.memory_space<vmem>>) attributes {dimension_semantics = [#tpu.dimension_semantics<parallel>], iteration_bounds = array<i64: 4>, scalar_prefetch = 0 : i64, scratch_operands = 0 : i64, tpu.core_type = #tpu.core_type<tc>, window_params = [{transform_indices = @transform_0, window_bounds = array<i64: 128, 128>}, {transform_indices = @transform_1, window_bounds = array<i64: 128, 128>}, {transform_indices = @transform_2, window_bounds = array<i64: 128, 128>}, {transform_indices = @transform_3, window_bounds = array<i64: 128, 128>}, {pipeline_mode = #tpu.pipeline_mode<synchronous>, transform_indices = @transform_4, window_bounds = array<i64: 2, 128>}, {pipeline_mode = #tpu.pipeline_mode<synchronous>, transform_indices = @transform_5, window_bounds = array<i64: 1, 128>}, {pipeline_mode = #tpu.pipeline_mode<synchronous>, transform_indices = @transform_6, window_bounds = array<i64: 1, 128>}, {transform_indices = @transform_7, window_bounds = array<i64: 128, 128>}, {transform_indices = @transform_8, window_bounds = array<i64: 128, 128>}, {transform_indices = @transform_9, window_bounds = array<i64: 128, 128>}, {transform_indices = @transform_10, window_bounds = array<i64: 128, 128>}]} {
    %c0 = arith.constant 0 : index
    %c0_0 = arith.constant 0 : index
    %0 = vector.load %arg5[%c0, %c0_0] : memref<2x128xf32, #tpu.memory_space<vmem>>, vector<1x128xf32>
    %c1 = arith.constant 1 : index
    %c0_1 = arith.constant 0 : index
    %1 = vector.load %arg5[%c1, %c0_1] : memref<2x128xf32, #tpu.memory_space<vmem>>, vector<1x128xf32>
    %c0_2 = arith.constant 0 : index
    %c0_3 = arith.constant 0 : index
    %2 = vector.load %arg1[%c0_2, %c0_3] : memref<128x128xf32, #tpu.memory_space<vmem>>, vector<128x128xf32>
    %3 = vector.broadcast %0 : vector<1x128xf32> to vector<128x128xf32>
    %4 = arith.subf %2, %3 : vector<128x128xf32>
    %5 = vector.broadcast %1 : vector<1x128xf32> to vector<128x128xf32>
    %6 = arith.mulf %4, %5 : vector<128x128xf32>
    %c0_4 = arith.constant 0 : index
    %c0_5 = arith.constant 0 : index
    %7 = vector.load %arg6[%c0_4, %c0_5] : memref<1x128xf32, #tpu.memory_space<vmem>>, vector<1x128xf32>
    %8 = vector.broadcast %7 : vector<1x128xf32> to vector<128x128xf32>
    %9 = arith.mulf %6, %8 : vector<128x128xf32>
    %c0_6 = arith.constant 0 : index
    %c0_7 = arith.constant 0 : index
    %10 = vector.load %arg7[%c0_6, %c0_7] : memref<1x128xf32, #tpu.memory_space<vmem>>, vector<1x128xf32>
    %11 = vector.broadcast %10 : vector<1x128xf32> to vector<128x128xf32>
    %12 = arith.addf %9, %11 : vector<128x128xf32>
    %c0_8 = arith.constant 0 : index
    %c0_9 = arith.constant 0 : index
    %13 = vector.load %arg2[%c0_8, %c0_9] : memref<128x128xf32, #tpu.memory_space<vmem>>, vector<128x128xf32>
    %cst = arith.constant 0.000000e+00 : f32
    %14 = vector.broadcast %cst : f32 to vector<128x128xf32>
    %15 = arith.maximumf %12, %14 : vector<128x128xf32>
    %16 = arith.addf %13, %15 : vector<128x128xf32>
    %17 = arith.negf %16 : vector<128x128xf32>
    %18 = math.exp %17 : vector<128x128xf32>
    %cst_10 = arith.constant 1.000000e+00 : f32
    %19 = vector.broadcast %cst_10 : f32 to vector<128x128xf32>
    %20 = arith.addf %19, %18 : vector<128x128xf32>
    %21 = arith.divf %19, %20 : vector<128x128xf32>
    %c0_11 = arith.constant 0 : index
    %c0_12 = arith.constant 0 : index
    %22 = vector.load %arg8[%c0_11, %c0_12] : memref<128x128xf32, #tpu.memory_space<vmem>>, vector<128x128xf32>
    tpu.vector_store %arg8[%c0_11, %c0_12], %16 {strides = array<i32>} : memref<128x128xf32, #tpu.memory_space<vmem>>, vector<128x128xf32>,
    %c0_13 = arith.constant 0 : index
    %c0_14 = arith.constant 0 : index
    %23 = vector.load %arg9[%c0_13, %c0_14] : memref<128x128xf32, #tpu.memory_space<vmem>>, vector<128x128xf32>
    tpu.vector_store %arg9[%c0_13, %c0_14], %21 {strides = array<i32>} : memref<128x128xf32, #tpu.memory_space<vmem>>, vector<128x128xf32>,
    %c0_15 = arith.constant 0 : index
    %c0_16 = arith.constant 0 : index
    %24 = vector.load %arg3[%c0_15, %c0_16] : memref<128x128xf32, #tpu.memory_space<vmem>>, vector<128x128xf32>
    %25 = arith.mulf %21, %24 : vector<128x128xf32>
    %c0_17 = arith.constant 0 : index
    %c0_18 = arith.constant 0 : index
    %26 = vector.load %arg10[%c0_17, %c0_18] : memref<128x128xf32, #tpu.memory_space<vmem>>, vector<128x128xf32>
    tpu.vector_store %arg10[%c0_17, %c0_18], %25 {strides = array<i32>} : memref<128x128xf32, #tpu.memory_space<vmem>>, vector<128x128xf32>,
    %c0_19 = arith.constant 0 : index
    %c0_20 = arith.constant 0 : index
    %27 = vector.load %arg4[%c0_19, %c0_20] : memref<128x128xf32, #tpu.memory_space<vmem>>, vector<128x128xf32>
    %28 = arith.mulf %21, %27 : vector<128x128xf32>
    %c0_21 = arith.constant 0 : index
    %c0_22 = arith.constant 0 : index
    %29 = vector.load %arg11[%c0_21, %c0_22] : memref<128x128xf32, #tpu.memory_space<vmem>>, vector<128x128xf32>
    tpu.vector_store %arg11[%c0_21, %c0_22], %28 {strides = array<i32>} : memref<128x128xf32, #tpu.memory_space<vmem>>, vector<128x128xf32>,
    return
  }
  func.func @transform_0(%arg0: i32) -> (i32, i32) {
    %c0_i32 = arith.constant 0 : i32
    %c0_i32_0 = arith.constant 0 : i32
    return %arg0, %c0_i32 : i32, i32
  }
  func.func @transform_1(%arg0: i32) -> (i32, i32) {
    %c0_i32 = arith.constant 0 : i32
    %c0_i32_0 = arith.constant 0 : i32
    return %arg0, %c0_i32 : i32, i32
  }
  func.func @transform_2(%arg0: i32) -> (i32, i32) {
    %c0_i32 = arith.constant 0 : i32
    %c0_i32_0 = arith.constant 0 : i32
    return %arg0, %c0_i32 : i32, i32
  }
  func.func @transform_3(%arg0: i32) -> (i32, i32) {
    %c0_i32 = arith.constant 0 : i32
    %c0_i32_0 = arith.constant 0 : i32
    return %arg0, %c0_i32 : i32, i32
  }
  func.func @transform_4(%arg0: i32) -> (i32, i32) {
    %c0_i32 = arith.constant 0 : i32
    %c0_i32_0 = arith.constant 0 : i32
    %c0_i32_1 = arith.constant 0 : i32
    return %c0_i32, %c0_i32_0 : i32, i32
  }
  func.func @transform_5(%arg0: i32) -> (i32, i32) {
    %c0_i32 = arith.constant 0 : i32
    %c0_i32_0 = arith.constant 0 : i32
    %c0_i32_1 = arith.constant 0 : i32
    return %c0_i32, %c0_i32_0 : i32, i32
  }
  func.func @transform_6(%arg0: i32) -> (i32, i32) {
    %c0_i32 = arith.constant 0 : i32
    %c0_i32_0 = arith.constant 0 : i32
    %c0_i32_1 = arith.constant 0 : i32
    return %c0_i32, %c0_i32_0 : i32, i32
  }
  func.func @transform_7(%arg0: i32) -> (i32, i32) {
    %c0_i32 = arith.constant 0 : i32
    %c0_i32_0 = arith.constant 0 : i32
    return %arg0, %c0_i32 : i32, i32
  }
  func.func @transform_8(%arg0: i32) -> (i32, i32) {
    %c0_i32 = arith.constant 0 : i32
    %c0_i32_0 = arith.constant 0 : i32
    return %arg0, %c0_i32 : i32, i32
  }
  func.func @transform_9(%arg0: i32) -> (i32, i32) {
    %c0_i32 = arith.constant 0 : i32
    %c0_i32_0 = arith.constant 0 : i32
    return %arg0, %c0_i32 : i32, i32
  }
  func.func @transform_10(%arg0: i32) -> (i32, i32) {
    %c0_i32 = arith.constant 0 : i32
    %c0_i32_0 = arith.constant 0 : i32
    return %arg0, %c0_i32 : i32, i32
  }
}

module attributes {stable_mosaic.version = 11 : i64} {
  func.func @_edge_pre_kernel(%arg0: i32, %arg1: memref<128x128xf32, #tpu.memory_space<vmem>>, %arg2: memref<128x128xf32, #tpu.memory_space<vmem>>, %arg3: memref<128x128xf32, #tpu.memory_space<vmem>>, %arg4: memref<128x128xbf16, #tpu.memory_space<vmem>>, %arg5: memref<1x128xf32, #tpu.memory_space<vmem>>, %arg6: memref<128x128xf32, #tpu.memory_space<vmem>>, %arg7: memref<2x128xf32, #tpu.memory_space<vmem>>) attributes {dimension_semantics = [#tpu.dimension_semantics<arbitrary>], iteration_bounds = array<i64: 4>, scalar_prefetch = 0 : i64, scratch_operands = 0 : i64, tpu.core_type = #tpu.core_type<tc>, window_params = [{transform_indices = @transform_0, window_bounds = array<i64: 128, 128>}, {transform_indices = @transform_1, window_bounds = array<i64: 128, 128>}, {transform_indices = @transform_2, window_bounds = array<i64: 128, 128>}, {pipeline_mode = #tpu.pipeline_mode<synchronous>, transform_indices = @transform_3, window_bounds = array<i64: 128, 128>}, {pipeline_mode = #tpu.pipeline_mode<synchronous>, transform_indices = @transform_4, window_bounds = array<i64: 1, 128>}, {transform_indices = @transform_5, window_bounds = array<i64: 128, 128>}, {pipeline_mode = #tpu.pipeline_mode<synchronous>, transform_indices = @transform_6, window_bounds = array<i64: 2, 128>}]} {
    %c0 = arith.constant 0 : index
    %c0_0 = arith.constant 0 : index
    %0 = vector.load %arg1[%c0, %c0_0] : memref<128x128xf32, #tpu.memory_space<vmem>>, vector<128x128xf32>
    %1 = arith.truncf %0 : vector<128x128xf32> to vector<128x128xbf16>
    %c0_1 = arith.constant 0 : index
    %c0_2 = arith.constant 0 : index
    %2 = vector.load %arg4[%c0_1, %c0_2] : memref<128x128xbf16, #tpu.memory_space<vmem>>, vector<128x128xbf16>
    %cst = arith.constant dense<0.000000e+00> : vector<128x128xf32>
    %3 = tpu.matmul %1, %2, %cst {dimension_numbers = #tpu.dot_dimension_numbers<[1], [0], [0], [1], [0, 0, 1, 1], [], []>} : vector<128x128xbf16>, vector<128x128xbf16>, vector<128x128xf32> -> vector<128x128xf32>
    %c0_3 = arith.constant 0 : index
    %c0_4 = arith.constant 0 : index
    %4 = vector.load %arg5[%c0_3, %c0_4] : memref<1x128xf32, #tpu.memory_space<vmem>>, vector<1x128xf32>
    %5 = vector.broadcast %4 : vector<1x128xf32> to vector<128x128xf32>
    %6 = arith.addf %3, %5 : vector<128x128xf32>
    %c0_5 = arith.constant 0 : index
    %c0_6 = arith.constant 0 : index
    %7 = vector.load %arg2[%c0_5, %c0_6] : memref<128x128xf32, #tpu.memory_space<vmem>>, vector<128x128xf32>
    %c0_7 = arith.constant 0 : index
    %c0_8 = arith.constant 0 : index
    %8 = vector.load %arg3[%c0_7, %c0_8] : memref<128x128xf32, #tpu.memory_space<vmem>>, vector<128x128xf32>
    %9 = arith.addf %7, %8 : vector<128x128xf32>
    %10 = arith.addf %9, %6 : vector<128x128xf32>
    %c0_9 = arith.constant 0 : index
    %c0_10 = arith.constant 0 : index
    %11 = vector.load %arg6[%c0_9, %c0_10] : memref<128x128xf32, #tpu.memory_space<vmem>>, vector<128x128xf32>
    tpu.vector_store %arg6[%c0_9, %c0_10], %10 {strides = array<i32>} : memref<128x128xf32, #tpu.memory_space<vmem>>, vector<128x128xf32>,
    %c0_i32 = arith.constant 0 : i32
    %12 = arith.cmpi eq, %arg0, %c0_i32 : i32
    %13 = arith.extui %12 : i1 to i32
    %c0_i32_11 = arith.constant 0 : i32
    %14 = arith.cmpi ne, %13, %c0_i32_11 : i32
    scf.if %14 {
      %cst_22 = arith.constant 0.000000e+00 : f32
      %29 = vector.broadcast %cst_22 : f32 to vector<2x128xf32>
      %c0_23 = arith.constant 0 : index
      %c0_24 = arith.constant 0 : index
      %30 = vector.load %arg7[%c0_23, %c0_24] : memref<2x128xf32, #tpu.memory_space<vmem>>, vector<2x128xf32>
      tpu.vector_store %arg7[%c0_23, %c0_24], %29 {strides = array<i32>} : memref<2x128xf32, #tpu.memory_space<vmem>>, vector<2x128xf32>,
    } else {
    }
    %c0_12 = arith.constant 0 : index
    %c0_13 = arith.constant 0 : index
    %15 = vector.load %arg7[%c0_12, %c0_13] : memref<2x128xf32, #tpu.memory_space<vmem>>, vector<1x128xf32>
    %cst_14 = arith.constant dense<0.000000e+00> : vector<128xf32>
    %16 = vector.multi_reduction <add>, %10, %cst_14 [0] : vector<128x128xf32> to vector<128xf32>
    %17 = vector.shape_cast %16 : vector<128xf32> to vector<1x128xf32>
    %18 = arith.addf %15, %17 : vector<1x128xf32>
    %c0_15 = arith.constant 0 : index
    %c0_16 = arith.constant 0 : index
    %19 = vector.load %arg7[%c0_15, %c0_16] : memref<2x128xf32, #tpu.memory_space<vmem>>, vector<1x128xf32>
    tpu.vector_store %arg7[%c0_15, %c0_16], %18 {strides = array<i32>} : memref<2x128xf32, #tpu.memory_space<vmem>>, vector<1x128xf32>,
    %c1 = arith.constant 1 : index
    %c0_17 = arith.constant 0 : index
    %20 = vector.load %arg7[%c1, %c0_17] : memref<2x128xf32, #tpu.memory_space<vmem>>, vector<1x128xf32>
    %21 = arith.mulf %10, %10 : vector<128x128xf32>
    %cst_18 = arith.constant dense<0.000000e+00> : vector<128xf32>
    %22 = vector.multi_reduction <add>, %21, %cst_18 [0] : vector<128x128xf32> to vector<128xf32>
    %23 = vector.shape_cast %22 : vector<128xf32> to vector<1x128xf32>
    %24 = arith.addf %20, %23 : vector<1x128xf32>
    %c1_19 = arith.constant 1 : index
    %c0_20 = arith.constant 0 : index
    %25 = vector.load %arg7[%c1_19, %c0_20] : memref<2x128xf32, #tpu.memory_space<vmem>>, vector<1x128xf32>
    tpu.vector_store %arg7[%c1_19, %c0_20], %24 {strides = array<i32>} : memref<2x128xf32, #tpu.memory_space<vmem>>, vector<1x128xf32>,
    %c3_i32 = arith.constant 3 : i32
    %26 = arith.cmpi eq, %arg0, %c3_i32 : i32
    %27 = arith.extui %26 : i1 to i32
    %c0_i32_21 = arith.constant 0 : i32
    %28 = arith.cmpi ne, %27, %c0_i32_21 : i32
    scf.if %28 {
      %c0_22 = arith.constant 0 : index
      %c0_23 = arith.constant 0 : index
      %29 = vector.load %arg7[%c0_22, %c0_23] : memref<2x128xf32, #tpu.memory_space<vmem>>, vector<1x128xf32>
      %c1_24 = arith.constant 1 : index
      %c0_25 = arith.constant 0 : index
      %30 = vector.load %arg7[%c1_24, %c0_25] : memref<2x128xf32, #tpu.memory_space<vmem>>, vector<1x128xf32>
      %cst_26 = arith.constant 0.001953125 : f32
      %31 = vector.broadcast %cst_26 : f32 to vector<1x128xf32>
      %32 = arith.mulf %29, %31 : vector<1x128xf32>
      %cst_27 = arith.constant 0.001953125 : f32
      %33 = vector.broadcast %cst_27 : f32 to vector<1x128xf32>
      %34 = arith.mulf %30, %33 : vector<1x128xf32>
      %35 = arith.mulf %32, %32 : vector<1x128xf32>
      %36 = arith.subf %34, %35 : vector<1x128xf32>
      %c0_28 = arith.constant 0 : index
      %c0_29 = arith.constant 0 : index
      %37 = vector.load %arg7[%c0_28, %c0_29] : memref<2x128xf32, #tpu.memory_space<vmem>>, vector<1x128xf32>
      tpu.vector_store %arg7[%c0_28, %c0_29], %32 {strides = array<i32>} : memref<2x128xf32, #tpu.memory_space<vmem>>, vector<1x128xf32>,
      %cst_30 = arith.constant 9.99999974E-6 : f32
      %38 = vector.broadcast %cst_30 : f32 to vector<1x128xf32>
      %39 = arith.addf %36, %38 : vector<1x128xf32>
      %40 = math.rsqrt %39 : vector<1x128xf32>
      %c1_31 = arith.constant 1 : index
      %c0_32 = arith.constant 0 : index
      %41 = vector.load %arg7[%c1_31, %c0_32] : memref<2x128xf32, #tpu.memory_space<vmem>>, vector<1x128xf32>
      tpu.vector_store %arg7[%c1_31, %c0_32], %40 {strides = array<i32>} : memref<2x128xf32, #tpu.memory_space<vmem>>, vector<1x128xf32>,
    } else {
    }
    return
  }
  func.func @transform_0(%arg0: i32) -> (i32, i32) {
    %c0_i32 = arith.constant 0 : i32
    %c0_i32_0 = arith.constant 0 : i32
    return %arg0, %c0_i32 : i32, i32
  }
  func.func @transform_1(%arg0: i32) -> (i32, i32) {
    %c1_i32 = arith.constant 1 : i32
    %c0_i32 = arith.constant 0 : i32
    return %arg0, %c1_i32 : i32, i32
  }
  func.func @transform_2(%arg0: i32) -> (i32, i32) {
    %c1_i32 = arith.constant 1 : i32
    %c0_i32 = arith.constant 0 : i32
    return %arg0, %c1_i32 : i32, i32
  }
  func.func @transform_3(%arg0: i32) -> (i32, i32) {
    %c0_i32 = arith.constant 0 : i32
    %c0_i32_0 = arith.constant 0 : i32
    %c0_i32_1 = arith.constant 0 : i32
    return %c0_i32, %c0_i32_0 : i32, i32
  }
  func.func @transform_4(%arg0: i32) -> (i32, i32) {
    %c0_i32 = arith.constant 0 : i32
    %c0_i32_0 = arith.constant 0 : i32
    %c0_i32_1 = arith.constant 0 : i32
    return %c0_i32, %c0_i32_0 : i32, i32
  }
  func.func @transform_5(%arg0: i32) -> (i32, i32) {
    %c0_i32 = arith.constant 0 : i32
    %c0_i32_0 = arith.constant 0 : i32
    return %arg0, %c0_i32 : i32, i32
  }
  func.func @transform_6(%arg0: i32) -> (i32, i32) {
    %c0_i32 = arith.constant 0 : i32
    %c0_i32_0 = arith.constant 0 : i32
    %c0_i32_1 = arith.constant 0 : i32
    return %c0_i32, %c0_i32_0 : i32, i32
  }
}

module attributes {stable_mosaic.version = 11 : i64} {
  func.func @_node_pre_kernel(%arg0: i32, %arg1: memref<128x128xf32, #tpu.memory_space<vmem>>, %arg2: memref<128x128xf32, #tpu.memory_space<vmem>>, %arg3: memref<128x128xf32, #tpu.memory_space<vmem>>, %arg4: memref<128x128xf32, #tpu.memory_space<vmem>>, %arg5: memref<128x128xf32, #tpu.memory_space<vmem>>, %arg6: memref<128x128xf32, #tpu.memory_space<vmem>>, %arg7: memref<2x128xf32, #tpu.memory_space<vmem>>) attributes {dimension_semantics = [#tpu.dimension_semantics<arbitrary>], iteration_bounds = array<i64: 2>, scalar_prefetch = 0 : i64, scratch_operands = 0 : i64, tpu.core_type = #tpu.core_type<tc>, window_params = [{transform_indices = @transform_0, window_bounds = array<i64: 128, 128>}, {transform_indices = @transform_1, window_bounds = array<i64: 128, 128>}, {transform_indices = @transform_2, window_bounds = array<i64: 128, 128>}, {transform_indices = @transform_3, window_bounds = array<i64: 128, 128>}, {transform_indices = @transform_4, window_bounds = array<i64: 128, 128>}, {transform_indices = @transform_5, window_bounds = array<i64: 128, 128>}, {pipeline_mode = #tpu.pipeline_mode<synchronous>, transform_indices = @transform_6, window_bounds = array<i64: 2, 128>}]} {
    %c0 = arith.constant 0 : index
    %c0_0 = arith.constant 0 : index
    %0 = vector.load %arg2[%c0, %c0_0] : memref<128x128xf32, #tpu.memory_space<vmem>>, vector<128x128xf32>
    %c0_1 = arith.constant 0 : index
    %c0_2 = arith.constant 0 : index
    %1 = vector.load %arg3[%c0_1, %c0_2] : memref<128x128xf32, #tpu.memory_space<vmem>>, vector<128x128xf32>
    %cst = arith.constant 9.99999997E-7 : f32
    %2 = vector.broadcast %cst : f32 to vector<128x128xf32>
    %3 = arith.addf %1, %2 : vector<128x128xf32>
    %4 = tpu.reciprocal %3 {approx = true} : vector<128x128xf32> -> vector<128x128xf32>
    %5 = arith.mulf %0, %4 : vector<128x128xf32>
    %c0_3 = arith.constant 0 : index
    %c0_4 = arith.constant 0 : index
    %6 = vector.load %arg4[%c0_3, %c0_4] : memref<128x128xf32, #tpu.memory_space<vmem>>, vector<128x128xf32>
    %c0_5 = arith.constant 0 : index
    %c0_6 = arith.constant 0 : index
    %7 = vector.load %arg5[%c0_5, %c0_6] : memref<128x128xf32, #tpu.memory_space<vmem>>, vector<128x128xf32>
    %cst_7 = arith.constant 9.99999997E-7 : f32
    %8 = vector.broadcast %cst_7 : f32 to vector<128x128xf32>
    %9 = arith.addf %7, %8 : vector<128x128xf32>
    %10 = tpu.reciprocal %9 {approx = true} : vector<128x128xf32> -> vector<128x128xf32>
    %11 = arith.mulf %6, %10 : vector<128x128xf32>
    %c0_8 = arith.constant 0 : index
    %c0_9 = arith.constant 0 : index
    %12 = vector.load %arg1[%c0_8, %c0_9] : memref<128x128xf32, #tpu.memory_space<vmem>>, vector<128x128xf32>
    %13 = arith.addf %12, %5 : vector<128x128xf32>
    %14 = arith.addf %13, %11 : vector<128x128xf32>
    %c0_10 = arith.constant 0 : index
    %c0_11 = arith.constant 0 : index
    %15 = vector.load %arg6[%c0_10, %c0_11] : memref<128x128xf32, #tpu.memory_space<vmem>>, vector<128x128xf32>
    tpu.vector_store %arg6[%c0_10, %c0_11], %14 {strides = array<i32>} : memref<128x128xf32, #tpu.memory_space<vmem>>, vector<128x128xf32>,
    %c0_i32 = arith.constant 0 : i32
    %16 = arith.cmpi eq, %arg0, %c0_i32 : i32
    %17 = arith.extui %16 : i1 to i32
    %c0_i32_12 = arith.constant 0 : i32
    %18 = arith.cmpi ne, %17, %c0_i32_12 : i32
    scf.if %18 {
      %cst_23 = arith.constant 0.000000e+00 : f32
      %33 = vector.broadcast %cst_23 : f32 to vector<2x128xf32>
      %c0_24 = arith.constant 0 : index
      %c0_25 = arith.constant 0 : index
      %34 = vector.load %arg7[%c0_24, %c0_25] : memref<2x128xf32, #tpu.memory_space<vmem>>, vector<2x128xf32>
      tpu.vector_store %arg7[%c0_24, %c0_25], %33 {strides = array<i32>} : memref<2x128xf32, #tpu.memory_space<vmem>>, vector<2x128xf32>,
    } else {
    }
    %c0_13 = arith.constant 0 : index
    %c0_14 = arith.constant 0 : index
    %19 = vector.load %arg7[%c0_13, %c0_14] : memref<2x128xf32, #tpu.memory_space<vmem>>, vector<1x128xf32>
    %cst_15 = arith.constant dense<0.000000e+00> : vector<128xf32>
    %20 = vector.multi_reduction <add>, %14, %cst_15 [0] : vector<128x128xf32> to vector<128xf32>
    %21 = vector.shape_cast %20 : vector<128xf32> to vector<1x128xf32>
    %22 = arith.addf %19, %21 : vector<1x128xf32>
    %c0_16 = arith.constant 0 : index
    %c0_17 = arith.constant 0 : index
    %23 = vector.load %arg7[%c0_16, %c0_17] : memref<2x128xf32, #tpu.memory_space<vmem>>, vector<1x128xf32>
    tpu.vector_store %arg7[%c0_16, %c0_17], %22 {strides = array<i32>} : memref<2x128xf32, #tpu.memory_space<vmem>>, vector<1x128xf32>,
    %c1 = arith.constant 1 : index
    %c0_18 = arith.constant 0 : index
    %24 = vector.load %arg7[%c1, %c0_18] : memref<2x128xf32, #tpu.memory_space<vmem>>, vector<1x128xf32>
    %25 = arith.mulf %14, %14 : vector<128x128xf32>
    %cst_19 = arith.constant dense<0.000000e+00> : vector<128xf32>
    %26 = vector.multi_reduction <add>, %25, %cst_19 [0] : vector<128x128xf32> to vector<128xf32>
    %27 = vector.shape_cast %26 : vector<128xf32> to vector<1x128xf32>
    %28 = arith.addf %24, %27 : vector<1x128xf32>
    %c1_20 = arith.constant 1 : index
    %c0_21 = arith.constant 0 : index
    %29 = vector.load %arg7[%c1_20, %c0_21] : memref<2x128xf32, #tpu.memory_space<vmem>>, vector<1x128xf32>
    tpu.vector_store %arg7[%c1_20, %c0_21], %28 {strides = array<i32>} : memref<2x128xf32, #tpu.memory_space<vmem>>, vector<1x128xf32>,
    %c1_i32 = arith.constant 1 : i32
    %30 = arith.cmpi eq, %arg0, %c1_i32 : i32
    %31 = arith.extui %30 : i1 to i32
    %c0_i32_22 = arith.constant 0 : i32
    %32 = arith.cmpi ne, %31, %c0_i32_22 : i32
    scf.if %32 {
      %c0_23 = arith.constant 0 : index
      %c0_24 = arith.constant 0 : index
      %33 = vector.load %arg7[%c0_23, %c0_24] : memref<2x128xf32, #tpu.memory_space<vmem>>, vector<1x128xf32>
      %c1_25 = arith.constant 1 : index
      %c0_26 = arith.constant 0 : index
      %34 = vector.load %arg7[%c1_25, %c0_26] : memref<2x128xf32, #tpu.memory_space<vmem>>, vector<1x128xf32>
      %cst_27 = arith.constant 3.906250e-03 : f32
      %35 = vector.broadcast %cst_27 : f32 to vector<1x128xf32>
      %36 = arith.mulf %33, %35 : vector<1x128xf32>
      %cst_28 = arith.constant 3.906250e-03 : f32
      %37 = vector.broadcast %cst_28 : f32 to vector<1x128xf32>
      %38 = arith.mulf %34, %37 : vector<1x128xf32>
      %39 = arith.mulf %36, %36 : vector<1x128xf32>
      %40 = arith.subf %38, %39 : vector<1x128xf32>
      %c0_29 = arith.constant 0 : index
      %c0_30 = arith.constant 0 : index
      %41 = vector.load %arg7[%c0_29, %c0_30] : memref<2x128xf32, #tpu.memory_space<vmem>>, vector<1x128xf32>
      tpu.vector_store %arg7[%c0_29, %c0_30], %36 {strides = array<i32>} : memref<2x128xf32, #tpu.memory_space<vmem>>, vector<1x128xf32>,
      %cst_31 = arith.constant 9.99999974E-6 : f32
      %42 = vector.broadcast %cst_31 : f32 to vector<1x128xf32>
      %43 = arith.addf %40, %42 : vector<1x128xf32>
      %44 = math.rsqrt %43 : vector<1x128xf32>
      %c1_32 = arith.constant 1 : index
      %c0_33 = arith.constant 0 : index
      %45 = vector.load %arg7[%c1_32, %c0_33] : memref<2x128xf32, #tpu.memory_space<vmem>>, vector<1x128xf32>
      tpu.vector_store %arg7[%c1_32, %c0_33], %44 {strides = array<i32>} : memref<2x128xf32, #tpu.memory_space<vmem>>, vector<1x128xf32>,
    } else {
    }
    return
  }
  func.func @transform_0(%arg0: i32) -> (i32, i32) {
    %c0_i32 = arith.constant 0 : i32
    %c0_i32_0 = arith.constant 0 : i32
    return %arg0, %c0_i32 : i32, i32
  }
  func.func @transform_1(%arg0: i32) -> (i32, i32) {
    %c0_i32 = arith.constant 0 : i32
    %c0_i32_0 = arith.constant 0 : i32
    return %arg0, %c0_i32 : i32, i32
  }
  func.func @transform_2(%arg0: i32) -> (i32, i32) {
    %c0_i32 = arith.constant 0 : i32
    %c0_i32_0 = arith.constant 0 : i32
    return %arg0, %c0_i32 : i32, i32
  }
  func.func @transform_3(%arg0: i32) -> (i32, i32) {
    %c0_i32 = arith.constant 0 : i32
    %c0_i32_0 = arith.constant 0 : i32
    return %arg0, %c0_i32 : i32, i32
  }
  func.func @transform_4(%arg0: i32) -> (i32, i32) {
    %c0_i32 = arith.constant 0 : i32
    %c0_i32_0 = arith.constant 0 : i32
    return %arg0, %c0_i32 : i32, i32
  }
  func.func @transform_5(%arg0: i32) -> (i32, i32) {
    %c0_i32 = arith.constant 0 : i32
    %c0_i32_0 = arith.constant 0 : i32
    return %arg0, %c0_i32 : i32, i32
  }
  func.func @transform_6(%arg0: i32) -> (i32, i32) {
    %c0_i32 = arith.constant 0 : i32
    %c0_i32_0 = arith.constant 0 : i32
    %c0_i32_1 = arith.constant 0 : i32
    return %c0_i32, %c0_i32_0 : i32, i32
  }
}

module attributes {stable_mosaic.version = 11 : i64} {
  func.func @_node_post_kernel(%arg0: i32, %arg1: memref<128x128xf32, #tpu.memory_space<vmem>>, %arg2: memref<128x128xf32, #tpu.memory_space<vmem>>, %arg3: memref<2x128xf32, #tpu.memory_space<vmem>>, %arg4: memref<1x128xf32, #tpu.memory_space<vmem>>, %arg5: memref<1x128xf32, #tpu.memory_space<vmem>>, %arg6: memref<128x128xf32, #tpu.memory_space<vmem>>) attributes {dimension_semantics = [#tpu.dimension_semantics<parallel>], iteration_bounds = array<i64: 2>, scalar_prefetch = 0 : i64, scratch_operands = 0 : i64, tpu.core_type = #tpu.core_type<tc>, window_params = [{transform_indices = @transform_0, window_bounds = array<i64: 128, 128>}, {transform_indices = @transform_1, window_bounds = array<i64: 128, 128>}, {pipeline_mode = #tpu.pipeline_mode<synchronous>, transform_indices = @transform_2, window_bounds = array<i64: 2, 128>}, {pipeline_mode = #tpu.pipeline_mode<synchronous>, transform_indices = @transform_3, window_bounds = array<i64: 1, 128>}, {pipeline_mode = #tpu.pipeline_mode<synchronous>, transform_indices = @transform_4, window_bounds = array<i64: 1, 128>}, {transform_indices = @transform_5, window_bounds = array<i64: 128, 128>}]} {
    %c0 = arith.constant 0 : index
    %c0_0 = arith.constant 0 : index
    %0 = vector.load %arg3[%c0, %c0_0] : memref<2x128xf32, #tpu.memory_space<vmem>>, vector<1x128xf32>
    %c1 = arith.constant 1 : index
    %c0_1 = arith.constant 0 : index
    %1 = vector.load %arg3[%c1, %c0_1] : memref<2x128xf32, #tpu.memory_space<vmem>>, vector<1x128xf32>
    %c0_2 = arith.constant 0 : index
    %c0_3 = arith.constant 0 : index
    %2 = vector.load %arg1[%c0_2, %c0_3] : memref<128x128xf32, #tpu.memory_space<vmem>>, vector<128x128xf32>
    %3 = vector.broadcast %0 : vector<1x128xf32> to vector<128x128xf32>
    %4 = arith.subf %2, %3 : vector<128x128xf32>
    %5 = vector.broadcast %1 : vector<1x128xf32> to vector<128x128xf32>
    %6 = arith.mulf %4, %5 : vector<128x128xf32>
    %c0_4 = arith.constant 0 : index
    %c0_5 = arith.constant 0 : index
    %7 = vector.load %arg4[%c0_4, %c0_5] : memref<1x128xf32, #tpu.memory_space<vmem>>, vector<1x128xf32>
    %8 = vector.broadcast %7 : vector<1x128xf32> to vector<128x128xf32>
    %9 = arith.mulf %6, %8 : vector<128x128xf32>
    %c0_6 = arith.constant 0 : index
    %c0_7 = arith.constant 0 : index
    %10 = vector.load %arg5[%c0_6, %c0_7] : memref<1x128xf32, #tpu.memory_space<vmem>>, vector<1x128xf32>
    %11 = vector.broadcast %10 : vector<1x128xf32> to vector<128x128xf32>
    %12 = arith.addf %9, %11 : vector<128x128xf32>
    %c0_8 = arith.constant 0 : index
    %c0_9 = arith.constant 0 : index
    %13 = vector.load %arg2[%c0_8, %c0_9] : memref<128x128xf32, #tpu.memory_space<vmem>>, vector<128x128xf32>
    %cst = arith.constant 0.000000e+00 : f32
    %14 = vector.broadcast %cst : f32 to vector<128x128xf32>
    %15 = arith.maximumf %12, %14 : vector<128x128xf32>
    %16 = arith.addf %13, %15 : vector<128x128xf32>
    %c0_10 = arith.constant 0 : index
    %c0_11 = arith.constant 0 : index
    %17 = vector.load %arg6[%c0_10, %c0_11] : memref<128x128xf32, #tpu.memory_space<vmem>>, vector<128x128xf32>
    tpu.vector_store %arg6[%c0_10, %c0_11], %16 {strides = array<i32>} : memref<128x128xf32, #tpu.memory_space<vmem>>, vector<128x128xf32>,
    return
  }
  func.func @transform_0(%arg0: i32) -> (i32, i32) {
    %c0_i32 = arith.constant 0 : i32
    %c0_i32_0 = arith.constant 0 : i32
    return %arg0, %c0_i32 : i32, i32
  }
  func.func @transform_1(%arg0: i32) -> (i32, i32) {
    %c0_i32 = arith.constant 0 : i32
    %c0_i32_0 = arith.constant 0 : i32
    return %arg0, %c0_i32 : i32, i32
  }
  func.func @transform_2(%arg0: i32) -> (i32, i32) {
    %c0_i32 = arith.constant 0 : i32
    %c0_i32_0 = arith.constant 0 : i32
    %c0_i32_1 = arith.constant 0 : i32
    return %c0_i32, %c0_i32_0 : i32, i32
  }
  func.func @transform_3(%arg0: i32) -> (i32, i32) {
    %c0_i32 = arith.constant 0 : i32
    %c0_i32_0 = arith.constant 0 : i32
    %c0_i32_1 = arith.constant 0 : i32
    return %c0_i32, %c0_i32_0 : i32, i32
  }
  func.func @transform_4(%arg0: i32) -> (i32, i32) {
    %c0_i32 = arith.constant 0 : i32
    %c0_i32_0 = arith.constant 0 : i32
    %c0_i32_1 = arith.constant 0 : i32
    return %c0_i32, %c0_i32_0 : i32, i32
  }
  func.func @transform_5(%arg0: i32) -> (i32, i32) {
    %c0_i32 = arith.constant 0 : i32
    %c0_i32_0 = arith.constant 0 : i32
    return %arg0, %c0_i32 : i32, i32
  }
}

module attributes {stable_mosaic.version = 11 : i64} {
  func.func @_score_kernel(%arg0: i32, %arg1: memref<128x384xf32, #tpu.memory_space<vmem>>, %arg2: memref<384x128xbf16, #tpu.memory_space<vmem>>, %arg3: memref<1x128xf32, #tpu.memory_space<vmem>>, %arg4: memref<128x1xbf16, #tpu.memory_space<vmem>>, %arg5: memref<1x1xf32, #tpu.memory_space<vmem>>, %arg6: memref<128x1xf32, #tpu.memory_space<vmem>>) attributes {dimension_semantics = [#tpu.dimension_semantics<parallel>], iteration_bounds = array<i64: 4>, scalar_prefetch = 0 : i64, scratch_operands = 0 : i64, tpu.core_type = #tpu.core_type<tc>, window_params = [{transform_indices = @transform_0, window_bounds = array<i64: 128, 384>}, {pipeline_mode = #tpu.pipeline_mode<synchronous>, transform_indices = @transform_1, window_bounds = array<i64: 384, 128>}, {pipeline_mode = #tpu.pipeline_mode<synchronous>, transform_indices = @transform_2, window_bounds = array<i64: 1, 128>}, {pipeline_mode = #tpu.pipeline_mode<synchronous>, transform_indices = @transform_3, window_bounds = array<i64: 128, 1>}, {pipeline_mode = #tpu.pipeline_mode<synchronous>, transform_indices = @transform_4, window_bounds = array<i64: 1, 1>}, {transform_indices = @transform_5, window_bounds = array<i64: 128, 1>}]} {
    %c0 = arith.constant 0 : index
    %c0_0 = arith.constant 0 : index
    %0 = vector.load %arg1[%c0, %c0_0] : memref<128x384xf32, #tpu.memory_space<vmem>>, vector<128x384xf32>
    %1 = arith.truncf %0 : vector<128x384xf32> to vector<128x384xbf16>
    %c0_1 = arith.constant 0 : index
    %c0_2 = arith.constant 0 : index
    %2 = vector.load %arg2[%c0_1, %c0_2] : memref<384x128xbf16, #tpu.memory_space<vmem>>, vector<384x128xbf16>
    %cst = arith.constant dense<0.000000e+00> : vector<128x128xf32>
    %3 = tpu.matmul %1, %2, %cst {dimension_numbers = #tpu.dot_dimension_numbers<[1], [0], [0], [1], [0, 0, 1, 1], [], []>} : vector<128x384xbf16>, vector<384x128xbf16>, vector<128x128xf32> -> vector<128x128xf32>
    %c0_3 = arith.constant 0 : index
    %c0_4 = arith.constant 0 : index
    %4 = vector.load %arg3[%c0_3, %c0_4] : memref<1x128xf32, #tpu.memory_space<vmem>>, vector<1x128xf32>
    %5 = vector.broadcast %4 : vector<1x128xf32> to vector<128x128xf32>
    %6 = arith.addf %3, %5 : vector<128x128xf32>
    %cst_5 = arith.constant 0.000000e+00 : f32
    %7 = vector.broadcast %cst_5 : f32 to vector<128x128xf32>
    %8 = arith.maximumf %6, %7 : vector<128x128xf32>
    %9 = arith.truncf %8 : vector<128x128xf32> to vector<128x128xbf16>
    %c0_6 = arith.constant 0 : index
    %c0_7 = arith.constant 0 : index
    %10 = vector.load %arg4[%c0_6, %c0_7] : memref<128x1xbf16, #tpu.memory_space<vmem>>, vector<128x1xbf16>
    %cst_8 = arith.constant dense<0.000000e+00> : vector<128x1xf32>
    %11 = tpu.matmul %9, %10, %cst_8 {dimension_numbers = #tpu.dot_dimension_numbers<[1], [0], [0], [1], [0, 0, 1, 1], [], []>} : vector<128x128xbf16>, vector<128x1xbf16>, vector<128x1xf32> -> vector<128x1xf32>
    %c0_9 = arith.constant 0 : index
    %c0_10 = arith.constant 0 : index
    %12 = vector.load %arg5[%c0_9, %c0_10] : memref<1x1xf32, #tpu.memory_space<vmem>>, vector<1x1xf32>
    %13 = vector.broadcast %12 : vector<1x1xf32> to vector<128x1xf32>
    %14 = arith.addf %11, %13 : vector<128x1xf32>
    %c0_11 = arith.constant 0 : index
    %c0_12 = arith.constant 0 : index
    %15 = vector.load %arg6[%c0_11, %c0_12] : memref<128x1xf32, #tpu.memory_space<vmem>>, vector<128x1xf32>
    tpu.vector_store %arg6[%c0_11, %c0_12], %14 {strides = array<i32>} : memref<128x1xf32, #tpu.memory_space<vmem>>, vector<128x1xf32>,
    return
  }
  func.func @transform_0(%arg0: i32) -> (i32, i32) {
    %c0_i32 = arith.constant 0 : i32
    %c0_i32_0 = arith.constant 0 : i32
    return %arg0, %c0_i32 : i32, i32
  }
  func.func @transform_1(%arg0: i32) -> (i32, i32) {
    %c0_i32 = arith.constant 0 : i32
    %c0_i32_0 = arith.constant 0 : i32
    %c0_i32_1 = arith.constant 0 : i32
    return %c0_i32, %c0_i32_0 : i32, i32
  }
  func.func @transform_2(%arg0: i32) -> (i32, i32) {
    %c0_i32 = arith.constant 0 : i32
    %c0_i32_0 = arith.constant 0 : i32
    %c0_i32_1 = arith.constant 0 : i32
    return %c0_i32, %c0_i32_0 : i32, i32
  }
  func.func @transform_3(%arg0: i32) -> (i32, i32) {
    %c0_i32 = arith.constant 0 : i32
    %c0_i32_0 = arith.constant 0 : i32
    %c0_i32_1 = arith.constant 0 : i32
    return %c0_i32, %c0_i32_0 : i32, i32
  }
  func.func @transform_4(%arg0: i32) -> (i32, i32) {
    %c0_i32 = arith.constant 0 : i32
    %c0_i32_0 = arith.constant 0 : i32
    %c0_i32_1 = arith.constant 0 : i32
    return %c0_i32, %c0_i32_0 : i32, i32
  }
  func.func @transform_5(%arg0: i32) -> (i32, i32) {
    %c0_i32 = arith.constant 0 : i32
    %c0_i32_0 = arith.constant 0 : i32
    return %arg0, %c0_i32 : i32, i32
  }
}

</mosaic_0001>

<llo_original>
// kernel: model_forward.13
$region0: #{model_forward.13}
  #allocation0 [shape = 'u32[]', space=smem, size = 0x4, offset = 0x4, fixed_abs, tag = 'smem constant byte address 0x4 - core index']
  #allocation1 [shape = 'u32[144,128]{1,0:T(1,128)}', space=vmem, size = 0x12000, scoped, tag = 'internal scratch']
  %s0 = inlined_call_operand.vmem [shape: f32[256,4], index: 0, kind: input, shape index: {}]
  %s1 = inlined_call_operand.vmem [shape: f32[4,128], index: 1, kind: input, shape index: {}]
  %s2 = inlined_call_operand.vmem [shape: f32[1,128], index: 2, kind: input, shape index: {}]
  %s3 = inlined_call_operand.vmem [shape: bf16[128,128], index: 3, kind: input, shape index: {}]
  %s4 = inlined_call_operand.vmem [shape: f32[1,128], index: 4, kind: input, shape index: {}]
  %s5 = inlined_call_operand.vmem [shape: f32[256,128], index: 5, kind: output, shape index: {}]
  %s6 = sld [smem:[#allocation0]]
  $region53: #{model_forward.13} parent=0
    _
  %s8 = ssub.s32 1, %s6
  %s9 = scalar_select 0, %s8, %s6
  loop: start=0, step=1, limit=4
  $region2: #{model_forward.13} parent=0 // loop_pre_header
    _
  $region3: #{model_forward.13} parent=0 // loop_header
    %s11 = sphi 0, %s15
    %p12 = scmp.ge.s32.totalorder %s11, 4
    %s21 = sphi 0, %s23
    %s24 = sphi 0, %s21
    %s25 = sphi 0, %s24
    %s41 = sphi 0, %s25
    %s45 = sphi 0, %s45
    %s47 = sphi 0, %s45
    %s48 = sphi 0, %s47
    %s62 = sphi 0, %s48
    %s66 = sphi 0, %s66
    %s68 = sphi 0, %s66
    %s69 = sphi 0, %s68
    %s83 = sphi 0, %s69
    %s87 = sphi 0, %s87
    %s89 = sphi 0, %s87
    %s90 = sphi 0, %s89
    %s104 = sphi 0, %s90
    %s108 = sphi 0, %s108
    %s110 = sphi 0, %s108
    %s111 = sphi 0, %s110
    %s125 = sphi 0, %s111
    %s131 = sphi 0, %s133
    %s134 = sphi 0, %s131
    %s135 = sphi 0, %s134
    %s151 = sphi 0, %s135
  $region4: #{model_forward.13} parent=0 // loop_header_branch
    %14 = sbr.rel (%p12) target = $region8
  $region5: #{model_forward.13} parent=0 // loop_body
    %s16 = ssub.s32 %s11, 1
    %s17 = ssub.s32 %s11, 2
    %s18 = sadd.s32 %s11, 1
    %s19 = ssub.s32 %s11, %s18
    %p20 = scmp.eq.s32.totalorder %s19, 0
    %s22 = sadd.s32 %s21, 1
    %s23 = scalar_select %p20, %s21, %s22
    %p26 = pneg %p20
    %p27 = scmp.eq.s32.totalorder %s11, 1
    %p28 = por %p26, %p27
    %p29 = scmp.ne.s32.totalorder %s21, %s24
    %p30 = scmp.eq.s32.totalorder %s11, 0
    %p31 = por %p29, %p30
    %p32 = scmp.ne.s32.totalorder %s21, %s24
    %p33 = scmp.eq.s32.totalorder %s16, 1
    %p34 = por %p32, %p33
    %p35 = scmp.ne.s32.totalorder %s24, %s25
    %p36 = scmp.eq.s32.totalorder %s16, 0
    %p37 = por %p35, %p36
    %p38 = scmp.ne.s32.totalorder %s24, %s25
    %p39 = scmp.eq.s32.totalorder %s17, 1
    %p40 = por %p38, %p39
    %p42 = scmp.ne.s32.totalorder %s25, %s41
    %p43 = scmp.eq.s32.totalorder %s17, 0
    %p44 = por %p42, %p43
    %s46 = sadd.s32 %s45, 1
    %p49 = scmp.eq.s32.totalorder %s11, 1
    %p50 = scmp.ne.s32.totalorder %s45, %s47
    %p51 = scmp.eq.s32.totalorder %s11, 0
    %p52 = por %p50, %p51
    %p53 = scmp.ne.s32.totalorder %s45, %s47
    %p54 = scmp.eq.s32.totalorder %s16, 1
    %p55 = por %p53, %p54
    %p56 = scmp.ne.s32.totalorder %s47, %s48
    %p57 = scmp.eq.s32.totalorder %s16, 0
    %p58 = por %p56, %p57
    %p59 = scmp.ne.s32.totalorder %s47, %s48
    %p60 = scmp.eq.s32.totalorder %s17, 1
    %p61 = por %p59, %p60
    %p63 = scmp.ne.s32.totalorder %s48, %s62
    %p64 = scmp.eq.s32.totalorder %s17, 0
    %p65 = por %p63, %p64
    %s67 = sadd.s32 %s66, 1
    %p70 = scmp.eq.s32.totalorder %s11, 1
    %p71 = scmp.ne.s32.totalorder %s66, %s68
    %p72 = scmp.eq.s32.totalorder %s11, 0
    %p73 = por %p71, %p72
    %p74 = scmp.ne.s32.totalorder %s66, %s68
    %p75 = scmp.eq.s32.totalorder %s16, 1
    %p76 = por %p74, %p75
    %p77 = scmp.ne.s32.totalorder %s68, %s69
    %p78 = scmp.eq.s32.totalorder %s16, 0
    %p79 = por %p77, %p78
    %p80 = scmp.ne.s32.totalorder %s68, %s69
    %p81 = scmp.eq.s32.totalorder %s17, 1
    %p82 = por %p80, %p81
    %p84 = scmp.ne.s32.totalorder %s69, %s83
    %p85 = scmp.eq.s32.totalorder %s17, 0
    %p86 = por %p84, %p85
    %s88 = sadd.s32 %s87, 1
    %p91 = scmp.eq.s32.totalorder %s11, 1
    %p92 = scmp.ne.s32.totalorder %s87, %s89
    %p93 = scmp.eq.s32.totalorder %s11, 0
    %p94 = por %p92, %p93
    %p95 = scmp.ne.s32.totalorder %s87, %s89
    %p96 = scmp.eq.s32.totalorder %s16, 1
    %p97 = por %p95, %p96
    %p98 = scmp.ne.s32.totalorder %s89, %s90
    %p99 = scmp.eq.s32.totalorder %s16, 0
    %p100 = por %p98, %p99
    %p101 = scmp.ne.s32.totalorder %s89, %s90
    %p102 = scmp.eq.s32.totalorder %s17, 1
    %p103 = por %p101, %p102
    %p105 = scmp.ne.s32.totalorder %s90, %s104
    %p106 = scmp.eq.s32.totalorder %s17, 0
    %p107 = por %p105, %p106
    %s109 = sadd.s32 %s108, 1
    %p112 = scmp.eq.s32.totalorder %s11, 1
    %p113 = scmp.ne.s32.totalorder %s108, %s110
    %p114 = scmp.eq.s32.totalorder %s11, 0
    %p115 = por %p113, %p114
    %p116 = scmp.ne.s32.totalorder %s108, %s110
    %p117 = scmp.eq.s32.totalorder %s16, 1
    %p118 = por %p116, %p117
    %p119 = scmp.ne.s32.totalorder %s110, %s111
    %p120 = scmp.eq.s32.totalorder %s16, 0
    %p121 = por %p119, %p120
    %p122 = scmp.ne.s32.totalorder %s110, %s111
    %p123 = scmp.eq.s32.totalorder %s17, 1
    %p124 = por %p122, %p123
    %p126 = scmp.ne.s32.totalorder %s111, %s125
    %p127 = scmp.eq.s32.totalorder %s17, 0
    %p128 = por %p126, %p127
    %s129 = ssub.s32 %s11, %s18
    %p130 = scmp.eq.s32.totalorder %s129, 0
    %s132 = sadd.s32 %s131, 1
    %s133 = scalar_select %p130, %s131, %s132
    %p136 = pneg %p130
    %p137 = scmp.eq.s32.totalorder %s11, 1
    %p138 = por %p136, %p137
    %p139 = scmp.ne.s32.totalorder %s131, %s134
    %p140 = scmp.eq.s32.totalorder %s11, 0
    %p141 = por %p139, %p140
    %p142 = scmp.ne.s32.totalorder %s131, %s134
    %p143 = scmp.eq.s32.totalorder %s16, 1
    %p144 = por %p142, %p143
    %p145 = scmp.ne.s32.totalorder %s134, %s135
    %p146 = scmp.eq.s32.totalorder %s16, 0
    %p147 = por %p145, %p146
    %p148 = scmp.ne.s32.totalorder %s134, %s135
    %p149 = scmp.eq.s32.totalorder %s17, 1
    %p150 = por %p148, %p149
    %p152 = scmp.ne.s32.totalorder %s135, %s151
    %p153 = scmp.eq.s32.totalorder %s17, 0
    %p154 = por %p152, %p153
    %p155 = scmp.le.s32.totalorder 1, %s11
    %p156 = scmp.lt.s32.totalorder %s11, 3
    %p157 = pnand %p155, %p156
    %p158 = pneg %p157
    // Predicated region
    $region9: #{model_forward.13} parent=5 // pred_check
      _
    $region10: #{model_forward.13} parent=5 // pred_check_branch
      %160 = sbr.rel (%p157) target = $region12
    $region11: #{model_forward.13} parent=5 // pred_region
      %s161 = ssub.s32 %s11, 1
      // Predicated region
      $region13: #{model_forward.13} parent=11 // pred_check
        %p162 = pneg %p58
      $region14: #{model_forward.13} parent=11 // pred_check_branch
        %164 = sbr.rel (%p162) target = $region16
      $region15: #{model_forward.13} parent=11 // pred_region
        _
      $region16: #{model_forward.13} parent=11 // pred_fallthru
        _
      // Predicated region
      $region17: #{model_forward.13} parent=11 // pred_check
        %p165 = pneg %p79
      $region18: #{model_forward.13} parent=11 // pred_check_branch
        %167 = sbr.rel (%p165) target = $region20
      $region19: #{model_forward.13} parent=11 // pred_region
        _
      $region20: #{model_forward.13} parent=11 // pred_fallthru
        _
      // Predicated region
      $region21: #{model_forward.13} parent=11 // pred_check
        %p168 = pneg %p100
      $region22: #{model_forward.13} parent=11 // pred_check_branch
        %170 = sbr.rel (%p168) target = $region24
      $region23: #{model_forward.13} parent=11 // pred_region
        _
      $region24: #{model_forward.13} parent=11 // pred_fallthru
        _
      // Predicated region
      $region25: #{model_forward.13} parent=11 // pred_check
        %p171 = pneg %p121
      $region26: #{model_forward.13} parent=11 // pred_check_branch
        %173 = sbr.rel (%p171) target = $region28
      $region27: #{model_forward.13} parent=11 // pred_region
        _
      $region28: #{model_forward.13} parent=11 // pred_fallthru
        _
    $region12: #{model_forward.13} parent=5 // pred_fallthru
      _
    %p174 = scmp.lt.s32.totalorder %s11, 2
    // Predicated region
    $region29: #{model_forward.13} parent=5 // pred_check
      %p175 = pneg %p174
    $region30: #{model_forward.13} parent=5 // pred_check_branch
      %177 = sbr.rel (%p175) target = $region32
    $region31: #{model_forward.13} parent=5 // pred_region
      // Predicated region
      $region33: #{model_forward.13} parent=31 // pred_check
        %p178 = pneg %p31
      $region34: #{model_forward.13} parent=31 // pred_check_branch
        %180 = sbr.rel (%p178) target = $region36
      $region35: #{model_forward.13} parent=31 // pred_region
        %s181 = smul.u32 16, %s11
        %p182 = scmp.lt.s32.totalorder %s181, 31
        %s183 = scalar_select %p182, %s181, 31
        %s184 = smul.addr %s183, 8
        %s185 = scalar_lea.vmem %s0, %s184
        %s186 = smul.u32 16, %s11
      $region36: #{model_forward.13} parent=31 // pred_fallthru
        _
    $region32: #{model_forward.13} parent=5 // pred_fallthru
      _
    %p187 = scmp.le.s32.totalorder 1, %s11
    %p188 = scmp.lt.s32.totalorder %s11, 3
    %p189 = pnand %p187, %p188
    %p190 = pneg %p189
    // Predicated region
    $region37: #{model_forward.13} parent=5 // pred_check
      _
    $region38: #{model_forward.13} parent=5 // pred_check_branch
      %192 = sbr.rel (%p189) target = $region40
    $region39: #{model_forward.13} parent=5 // pred_region
      %s193 = ssub.s32 %s11, 1
      %s194 = smul.u32 16, %s16
      %p195 = scmp.lt.s32.totalorder %s194, 31
      %s196 = scalar_select %p195, %s194, 31
      %s197 = smul.addr %s196, 8
      %s198 = scalar_lea.vmem %s0, %s197
      %p199 = pneg %p37
      %p200 = pneg %p34
      %p201 = pneg %p58
      %p202 = pneg %p55
      %p203 = pneg %p79
      %p204 = pneg %p76
      %p205 = pneg %p100
      %p206 = pneg %p97
      %p207 = pneg %p121
      %p208 = pneg %p118
      %p209 = pneg %p147
      %p210 = pneg %p144
      %s211 = smul.u32 16, %s16
      %p212 = scmp.lt.s32.totalorder %s211, 31
      %s213 = scalar_select %p212, %s211, 31
      %s214 = smul.addr %s213, 8
      %s215 = scalar_lea.vmem %s5, %s214
      %s216 = smul.u32 16, %s16
      %p217 = scmp.lt.s32.totalorder %s216, 31
      %s218 = scalar_select %p217, %s216, 31
      %s219 = smul.addr %s218, 8
      %s220 = scalar_lea.vmem %s0, %s219
      %s221 = smul.u32 16, %s16
      %s222 = smul.u32 16, %s16
      %p223 = scmp.lt.s32.totalorder %s222, 31
      %s224 = scalar_select %p223, %s222, 31
      %s225 = smul.addr %s224, 8
      %s226 = scalar_lea.vmem %s5, %s225
      %s227 = smul.u32 16, %s16
      %v229 = vld [vmem:[%s220] sm:$0xff]
      %v230 = vld [vmem:[%s220 + $0x8] sm:$0xff]
      %v231 = vld [vmem:[%s220 + $0x10] sm:$0xff]
      %v232 = vld [vmem:[%s220 + $0x18] sm:$0xff]
      %v233 = vld [vmem:[%s220 + $0x20] sm:$0xff]
      %v234 = vld [vmem:[%s220 + $0x28] sm:$0xff]
      %v235 = vld [vmem:[%s220 + $0x30] sm:$0xff]
      %v236 = vld [vmem:[%s220 + $0x38] sm:$0xff]
      %v237 = vld [vmem:[%s220 + $0x40] sm:$0xff]
      %v238 = vld [vmem:[%s220 + $0x48] sm:$0xff]
      %v239 = vld [vmem:[%s220 + $0x50] sm:$0xff]
      %v240 = vld [vmem:[%s220 + $0x58] sm:$0xff]
      %v241 = vld [vmem:[%s220 + $0x60] sm:$0xff]
      %v242 = vld [vmem:[%s220 + $0x68] sm:$0xff]
      %v243 = vld [vmem:[%s220 + $0x70] sm:$0xff]
      %v244 = vld [vmem:[%s220 + $0x78] sm:$0xff]
      %v245 = vld [vmem:[%s1] sm:$0xf]
      %v246 = vld [vmem:[%s2] sm:$0x1]
      %v248 = vlaneseq
      %v249 = vshrl.u32 %v248, 7
      %v250 = vsub.s32 0, %v249
      %v251 = vrot.slane %v246, %v250
      %vm253 = vcmask 31744
      %v255 = vsel %vm253, %v229, 0
      %v258 = vsel %vm253, %v230, 0
      %v261 = vsel %vm253, %v231, 0
      %v264 = vsel %vm253, %v232, 0
      %v267 = vsel %vm253, %v233, 0
      %v270 = vsel %vm253, %v234, 0
      %v273 = vsel %vm253, %v235, 0
      %v276 = vsel %vm253, %v236, 0
      %v279 = vsel %vm253, %v237, 0
      %v282 = vsel %vm253, %v238, 0
      %v285 = vsel %vm253, %v239, 0
      %v288 = vsel %vm253, %v240, 0
      %v291 = vsel %vm253, %v241, 0
      %v294 = vsel %vm253, %v242, 0
      %v297 = vsel %vm253, %v243, 0
      %v300 = vsel %vm253, %v244, 0
      %vm302 = vcmask 1043456
      %v304 = vsel %vm302, %v245, 0
      %306 = vmatprep.subr.mxu0 0.0
      %307 = vmatpush1.msra.mxu0 0.0
      %308 = vmatprep.subr.mxu0 0.0
      %309 = vmatpush1.msra.mxu0 0.0
      %310 = vmatprep.subr.mxu0 0.0
      %311 = vmatpush1.msra.mxu0 0.0
      %312 = vmatprep.subr.mxu0 0.0
      %313 = vmatpush1.msra.mxu0 0.0
      %314 = vmatprep.subr.mxu0 0.0
      %315 = vmatpush1.msra.mxu0 0.0
      %316 = vmatprep.subr.mxu0 0.0
      %317 = vmatpush1.msra.mxu0 0.0
      %318 = vmatprep.subr.mxu0 0.0
      %319 = vmatpush1.msra.mxu0 0.0
      %320 = vmatprep.subr.mxu0 0.0
      %321 = vmatpush1.msra.mxu0 0.0
      %322 = vmatprep.subr.mxu0 0.0
      %323 = vmatpush1.msra.mxu0 0.0
      %324 = vmatprep.subr.mxu0 0.0
      %325 = vmatpush1.msra.mxu0 0.0
      %326 = vmatprep.subr.mxu0 0.0
      %327 = vmatpush1.msra.mxu0 0.0
      %328 = vmatprep.subr.mxu0 0.0
      %329 = vmatpush1.msra.mxu0 0.0
      %330 = vmatprep.subr.mxu0 0.0
      %331 = vmatpush1.msra.mxu0 0.0
      %332 = vmatprep.subr.mxu0 0.0
      %333 = vmatpush1.msra.mxu0 0.0
      %334 = vmatprep.subr.mxu0 0.0
      %335 = vmatpush1.msra.mxu0 0.0
      %336 = vmatprep.subr.mxu0 0.0
      %337 = vmatpush1.msra.mxu0 %v304
      %338 = vmatprep.subr.mxu0 0.0
      %339 = vmatpush2.msra.mxu0 0.0
      %340 = vmatprep.subr.mxu0 0.0
      %341 = vmatpush2.msra.mxu0 0.0
      %342 = vmatprep.subr.mxu0 0.0
      %343 = vmatpush2.msra.mxu0 0.0
      %344 = vmatprep.subr.mxu0 0.0
      %345 = vmatpush2.msra.mxu0 0.0
      %346 = vmatprep.subr.mxu0 0.0
      %347 = vmatpush2.msra.mxu0 0.0
      %348 = vmatprep.subr.mxu0 0.0
      %349 = vmatpush2.msra.mxu0 0.0
      %350 = vmatprep.subr.mxu0 0.0
      %351 = vmatpush2.msra.mxu0 0.0
      %352 = vmatprep.subr.mxu0 0.0
      %353 = vmatpush2.msra.mxu0 0.0
      %354 = vmatprep.subr.mxu0 0.0
      %355 = vmatpush2.msra.mxu0 0.0
      %356 = vmatprep.subr.mxu0 0.0
      %357 = vmatpush2.msra.mxu0 0.0
      %358 = vmatprep.subr.mxu0 0.0
      %359 = vmatpush2.msra.mxu0 0.0
      %360 = vmatprep.subr.mxu0 0.0
      %361 = vmatpush2.msra.mxu0 0.0
      %362 = vmatprep.subr.mxu0 0.0
      %363 = vmatpush2.msra.mxu0 0.0
      %364 = vmatprep.subr.mxu0 0.0
      %365 = vmatpush2.msra.mxu0 0.0
      %366 = vmatprep.subr.mxu0 0.0
      %367 = vmatpush2.msra.mxu0 0.0
      %368 = vmatprep.subr.mxu0 0.0
      %369 = vmatpush2.msra.mxu0 0.0
      %370 = vmatprep.mubr.f32.mxu0 0.0
      %371 = vmatmul.mubr.f32.gmra.mxu0 %v255
      %v372 = vpop.f32.mrf.mxu0
      %v373 = vadd.f32 %v251, %v372
      %v374 = vpop.f32.mrf.mxu0
      %375 = vmatprep.mubr.f32.mxu0 0.0
      %376 = vmatmul.mubr.f32.gmra.mxu0 %v258
      %v377 = vpop.f32.mrf.mxu0
      %v378 = vadd.f32 %v251, %v377
      %v379 = vpop.f32.mrf.mxu0
      %380 = vmatprep.mubr.f32.mxu0 0.0
      %381 = vmatmul.mubr.f32.gmra.mxu0 %v261
      %v382 = vpop.f32.mrf.mxu0
      %v383 = vadd.f32 %v251, %v382
      %v384 = vpop.f32.mrf.mxu0
      %385 = vmatprep.mubr.f32.mxu0 0.0
      %386 = vmatmul.mubr.f32.gmra.mxu0 %v264
      %v387 = vpop.f32.mrf.mxu0
      %v388 = vadd.f32 %v251, %v387
      %v389 = vpop.f32.mrf.mxu0
      %390 = vmatprep.mubr.f32.mxu0 0.0
      %391 = vmatmul.mubr.f32.gmra.mxu0 %v267
      %v392 = vpop.f32.mrf.mxu0
      %v393 = vadd.f32 %v251, %v392
      %v394 = vpop.f32.mrf.mxu0
      %395 = vmatprep.mubr.f32.mxu0 0.0
      %396 = vmatmul.mubr.f32.gmra.mxu0 %v270
      %v397 = vpop.f32.mrf.mxu0
      %v398 = vadd.f32 %v251, %v397
      %v399 = vpop.f32.mrf.mxu0
      %400 = vmatprep.mubr.f32.mxu0 0.0
      %401 = vmatmul.mubr.f32.gmra.mxu0 %v273
      %v402 = vpop.f32.mrf.mxu0
      %v403 = vadd.f32 %v251, %v402
      %v404 = vpop.f32.mrf.mxu0
      %405 = vmatprep.mubr.f32.mxu0 0.0
      %406 = vmatmul.mubr.f32.gmra.mxu0 %v276
      %v407 = vpop.f32.mrf.mxu0
      %v408 = vadd.f32 %v251, %v407
      %v409 = vpop.f32.mrf.mxu0
      %410 = vmatprep.mubr.f32.mxu0 0.0
      %411 = vmatmul.mubr.f32.gmra.mxu0 %v279
      %v412 = vpop.f32.mrf.mxu0
      %v413 = vadd.f32 %v251, %v412
      %v414 = vpop.f32.mrf.mxu0
      %415 = vmatprep.mubr.f32.mxu0 0.0
      %416 = vmatmul.mubr.f32.gmra.mxu0 %v282
      %v417 = vpop.f32.mrf.mxu0
      %v418 = vadd.f32 %v251, %v417
      %v419 = vpop.f32.mrf.mxu0
      %420 = vmatprep.mubr.f32.mxu0 0.0
      %421 = vmatmul.mubr.f32.gmra.mxu0 %v285
      %v422 = vpop.f32.mrf.mxu0
      %v423 = vadd.f32 %v251, %v422
      %v424 = vpop.f32.mrf.mxu0
      %425 = vmatprep.mubr.f32.mxu0 0.0
      %426 = vmatmul.mubr.f32.gmra.mxu0 %v288
      %v427 = vpop.f32.mrf.mxu0
      %v428 = vadd.f32 %v251, %v427
      %v429 = vpop.f32.mrf.mxu0
      %430 = vmatprep.mubr.f32.mxu0 0.0
      %431 = vmatmul.mubr.f32.gmra.mxu0 %v291
      %v432 = vpop.f32.mrf.mxu0
      %v433 = vadd.f32 %v251, %v432
      %v434 = vpop.f32.mrf.mxu0
      %435 = vmatprep.mubr.f32.mxu0 0.0
      %436 = vmatmul.mubr.f32.gmra.mxu0 %v294
      %v437 = vpop.f32.mrf.mxu0
      %v438 = vadd.f32 %v251, %v437
      %v439 = vpop.f32.mrf.mxu0
      %440 = vmatprep.mubr.f32.mxu0 0.0
      %441 = vmatmul.mubr.f32.gmra.mxu0 %v297
      %v442 = vpop.f32.mrf.mxu0
      %v443 = vadd.f32 %v251, %v442
      %v444 = vpop.f32.mrf.mxu0
      %445 = vmatprep.mubr.f32.mxu0 0.0
      %446 = vmatmul.mubr.f32.gmra.mxu0 %v300
      %v447 = vpop.f32.mrf.mxu0
      %v448 = vadd.f32 %v251, %v447
      %v449 = vpop.f32.mrf.mxu0
      %450 = vdwg.mxu0
      %v451 = vmax.f32 %v373, 0.0
      %v452 = vmax.f32 %v378, 0.0
      %v453 = vmax.f32 %v383, 0.0
      %v454 = vmax.f32 %v388, 0.0
      %v455 = vmax.f32 %v393, 0.0
      %v456 = vmax.f32 %v398, 0.0
      %v457 = vmax.f32 %v403, 0.0
      %v458 = vmax.f32 %v408, 0.0
      %v459 = vmax.f32 %v413, 0.0
      %v460 = vmax.f32 %v418, 0.0
      %v461 = vmax.f32 %v423, 0.0
      %v462 = vmax.f32 %v428, 0.0
      %v463 = vmax.f32 %v433, 0.0
      %v464 = vmax.f32 %v438, 0.0
      %v465 = vmax.f32 %v443, 0.0
      %v466 = vmax.f32 %v448, 0.0
      %v467 = vpack.c.bf16 %v452, %v451
      %v468 = vpack.c.bf16 %v454, %v453
      %v469 = vpack.c.bf16 %v456, %v455
      %v470 = vpack.c.bf16 %v458, %v457
      %v471 = vpack.c.bf16 %v460, %v459
      %v472 = vpack.c.bf16 %v462, %v461
      %v473 = vpack.c.bf16 %v464, %v463
      %v474 = vpack.c.bf16 %v466, %v465
      %v475 = vld [vmem:[%s3] sm:$0xf]
      %v476 = vld [vmem:[%s3 + $0x4] sm:$0xf]
      %v477 = vld [vmem:[%s3 + $0x8] sm:$0xf]
      %v478 = vld [vmem:[%s3 + $0xc] sm:$0xf]
      %v479 = vld [vmem:[%s3 + $0x10] sm:$0xf]
      %v480 = vld [vmem:[%s3 + $0x14] sm:$0xf]
      %v481 = vld [vmem:[%s3 + $0x18] sm:$0xf]
      %v482 = vld [vmem:[%s3 + $0x1c] sm:$0xf]
      %v483 = vld [vmem:[%s3 + $0x20] sm:$0xf]
      %v484 = vld [vmem:[%s3 + $0x24] sm:$0xf]
      %v485 = vld [vmem:[%s3 + $0x28] sm:$0xf]
      %v486 = vld [vmem:[%s3 + $0x2c] sm:$0xf]
      %v487 = vld [vmem:[%s3 + $0x30] sm:$0xf]
      %v488 = vld [vmem:[%s3 + $0x34] sm:$0xf]
      %v489 = vld [vmem:[%s3 + $0x38] sm:$0xf]
      %v490 = vld [vmem:[%s3 + $0x3c] sm:$0xf]
      %v491 = vld [vmem:[%s4] sm:$0x1]
      %v493 = vlaneseq
      %v494 = vshrl.u32 %v493, 7
      %v495 = vsub.s32 0, %v494
      %v496 = vrot.slane %v491, %v495
      %v514 = vunpack.c.l.b16 %v475
      %v515 = vunpack.c.l.b16 %v476
      %v516 = vunpack.c.l.b16 %v477
      %v517 = vunpack.c.l.b16 %v478
      %v518 = vunpack.c.l.b16 %v479
      %v519 = vunpack.c.l.b16 %v480
      %v520 = vunpack.c.l.b16 %v481
      %v521 = vunpack.c.l.b16 %v482
      %v522 = vunpack.c.l.b16 %v483
      %v523 = vunpack.c.l.b16 %v484
      %v524 = vunpack.c.l.b16 %v485
      %v525 = vunpack.c.l.b16 %v486
      %v526 = vunpack.c.l.b16 %v487
      %v527 = vunpack.c.l.b16 %v488
      %v528 = vunpack.c.l.b16 %v489
      %v529 = vunpack.c.l.b16 %v490
      %v530 = vpack.c.b16 %v515, %v514
      %v531 = vpack.c.b16 %v517, %v516
      %v532 = vpack.c.b16 %v519, %v518
      %v533 = vpack.c.b16 %v521, %v520
      %v534 = vpack.c.b16 %v523, %v522
      %v535 = vpack.c.b16 %v525, %v524
      %v536 = vpack.c.b16 %v527, %v526
      %v537 = vpack.c.b16 %v529, %v528
      %546 = vmatprep.subr.bf16.mxu0 0
      %547 = vmatpush1.bf16.msra.mxu0 %v537
      %548 = vmatprep.subr.bf16.mxu0 0
      %549 = vmatpush1.bf16.msra.mxu0 %v536
      %550 = vmatprep.subr.bf16.mxu0 0
      %551 = vmatpush1.bf16.msra.mxu0 %v535
      %552 = vmatprep.subr.bf16.mxu0 0
      %553 = vmatpush1.bf16.msra.mxu0 %v534
      %554 = vmatprep.subr.bf16.mxu0 0
      %555 = vmatpush1.bf16.msra.mxu0 %v533
      %556 = vmatprep.subr.bf16.mxu0 0
      %557 = vmatpush1.bf16.msra.mxu0 %v532
      %558 = vmatprep.subr.bf16.mxu0 0
      %559 = vmatpush1.bf16.msra.mxu0 %v531
      %560 = vmatprep.subr.bf16.mxu0 0
      %561 = vmatpush1.bf16.msra.mxu0 %v530
      %562 = vmatprep.subr.bf16.mxu0 0
      %563 = vmatpush2.bf16.msra.mxu0 0
      %564 = vmatprep.subr.bf16.mxu0 0
      %565 = vmatpush2.bf16.msra.mxu0 0
      %566 = vmatprep.subr.bf16.mxu0 0
      %567 = vmatpush2.bf16.msra.mxu0 0
      %568 = vmatprep.subr.bf16.mxu0 0
      %569 = vmatpush2.bf16.msra.mxu0 0
      %570 = vmatprep.subr.bf16.mxu0 0
      %571 = vmatpush2.bf16.msra.mxu0 0
      %572 = vmatprep.subr.bf16.mxu0 0
      %573 = vmatpush2.bf16.msra.mxu0 0
      %574 = vmatprep.subr.bf16.mxu0 0
      %575 = vmatpush2.bf16.msra.mxu0 0
      %576 = vmatprep.subr.bf16.mxu0 0
      %577 = vmatpush2.bf16.msra.mxu0 0
      %578 = vmatprep.mubr.bf16.mxu0 0
      %579 = vmatmul.mubr.bf16.gmra.mxu0 %v467
      %v580 = vpop.f32.mrf.mxu0
      %v581 = vadd.f32 %v496, %v580
      %v582 = vpop.f32.mrf.mxu0
      %v583 = vpop.f32.mrf.mxu0
      %v584 = vadd.f32 %v496, %v583
      %v585 = vpop.f32.mrf.mxu0
      %586 = vmatprep.mubr.bf16.mxu0 0
      %587 = vmatmul.mubr.bf16.gmra.mxu0 %v468
      %v588 = vpop.f32.mrf.mxu0
      %v589 = vadd.f32 %v496, %v588
      %v590 = vpop.f32.mrf.mxu0
      %v591 = vpop.f32.mrf.mxu0
      %v592 = vadd.f32 %v496, %v591
      %v593 = vpop.f32.mrf.mxu0
      %594 = vmatprep.mubr.bf16.mxu0 0
      %595 = vmatmul.mubr.bf16.gmra.mxu0 %v469
      %v596 = vpop.f32.mrf.mxu0
      %v597 = vadd.f32 %v496, %v596
      %v598 = vpop.f32.mrf.mxu0
      %v599 = vpop.f32.mrf.mxu0
      %v600 = vadd.f32 %v496, %v599
      %v601 = vpop.f32.mrf.mxu0
      %602 = vmatprep.mubr.bf16.mxu0 0
      %603 = vmatmul.mubr.bf16.gmra.mxu0 %v470
      %v604 = vpop.f32.mrf.mxu0
      %v605 = vadd.f32 %v496, %v604
      %v606 = vpop.f32.mrf.mxu0
      %v607 = vpop.f32.mrf.mxu0
      %v608 = vadd.f32 %v496, %v607
      %v609 = vpop.f32.mrf.mxu0
      %610 = vmatprep.mubr.bf16.mxu0 0
      %611 = vmatmul.mubr.bf16.gmra.mxu0 %v471
      %v612 = vpop.f32.mrf.mxu0
      %v613 = vadd.f32 %v496, %v612
      %v614 = vpop.f32.mrf.mxu0
      %v615 = vpop.f32.mrf.mxu0
      %v616 = vadd.f32 %v496, %v615
      %v617 = vpop.f32.mrf.mxu0
      %618 = vmatprep.mubr.bf16.mxu0 0
      %619 = vmatmul.mubr.bf16.gmra.mxu0 %v472
      %v620 = vpop.f32.mrf.mxu0
      %v621 = vadd.f32 %v496, %v620
      %v622 = vpop.f32.mrf.mxu0
      %v623 = vpop.f32.mrf.mxu0
      %v624 = vadd.f32 %v496, %v623
      %v625 = vpop.f32.mrf.mxu0
      %626 = vmatprep.mubr.bf16.mxu0 0
      %627 = vmatmul.mubr.bf16.gmra.mxu0 %v473
      %v628 = vpop.f32.mrf.mxu0
      %v629 = vadd.f32 %v496, %v628
      %v630 = vpop.f32.mrf.mxu0
      %v631 = vpop.f32.mrf.mxu0
      %v632 = vadd.f32 %v496, %v631
      %v633 = vpop.f32.mrf.mxu0
      %634 = vmatprep.mubr.bf16.mxu0 0
      %635 = vmatmul.mubr.bf16.gmra.mxu0 %v474
      %v636 = vpop.f32.mrf.mxu0
      %v637 = vadd.f32 %v496, %v636
      %v638 = vpop.f32.mrf.mxu0
      %v639 = vpop.f32.mrf.mxu0
      %v640 = vadd.f32 %v496, %v639
      %v641 = vpop.f32.mrf.mxu0
      %642 = vdwg.mxu0
      %643 = vst [vmem:[%s226] sm:$0xff] %v581
      %644 = vst [vmem:[%s226 + $0x8] sm:$0xff] %v584
      %645 = vst [vmem:[%s226 + $0x10] sm:$0xff] %v589
      %646 = vst [vmem:[%s226 + $0x18] sm:$0xff] %v592
      %647 = vst [vmem:[%s226 + $0x20] sm:$0xff] %v597
      %648 = vst [vmem:[%s226 + $0x28] sm:$0xff] %v600
      %649 = vst [vmem:[%s226 + $0x30] sm:$0xff] %v605
      %650 = vst [vmem:[%s226 + $0x38] sm:$0xff] %v608
      %651 = vst [vmem:[%s226 + $0x40] sm:$0xff] %v613
      %652 = vst [vmem:[%s226 + $0x48] sm:$0xff] %v616
      %653 = vst [vmem:[%s226 + $0x50] sm:$0xff] %v621
      %654 = vst [vmem:[%s226 + $0x58] sm:$0xff] %v624
      %655 = vst [vmem:[%s226 + $0x60] sm:$0xff] %v629
      %656 = vst [vmem:[%s226 + $0x68] sm:$0xff] %v632
      %657 = vst [vmem:[%s226 + $0x70] sm:$0xff] %v637
      %658 = vst [vmem:[%s226 + $0x78] sm:$0xff] %v640
      %s659 = smul.u32 16, %s16
      %p660 = scmp.lt.s32.totalorder %s659, 31
      %s661 = scalar_select %p660, %s659, 31
      %s662 = smul.addr %s661, 8
      %s663 = scalar_lea.vmem %s5, %s662
      // Predicated region
      $region41: #{model_forward.13} parent=39 // pred_check
        %p664 = pneg %p144
      $region42: #{model_forward.13} parent=39 // pred_check_branch
        %666 = sbr.rel (%p664) target = $region44
      $region43: #{model_forward.13} parent=39 // pred_region
        %s667 = smul.u32 16, %s16
      $region44: #{model_forward.13} parent=39 // pred_fallthru
        _
    $region40: #{model_forward.13} parent=5 // pred_fallthru
      _
    %p668 = scmp.le.s32.totalorder 2, %s11
    // Predicated region
    $region45: #{model_forward.13} parent=5 // pred_check
      %p669 = pneg %p668
    $region46: #{model_forward.13} parent=5 // pred_check_branch
      %671 = sbr.rel (%p669) target = $region48
    $region47: #{model_forward.13} parent=5 // pred_region
      %s672 = ssub.s32 %s11, 2
      // Predicated region
      $region49: #{model_forward.13} parent=47 // pred_check
        %p673 = pneg %p150
      $region50: #{model_forward.13} parent=47 // pred_check_branch
        %675 = sbr.rel (%p673) target = $region52
      $region51: #{model_forward.13} parent=47 // pred_region
        %s676 = smul.u32 16, %s17
        %p677 = scmp.lt.s32.totalorder %s676, 31
        %s678 = scalar_select %p677, %s676, 31
        %s679 = smul.addr %s678, 8
        %s680 = scalar_lea.vmem %s5, %s679
      $region52: #{model_forward.13} parent=47 // pred_fallthru
        _
    $region48: #{model_forward.13} parent=5 // pred_fallthru
      _
  $region6: #{model_forward.13} parent=0 // loop_footer
    %s15 = sadd.s32 1, %s11
  $region7: #{model_forward.13} parent=0 // loop_footer_branch
    %10 = sbr.rel target = $region3
  $region8: #{model_forward.13} parent=0 // loop_exit
    _

// kernel: model_forward.15
$region0: #{model_forward.15}
  #allocation0 [shape = 'u32[]', space=smem, size = 0x4, offset = 0x4, fixed_abs, tag = 'smem constant byte address 0x4 - core index']
  #allocation1 [shape = 'u32[144,128]{1,0:T(1,128)}', space=vmem, size = 0x12000, scoped, tag = 'internal scratch']
  %s0 = inlined_call_operand.vmem [shape: f32[256,128], index: 0, kind: input, shape index: {}]
  %s1 = inlined_call_operand.vmem [shape: bf16[128,640], index: 1, kind: input, shape index: {}]
  %s2 = inlined_call_operand.vmem [shape: f32[1,640], index: 2, kind: input, shape index: {}]
  %s3 = inlined_call_operand.vmem [shape: f32[256,640], index: 3, kind: output, shape index: {}]
  %s4 = sld [smem:[#allocation0]]
  $region45: #{model_forward.15} parent=0
    _
  %s6 = ssub.s32 1, %s4
  %s7 = scalar_select 0, %s6, %s4
  loop: start=0, step=1, limit=4
  $region2: #{model_forward.15} parent=0 // loop_pre_header
    _
  $region3: #{model_forward.15} parent=0 // loop_header
    %s9 = sphi 0, %s13
    %p10 = scmp.ge.s32.totalorder %s9, 4
    %s19 = sphi 0, %s21
    %s22 = sphi 0, %s19
    %s23 = sphi 0, %s22
    %s39 = sphi 0, %s23
    %s43 = sphi 0, %s43
    %s45 = sphi 0, %s43
    %s46 = sphi 0, %s45
    %s60 = sphi 0, %s46
    %s64 = sphi 0, %s64
    %s66 = sphi 0, %s64
    %s67 = sphi 0, %s66
    %s81 = sphi 0, %s67
    %s87 = sphi 0, %s89
    %s90 = sphi 0, %s87
    %s91 = sphi 0, %s90
    %s107 = sphi 0, %s91
  $region4: #{model_forward.15} parent=0 // loop_header_branch
    %12 = sbr.rel (%p10) target = $region8
  $region5: #{model_forward.15} parent=0 // loop_body
    %s14 = ssub.s32 %s9, 1
    %s15 = ssub.s32 %s9, 2
    %s16 = sadd.s32 %s9, 1
    %s17 = ssub.s32 %s9, %s16
    %p18 = scmp.eq.s32.totalorder %s17, 0
    %s20 = sadd.s32 %s19, 1
    %s21 = scalar_select %p18, %s19, %s20
    %p24 = pneg %p18
    %p25 = scmp.eq.s32.totalorder %s9, 1
    %p26 = por %p24, %p25
    %p27 = scmp.ne.s32.totalorder %s19, %s22
    %p28 = scmp.eq.s32.totalorder %s9, 0
    %p29 = por %p27, %p28
    %p30 = scmp.ne.s32.totalorder %s19, %s22
    %p31 = scmp.eq.s32.totalorder %s14, 1
    %p32 = por %p30, %p31
    %p33 = scmp.ne.s32.totalorder %s22, %s23
    %p34 = scmp.eq.s32.totalorder %s14, 0
    %p35 = por %p33, %p34
    %p36 = scmp.ne.s32.totalorder %s22, %s23
    %p37 = scmp.eq.s32.totalorder %s15, 1
    %p38 = por %p36, %p37
    %p40 = scmp.ne.s32.totalorder %s23, %s39
    %p41 = scmp.eq.s32.totalorder %s15, 0
    %p42 = por %p40, %p41
    %s44 = sadd.s32 %s43, 1
    %p47 = scmp.eq.s32.totalorder %s9, 1
    %p48 = scmp.ne.s32.totalorder %s43, %s45
    %p49 = scmp.eq.s32.totalorder %s9, 0
    %p50 = por %p48, %p49
    %p51 = scmp.ne.s32.totalorder %s43, %s45
    %p52 = scmp.eq.s32.totalorder %s14, 1
    %p53 = por %p51, %p52
    %p54 = scmp.ne.s32.totalorder %s45, %s46
    %p55 = scmp.eq.s32.totalorder %s14, 0
    %p56 = por %p54, %p55
    %p57 = scmp.ne.s32.totalorder %s45, %s46
    %p58 = scmp.eq.s32.totalorder %s15, 1
    %p59 = por %p57, %p58
    %p61 = scmp.ne.s32.totalorder %s46, %s60
    %p62 = scmp.eq.s32.totalorder %s15, 0
    %p63 = por %p61, %p62
    %s65 = sadd.s32 %s64, 1
    %p68 = scmp.eq.s32.totalorder %s9, 1
    %p69 = scmp.ne.s32.totalorder %s64, %s66
    %p70 = scmp.eq.s32.totalorder %s9, 0
    %p71 = por %p69, %p70
    %p72 = scmp.ne.s32.totalorder %s64, %s66
    %p73 = scmp.eq.s32.totalorder %s14, 1
    %p74 = por %p72, %p73
    %p75 = scmp.ne.s32.totalorder %s66, %s67
    %p76 = scmp.eq.s32.totalorder %s14, 0
    %p77 = por %p75, %p76
    %p78 = scmp.ne.s32.totalorder %s66, %s67
    %p79 = scmp.eq.s32.totalorder %s15, 1
    %p80 = por %p78, %p79
    %p82 = scmp.ne.s32.totalorder %s67, %s81
    %p83 = scmp.eq.s32.totalorder %s15, 0
    %p84 = por %p82, %p83
    %s85 = ssub.s32 %s9, %s16
    %p86 = scmp.eq.s32.totalorder %s85, 0
    %s88 = sadd.s32 %s87, 1
    %s89 = scalar_select %p86, %s87, %s88
    %p92 = pneg %p86
    %p93 = scmp.eq.s32.totalorder %s9, 1
    %p94 = por %p92, %p93
    %p95 = scmp.ne.s32.totalorder %s87, %s90
    %p96 = scmp.eq.s32.totalorder %s9, 0
    %p97 = por %p95, %p96
    %p98 = scmp.ne.s32.totalorder %s87, %s90
    %p99 = scmp.eq.s32.totalorder %s14, 1
    %p100 = por %p98, %p99
    %p101 = scmp.ne.s32.totalorder %s90, %s91
    %p102 = scmp.eq.s32.totalorder %s14, 0
    %p103 = por %p101, %p102
    %p104 = scmp.ne.s32.totalorder %s90, %s91
    %p105 = scmp.eq.s32.totalorder %s15, 1
    %p106 = por %p104, %p105
    %p108 = scmp.ne.s32.totalorder %s91, %s107
    %p109 = scmp.eq.s32.totalorder %s15, 0
    %p110 = por %p108, %p109
    %p111 = scmp.le.s32.totalorder 1, %s9
    %p112 = scmp.lt.s32.totalorder %s9, 3
    %p113 = pnand %p111, %p112
    %p114 = pneg %p113
    // Predicated region
    $region9: #{model_forward.15} parent=5 // pred_check
      _
    $region10: #{model_forward.15} parent=5 // pred_check_branch
      %116 = sbr.rel (%p113) target = $region12
    $region11: #{model_forward.15} parent=5 // pred_region
      %s117 = ssub.s32 %s9, 1
      // Predicated region
      $region13: #{model_forward.15} parent=11 // pred_check
        %p118 = pneg %p56
      $region14: #{model_forward.15} parent=11 // pred_check_branch
        %120 = sbr.rel (%p118) target = $region16
      $region15: #{model_forward.15} parent=11 // pred_region
        _
      $region16: #{model_forward.15} parent=11 // pred_fallthru
        _
      // Predicated region
      $region17: #{model_forward.15} parent=11 // pred_check
        %p121 = pneg %p77
      $region18: #{model_forward.15} parent=11 // pred_check_branch
        %123 = sbr.rel (%p121) target = $region20
      $region19: #{model_forward.15} parent=11 // pred_region
        _
      $region20: #{model_forward.15} parent=11 // pred_fallthru
        _
    $region12: #{model_forward.15} parent=5 // pred_fallthru
      _
    %p124 = scmp.lt.s32.totalorder %s9, 2
    // Predicated region
    $region21: #{model_forward.15} parent=5 // pred_check
      %p125 = pneg %p124
    $region22: #{model_forward.15} parent=5 // pred_check_branch
      %127 = sbr.rel (%p125) target = $region24
    $region23: #{model_forward.15} parent=5 // pred_region
      // Predicated region
      $region25: #{model_forward.15} parent=23 // pred_check
        %p128 = pneg %p29
      $region26: #{model_forward.15} parent=23 // pred_check_branch
        %130 = sbr.rel (%p128) target = $region28
      $region27: #{model_forward.15} parent=23 // pred_region
        %s131 = smul.u32 16, %s9
        %p132 = scmp.lt.s32.totalorder %s131, 31
        %s133 = scalar_select %p132, %s131, 31
        %s134 = smul.addr %s133, 8
        %s135 = scalar_lea.vmem %s0, %s134
        %s136 = smul.u32 16, %s9
      $region28: #{model_forward.15} parent=23 // pred_fallthru
        _
    $region24: #{model_forward.15} parent=5 // pred_fallthru
      _
    %p137 = scmp.le.s32.totalorder 1, %s9
    %p138 = scmp.lt.s32.totalorder %s9, 3
    %p139 = pnand %p137, %p138
    %p140 = pneg %p139
    // Predicated region
    $region29: #{model_forward.15} parent=5 // pred_check
      _
    $region30: #{model_forward.15} parent=5 // pred_check_branch
      %142 = sbr.rel (%p139) target = $region32
    $region31: #{model_forward.15} parent=5 // pred_region
      %s143 = ssub.s32 %s9, 1
      %s144 = smul.u32 16, %s14
      %p145 = scmp.lt.s32.totalorder %s144, 31
      %s146 = scalar_select %p145, %s144, 31
      %s147 = smul.addr %s146, 8
      %s148 = scalar_lea.vmem %s0, %s147
      %p149 = pneg %p35
      %p150 = pneg %p32
      %p151 = pneg %p56
      %p152 = pneg %p53
      %p153 = pneg %p77
      %p154 = pneg %p74
      %p155 = pneg %p103
      %p156 = pneg %p100
      %s157 = smul.u32 16, %s14
      %p158 = scmp.lt.s32.totalorder %s157, 31
      %s159 = scalar_select %p158, %s157, 31
      %s160 = smul.addr %s159, 5
      %s161 = smul.addr %s160, 8
      %s162 = scalar_lea.vmem %s3, %s161
      %s163 = smul.u32 16, %s14
      %p164 = scmp.lt.s32.totalorder %s163, 31
      %s165 = scalar_select %p164, %s163, 31
      %s166 = smul.addr %s165, 8
      %s167 = scalar_lea.vmem %s0, %s166
      %s168 = smul.u32 16, %s14
      %s169 = smul.u32 16, %s14
      %p170 = scmp.lt.s32.totalorder %s169, 31
      %s171 = scalar_select %p170, %s169, 31
      %s172 = smul.addr %s171, 5
      %s173 = smul.addr %s172, 8
      %s174 = scalar_lea.vmem %s3, %s173
      %s175 = smul.u32 16, %s14
      %v177 = vld [vmem:[%s167] sm:$0xff]
      %v178 = vld [vmem:[%s167 + $0x8] sm:$0xff]
      %v179 = vld [vmem:[%s167 + $0x10] sm:$0xff]
      %v180 = vld [vmem:[%s167 + $0x18] sm:$0xff]
      %v181 = vld [vmem:[%s167 + $0x20] sm:$0xff]
      %v182 = vld [vmem:[%s167 + $0x28] sm:$0xff]
      %v183 = vld [vmem:[%s167 + $0x30] sm:$0xff]
      %v184 = vld [vmem:[%s167 + $0x38] sm:$0xff]
      %v185 = vld [vmem:[%s167 + $0x40] sm:$0xff]
      %v186 = vld [vmem:[%s167 + $0x48] sm:$0xff]
      %v187 = vld [vmem:[%s167 + $0x50] sm:$0xff]
      %v188 = vld [vmem:[%s167 + $0x58] sm:$0xff]
      %v189 = vld [vmem:[%s167 + $0x60] sm:$0xff]
      %v190 = vld [vmem:[%s167 + $0x68] sm:$0xff]
      %v191 = vld [vmem:[%s167 + $0x70] sm:$0xff]
      %v192 = vld [vmem:[%s167 + $0x78] sm:$0xff]
      %v193 = vpack.c.bf16 %v178, %v177
      %v194 = vpack.c.bf16 %v180, %v179
      %v195 = vpack.c.bf16 %v182, %v181
      %v196 = vpack.c.bf16 %v184, %v183
      %v197 = vpack.c.bf16 %v186, %v185
      %v198 = vpack.c.bf16 %v188, %v187
      %v199 = vpack.c.bf16 %v190, %v189
      %v200 = vpack.c.bf16 %v192, %v191
      %v201 = vld [vmem:[%s1] sm:$0xff]
      %v202 = vld [vmem:[%s1 + $0x8] sm:$0xff]
      %v203 = vld [vmem:[%s1 + $0x10] sm:$0xf]
      %v204 = vld [vmem:[%s1 + $0x14] sm:$0xff]
      %v205 = vld [vmem:[%s1 + $0x1c] sm:$0xff]
      %v206 = vld [vmem:[%s1 + $0x24] sm:$0xf]
      %v207 = vld [vmem:[%s1 + $0x28] sm:$0xff]
      %v208 = vld [vmem:[%s1 + $0x30] sm:$0xff]
      %v209 = vld [vmem:[%s1 + $0x38] sm:$0xf]
      %v210 = vld [vmem:[%s1 + $0x3c] sm:$0xff]
      %v211 = vld [vmem:[%s1 + $0x44] sm:$0xff]
      %v212 = vld [vmem:[%s1 + $0x4c] sm:$0xf]
      %v213 = vld [vmem:[%s1 + $0x50] sm:$0xff]
      %v214 = vld [vmem:[%s1 + $0x58] sm:$0xff]
      %v215 = vld [vmem:[%s1 + $0x60] sm:$0xf]
      %v216 = vld [vmem:[%s1 + $0x64] sm:$0xff]
      %v217 = vld [vmem:[%s1 + $0x6c] sm:$0xff]
      %v218 = vld [vmem:[%s1 + $0x74] sm:$0xf]
      %v219 = vld [vmem:[%s1 + $0x78] sm:$0xff]
      %v220 = vld [vmem:[%s1 + $0x80] sm:$0xff]
      %v221 = vld [vmem:[%s1 + $0x88] sm:$0xf]
      %v222 = vld [vmem:[%s1 + $0x8c] sm:$0xff]
      %v223 = vld [vmem:[%s1 + $0x94] sm:$0xff]
      %v224 = vld [vmem:[%s1 + $0x9c] sm:$0xf]
      %v225 = vld [vmem:[%s1 + $0xa0] sm:$0xff]
      %v226 = vld [vmem:[%s1 + $0xa8] sm:$0xff]
      %v227 = vld [vmem:[%s1 + $0xb0] sm:$0xf]
      %v228 = vld [vmem:[%s1 + $0xb4] sm:$0xff]
      %v229 = vld [vmem:[%s1 + $0xbc] sm:$0xff]
      %v230 = vld [vmem:[%s1 + $0xc4] sm:$0xf]
      %v231 = vld [vmem:[%s1 + $0xc8] sm:$0xff]
      %v232 = vld [vmem:[%s1 + $0xd0] sm:$0xff]
      %v233 = vld [vmem:[%s1 + $0xd8] sm:$0xf]
      %v234 = vld [vmem:[%s1 + $0xdc] sm:$0xff]
      %v235 = vld [vmem:[%s1 + $0xe4] sm:$0xff]
      %v236 = vld [vmem:[%s1 + $0xec] sm:$0xf]
      %v237 = vld [vmem:[%s1 + $0xf0] sm:$0xff]
      %v238 = vld [vmem:[%s1 + $0xf8] sm:$0xff]
      %v239 = vld [vmem:[%s1 + $0x100] sm:$0xf]
      %v240 = vld [vmem:[%s1 + $0x104] sm:$0xff]
      %v241 = vld [vmem:[%s1 + $0x10c] sm:$0xff]
      %v242 = vld [vmem:[%s1 + $0x114] sm:$0xf]
      %v243 = vld [vmem:[%s1 + $0x118] sm:$0xff]
      %v244 = vld [vmem:[%s1 + $0x120] sm:$0xff]
      %v245 = vld [vmem:[%s1 + $0x128] sm:$0xf]
      %v246 = vld [vmem:[%s1 + $0x12c] sm:$0xff]
      %v247 = vld [vmem:[%s1 + $0x134] sm:$0xff]
      %v248 = vld [vmem:[%s1 + $0x13c] sm:$0xf]
      %v249 = vld [vmem:[%s2] sm:$0x1f]
      %v251 = vlaneseq
      %v252 = vshrl.u32 %v251, 7
      %v253 = vsub.s32 0, %v252
      %v254 = vrot.slane %v249, %v253
      %v255 = vlaneseq
      %v256 = vshrl.u32 %v255, 7
      %v257 = vsub.s32 1, %v256
      %v258 = vrot.slane %v249, %v257
      %v259 = vlaneseq
      %v260 = vshrl.u32 %v259, 7
      %v261 = vsub.s32 2, %v260
      %v262 = vrot.slane %v249, %v261
      %v263 = vlaneseq
      %v264 = vshrl.u32 %v263, 7
      %v265 = vsub.s32 3, %v264
      %v266 = vrot.slane %v249, %v265
      %v267 = vlaneseq
      %v268 = vshrl.u32 %v267, 7
      %v269 = vsub.s32 4, %v268
      %v270 = vrot.slane %v249, %v269
      %v324 = vunpack.c.l.b16 %v201
      %v325 = vunpack.c.h.b16 %v201
      %v326 = vunpack.c.l.b16 %v202
      %v327 = vunpack.c.h.b16 %v202
      %v328 = vunpack.c.l.b16 %v203
      %v329 = vunpack.c.l.b16 %v204
      %v330 = vunpack.c.h.b16 %v204
      %v331 = vunpack.c.l.b16 %v205
      %v332 = vunpack.c.h.b16 %v205
      %v333 = vunpack.c.l.b16 %v206
      %v334 = vunpack.c.l.b16 %v207
      %v335 = vunpack.c.h.b16 %v207
      %v336 = vunpack.c.l.b16 %v208
      %v337 = vunpack.c.h.b16 %v208
      %v338 = vunpack.c.l.b16 %v209
      %v339 = vunpack.c.l.b16 %v210
      %v340 = vunpack.c.h.b16 %v210
      %v341 = vunpack.c.l.b16 %v211
      %v342 = vunpack.c.h.b16 %v211
      %v343 = vunpack.c.l.b16 %v212
      %v344 = vunpack.c.l.b16 %v213
      %v345 = vunpack.c.h.b16 %v213
      %v346 = vunpack.c.l.b16 %v214
      %v347 = vunpack.c.h.b16 %v214
      %v348 = vunpack.c.l.b16 %v215
      %v349 = vunpack.c.l.b16 %v216
      %v350 = vunpack.c.h.b16 %v216
      %v351 = vunpack.c.l.b16 %v217
      %v352 = vunpack.c.h.b16 %v217
      %v353 = vunpack.c.l.b16 %v218
      %v354 = vunpack.c.l.b16 %v219
      %v355 = vunpack.c.h.b16 %v219
      %v356 = vunpack.c.l.b16 %v220
      %v357 = vunpack.c.h.b16 %v220
      %v358 = vunpack.c.l.b16 %v221
      %v359 = vunpack.c.l.b16 %v222
      %v360 = vunpack.c.h.b16 %v222
      %v361 = vunpack.c.l.b16 %v223
      %v362 = vunpack.c.h.b16 %v223
      %v363 = vunpack.c.l.b16 %v224
      %v364 = vunpack.c.l.b16 %v225
      %v365 = vunpack.c.h.b16 %v225
      %v366 = vunpack.c.l.b16 %v226
      %v367 = vunpack.c.h.b16 %v226
      %v368 = vunpack.c.l.b16 %v227
      %v369 = vunpack.c.l.b16 %v228
      %v370 = vunpack.c.h.b16 %v228
      %v371 = vunpack.c.l.b16 %v229
      %v372 = vunpack.c.h.b16 %v229
      %v373 = vunpack.c.l.b16 %v230
      %v374 = vunpack.c.l.b16 %v231
      %v375 = vunpack.c.h.b16 %v231
      %v376 = vunpack.c.l.b16 %v232
      %v377 = vunpack.c.h.b16 %v232
      %v378 = vunpack.c.l.b16 %v233
      %v379 = vunpack.c.l.b16 %v234
      %v380 = vunpack.c.h.b16 %v234
      %v381 = vunpack.c.l.b16 %v235
      %v382 = vunpack.c.h.b16 %v235
      %v383 = vunpack.c.l.b16 %v236
      %v384 = vunpack.c.l.b16 %v237
      %v385 = vunpack.c.h.b16 %v237
      %v386 = vunpack.c.l.b16 %v238
      %v387 = vunpack.c.h.b16 %v238
      %v388 = vunpack.c.l.b16 %v239
      %v389 = vunpack.c.l.b16 %v240
      %v390 = vunpack.c.h.b16 %v240
      %v391 = vunpack.c.l.b16 %v241
      %v392 = vunpack.c.h.b16 %v241
      %v393 = vunpack.c.l.b16 %v242
      %v394 = vunpack.c.l.b16 %v243
      %v395 = vunpack.c.h.b16 %v243
      %v396 = vunpack.c.l.b16 %v244
      %v397 = vunpack.c.h.b16 %v244
      %v398 = vunpack.c.l.b16 %v245
      %v399 = vunpack.c.l.b16 %v246
      %v400 = vunpack.c.h.b16 %v246
      %v401 = vunpack.c.l.b16 %v247
      %v402 = vunpack.c.h.b16 %v247
      %v403 = vunpack.c.l.b16 %v248
      %v404 = vpack.c.b16 %v329, %v324
      %v405 = vpack.c.b16 %v330, %v325
      %v406 = vpack.c.b16 %v331, %v326
      %v407 = vpack.c.b16 %v332, %v327
      %v408 = vpack.c.b16 %v333, %v328
      %v409 = vpack.c.b16 %v339, %v334
      %v410 = vpack.c.b16 %v340, %v335
      %v411 = vpack.c.b16 %v341, %v336
      %v412 = vpack.c.b16 %v342, %v337
      %v413 = vpack.c.b16 %v343, %v338
      %v414 = vpack.c.b16 %v349, %v344
      %v415 = vpack.c.b16 %v350, %v345
      %v416 = vpack.c.b16 %v351, %v346
      %v417 = vpack.c.b16 %v352, %v347
      %v418 = vpack.c.b16 %v353, %v348
      %v419 = vpack.c.b16 %v359, %v354
      %v420 = vpack.c.b16 %v360, %v355
      %v421 = vpack.c.b16 %v361, %v356
      %v422 = vpack.c.b16 %v362, %v357
      %v423 = vpack.c.b16 %v363, %v358
      %v424 = vpack.c.b16 %v369, %v364
      %v425 = vpack.c.b16 %v370, %v365
      %v426 = vpack.c.b16 %v371, %v366
      %v427 = vpack.c.b16 %v372, %v367
      %v428 = vpack.c.b16 %v373, %v368
      %v429 = vpack.c.b16 %v379, %v374
      %v430 = vpack.c.b16 %v380, %v375
      %v431 = vpack.c.b16 %v381, %v376
      %v432 = vpack.c.b16 %v382, %v377
      %v433 = vpack.c.b16 %v383, %v378
      %v434 = vpack.c.b16 %v389, %v384
      %v435 = vpack.c.b16 %v390, %v385
      %v436 = vpack.c.b16 %v391, %v386
      %v437 = vpack.c.b16 %v392, %v387
      %v438 = vpack.c.b16 %v393, %v388
      %v439 = vpack.c.b16 %v399, %v394
      %v440 = vpack.c.b16 %v400, %v395
      %v441 = vpack.c.b16 %v401, %v396
      %v442 = vpack.c.b16 %v402, %v397
      %v443 = vpack.c.b16 %v403, %v398
      %484 = vmatprep.subr.bf16.mxu0 %v440
      %485 = vmatpush1.bf16.msra.mxu0 %v439
      %486 = vmatprep.subr.bf16.mxu0 %v435
      %487 = vmatpush1.bf16.msra.mxu0 %v434
      %488 = vmatprep.subr.bf16.mxu0 %v430
      %489 = vmatpush1.bf16.msra.mxu0 %v429
      %490 = vmatprep.subr.bf16.mxu0 %v425
      %491 = vmatpush1.bf16.msra.mxu0 %v424
      %492 = vmatprep.subr.bf16.mxu0 %v420
      %493 = vmatpush1.bf16.msra.mxu0 %v419
      %494 = vmatprep.subr.bf16.mxu0 %v415
      %495 = vmatpush1.bf16.msra.mxu0 %v414
      %496 = vmatprep.subr.bf16.mxu0 %v410
      %497 = vmatpush1.bf16.msra.mxu0 %v409
      %498 = vmatprep.subr.bf16.mxu0 %v405
      %499 = vmatpush1.bf16.msra.mxu0 %v404
      %500 = vmatprep.subr.bf16.mxu0 0
      %501 = vmatpush2.bf16.msra.mxu0 0
      %502 = vmatprep.subr.bf16.mxu0 0
      %503 = vmatpush2.bf16.msra.mxu0 0
      %504 = vmatprep.subr.bf16.mxu0 0
      %505 = vmatpush2.bf16.msra.mxu0 0
      %506 = vmatprep.subr.bf16.mxu0 0
      %507 = vmatpush2.bf16.msra.mxu0 0
      %508 = vmatprep.subr.bf16.mxu0 0
      %509 = vmatpush2.bf16.msra.mxu0 0
      %510 = vmatprep.subr.bf16.mxu0 0
      %511 = vmatpush2.bf16.msra.mxu0 0
      %512 = vmatprep.subr.bf16.mxu0 0
      %513 = vmatpush2.bf16.msra.mxu0 0
      %514 = vmatprep.subr.bf16.mxu0 0
      %515 = vmatpush2.bf16.msra.mxu0 0
      %516 = vmatprep.mubr.bf16.mxu0 0
      %517 = vmatmul.mubr.bf16.gmra.mxu0 %v193
      %v518 = vpop.f32.mrf.mxu0
      %v519 = vadd.f32 %v254, %v518
      %v520 = vpop.f32.mrf.mxu0
      %v521 = vadd.f32 %v258, %v520
      %v522 = vpop.f32.mrf.mxu0
      %v523 = vadd.f32 %v254, %v522
      %v524 = vpop.f32.mrf.mxu0
      %v525 = vadd.f32 %v258, %v524
      %526 = vmatprep.mubr.bf16.mxu0 0
      %527 = vmatmul.mubr.bf16.gmra.mxu0 %v194
      %v528 = vpop.f32.mrf.mxu0
      %v529 = vadd.f32 %v254, %v528
      %v530 = vpop.f32.mrf.mxu0
      %v531 = vadd.f32 %v258, %v530
      %v532 = vpop.f32.mrf.mxu0
      %v533 = vadd.f32 %v254, %v532
      %v534 = vpop.f32.mrf.mxu0
      %v535 = vadd.f32 %v258, %v534
      %536 = vmatprep.mubr.bf16.mxu0 0
      %537 = vmatmul.mubr.bf16.gmra.mxu0 %v195
      %v538 = vpop.f32.mrf.mxu0
      %v539 = vadd.f32 %v254, %v538
      %v540 = vpop.f32.mrf.mxu0
      %v541 = vadd.f32 %v258, %v540
      %v542 = vpop.f32.mrf.mxu0
      %v543 = vadd.f32 %v254, %v542
      %v544 = vpop.f32.mrf.mxu0
      %v545 = vadd.f32 %v258, %v544
      %546 = vmatprep.mubr.bf16.mxu0 0
      %547 = vmatmul.mubr.bf16.gmra.mxu0 %v196
      %v548 = vpop.f32.mrf.mxu0
      %v549 = vadd.f32 %v254, %v548
      %v550 = vpop.f32.mrf.mxu0
      %v551 = vadd.f32 %v258, %v550
      %v552 = vpop.f32.mrf.mxu0
      %v553 = vadd.f32 %v254, %v552
      %v554 = vpop.f32.mrf.mxu0
      %v555 = vadd.f32 %v258, %v554
      %556 = vmatprep.mubr.bf16.mxu0 0
      %557 = vmatmul.mubr.bf16.gmra.mxu0 %v197
      %v558 = vpop.f32.mrf.mxu0
      %v559 = vadd.f32 %v254, %v558
      %v560 = vpop.f32.mrf.mxu0
      %v561 = vadd.f32 %v258, %v560
      %v562 = vpop.f32.mrf.mxu0
      %v563 = vadd.f32 %v254, %v562
      %v564 = vpop.f32.mrf.mxu0
      %v565 = vadd.f32 %v258, %v564
      %566 = vmatprep.mubr.bf16.mxu0 0
      %567 = vmatmul.mubr.bf16.gmra.mxu0 %v198
      %v568 = vpop.f32.mrf.mxu0
      %v569 = vadd.f32 %v254, %v568
      %v570 = vpop.f32.mrf.mxu0
      %v571 = vadd.f32 %v258, %v570
      %v572 = vpop.f32.mrf.mxu0
      %v573 = vadd.f32 %v254, %v572
      %v574 = vpop.f32.mrf.mxu0
      %v575 = vadd.f32 %v258, %v574
      %576 = vmatprep.mubr.bf16.mxu0 0
      %577 = vmatmul.mubr.bf16.gmra.mxu0 %v199
      %v578 = vpop.f32.mrf.mxu0
      %v579 = vadd.f32 %v254, %v578
      %v580 = vpop.f32.mrf.mxu0
      %v581 = vadd.f32 %v258, %v580
      %v582 = vpop.f32.mrf.mxu0
      %v583 = vadd.f32 %v254, %v582
      %v584 = vpop.f32.mrf.mxu0
      %v585 = vadd.f32 %v258, %v584
      %586 = vmatprep.mubr.bf16.mxu0 0
      %587 = vmatmul.mubr.bf16.gmra.mxu0 %v200
      %v588 = vpop.f32.mrf.mxu0
      %v589 = vadd.f32 %v254, %v588
      %v590 = vpop.f32.mrf.mxu0
      %v591 = vadd.f32 %v258, %v590
      %v592 = vpop.f32.mrf.mxu0
      %v593 = vadd.f32 %v254, %v592
      %v594 = vpop.f32.mrf.mxu0
      %v595 = vadd.f32 %v258, %v594
      %596 = vdwg.mxu0
      %597 = vmatprep.subr.bf16.mxu0 %v442
      %598 = vmatpush1.bf16.msra.mxu0 %v441
      %599 = vmatprep.subr.bf16.mxu0 %v437
      %600 = vmatpush1.bf16.msra.mxu0 %v436
      %601 = vmatprep.subr.bf16.mxu0 %v432
      %602 = vmatpush1.bf16.msra.mxu0 %v431
      %603 = vmatprep.subr.bf16.mxu0 %v427
      %604 = vmatpush1.bf16.msra.mxu0 %v426
      %605 = vmatprep.subr.bf16.mxu0 %v422
      %606 = vmatpush1.bf16.msra.mxu0 %v421
      %607 = vmatprep.subr.bf16.mxu0 %v417
      %608 = vmatpush1.bf16.msra.mxu0 %v416
      %609 = vmatprep.subr.bf16.mxu0 %v412
      %610 = vmatpush1.bf16.msra.mxu0 %v411
      %611 = vmatprep.subr.bf16.mxu0 %v407
      %612 = vmatpush1.bf16.msra.mxu0 %v406
      %613 = vmatprep.subr.bf16.mxu0 0
      %614 = vmatpush2.bf16.msra.mxu0 0
      %615 = vmatprep.subr.bf16.mxu0 0
      %616 = vmatpush2.bf16.msra.mxu0 0
      %617 = vmatprep.subr.bf16.mxu0 0
      %618 = vmatpush2.bf16.msra.mxu0 0
      %619 = vmatprep.subr.bf16.mxu0 0
      %620 = vmatpush2.bf16.msra.mxu0 0
      %621 = vmatprep.subr.bf16.mxu0 0
      %622 = vmatpush2.bf16.msra.mxu0 0
      %623 = vmatprep.subr.bf16.mxu0 0
      %624 = vmatpush2.bf16.msra.mxu0 0
      %625 = vmatprep.subr.bf16.mxu0 0
      %626 = vmatpush2.bf16.msra.mxu0 0
      %627 = vmatprep.subr.bf16.mxu0 0
      %628 = vmatpush2.bf16.msra.mxu0 0
      %629 = vmatprep.mubr.bf16.mxu0 0
      %630 = vmatmul.mubr.bf16.gmra.mxu0 %v193
      %v631 = vpop.f32.mrf.mxu0
      %v632 = vadd.f32 %v262, %v631
      %v633 = vpop.f32.mrf.mxu0
      %v634 = vadd.f32 %v266, %v633
      %v635 = vpop.f32.mrf.mxu0
      %v636 = vadd.f32 %v262, %v635
      %v637 = vpop.f32.mrf.mxu0
      %v638 = vadd.f32 %v266, %v637
      %639 = vmatprep.mubr.bf16.mxu0 0
      %640 = vmatmul.mubr.bf16.gmra.mxu0 %v194
      %v641 = vpop.f32.mrf.mxu0
      %v642 = vadd.f32 %v262, %v641
      %v643 = vpop.f32.mrf.mxu0
      %v644 = vadd.f32 %v266, %v643
      %v645 = vpop.f32.mrf.mxu0
      %v646 = vadd.f32 %v262, %v645
      %v647 = vpop.f32.mrf.mxu0
      %v648 = vadd.f32 %v266, %v647
      %649 = vmatprep.mubr.bf16.mxu0 0
      %650 = vmatmul.mubr.bf16.gmra.mxu0 %v195
      %v651 = vpop.f32.mrf.mxu0
      %v652 = vadd.f32 %v262, %v651
      %v653 = vpop.f32.mrf.mxu0
      %v654 = vadd.f32 %v266, %v653
      %v655 = vpop.f32.mrf.mxu0
      %v656 = vadd.f32 %v262, %v655
      %v657 = vpop.f32.mrf.mxu0
      %v658 = vadd.f32 %v266, %v657
      %659 = vmatprep.mubr.bf16.mxu0 0
      %660 = vmatmul.mubr.bf16.gmra.mxu0 %v196
      %v661 = vpop.f32.mrf.mxu0
      %v662 = vadd.f32 %v262, %v661
      %v663 = vpop.f32.mrf.mxu0
      %v664 = vadd.f32 %v266, %v663
      %v665 = vpop.f32.mrf.mxu0
      %v666 = vadd.f32 %v262, %v665
      %v667 = vpop.f32.mrf.mxu0
      %v668 = vadd.f32 %v266, %v667
      %669 = vmatprep.mubr.bf16.mxu0 0
      %670 = vmatmul.mubr.bf16.gmra.mxu0 %v197
      %v671 = vpop.f32.mrf.mxu0
      %v672 = vadd.f32 %v262, %v671
      %v673 = vpop.f32.mrf.mxu0
      %v674 = vadd.f32 %v266, %v673
      %v675 = vpop.f32.mrf.mxu0
      %v676 = vadd.f32 %v262, %v675
      %v677 = vpop.f32.mrf.mxu0
      %v678 = vadd.f32 %v266, %v677
      %679 = vmatprep.mubr.bf16.mxu0 0
      %680 = vmatmul.mubr.bf16.gmra.mxu0 %v198
      %v681 = vpop.f32.mrf.mxu0
      %v682 = vadd.f32 %v262, %v681
      %v683 = vpop.f32.mrf.mxu0
      %v684 = vadd.f32 %v266, %v683
      %v685 = vpop.f32.mrf.mxu0
      %v686 = vadd.f32 %v262, %v685
      %v687 = vpop.f32.mrf.mxu0
      %v688 = vadd.f32 %v266, %v687
      %689 = vmatprep.mubr.bf16.mxu0 0
      %690 = vmatmul.mubr.bf16.gmra.mxu0 %v199
      %v691 = vpop.f32.mrf.mxu0
      %v692 = vadd.f32 %v262, %v691
      %v693 = vpop.f32.mrf.mxu0
      %v694 = vadd.f32 %v266, %v693
      %v695 = vpop.f32.mrf.mxu0
      %v696 = vadd.f32 %v262, %v695
      %v697 = vpop.f32.mrf.mxu0
      %v698 = vadd.f32 %v266, %v697
      %699 = vmatprep.mubr.bf16.mxu0 0
      %700 = vmatmul.mubr.bf16.gmra.mxu0 %v200
      %v701 = vpop.f32.mrf.mxu0
      %v702 = vadd.f32 %v262, %v701
      %v703 = vpop.f32.mrf.mxu0
      %v704 = vadd.f32 %v266, %v703
      %v705 = vpop.f32.mrf.mxu0
      %v706 = vadd.f32 %v262, %v705
      %v707 = vpop.f32.mrf.mxu0
      %v708 = vadd.f32 %v266, %v707
      %709 = vdwg.mxu0
      %710 = vmatprep.subr.bf16.mxu0 0
      %711 = vmatpush1.bf16.msra.mxu0 %v443
      %712 = vmatprep.subr.bf16.mxu0 0
      %713 = vmatpush1.bf16.msra.mxu0 %v438
      %714 = vmatprep.subr.bf16.mxu0 0
      %715 = vmatpush1.bf16.msra.mxu0 %v433
      %716 = vmatprep.subr.bf16.mxu0 0
      %717 = vmatpush1.bf16.msra.mxu0 %v428
      %718 = vmatprep.subr.bf16.mxu0 0
      %719 = vmatpush1.bf16.msra.mxu0 %v423
      %720 = vmatprep.subr.bf16.mxu0 0
      %721 = vmatpush1.bf16.msra.mxu0 %v418
      %722 = vmatprep.subr.bf16.mxu0 0
      %723 = vmatpush1.bf16.msra.mxu0 %v413
      %724 = vmatprep.subr.bf16.mxu0 0
      %725 = vmatpush1.bf16.msra.mxu0 %v408
      %726 = vmatprep.subr.bf16.mxu0 0
      %727 = vmatpush2.bf16.msra.mxu0 0
      %728 = vmatprep.subr.bf16.mxu0 0
      %729 = vmatpush2.bf16.msra.mxu0 0
      %730 = vmatprep.subr.bf16.mxu0 0
      %731 = vmatpush2.bf16.msra.mxu0 0
      %732 = vmatprep.subr.bf16.mxu0 0
      %733 = vmatpush2.bf16.msra.mxu0 0
      %734 = vmatprep.subr.bf16.mxu0 0
      %735 = vmatpush2.bf16.msra.mxu0 0
      %736 = vmatprep.subr.bf16.mxu0 0
      %737 = vmatpush2.bf16.msra.mxu0 0
      %738 = vmatprep.subr.bf16.mxu0 0
      %739 = vmatpush2.bf16.msra.mxu0 0
      %740 = vmatprep.subr.bf16.mxu0 0
      %741 = vmatpush2.bf16.msra.mxu0 0
      %742 = vmatprep.mubr.bf16.mxu0 0
      %743 = vmatmul.mubr.bf16.gmra.mxu0 %v193
      %v744 = vpop.f32.mrf.mxu0
      %v745 = vadd.f32 %v270, %v744
      %v746 = vpop.f32.mrf.mxu0
      %v747 = vpop.f32.mrf.mxu0
      %v748 = vadd.f32 %v270, %v747
      %v749 = vpop.f32.mrf.mxu0
      %750 = vmatprep.mubr.bf16.mxu0 0
      %751 = vmatmul.mubr.bf16.gmra.mxu0 %v194
      %v752 = vpop.f32.mrf.mxu0
      %v753 = vadd.f32 %v270, %v752
      %v754 = vpop.f32.mrf.mxu0
      %v755 = vpop.f32.mrf.mxu0
      %v756 = vadd.f32 %v270, %v755
      %v757 = vpop.f32.mrf.mxu0
      %758 = vmatprep.mubr.bf16.mxu0 0
      %759 = vmatmul.mubr.bf16.gmra.mxu0 %v195
      %v760 = vpop.f32.mrf.mxu0
      %v761 = vadd.f32 %v270, %v760
      %v762 = vpop.f32.mrf.mxu0
      %v763 = vpop.f32.mrf.mxu0
      %v764 = vadd.f32 %v270, %v763
      %v765 = vpop.f32.mrf.mxu0
      %766 = vmatprep.mubr.bf16.mxu0 0
      %767 = vmatmul.mubr.bf16.gmra.mxu0 %v196
      %v768 = vpop.f32.mrf.mxu0
      %v769 = vadd.f32 %v270, %v768
      %v770 = vpop.f32.mrf.mxu0
      %v771 = vpop.f32.mrf.mxu0
      %v772 = vadd.f32 %v270, %v771
      %v773 = vpop.f32.mrf.mxu0
      %774 = vmatprep.mubr.bf16.mxu0 0
      %775 = vmatmul.mubr.bf16.gmra.mxu0 %v197
      %v776 = vpop.f32.mrf.mxu0
      %v777 = vadd.f32 %v270, %v776
      %v778 = vpop.f32.mrf.mxu0
      %v779 = vpop.f32.mrf.mxu0
      %v780 = vadd.f32 %v270, %v779
      %v781 = vpop.f32.mrf.mxu0
      %782 = vmatprep.mubr.bf16.mxu0 0
      %783 = vmatmul.mubr.bf16.gmra.mxu0 %v198
      %v784 = vpop.f32.mrf.mxu0
      %v785 = vadd.f32 %v270, %v784
      %v786 = vpop.f32.mrf.mxu0
      %v787 = vpop.f32.mrf.mxu0
      %v788 = vadd.f32 %v270, %v787
      %v789 = vpop.f32.mrf.mxu0
      %790 = vmatprep.mubr.bf16.mxu0 0
      %791 = vmatmul.mubr.bf16.gmra.mxu0 %v199
      %v792 = vpop.f32.mrf.mxu0
      %v793 = vadd.f32 %v270, %v792
      %v794 = vpop.f32.mrf.mxu0
      %v795 = vpop.f32.mrf.mxu0
      %v796 = vadd.f32 %v270, %v795
      %v797 = vpop.f32.mrf.mxu0
      %798 = vmatprep.mubr.bf16.mxu0 0
      %799 = vmatmul.mubr.bf16.gmra.mxu0 %v200
      %v800 = vpop.f32.mrf.mxu0
      %v801 = vadd.f32 %v270, %v800
      %v802 = vpop.f32.mrf.mxu0
      %v803 = vpop.f32.mrf.mxu0
      %v804 = vadd.f32 %v270, %v803
      %v805 = vpop.f32.mrf.mxu0
      %806 = vdwg.mxu0
      %807 = vst [vmem:[%s174] sm:$0xff] %v519
      %808 = vst [vmem:[%s174 + $0x8] sm:$0xff] %v521
      %809 = vst [vmem:[%s174 + $0x10] sm:$0xff] %v632
      %810 = vst [vmem:[%s174 + $0x18] sm:$0xff] %v634
      %811 = vst [vmem:[%s174 + $0x20] sm:$0xff] %v745
      %812 = vst [vmem:[%s174 + $0x28] sm:$0xff] %v523
      %813 = vst [vmem:[%s174 + $0x30] sm:$0xff] %v525
      %814 = vst [vmem:[%s174 + $0x38] sm:$0xff] %v636
      %815 = vst [vmem:[%s174 + $0x40] sm:$0xff] %v638
      %816 = vst [vmem:[%s174 + $0x48] sm:$0xff] %v748
      %817 = vst [vmem:[%s174 + $0x50] sm:$0xff] %v529
      %818 = vst [vmem:[%s174 + $0x58] sm:$0xff] %v531
      %819 = vst [vmem:[%s174 + $0x60] sm:$0xff] %v642
      %820 = vst [vmem:[%s174 + $0x68] sm:$0xff] %v644
      %821 = vst [vmem:[%s174 + $0x70] sm:$0xff] %v753
      %822 = vst [vmem:[%s174 + $0x78] sm:$0xff] %v533
      %823 = vst [vmem:[%s174 + $0x80] sm:$0xff] %v535
      %824 = vst [vmem:[%s174 + $0x88] sm:$0xff] %v646
      %825 = vst [vmem:[%s174 + $0x90] sm:$0xff] %v648
      %826 = vst [vmem:[%s174 + $0x98] sm:$0xff] %v756
      %827 = vst [vmem:[%s174 + $0xa0] sm:$0xff] %v539
      %828 = vst [vmem:[%s174 + $0xa8] sm:$0xff] %v541
      %829 = vst [vmem:[%s174 + $0xb0] sm:$0xff] %v652
      %830 = vst [vmem:[%s174 + $0xb8] sm:$0xff] %v654
      %831 = vst [vmem:[%s174 + $0xc0] sm:$0xff] %v761
      %832 = vst [vmem:[%s174 + $0xc8] sm:$0xff] %v543
      %833 = vst [vmem:[%s174 + $0xd0] sm:$0xff] %v545
      %834 = vst [vmem:[%s174 + $0xd8] sm:$0xff] %v656
      %835 = vst [vmem:[%s174 + $0xe0] sm:$0xff] %v658
      %836 = vst [vmem:[%s174 + $0xe8] sm:$0xff] %v764
      %837 = vst [vmem:[%s174 + $0xf0] sm:$0xff] %v549
      %838 = vst [vmem:[%s174 + $0xf8] sm:$0xff] %v551
      %839 = vst [vmem:[%s174 + $0x100] sm:$0xff] %v662
      %840 = vst [vmem:[%s174 + $0x108] sm:$0xff] %v664
      %841 = vst [vmem:[%s174 + $0x110] sm:$0xff] %v769
      %842 = vst [vmem:[%s174 + $0x118] sm:$0xff] %v553
      %843 = vst [vmem:[%s174 + $0x120] sm:$0xff] %v555
      %844 = vst [vmem:[%s174 + $0x128] sm:$0xff] %v666
      %845 = vst [vmem:[%s174 + $0x130] sm:$0xff] %v668
      %846 = vst [vmem:[%s174 + $0x138] sm:$0xff] %v772
      %847 = vst [vmem:[%s174 + $0x140] sm:$0xff] %v559
      %848 = vst [vmem:[%s174 + $0x148] sm:$0xff] %v561
      %849 = vst [vmem:[%s174 + $0x150] sm:$0xff] %v672
      %850 = vst [vmem:[%s174 + $0x158] sm:$0xff] %v674
      %851 = vst [vmem:[%s174 + $0x160] sm:$0xff] %v777
      %852 = vst [vmem:[%s174 + $0x168] sm:$0xff] %v563
      %853 = vst [vmem:[%s174 + $0x170] sm:$0xff] %v565
      %854 = vst [vmem:[%s174 + $0x178] sm:$0xff] %v676
      %855 = vst [vmem:[%s174 + $0x180] sm:$0xff] %v678
      %856 = vst [vmem:[%s174 + $0x188] sm:$0xff] %v780
      %857 = vst [vmem:[%s174 + $0x190] sm:$0xff] %v569
      %858 = vst [vmem:[%s174 + $0x198] sm:$0xff] %v571
      %859 = vst [vmem:[%s174 + $0x1a0] sm:$0xff] %v682
      %860 = vst [vmem:[%s174 + $0x1a8] sm:$0xff] %v684
      %861 = vst [vmem:[%s174 + $0x1b0] sm:$0xff] %v785
      %862 = vst [vmem:[%s174 + $0x1b8] sm:$0xff] %v573
      %863 = vst [vmem:[%s174 + $0x1c0] sm:$0xff] %v575
      %864 = vst [vmem:[%s174 + $0x1c8] sm:$0xff] %v686
      %865 = vst [vmem:[%s174 + $0x1d0] sm:$0xff] %v688
      %866 = vst [vmem:[%s174 + $0x1d8] sm:$0xff] %v788
      %867 = vst [vmem:[%s174 + $0x1e0] sm:$0xff] %v579
      %868 = vst [vmem:[%s174 + $0x1e8] sm:$0xff] %v581
      %869 = vst [vmem:[%s174 + $0x1f0] sm:$0xff] %v692
      %870 = vst [vmem:[%s174 + $0x1f8] sm:$0xff] %v694
      %871 = vst [vmem:[%s174 + $0x200] sm:$0xff] %v793
      %872 = vst [vmem:[%s174 + $0x208] sm:$0xff] %v583
      %873 = vst [vmem:[%s174 + $0x210] sm:$0xff] %v585
      %874 = vst [vmem:[%s174 + $0x218] sm:$0xff] %v696
      %875 = vst [vmem:[%s174 + $0x220] sm:$0xff] %v698
      %876 = vst [vmem:[%s174 + $0x228] sm:$0xff] %v796
      %877 = vst [vmem:[%s174 + $0x230] sm:$0xff] %v589
      %878 = vst [vmem:[%s174 + $0x238] sm:$0xff] %v591
      %879 = vst [vmem:[%s174 + $0x240] sm:$0xff] %v702
      %880 = vst [vmem:[%s174 + $0x248] sm:$0xff] %v704
      %881 = vst [vmem:[%s174 + $0x250] sm:$0xff] %v801
      %882 = vst [vmem:[%s174 + $0x258] sm:$0xff] %v593
      %883 = vst [vmem:[%s174 + $0x260] sm:$0xff] %v595
      %884 = vst [vmem:[%s174 + $0x268] sm:$0xff] %v706
      %885 = vst [vmem:[%s174 + $0x270] sm:$0xff] %v708
      %886 = vst [vmem:[%s174 + $0x278] sm:$0xff] %v804
      %s887 = smul.u32 16, %s14
      %p888 = scmp.lt.s32.totalorder %s887, 31
      %s889 = scalar_select %p888, %s887, 31
      %s890 = smul.addr %s889, 5
      %s891 = smul.addr %s890, 8
      %s892 = scalar_lea.vmem %s3, %s891
      // Predicated region
      $region33: #{model_forward.15} parent=31 // pred_check
        %p893 = pneg %p100
      $region34: #{model_forward.15} parent=31 // pred_check_branch
        %895 = sbr.rel (%p893) target = $region36
      $region35: #{model_forward.15} parent=31 // pred_region
        %s896 = smul.u32 16, %s14
      $region36: #{model_forward.15} parent=31 // pred_fallthru
        _
    $region32: #{model_forward.15} parent=5 // pred_fallthru
      _
    %p897 = scmp.le.s32.totalorder 2, %s9
    // Predicated region
    $region37: #{model_forward.15} parent=5 // pred_check
      %p898 = pneg %p897
    $region38: #{model_forward.15} parent=5 // pred_check_branch
      %900 = sbr.rel (%p898) target = $region40
    $region39: #{model_forward.15} parent=5 // pred_region
      %s901 = ssub.s32 %s9, 2
      // Predicated region
      $region41: #{model_forward.15} parent=39 // pred_check
        %p902 = pneg %p106
      $region42: #{model_forward.15} parent=39 // pred_check_branch
        %904 = sbr.rel (%p902) target = $region44
      $region43: #{model_forward.15} parent=39 // pred_region
        %s905 = smul.u32 16, %s15
        %p906 = scmp.lt.s32.totalorder %s905, 31
        %s907 = scalar_select %p906, %s905, 31
        %s908 = smul.addr %s907, 5
        %s909 = smul.addr %s908, 8
        %s910 = scalar_lea.vmem %s3, %s909
      $region44: #{model_forward.15} parent=39 // pred_fallthru
        _
    $region40: #{model_forward.15} parent=5 // pred_fallthru
      _
  $region6: #{model_forward.15} parent=0 // loop_footer
    %s13 = sadd.s32 1, %s9
  $region7: #{model_forward.15} parent=0 // loop_footer_branch
    %8 = sbr.rel target = $region3
  $region8: #{model_forward.15} parent=0 // loop_exit
    _

// kernel: model_forward.14
$region0: #{model_forward.14}
  #allocation0 [shape = 'u32[]', space=smem, size = 0x4, offset = 0x4, fixed_abs, tag = 'smem constant byte address 0x4 - core index']
  #allocation1 [shape = 'u32[144,128]{1,0:T(1,128)}', space=vmem, size = 0x12000, scoped, tag = 'internal scratch']
  %s0 = inlined_call_operand.vmem [shape: f32[512,4], index: 0, kind: input, shape index: {}]
  %s1 = inlined_call_operand.vmem [shape: f32[4,128], index: 1, kind: input, shape index: {}]
  %s2 = inlined_call_operand.vmem [shape: f32[1,128], index: 2, kind: input, shape index: {}]
  %s3 = inlined_call_operand.vmem [shape: bf16[128,128], index: 3, kind: input, shape index: {}]
  %s4 = inlined_call_operand.vmem [shape: f32[1,128], index: 4, kind: input, shape index: {}]
  %s5 = inlined_call_operand.vmem [shape: f32[512,128], index: 5, kind: output, shape index: {}]
  %s6 = sld [smem:[#allocation0]]
  $region53: #{model_forward.14} parent=0
    _
  %s8 = ssub.s32 1, %s6
  %s9 = scalar_select 0, %s8, %s6
  loop: start=0, step=1, limit=6
  $region2: #{model_forward.14} parent=0 // loop_pre_header
    _
  $region3: #{model_forward.14} parent=0 // loop_header
    %s11 = sphi 0, %s15
    %p12 = scmp.ge.s32.totalorder %s11, 6
    %s21 = sphi 0, %s23
    %s24 = sphi 0, %s21
    %s25 = sphi 0, %s24
    %s41 = sphi 0, %s25
    %s45 = sphi 0, %s45
    %s47 = sphi 0, %s45
    %s48 = sphi 0, %s47
    %s62 = sphi 0, %s48
    %s66 = sphi 0, %s66
    %s68 = sphi 0, %s66
    %s69 = sphi 0, %s68
    %s83 = sphi 0, %s69
    %s87 = sphi 0, %s87
    %s89 = sphi 0, %s87
    %s90 = sphi 0, %s89
    %s104 = sphi 0, %s90
    %s108 = sphi 0, %s108
    %s110 = sphi 0, %s108
    %s111 = sphi 0, %s110
    %s125 = sphi 0, %s111
    %s131 = sphi 0, %s133
    %s134 = sphi 0, %s131
    %s135 = sphi 0, %s134
    %s151 = sphi 0, %s135
  $region4: #{model_forward.14} parent=0 // loop_header_branch
    %14 = sbr.rel (%p12) target = $region8
  $region5: #{model_forward.14} parent=0 // loop_body
    %s16 = ssub.s32 %s11, 1
    %s17 = ssub.s32 %s11, 2
    %s18 = sadd.s32 %s11, 1
    %s19 = ssub.s32 %s11, %s18
    %p20 = scmp.eq.s32.totalorder %s19, 0
    %s22 = sadd.s32 %s21, 1
    %s23 = scalar_select %p20, %s21, %s22
    %p26 = pneg %p20
    %p27 = scmp.eq.s32.totalorder %s11, 3
    %p28 = por %p26, %p27
    %p29 = scmp.ne.s32.totalorder %s21, %s24
    %p30 = scmp.eq.s32.totalorder %s11, 0
    %p31 = por %p29, %p30
    %p32 = scmp.ne.s32.totalorder %s21, %s24
    %p33 = scmp.eq.s32.totalorder %s16, 3
    %p34 = por %p32, %p33
    %p35 = scmp.ne.s32.totalorder %s24, %s25
    %p36 = scmp.eq.s32.totalorder %s16, 0
    %p37 = por %p35, %p36
    %p38 = scmp.ne.s32.totalorder %s24, %s25
    %p39 = scmp.eq.s32.totalorder %s17, 3
    %p40 = por %p38, %p39
    %p42 = scmp.ne.s32.totalorder %s25, %s41
    %p43 = scmp.eq.s32.totalorder %s17, 0
    %p44 = por %p42, %p43
    %s46 = sadd.s32 %s45, 1
    %p49 = scmp.eq.s32.totalorder %s11, 3
    %p50 = scmp.ne.s32.totalorder %s45, %s47
    %p51 = scmp.eq.s32.totalorder %s11, 0
    %p52 = por %p50, %p51
    %p53 = scmp.ne.s32.totalorder %s45, %s47
    %p54 = scmp.eq.s32.totalorder %s16, 3
    %p55 = por %p53, %p54
    %p56 = scmp.ne.s32.totalorder %s47, %s48
    %p57 = scmp.eq.s32.totalorder %s16, 0
    %p58 = por %p56, %p57
    %p59 = scmp.ne.s32.totalorder %s47, %s48
    %p60 = scmp.eq.s32.totalorder %s17, 3
    %p61 = por %p59, %p60
    %p63 = scmp.ne.s32.totalorder %s48, %s62
    %p64 = scmp.eq.s32.totalorder %s17, 0
    %p65 = por %p63, %p64
    %s67 = sadd.s32 %s66, 1
    %p70 = scmp.eq.s32.totalorder %s11, 3
    %p71 = scmp.ne.s32.totalorder %s66, %s68
    %p72 = scmp.eq.s32.totalorder %s11, 0
    %p73 = por %p71, %p72
    %p74 = scmp.ne.s32.totalorder %s66, %s68
    %p75 = scmp.eq.s32.totalorder %s16, 3
    %p76 = por %p74, %p75
    %p77 = scmp.ne.s32.totalorder %s68, %s69
    %p78 = scmp.eq.s32.totalorder %s16, 0
    %p79 = por %p77, %p78
    %p80 = scmp.ne.s32.totalorder %s68, %s69
    %p81 = scmp.eq.s32.totalorder %s17, 3
    %p82 = por %p80, %p81
    %p84 = scmp.ne.s32.totalorder %s69, %s83
    %p85 = scmp.eq.s32.totalorder %s17, 0
    %p86 = por %p84, %p85
    %s88 = sadd.s32 %s87, 1
    %p91 = scmp.eq.s32.totalorder %s11, 3
    %p92 = scmp.ne.s32.totalorder %s87, %s89
    %p93 = scmp.eq.s32.totalorder %s11, 0
    %p94 = por %p92, %p93
    %p95 = scmp.ne.s32.totalorder %s87, %s89
    %p96 = scmp.eq.s32.totalorder %s16, 3
    %p97 = por %p95, %p96
    %p98 = scmp.ne.s32.totalorder %s89, %s90
    %p99 = scmp.eq.s32.totalorder %s16, 0
    %p100 = por %p98, %p99
    %p101 = scmp.ne.s32.totalorder %s89, %s90
    %p102 = scmp.eq.s32.totalorder %s17, 3
    %p103 = por %p101, %p102
    %p105 = scmp.ne.s32.totalorder %s90, %s104
    %p106 = scmp.eq.s32.totalorder %s17, 0
    %p107 = por %p105, %p106
    %s109 = sadd.s32 %s108, 1
    %p112 = scmp.eq.s32.totalorder %s11, 3
    %p113 = scmp.ne.s32.totalorder %s108, %s110
    %p114 = scmp.eq.s32.totalorder %s11, 0
    %p115 = por %p113, %p114
    %p116 = scmp.ne.s32.totalorder %s108, %s110
    %p117 = scmp.eq.s32.totalorder %s16, 3
    %p118 = por %p116, %p117
    %p119 = scmp.ne.s32.totalorder %s110, %s111
    %p120 = scmp.eq.s32.totalorder %s16, 0
    %p121 = por %p119, %p120
    %p122 = scmp.ne.s32.totalorder %s110, %s111
    %p123 = scmp.eq.s32.totalorder %s17, 3
    %p124 = por %p122, %p123
    %p126 = scmp.ne.s32.totalorder %s111, %s125
    %p127 = scmp.eq.s32.totalorder %s17, 0
    %p128 = por %p126, %p127
    %s129 = ssub.s32 %s11, %s18
    %p130 = scmp.eq.s32.totalorder %s129, 0
    %s132 = sadd.s32 %s131, 1
    %s133 = scalar_select %p130, %s131, %s132
    %p136 = pneg %p130
    %p137 = scmp.eq.s32.totalorder %s11, 3
    %p138 = por %p136, %p137
    %p139 = scmp.ne.s32.totalorder %s131, %s134
    %p140 = scmp.eq.s32.totalorder %s11, 0
    %p141 = por %p139, %p140
    %p142 = scmp.ne.s32.totalorder %s131, %s134
    %p143 = scmp.eq.s32.totalorder %s16, 3
    %p144 = por %p142, %p143
    %p145 = scmp.ne.s32.totalorder %s134, %s135
    %p146 = scmp.eq.s32.totalorder %s16, 0
    %p147 = por %p145, %p146
    %p148 = scmp.ne.s32.totalorder %s134, %s135
    %p149 = scmp.eq.s32.totalorder %s17, 3
    %p150 = por %p148, %p149
    %p152 = scmp.ne.s32.totalorder %s135, %s151
    %p153 = scmp.eq.s32.totalorder %s17, 0
    %p154 = por %p152, %p153
    %p155 = scmp.le.s32.totalorder 1, %s11
    %p156 = scmp.lt.s32.totalorder %s11, 5
    %p157 = pnand %p155, %p156
    %p158 = pneg %p157
    // Predicated region
    $region9: #{model_forward.14} parent=5 // pred_check
      _
    $region10: #{model_forward.14} parent=5 // pred_check_branch
      %160 = sbr.rel (%p157) target = $region12
    $region11: #{model_forward.14} parent=5 // pred_region
      %s161 = ssub.s32 %s11, 1
      // Predicated region
      $region13: #{model_forward.14} parent=11 // pred_check
        %p162 = pneg %p58
      $region14: #{model_forward.14} parent=11 // pred_check_branch
        %164 = sbr.rel (%p162) target = $region16
      $region15: #{model_forward.14} parent=11 // pred_region
        _
      $region16: #{model_forward.14} parent=11 // pred_fallthru
        _
      // Predicated region
      $region17: #{model_forward.14} parent=11 // pred_check
        %p165 = pneg %p79
      $region18: #{model_forward.14} parent=11 // pred_check_branch
        %167 = sbr.rel (%p165) target = $region20
      $region19: #{model_forward.14} parent=11 // pred_region
        _
      $region20: #{model_forward.14} parent=11 // pred_fallthru
        _
      // Predicated region
      $region21: #{model_forward.14} parent=11 // pred_check
        %p168 = pneg %p100
      $region22: #{model_forward.14} parent=11 // pred_check_branch
        %170 = sbr.rel (%p168) target = $region24
      $region23: #{model_forward.14} parent=11 // pred_region
        _
      $region24: #{model_forward.14} parent=11 // pred_fallthru
        _
      // Predicated region
      $region25: #{model_forward.14} parent=11 // pred_check
        %p171 = pneg %p121
      $region26: #{model_forward.14} parent=11 // pred_check_branch
        %173 = sbr.rel (%p171) target = $region28
      $region27: #{model_forward.14} parent=11 // pred_region
        _
      $region28: #{model_forward.14} parent=11 // pred_fallthru
        _
    $region12: #{model_forward.14} parent=5 // pred_fallthru
      _
    %p174 = scmp.lt.s32.totalorder %s11, 4
    // Predicated region
    $region29: #{model_forward.14} parent=5 // pred_check
      %p175 = pneg %p174
    $region30: #{model_forward.14} parent=5 // pred_check_branch
      %177 = sbr.rel (%p175) target = $region32
    $region31: #{model_forward.14} parent=5 // pred_region
      // Predicated region
      $region33: #{model_forward.14} parent=31 // pred_check
        %p178 = pneg %p31
      $region34: #{model_forward.14} parent=31 // pred_check_branch
        %180 = sbr.rel (%p178) target = $region36
      $region35: #{model_forward.14} parent=31 // pred_region
        %s181 = smul.u32 16, %s11
        %p182 = scmp.lt.s32.totalorder %s181, 63
        %s183 = scalar_select %p182, %s181, 63
        %s184 = smul.addr %s183, 8
        %s185 = scalar_lea.vmem %s0, %s184
        %s186 = smul.u32 16, %s11
      $region36: #{model_forward.14} parent=31 // pred_fallthru
        _
    $region32: #{model_forward.14} parent=5 // pred_fallthru
      _
    %p187 = scmp.le.s32.totalorder 1, %s11
    %p188 = scmp.lt.s32.totalorder %s11, 5
    %p189 = pnand %p187, %p188
    %p190 = pneg %p189
    // Predicated region
    $region37: #{model_forward.14} parent=5 // pred_check
      _
    $region38: #{model_forward.14} parent=5 // pred_check_branch
      %192 = sbr.rel (%p189) target = $region40
    $region39: #{model_forward.14} parent=5 // pred_region
      %s193 = ssub.s32 %s11, 1
      %s194 = smul.u32 16, %s16
      %p195 = scmp.lt.s32.totalorder %s194, 63
      %s196 = scalar_select %p195, %s194, 63
      %s197 = smul.addr %s196, 8
      %s198 = scalar_lea.vmem %s0, %s197
      %p199 = pneg %p37
      %p200 = pneg %p34
      %p201 = pneg %p58
      %p202 = pneg %p55
      %p203 = pneg %p79
      %p204 = pneg %p76
      %p205 = pneg %p100
      %p206 = pneg %p97
      %p207 = pneg %p121
      %p208 = pneg %p118
      %p209 = pneg %p147
      %p210 = pneg %p144
      %s211 = smul.u32 16, %s16
      %p212 = scmp.lt.s32.totalorder %s211, 63
      %s213 = scalar_select %p212, %s211, 63
      %s214 = smul.addr %s213, 8
      %s215 = scalar_lea.vmem %s5, %s214
      %s216 = smul.u32 16, %s16
      %p217 = scmp.lt.s32.totalorder %s216, 63
      %s218 = scalar_select %p217, %s216, 63
      %s219 = smul.addr %s218, 8
      %s220 = scalar_lea.vmem %s0, %s219
      %s221 = smul.u32 16, %s16
      %s222 = smul.u32 16, %s16
      %p223 = scmp.lt.s32.totalorder %s222, 63
      %s224 = scalar_select %p223, %s222, 63
      %s225 = smul.addr %s224, 8
      %s226 = scalar_lea.vmem %s5, %s225
      %s227 = smul.u32 16, %s16
      %v229 = vld [vmem:[%s220] sm:$0xff]
      %v230 = vld [vmem:[%s220 + $0x8] sm:$0xff]
      %v231 = vld [vmem:[%s220 + $0x10] sm:$0xff]
      %v232 = vld [vmem:[%s220 + $0x18] sm:$0xff]
      %v233 = vld [vmem:[%s220 + $0x20] sm:$0xff]
      %v234 = vld [vmem:[%s220 + $0x28] sm:$0xff]
      %v235 = vld [vmem:[%s220 + $0x30] sm:$0xff]
      %v236 = vld [vmem:[%s220 + $0x38] sm:$0xff]
      %v237 = vld [vmem:[%s220 + $0x40] sm:$0xff]
      %v238 = vld [vmem:[%s220 + $0x48] sm:$0xff]
      %v239 = vld [vmem:[%s220 + $0x50] sm:$0xff]
      %v240 = vld [vmem:[%s220 + $0x58] sm:$0xff]
      %v241 = vld [vmem:[%s220 + $0x60] sm:$0xff]
      %v242 = vld [vmem:[%s220 + $0x68] sm:$0xff]
      %v243 = vld [vmem:[%s220 + $0x70] sm:$0xff]
      %v244 = vld [vmem:[%s220 + $0x78] sm:$0xff]
      %v245 = vld [vmem:[%s1] sm:$0xf]
      %v246 = vld [vmem:[%s2] sm:$0x1]
      %v248 = vlaneseq
      %v249 = vshrl.u32 %v248, 7
      %v250 = vsub.s32 0, %v249
      %v251 = vrot.slane %v246, %v250
      %vm253 = vcmask 31744
      %v255 = vsel %vm253, %v229, 0
      %v258 = vsel %vm253, %v230, 0
      %v261 = vsel %vm253, %v231, 0
      %v264 = vsel %vm253, %v232, 0
      %v267 = vsel %vm253, %v233, 0
      %v270 = vsel %vm253, %v234, 0
      %v273 = vsel %vm253, %v235, 0
      %v276 = vsel %vm253, %v236, 0
      %v279 = vsel %vm253, %v237, 0
      %v282 = vsel %vm253, %v238, 0
      %v285 = vsel %vm253, %v239, 0
      %v288 = vsel %vm253, %v240, 0
      %v291 = vsel %vm253, %v241, 0
      %v294 = vsel %vm253, %v242, 0
      %v297 = vsel %vm253, %v243, 0
      %v300 = vsel %vm253, %v244, 0
      %vm302 = vcmask 1043456
      %v304 = vsel %vm302, %v245, 0
      %306 = vmatprep.subr.mxu0 0.0
      %307 = vmatpush1.msra.mxu0 0.0
      %308 = vmatprep.subr.mxu0 0.0
      %309 = vmatpush1.msra.mxu0 0.0
      %310 = vmatprep.subr.mxu0 0.0
      %311 = vmatpush1.msra.mxu0 0.0
      %312 = vmatprep.subr.mxu0 0.0
      %313 = vmatpush1.msra.mxu0 0.0
      %314 = vmatprep.subr.mxu0 0.0
      %315 = vmatpush1.msra.mxu0 0.0
      %316 = vmatprep.subr.mxu0 0.0
      %317 = vmatpush1.msra.mxu0 0.0
      %318 = vmatprep.subr.mxu0 0.0
      %319 = vmatpush1.msra.mxu0 0.0
      %320 = vmatprep.subr.mxu0 0.0
      %321 = vmatpush1.msra.mxu0 0.0
      %322 = vmatprep.subr.mxu0 0.0
      %323 = vmatpush1.msra.mxu0 0.0
      %324 = vmatprep.subr.mxu0 0.0
      %325 = vmatpush1.msra.mxu0 0.0
      %326 = vmatprep.subr.mxu0 0.0
      %327 = vmatpush1.msra.mxu0 0.0
      %328 = vmatprep.subr.mxu0 0.0
      %329 = vmatpush1.msra.mxu0 0.0
      %330 = vmatprep.subr.mxu0 0.0
      %331 = vmatpush1.msra.mxu0 0.0
      %332 = vmatprep.subr.mxu0 0.0
      %333 = vmatpush1.msra.mxu0 0.0
      %334 = vmatprep.subr.mxu0 0.0
      %335 = vmatpush1.msra.mxu0 0.0
      %336 = vmatprep.subr.mxu0 0.0
      %337 = vmatpush1.msra.mxu0 %v304
      %338 = vmatprep.subr.mxu0 0.0
      %339 = vmatpush2.msra.mxu0 0.0
      %340 = vmatprep.subr.mxu0 0.0
      %341 = vmatpush2.msra.mxu0 0.0
      %342 = vmatprep.subr.mxu0 0.0
      %343 = vmatpush2.msra.mxu0 0.0
      %344 = vmatprep.subr.mxu0 0.0
      %345 = vmatpush2.msra.mxu0 0.0
      %346 = vmatprep.subr.mxu0 0.0
      %347 = vmatpush2.msra.mxu0 0.0
      %348 = vmatprep.subr.mxu0 0.0
      %349 = vmatpush2.msra.mxu0 0.0
      %350 = vmatprep.subr.mxu0 0.0
      %351 = vmatpush2.msra.mxu0 0.0
      %352 = vmatprep.subr.mxu0 0.0
      %353 = vmatpush2.msra.mxu0 0.0
      %354 = vmatprep.subr.mxu0 0.0
      %355 = vmatpush2.msra.mxu0 0.0
      %356 = vmatprep.subr.mxu0 0.0
      %357 = vmatpush2.msra.mxu0 0.0
      %358 = vmatprep.subr.mxu0 0.0
      %359 = vmatpush2.msra.mxu0 0.0
      %360 = vmatprep.subr.mxu0 0.0
      %361 = vmatpush2.msra.mxu0 0.0
      %362 = vmatprep.subr.mxu0 0.0
      %363 = vmatpush2.msra.mxu0 0.0
      %364 = vmatprep.subr.mxu0 0.0
      %365 = vmatpush2.msra.mxu0 0.0
      %366 = vmatprep.subr.mxu0 0.0
      %367 = vmatpush2.msra.mxu0 0.0
      %368 = vmatprep.subr.mxu0 0.0
      %369 = vmatpush2.msra.mxu0 0.0
      %370 = vmatprep.mubr.f32.mxu0 0.0
      %371 = vmatmul.mubr.f32.gmra.mxu0 %v255
      %v372 = vpop.f32.mrf.mxu0
      %v373 = vadd.f32 %v251, %v372
      %v374 = vpop.f32.mrf.mxu0
      %375 = vmatprep.mubr.f32.mxu0 0.0
      %376 = vmatmul.mubr.f32.gmra.mxu0 %v258
      %v377 = vpop.f32.mrf.mxu0
      %v378 = vadd.f32 %v251, %v377
      %v379 = vpop.f32.mrf.mxu0
      %380 = vmatprep.mubr.f32.mxu0 0.0
      %381 = vmatmul.mubr.f32.gmra.mxu0 %v261
      %v382 = vpop.f32.mrf.mxu0
      %v383 = vadd.f32 %v251, %v382
      %v384 = vpop.f32.mrf.mxu0
      %385 = vmatprep.mubr.f32.mxu0 0.0
      %386 = vmatmul.mubr.f32.gmra.mxu0 %v264
      %v387 = vpop.f32.mrf.mxu0
      %v388 = vadd.f32 %v251, %v387
      %v389 = vpop.f32.mrf.mxu0
      %390 = vmatprep.mubr.f32.mxu0 0.0
      %391 = vmatmul.mubr.f32.gmra.mxu0 %v267
      %v392 = vpop.f32.mrf.mxu0
      %v393 = vadd.f32 %v251, %v392
      %v394 = vpop.f32.mrf.mxu0
      %395 = vmatprep.mubr.f32.mxu0 0.0
      %396 = vmatmul.mubr.f32.gmra.mxu0 %v270
      %v397 = vpop.f32.mrf.mxu0
      %v398 = vadd.f32 %v251, %v397
      %v399 = vpop.f32.mrf.mxu0
      %400 = vmatprep.mubr.f32.mxu0 0.0
      %401 = vmatmul.mubr.f32.gmra.mxu0 %v273
      %v402 = vpop.f32.mrf.mxu0
      %v403 = vadd.f32 %v251, %v402
      %v404 = vpop.f32.mrf.mxu0
      %405 = vmatprep.mubr.f32.mxu0 0.0
      %406 = vmatmul.mubr.f32.gmra.mxu0 %v276
      %v407 = vpop.f32.mrf.mxu0
      %v408 = vadd.f32 %v251, %v407
      %v409 = vpop.f32.mrf.mxu0
      %410 = vmatprep.mubr.f32.mxu0 0.0
      %411 = vmatmul.mubr.f32.gmra.mxu0 %v279
      %v412 = vpop.f32.mrf.mxu0
      %v413 = vadd.f32 %v251, %v412
      %v414 = vpop.f32.mrf.mxu0
      %415 = vmatprep.mubr.f32.mxu0 0.0
      %416 = vmatmul.mubr.f32.gmra.mxu0 %v282
      %v417 = vpop.f32.mrf.mxu0
      %v418 = vadd.f32 %v251, %v417
      %v419 = vpop.f32.mrf.mxu0
      %420 = vmatprep.mubr.f32.mxu0 0.0
      %421 = vmatmul.mubr.f32.gmra.mxu0 %v285
      %v422 = vpop.f32.mrf.mxu0
      %v423 = vadd.f32 %v251, %v422
      %v424 = vpop.f32.mrf.mxu0
      %425 = vmatprep.mubr.f32.mxu0 0.0
      %426 = vmatmul.mubr.f32.gmra.mxu0 %v288
      %v427 = vpop.f32.mrf.mxu0
      %v428 = vadd.f32 %v251, %v427
      %v429 = vpop.f32.mrf.mxu0
      %430 = vmatprep.mubr.f32.mxu0 0.0
      %431 = vmatmul.mubr.f32.gmra.mxu0 %v291
      %v432 = vpop.f32.mrf.mxu0
      %v433 = vadd.f32 %v251, %v432
      %v434 = vpop.f32.mrf.mxu0
      %435 = vmatprep.mubr.f32.mxu0 0.0
      %436 = vmatmul.mubr.f32.gmra.mxu0 %v294
      %v437 = vpop.f32.mrf.mxu0
      %v438 = vadd.f32 %v251, %v437
      %v439 = vpop.f32.mrf.mxu0
      %440 = vmatprep.mubr.f32.mxu0 0.0
      %441 = vmatmul.mubr.f32.gmra.mxu0 %v297
      %v442 = vpop.f32.mrf.mxu0
      %v443 = vadd.f32 %v251, %v442
      %v444 = vpop.f32.mrf.mxu0
      %445 = vmatprep.mubr.f32.mxu0 0.0
      %446 = vmatmul.mubr.f32.gmra.mxu0 %v300
      %v447 = vpop.f32.mrf.mxu0
      %v448 = vadd.f32 %v251, %v447
      %v449 = vpop.f32.mrf.mxu0
      %450 = vdwg.mxu0
      %v451 = vmax.f32 %v373, 0.0
      %v452 = vmax.f32 %v378, 0.0
      %v453 = vmax.f32 %v383, 0.0
      %v454 = vmax.f32 %v388, 0.0
      %v455 = vmax.f32 %v393, 0.0
      %v456 = vmax.f32 %v398, 0.0
      %v457 = vmax.f32 %v403, 0.0
      %v458 = vmax.f32 %v408, 0.0
      %v459 = vmax.f32 %v413, 0.0
      %v460 = vmax.f32 %v418, 0.0
      %v461 = vmax.f32 %v423, 0.0
      %v462 = vmax.f32 %v428, 0.0
      %v463 = vmax.f32 %v433, 0.0
      %v464 = vmax.f32 %v438, 0.0
      %v465 = vmax.f32 %v443, 0.0
      %v466 = vmax.f32 %v448, 0.0
      %v467 = vpack.c.bf16 %v452, %v451
      %v468 = vpack.c.bf16 %v454, %v453
      %v469 = vpack.c.bf16 %v456, %v455
      %v470 = vpack.c.bf16 %v458, %v457
      %v471 = vpack.c.bf16 %v460, %v459
      %v472 = vpack.c.bf16 %v462, %v461
      %v473 = vpack.c.bf16 %v464, %v463
      %v474 = vpack.c.bf16 %v466, %v465
      %v475 = vld [vmem:[%s3] sm:$0xf]
      %v476 = vld [vmem:[%s3 + $0x4] sm:$0xf]
      %v477 = vld [vmem:[%s3 + $0x8] sm:$0xf]
      %v478 = vld [vmem:[%s3 + $0xc] sm:$0xf]
      %v479 = vld [vmem:[%s3 + $0x10] sm:$0xf]
      %v480 = vld [vmem:[%s3 + $0x14] sm:$0xf]
      %v481 = vld [vmem:[%s3 + $0x18] sm:$0xf]
      %v482 = vld [vmem:[%s3 + $0x1c] sm:$0xf]
      %v483 = vld [vmem:[%s3 + $0x20] sm:$0xf]
      %v484 = vld [vmem:[%s3 + $0x24] sm:$0xf]
      %v485 = vld [vmem:[%s3 + $0x28] sm:$0xf]
      %v486 = vld [vmem:[%s3 + $0x2c] sm:$0xf]
      %v487 = vld [vmem:[%s3 + $0x30] sm:$0xf]
      %v488 = vld [vmem:[%s3 + $0x34] sm:$0xf]
      %v489 = vld [vmem:[%s3 + $0x38] sm:$0xf]
      %v490 = vld [vmem:[%s3 + $0x3c] sm:$0xf]
      %v491 = vld [vmem:[%s4] sm:$0x1]
      %v493 = vlaneseq
      %v494 = vshrl.u32 %v493, 7
      %v495 = vsub.s32 0, %v494
      %v496 = vrot.slane %v491, %v495
      %v514 = vunpack.c.l.b16 %v475
      %v515 = vunpack.c.l.b16 %v476
      %v516 = vunpack.c.l.b16 %v477
      %v517 = vunpack.c.l.b16 %v478
      %v518 = vunpack.c.l.b16 %v479
      %v519 = vunpack.c.l.b16 %v480
      %v520 = vunpack.c.l.b16 %v481
      %v521 = vunpack.c.l.b16 %v482
      %v522 = vunpack.c.l.b16 %v483
      %v523 = vunpack.c.l.b16 %v484
      %v524 = vunpack.c.l.b16 %v485
      %v525 = vunpack.c.l.b16 %v486
      %v526 = vunpack.c.l.b16 %v487
      %v527 = vunpack.c.l.b16 %v488
      %v528 = vunpack.c.l.b16 %v489
      %v529 = vunpack.c.l.b16 %v490
      %v530 = vpack.c.b16 %v515, %v514
      %v531 = vpack.c.b16 %v517, %v516
      %v532 = vpack.c.b16 %v519, %v518
      %v533 = vpack.c.b16 %v521, %v520
      %v534 = vpack.c.b16 %v523, %v522
      %v535 = vpack.c.b16 %v525, %v524
      %v536 = vpack.c.b16 %v527, %v526
      %v537 = vpack.c.b16 %v529, %v528
      %546 = vmatprep.subr.bf16.mxu0 0
      %547 = vmatpush1.bf16.msra.mxu0 %v537
      %548 = vmatprep.subr.bf16.mxu0 0
      %549 = vmatpush1.bf16.msra.mxu0 %v536
      %550 = vmatprep.subr.bf16.mxu0 0
      %551 = vmatpush1.bf16.msra.mxu0 %v535
      %552 = vmatprep.subr.bf16.mxu0 0
      %553 = vmatpush1.bf16.msra.mxu0 %v534
      %554 = vmatprep.subr.bf16.mxu0 0
      %555 = vmatpush1.bf16.msra.mxu0 %v533
      %556 = vmatprep.subr.bf16.mxu0 0
      %557 = vmatpush1.bf16.msra.mxu0 %v532
      %558 = vmatprep.subr.bf16.mxu0 0
      %559 = vmatpush1.bf16.msra.mxu0 %v531
      %560 = vmatprep.subr.bf16.mxu0 0
      %561 = vmatpush1.bf16.msra.mxu0 %v530
      %562 = vmatprep.subr.bf16.mxu0 0
      %563 = vmatpush2.bf16.msra.mxu0 0
      %564 = vmatprep.subr.bf16.mxu0 0
      %565 = vmatpush2.bf16.msra.mxu0 0
      %566 = vmatprep.subr.bf16.mxu0 0
      %567 = vmatpush2.bf16.msra.mxu0 0
      %568 = vmatprep.subr.bf16.mxu0 0
      %569 = vmatpush2.bf16.msra.mxu0 0
      %570 = vmatprep.subr.bf16.mxu0 0
      %571 = vmatpush2.bf16.msra.mxu0 0
      %572 = vmatprep.subr.bf16.mxu0 0
      %573 = vmatpush2.bf16.msra.mxu0 0
      %574 = vmatprep.subr.bf16.mxu0 0
      %575 = vmatpush2.bf16.msra.mxu0 0
      %576 = vmatprep.subr.bf16.mxu0 0
      %577 = vmatpush2.bf16.msra.mxu0 0
      %578 = vmatprep.mubr.bf16.mxu0 0
      %579 = vmatmul.mubr.bf16.gmra.mxu0 %v467
      %v580 = vpop.f32.mrf.mxu0
      %v581 = vadd.f32 %v496, %v580
      %v582 = vpop.f32.mrf.mxu0
      %v583 = vpop.f32.mrf.mxu0
      %v584 = vadd.f32 %v496, %v583
      %v585 = vpop.f32.mrf.mxu0
      %586 = vmatprep.mubr.bf16.mxu0 0
      %587 = vmatmul.mubr.bf16.gmra.mxu0 %v468
      %v588 = vpop.f32.mrf.mxu0
      %v589 = vadd.f32 %v496, %v588
      %v590 = vpop.f32.mrf.mxu0
      %v591 = vpop.f32.mrf.mxu0
      %v592 = vadd.f32 %v496, %v591
      %v593 = vpop.f32.mrf.mxu0
      %594 = vmatprep.mubr.bf16.mxu0 0
      %595 = vmatmul.mubr.bf16.gmra.mxu0 %v469
      %v596 = vpop.f32.mrf.mxu0
      %v597 = vadd.f32 %v496, %v596
      %v598 = vpop.f32.mrf.mxu0
      %v599 = vpop.f32.mrf.mxu0
      %v600 = vadd.f32 %v496, %v599
      %v601 = vpop.f32.mrf.mxu0
      %602 = vmatprep.mubr.bf16.mxu0 0
      %603 = vmatmul.mubr.bf16.gmra.mxu0 %v470
      %v604 = vpop.f32.mrf.mxu0
      %v605 = vadd.f32 %v496, %v604
      %v606 = vpop.f32.mrf.mxu0
      %v607 = vpop.f32.mrf.mxu0
      %v608 = vadd.f32 %v496, %v607
      %v609 = vpop.f32.mrf.mxu0
      %610 = vmatprep.mubr.bf16.mxu0 0
      %611 = vmatmul.mubr.bf16.gmra.mxu0 %v471
      %v612 = vpop.f32.mrf.mxu0
      %v613 = vadd.f32 %v496, %v612
      %v614 = vpop.f32.mrf.mxu0
      %v615 = vpop.f32.mrf.mxu0
      %v616 = vadd.f32 %v496, %v615
      %v617 = vpop.f32.mrf.mxu0
      %618 = vmatprep.mubr.bf16.mxu0 0
      %619 = vmatmul.mubr.bf16.gmra.mxu0 %v472
      %v620 = vpop.f32.mrf.mxu0
      %v621 = vadd.f32 %v496, %v620
      %v622 = vpop.f32.mrf.mxu0
      %v623 = vpop.f32.mrf.mxu0
      %v624 = vadd.f32 %v496, %v623
      %v625 = vpop.f32.mrf.mxu0
      %626 = vmatprep.mubr.bf16.mxu0 0
      %627 = vmatmul.mubr.bf16.gmra.mxu0 %v473
      %v628 = vpop.f32.mrf.mxu0
      %v629 = vadd.f32 %v496, %v628
      %v630 = vpop.f32.mrf.mxu0
      %v631 = vpop.f32.mrf.mxu0
      %v632 = vadd.f32 %v496, %v631
      %v633 = vpop.f32.mrf.mxu0
      %634 = vmatprep.mubr.bf16.mxu0 0
      %635 = vmatmul.mubr.bf16.gmra.mxu0 %v474
      %v636 = vpop.f32.mrf.mxu0
      %v637 = vadd.f32 %v496, %v636
      %v638 = vpop.f32.mrf.mxu0
      %v639 = vpop.f32.mrf.mxu0
      %v640 = vadd.f32 %v496, %v639
      %v641 = vpop.f32.mrf.mxu0
      %642 = vdwg.mxu0
      %643 = vst [vmem:[%s226] sm:$0xff] %v581
      %644 = vst [vmem:[%s226 + $0x8] sm:$0xff] %v584
      %645 = vst [vmem:[%s226 + $0x10] sm:$0xff] %v589
      %646 = vst [vmem:[%s226 + $0x18] sm:$0xff] %v592
      %647 = vst [vmem:[%s226 + $0x20] sm:$0xff] %v597
      %648 = vst [vmem:[%s226 + $0x28] sm:$0xff] %v600
      %649 = vst [vmem:[%s226 + $0x30] sm:$0xff] %v605
      %650 = vst [vmem:[%s226 + $0x38] sm:$0xff] %v608
      %651 = vst [vmem:[%s226 + $0x40] sm:$0xff] %v613
      %652 = vst [vmem:[%s226 + $0x48] sm:$0xff] %v616
      %653 = vst [vmem:[%s226 + $0x50] sm:$0xff] %v621
      %654 = vst [vmem:[%s226 + $0x58] sm:$0xff] %v624
      %655 = vst [vmem:[%s226 + $0x60] sm:$0xff] %v629
      %656 = vst [vmem:[%s226 + $0x68] sm:$0xff] %v632
      %657 = vst [vmem:[%s226 + $0x70] sm:$0xff] %v637
      %658 = vst [vmem:[%s226 + $0x78] sm:$0xff] %v640
      %s659 = smul.u32 16, %s16
      %p660 = scmp.lt.s32.totalorder %s659, 63
      %s661 = scalar_select %p660, %s659, 63
      %s662 = smul.addr %s661, 8
      %s663 = scalar_lea.vmem %s5, %s662
      // Predicated region
      $region41: #{model_forward.14} parent=39 // pred_check
        %p664 = pneg %p144
      $region42: #{model_forward.14} parent=39 // pred_check_branch
        %666 = sbr.rel (%p664) target = $region44
      $region43: #{model_forward.14} parent=39 // pred_region
        %s667 = smul.u32 16, %s16
      $region44: #{model_forward.14} parent=39 // pred_fallthru
        _
    $region40: #{model_forward.14} parent=5 // pred_fallthru
      _
    %p668 = scmp.le.s32.totalorder 2, %s11
    // Predicated region
    $region45: #{model_forward.14} parent=5 // pred_check
      %p669 = pneg %p668
    $region46: #{model_forward.14} parent=5 // pred_check_branch
      %671 = sbr.rel (%p669) target = $region48
    $region47: #{model_forward.14} parent=5 // pred_region
      %s672 = ssub.s32 %s11, 2
      // Predicated region
      $region49: #{model_forward.14} parent=47 // pred_check
        %p673 = pneg %p150
      $region50: #{model_forward.14} parent=47 // pred_check_branch
        %675 = sbr.rel (%p673) target = $region52
      $region51: #{model_forward.14} parent=47 // pred_region
        %s676 = smul.u32 16, %s17
        %p677 = scmp.lt.s32.totalorder %s676, 63
        %s678 = scalar_select %p677, %s676, 63
        %s679 = smul.addr %s678, 8
        %s680 = scalar_lea.vmem %s5, %s679
      $region52: #{model_forward.14} parent=47 // pred_fallthru
        _
    $region48: #{model_forward.14} parent=5 // pred_fallthru
      _
  $region6: #{model_forward.14} parent=0 // loop_footer
    %s15 = sadd.s32 1, %s11
  $region7: #{model_forward.14} parent=0 // loop_footer_branch
    %10 = sbr.rel target = $region3
  $region8: #{model_forward.14} parent=0 // loop_exit
    _

// kernel: model_forward.17
$region0: #{model_forward.17}
  #allocation0 [shape = 'u32[]', space=smem, size = 0x4, offset = 0x4, fixed_abs, tag = 'smem constant byte address 0x4 - core index']
  #allocation1 [shape = 'u32[144,128]{1,0:T(1,128)}', space=vmem, size = 0x12000, scoped, tag = 'internal scratch']
  %s0 = inlined_call_operand.vmem [shape: f32[512,128], index: 0, kind: input, shape index: {}]
  %s1 = inlined_call_operand.vmem [shape: f32[512,128], index: 1, kind: input, shape index: {}]
  %s2 = inlined_call_operand.vmem [shape: f32[512,256], index: 2, kind: input, shape index: {}]
  %s3 = inlined_call_operand.vmem [shape: f32[512,256], index: 3, kind: input, shape index: {}]
  %s4 = inlined_call_operand.vmem [shape: f32[2,128], index: 4, kind: input, shape index: {}]
  %s5 = inlined_call_operand.vmem [shape: f32[1,128], index: 5, kind: input, shape index: {}]
  %s6 = inlined_call_operand.vmem [shape: f32[1,128], index: 6, kind: input, shape index: {}]
  %s7 = inlined_call_operand.vmem [shape: f32[512,128], index: 7, kind: output, shape index: {0}]
  %s8 = inlined_call_operand.vmem [shape: f32[512,128], index: 8, kind: output, shape index: {1}]
  %s9 = inlined_call_operand.vmem [shape: f32[512,128], index: 9, kind: output, shape index: {2}]
  %s10 = inlined_call_operand.vmem [shape: f32[512,128], index: 10, kind: output, shape index: {3}]
  %11 = xla_tuple %s7, %s8, %s9, %s10
  %s12 = sld [smem:[#allocation0]]
  $region161: #{model_forward.17} parent=0
    _
  %s14 = ssub.s32 1, %s12
  %s15 = scalar_select 0, %s14, %s12
  $region1: #{model_forward.17} parent=0
    #allocation2 [shape = 'u8[131072]{0}', space=vmem, size = 0x20000, scoped, tag = 'input window, operand 2']
    #allocation3 [shape = 'u8[131072]{0}', space=vmem, size = 0x20000, scoped, tag = 'input window, operand 3']
    loop: start=0, step=1, limit=6
    $region2: #{model_forward.17} parent=1 // loop_pre_header
      _
    $region3: #{model_forward.17} parent=1 // loop_header
      %s17 = sphi 0, %s21
      %p18 = scmp.ge.s32.totalorder %s17, 6
      %s27 = sphi 0, %s29
      %s30 = sphi 0, %s27
      %s31 = sphi 0, %s30
      %s47 = sphi 0, %s31
      %s53 = sphi 0, %s55
      %s56 = sphi 0, %s53
      %s57 = sphi 0, %s56
      %s73 = sphi 0, %s57
      %s79 = sphi 0, %s81
      %s82 = sphi 0, %s79
      %s83 = sphi 0, %s82
      %s99 = sphi 0, %s83
      %s105 = sphi 0, %s107
      %s108 = sphi 0, %s105
      %s109 = sphi 0, %s108
      %s125 = sphi 0, %s109
      %s129 = sphi 0, %s129
      %s131 = sphi 0, %s129
      %s132 = sphi 0, %s131
      %s146 = sphi 0, %s132
      %s150 = sphi 0, %s150
      %s152 = sphi 0, %s150
      %s153 = sphi 0, %s152
      %s167 = sphi 0, %s153
      %s171 = sphi 0, %s171
      %s173 = sphi 0, %s171
      %s174 = sphi 0, %s173
      %s188 = sphi 0, %s174
      %s194 = sphi 0, %s196
      %s197 = sphi 0, %s194
      %s198 = sphi 0, %s197
      %s214 = sphi 0, %s198
      %s220 = sphi 0, %s222
      %s223 = sphi 0, %s220
      %s224 = sphi 0, %s223
      %s240 = sphi 0, %s224
      %s246 = sphi 0, %s248
      %s249 = sphi 0, %s246
      %s250 = sphi 0, %s249
      %s266 = sphi 0, %s250
      %s272 = sphi 0, %s274
      %s275 = sphi 0, %s272
      %s276 = sphi 0, %s275
      %s292 = sphi 0, %s276
    $region4: #{model_forward.17} parent=1 // loop_header_branch
      %20 = sbr.rel (%p18) target = $region8
    $region5: #{model_forward.17} parent=1 // loop_body
      %s22 = ssub.s32 %s17, 1
      %s23 = ssub.s32 %s17, 2
      %s24 = sadd.s32 %s17, 1
      %s25 = ssub.s32 %s17, %s24
      %p26 = scmp.eq.s32.totalorder %s25, 0
      %s28 = sadd.s32 %s27, 1
      %s29 = scalar_select %p26, %s27, %s28
      %p32 = pneg %p26
      %p33 = scmp.eq.s32.totalorder %s17, 3
      %p34 = por %p32, %p33
      %p35 = scmp.ne.s32.totalorder %s27, %s30
      %p36 = scmp.eq.s32.totalorder %s17, 0
      %p37 = por %p35, %p36
      %p38 = scmp.ne.s32.totalorder %s27, %s30
      %p39 = scmp.eq.s32.totalorder %s22, 3
      %p40 = por %p38, %p39
      %p41 = scmp.ne.s32.totalorder %s30, %s31
      %p42 = scmp.eq.s32.totalorder %s22, 0
      %p43 = por %p41, %p42
      %p44 = scmp.ne.s32.totalorder %s30, %s31
      %p45 = scmp.eq.s32.totalorder %s23, 3
      %p46 = por %p44, %p45
      %p48 = scmp.ne.s32.totalorder %s31, %s47
      %p49 = scmp.eq.s32.totalorder %s23, 0
      %p50 = por %p48, %p49
      %s51 = ssub.s32 %s17, %s24
      %p52 = scmp.eq.s32.totalorder %s51, 0
      %s54 = sadd.s32 %s53, 1
      %s55 = scalar_select %p52, %s53, %s54
      %p58 = pneg %p52
      %p59 = scmp.eq.s32.totalorder %s17, 3
      %p60 = por %p58, %p59
      %p61 = scmp.ne.s32.totalorder %s53, %s56
      %p62 = scmp.eq.s32.totalorder %s17, 0
      %p63 = por %p61, %p62
      %p64 = scmp.ne.s32.totalorder %s53, %s56
      %p65 = scmp.eq.s32.totalorder %s22, 3
      %p66 = por %p64, %p65
      %p67 = scmp.ne.s32.totalorder %s56, %s57
      %p68 = scmp.eq.s32.totalorder %s22, 0
      %p69 = por %p67, %p68
      %p70 = scmp.ne.s32.totalorder %s56, %s57
      %p71 = scmp.eq.s32.totalorder %s23, 3
      %p72 = por %p70, %p71
      %p74 = scmp.ne.s32.totalorder %s57, %s73
      %p75 = scmp.eq.s32.totalorder %s23, 0
      %p76 = por %p74, %p75
      %s77 = ssub.s32 %s17, %s24
      %p78 = scmp.eq.s32.totalorder %s77, 0
      %s80 = sadd.s32 %s79, 1
      %s81 = scalar_select %p78, %s79, %s80
      %p84 = pneg %p78
      %p85 = scmp.eq.s32.totalorder %s17, 3
      %p86 = por %p84, %p85
      %p87 = scmp.ne.s32.totalorder %s79, %s82
      %p88 = scmp.eq.s32.totalorder %s17, 0
      %p89 = por %p87, %p88
      %p90 = scmp.ne.s32.totalorder %s79, %s82
      %p91 = scmp.eq.s32.totalorder %s22, 3
      %p92 = por %p90, %p91
      %p93 = scmp.ne.s32.totalorder %s82, %s83
      %p94 = scmp.eq.s32.totalorder %s22, 0
      %p95 = por %p93, %p94
      %p96 = scmp.ne.s32.totalorder %s82, %s83
      %p97 = scmp.eq.s32.totalorder %s23, 3
      %p98 = por %p96, %p97
      %p100 = scmp.ne.s32.totalorder %s83, %s99
      %p101 = scmp.eq.s32.totalorder %s23, 0
      %p102 = por %p100, %p101
      %s103 = ssub.s32 %s17, %s24
      %p104 = scmp.eq.s32.totalorder %s103, 0
      %s106 = sadd.s32 %s105, 1
      %s107 = scalar_select %p104, %s105, %s106
      %p110 = pneg %p104
      %p111 = scmp.eq.s32.totalorder %s17, 3
      %p112 = por %p110, %p111
      %p113 = scmp.ne.s32.totalorder %s105, %s108
      %p114 = scmp.eq.s32.totalorder %s17, 0
      %p115 = por %p113, %p114
      %p116 = scmp.ne.s32.totalorder %s105, %s108
      %p117 = scmp.eq.s32.totalorder %s22, 3
      %p118 = por %p116, %p117
      %p119 = scmp.ne.s32.totalorder %s108, %s109
      %p120 = scmp.eq.s32.totalorder %s22, 0
      %p121 = por %p119, %p120
      %p122 = scmp.ne.s32.totalorder %s108, %s109
      %p123 = scmp.eq.s32.totalorder %s23, 3
      %p124 = por %p122, %p123
      %p126 = scmp.ne.s32.totalorder %s109, %s125
      %p127 = scmp.eq.s32.totalorder %s23, 0
      %p128 = por %p126, %p127
      %s130 = sadd.s32 %s129, 1
      %p133 = scmp.eq.s32.totalorder %s17, 3
      %p134 = scmp.ne.s32.totalorder %s129, %s131
      %p135 = scmp.eq.s32.totalorder %s17, 0
      %p136 = por %p134, %p135
      %p137 = scmp.ne.s32.totalorder %s129, %s131
      %p138 = scmp.eq.s32.totalorder %s22, 3
      %p139 = por %p137, %p138
      %p140 = scmp.ne.s32.totalorder %s131, %s132
      %p141 = scmp.eq.s32.totalorder %s22, 0
      %p142 = por %p140, %p141
      %p143 = scmp.ne.s32.totalorder %s131, %s132
      %p144 = scmp.eq.s32.totalorder %s23, 3
      %p145 = por %p143, %p144
      %p147 = scmp.ne.s32.totalorder %s132, %s146
      %p148 = scmp.eq.s32.totalorder %s23, 0
      %p149 = por %p147, %p148
      %s151 = sadd.s32 %s150, 1
      %p154 = scmp.eq.s32.totalorder %s17, 3
      %p155 = scmp.ne.s32.totalorder %s150, %s152
      %p156 = scmp.eq.s32.totalorder %s17, 0
      %p157 = por %p155, %p156
      %p158 = scmp.ne.s32.totalorder %s150, %s152
      %p159 = scmp.eq.s32.totalorder %s22, 3
      %p160 = por %p158, %p159
      %p161 = scmp.ne.s32.totalorder %s152, %s153
      %p162 = scmp.eq.s32.totalorder %s22, 0
      %p163 = por %p161, %p162
      %p164 = scmp.ne.s32.totalorder %s152, %s153
      %p165 = scmp.eq.s32.totalorder %s23, 3
      %p166 = por %p164, %p165
      %p168 = scmp.ne.s32.totalorder %s153, %s167
      %p169 = scmp.eq.s32.totalorder %s23, 0
      %p170 = por %p168, %p169
      %s172 = sadd.s32 %s171, 1
      %p175 = scmp.eq.s32.totalorder %s17, 3
      %p176 = scmp.ne.s32.totalorder %s171, %s173
      %p177 = scmp.eq.s32.totalorder %s17, 0
      %p178 = por %p176, %p177
      %p179 = scmp.ne.s32.totalorder %s171, %s173
      %p180 = scmp.eq.s32.totalorder %s22, 3
      %p181 = por %p179, %p180
      %p182 = scmp.ne.s32.totalorder %s173, %s174
      %p183 = scmp.eq.s32.totalorder %s22, 0
      %p184 = por %p182, %p183
      %p185 = scmp.ne.s32.totalorder %s173, %s174
      %p186 = scmp.eq.s32.totalorder %s23, 3
      %p187 = por %p185, %p186
      %p189 = scmp.ne.s32.totalorder %s174, %s188
      %p190 = scmp.eq.s32.totalorder %s23, 0
      %p191 = por %p189, %p190
      %s192 = ssub.s32 %s17, %s24
      %p193 = scmp.eq.s32.totalorder %s192, 0
      %s195 = sadd.s32 %s194, 1
      %s196 = scalar_select %p193, %s194, %s195
      %p199 = pneg %p193
      %p200 = scmp.eq.s32.totalorder %s17, 3
      %p201 = por %p199, %p200
      %p202 = scmp.ne.s32.totalorder %s194, %s197
      %p203 = scmp.eq.s32.totalorder %s17, 0
      %p204 = por %p202, %p203
      %p205 = scmp.ne.s32.totalorder %s194, %s197
      %p206 = scmp.eq.s32.totalorder %s22, 3
      %p207 = por %p205, %p206
      %p208 = scmp.ne.s32.totalorder %s197, %s198
      %p209 = scmp.eq.s32.totalorder %s22, 0
      %p210 = por %p208, %p209
      %p211 = scmp.ne.s32.totalorder %s197, %s198
      %p212 = scmp.eq.s32.totalorder %s23, 3
      %p213 = por %p211, %p212
      %p215 = scmp.ne.s32.totalorder %s198, %s214
      %p216 = scmp.eq.s32.totalorder %s23, 0
      %p217 = por %p215, %p216
      %s218 = ssub.s32 %s17, %s24
      %p219 = scmp.eq.s32.totalorder %s218, 0
      %s221 = sadd.s32 %s220, 1
      %s222 = scalar_select %p219, %s220, %s221
      %p225 = pneg %p219
      %p226 = scmp.eq.s32.totalorder %s17, 3
      %p227 = por %p225, %p226
      %p228 = scmp.ne.s32.totalorder %s220, %s223
      %p229 = scmp.eq.s32.totalorder %s17, 0
      %p230 = por %p228, %p229
      %p231 = scmp.ne.s32.totalorder %s220, %s223
      %p232 = scmp.eq.s32.totalorder %s22, 3
      %p233 = por %p231, %p232
      %p234 = scmp.ne.s32.totalorder %s223, %s224
      %p235 = scmp.eq.s32.totalorder %s22, 0
      %p236 = por %p234, %p235
      %p237 = scmp.ne.s32.totalorder %s223, %s224
      %p238 = scmp.eq.s32.totalorder %s23, 3
      %p239 = por %p237, %p238
      %p241 = scmp.ne.s32.totalorder %s224, %s240
      %p242 = scmp.eq.s32.totalorder %s23, 0
      %p243 = por %p241, %p242
      %s244 = ssub.s32 %s17, %s24
      %p245 = scmp.eq.s32.totalorder %s244, 0
      %s247 = sadd.s32 %s246, 1
      %s248 = scalar_select %p245, %s246, %s247
      %p251 = pneg %p245
      %p252 = scmp.eq.s32.totalorder %s17, 3
      %p253 = por %p251, %p252
      %p254 = scmp.ne.s32.totalorder %s246, %s249
      %p255 = scmp.eq.s32.totalorder %s17, 0
      %p256 = por %p254, %p255
      %p257 = scmp.ne.s32.totalorder %s246, %s249
      %p258 = scmp.eq.s32.totalorder %s22, 3
      %p259 = por %p257, %p258
      %p260 = scmp.ne.s32.totalorder %s249, %s250
      %p261 = scmp.eq.s32.totalorder %s22, 0
      %p262 = por %p260, %p261
      %p263 = scmp.ne.s32.totalorder %s249, %s250
      %p264 = scmp.eq.s32.totalorder %s23, 3
      %p265 = por %p263, %p264
      %p267 = scmp.ne.s32.totalorder %s250, %s266
      %p268 = scmp.eq.s32.totalorder %s23, 0
      %p269 = por %p267, %p268
      %s270 = ssub.s32 %s17, %s24
      %p271 = scmp.eq.s32.totalorder %s270, 0
      %s273 = sadd.s32 %s272, 1
      %s274 = scalar_select %p271, %s272, %s273
      %p277 = pneg %p271
      %p278 = scmp.eq.s32.totalorder %s17, 3
      %p279 = por %p277, %p278
      %p280 = scmp.ne.s32.totalorder %s272, %s275
      %p281 = scmp.eq.s32.totalorder %s17, 0
      %p282 = por %p280, %p281
      %p283 = scmp.ne.s32.totalorder %s272, %s275
      %p284 = scmp.eq.s32.totalorder %s22, 3
      %p285 = por %p283, %p284
      %p286 = scmp.ne.s32.totalorder %s275, %s276
      %p287 = scmp.eq.s32.totalorder %s22, 0
      %p288 = por %p286, %p287
      %p289 = scmp.ne.s32.totalorder %s275, %s276
      %p290 = scmp.eq.s32.totalorder %s23, 3
      %p291 = por %p289, %p290
      %p293 = scmp.ne.s32.totalorder %s276, %s292
      %p294 = scmp.eq.s32.totalorder %s23, 0
      %p295 = por %p293, %p294
      %p296 = scmp.le.s32.totalorder 1, %s17
      %p297 = scmp.lt.s32.totalorder %s17, 5
      %p298 = pnand %p296, %p297
      %p299 = pneg %p298
      // Predicated region
      $region9: #{model_forward.17} parent=5 // pred_check
        _
      $region10: #{model_forward.17} parent=5 // pred_check_branch
        %301 = sbr.rel (%p298) target = $region12
      $region11: #{model_forward.17} parent=5 // pred_region
        %s302 = ssub.s32 %s17, 1
        // Predicated region
        $region13: #{model_forward.17} parent=11 // pred_check
          %p303 = pneg %p142
        $region14: #{model_forward.17} parent=11 // pred_check_branch
          %305 = sbr.rel (%p303) target = $region16
        $region15: #{model_forward.17} parent=11 // pred_region
          _
        $region16: #{model_forward.17} parent=11 // pred_fallthru
          _
        // Predicated region
        $region17: #{model_forward.17} parent=11 // pred_check
          %p306 = pneg %p163
        $region18: #{model_forward.17} parent=11 // pred_check_branch
          %308 = sbr.rel (%p306) target = $region20
        $region19: #{model_forward.17} parent=11 // pred_region
          _
        $region20: #{model_forward.17} parent=11 // pred_fallthru
          _
        // Predicated region
        $region21: #{model_forward.17} parent=11 // pred_check
          %p309 = pneg %p184
        $region22: #{model_forward.17} parent=11 // pred_check_branch
          %311 = sbr.rel (%p309) target = $region24
        $region23: #{model_forward.17} parent=11 // pred_region
          _
        $region24: #{model_forward.17} parent=11 // pred_fallthru
          _
      $region12: #{model_forward.17} parent=5 // pred_fallthru
        _
      %p312 = scmp.lt.s32.totalorder %s17, 4
      // Predicated region
      $region25: #{model_forward.17} parent=5 // pred_check
        %p313 = pneg %p312
      $region26: #{model_forward.17} parent=5 // pred_check_branch
        %315 = sbr.rel (%p313) target = $region28
      $region27: #{model_forward.17} parent=5 // pred_region
        // Predicated region
        $region29: #{model_forward.17} parent=27 // pred_check
          %p316 = pneg %p37
        $region30: #{model_forward.17} parent=27 // pred_check_branch
          %318 = sbr.rel (%p316) target = $region32
        $region31: #{model_forward.17} parent=27 // pred_region
          %s319 = smul.u32 16, %s17
          %p320 = scmp.lt.s32.totalorder %s319, 63
          %s321 = scalar_select %p320, %s319, 63
          %s322 = smul.addr %s321, 8
          %s323 = scalar_lea.vmem %s0, %s322
          %s324 = smul.u32 16, %s17
        $region32: #{model_forward.17} parent=27 // pred_fallthru
          _
        // Predicated region
        $region33: #{model_forward.17} parent=27 // pred_check
          %p325 = pneg %p63
        $region34: #{model_forward.17} parent=27 // pred_check_branch
          %327 = sbr.rel (%p325) target = $region36
        $region35: #{model_forward.17} parent=27 // pred_region
          %s328 = smul.u32 16, %s17
          %p329 = scmp.lt.s32.totalorder %s328, 63
          %s330 = scalar_select %p329, %s328, 63
          %s331 = smul.addr %s330, 8
          %s332 = scalar_lea.vmem %s1, %s331
          %s333 = smul.u32 16, %s17
        $region36: #{model_forward.17} parent=27 // pred_fallthru
          _
        // Predicated region
        $region37: #{model_forward.17} parent=27 // pred_check
          %p334 = pneg %p89
        $region38: #{model_forward.17} parent=27 // pred_check_branch
          %336 = sbr.rel (%p334) target = $region40
        $region39: #{model_forward.17} parent=27 // pred_region
          %s337 = sand.u32 %s79, 1
          %s338 = sand.u32 %s79, 1
          %s339 = smul.addr %s338, 128
          %s340 = scalar_lea.vmem [#allocation2], %s339
          %s341 = smul.u32 16, %s17
          %s342 = smul.addr %s341, 2
          %s343 = smul.addr %s342, 8
          %s344 = scalar_lea.vmem %s2, %s343
          // Predicated region
          $region41: #{model_forward.17} parent=39 // pred_check
            _
          $region42: #{model_forward.17} parent=39 // pred_check_branch
            %346 = sbr.rel (0) target = $region44
          $region43: #{model_forward.17} parent=39 // pred_region
            // Predicated region
            $region45: #{model_forward.17} parent=43 // pred_check
              _
            $region46: #{model_forward.17} parent=43 // pred_check_branch
              %348 = sbr.rel (0) target = $region48
            $region47: #{model_forward.17} parent=43 // pred_region
              // Predicated region
              $region60: #{model_forward.17} parent=47 // pred_check
                _
              $region61: #{model_forward.17} parent=47 // pred_check_branch
                %394 = sbr.rel (0) target = $region63
              $region62: #{model_forward.17} parent=47 // pred_region
                loop: start=0, step=1, limit=1
                $region64: #{model_forward.17} parent=62 // loop_pre_header
                  _
                $region65: #{model_forward.17} parent=62 // loop_header
                  %s396 = sphi 0, %s400
                  %p397 = scmp.ge.s32.totalorder %s396, 1
                  %s401 = sphi %s344, %s344
                  %s402 = sphi %s340, %s340
                $region66: #{model_forward.17} parent=62 // loop_header_branch
                  %399 = sbr.rel (%p397) target = $region70
                $region67: #{model_forward.17} parent=62 // loop_body
                  %v403 = vld [vmem:[%s401] sm:$0xff]
                  %404 = vst [vmem:[%s402] sm:$0xff] %v403
                  %v405 = vld [vmem:[%s401 + $0x10] sm:$0xff]
                  %406 = vst [vmem:[%s402 + $0x8] sm:$0xff] %v405
                  %v407 = vld [vmem:[%s401 + $0x20] sm:$0xff]
                  %408 = vst [vmem:[%s402 + $0x10] sm:$0xff] %v407
                  %v409 = vld [vmem:[%s401 + $0x30] sm:$0xff]
                  %410 = vst [vmem:[%s402 + $0x18] sm:$0xff] %v409
                  %v411 = vld [vmem:[%s401 + $0x40] sm:$0xff]
                  %412 = vst [vmem:[%s402 + $0x20] sm:$0xff] %v411
                  %v413 = vld [vmem:[%s401 + $0x50] sm:$0xff]
                  %414 = vst [vmem:[%s402 + $0x28] sm:$0xff] %v413
                  %v415 = vld [vmem:[%s401 + $0x60] sm:$0xff]
                  %416 = vst [vmem:[%s402 + $0x30] sm:$0xff] %v415
                  %v417 = vld [vmem:[%s401 + $0x70] sm:$0xff]
                  %418 = vst [vmem:[%s402 + $0x38] sm:$0xff] %v417
                  %v419 = vld [vmem:[%s401 + $0x80] sm:$0xff]
                  %420 = vst [vmem:[%s402 + $0x40] sm:$0xff] %v419
                  %v421 = vld [vmem:[%s401 + $0x90] sm:$0xff]
                  %422 = vst [vmem:[%s402 + $0x48] sm:$0xff] %v421
                  %v423 = vld [vmem:[%s401 + $0xa0] sm:$0xff]
                  %424 = vst [vmem:[%s402 + $0x50] sm:$0xff] %v423
                  %v425 = vld [vmem:[%s401 + $0xb0] sm:$0xff]
                  %426 = vst [vmem:[%s402 + $0x58] sm:$0xff] %v425
                  %v427 = vld [vmem:[%s401 + $0xc0] sm:$0xff]
                  %428 = vst [vmem:[%s402 + $0x60] sm:$0xff] %v427
                  %v429 = vld [vmem:[%s401 + $0xd0] sm:$0xff]
                  %430 = vst [vmem:[%s402 + $0x68] sm:$0xff] %v429
                  %v431 = vld [vmem:[%s401 + $0xe0] sm:$0xff]
                  %432 = vst [vmem:[%s402 + $0x70] sm:$0xff] %v431
                  %v433 = vld [vmem:[%s401 + $0xf0] sm:$0xff]
                  %434 = vst [vmem:[%s402 + $0x78] sm:$0xff] %v433
                $region68: #{model_forward.17} parent=62 // loop_footer
                  %s400 = sadd.s32 1, %s396
                $region69: #{model_forward.17} parent=62 // loop_footer_branch
                  %395 = sbr.rel target = $region65
                $region70: #{model_forward.17} parent=62 // loop_exit
                  _
              $region63: #{model_forward.17} parent=47 // pred_fallthru
                _
              // Predicated region
              $region71: #{model_forward.17} parent=47 // pred_check
                _
              $region72: #{model_forward.17} parent=47 // pred_check_branch
                %436 = sbr.rel target = $region74
              $region73: #{model_forward.17} parent=47 // pred_region
                _
              $region74: #{model_forward.17} parent=47 // pred_fallthru
                _
            $region48: #{model_forward.17} parent=43 // pred_fallthru
              _
            // Predicated region
            $region49: #{model_forward.17} parent=43 // pred_check
              _
            $region50: #{model_forward.17} parent=43 // pred_check_branch
              %350 = sbr.rel target = $region52
            $region51: #{model_forward.17} parent=43 // pred_region
              %s352 = ssub.s32 256, 1
              loop: start=0, step=1, limit=1
              $region53: #{model_forward.17} parent=51 // loop_pre_header
                _
              $region54: #{model_forward.17} parent=51 // loop_header
                %s354 = sphi 0, %s358
                %p355 = scmp.ge.s32.totalorder %s354, 1
                %s359 = sphi %s344, %s344
                %s360 = sphi %s340, %s340
              $region55: #{model_forward.17} parent=51 // loop_header_branch
                %357 = sbr.rel (%p355) target = $region59
              $region56: #{model_forward.17} parent=51 // loop_body
                %v361 = vld [vmem:[%s359] sm:%s352]
                %362 = vst [vmem:[%s360] sm:%s352] %v361
                %v363 = vld [vmem:[%s359 + $0x10] sm:%s352]
                %364 = vst [vmem:[%s360 + $0x8] sm:%s352] %v363
                %v365 = vld [vmem:[%s359 + $0x20] sm:%s352]
                %366 = vst [vmem:[%s360 + $0x10] sm:%s352] %v365
                %v367 = vld [vmem:[%s359 + $0x30] sm:%s352]
                %368 = vst [vmem:[%s360 + $0x18] sm:%s352] %v367
                %v369 = vld [vmem:[%s359 + $0x40] sm:%s352]
                %370 = vst [vmem:[%s360 + $0x20] sm:%s352] %v369
                %v371 = vld [vmem:[%s359 + $0x50] sm:%s352]
                %372 = vst [vmem:[%s360 + $0x28] sm:%s352] %v371
                %v373 = vld [vmem:[%s359 + $0x60] sm:%s352]
                %374 = vst [vmem:[%s360 + $0x30] sm:%s352] %v373
                %v375 = vld [vmem:[%s359 + $0x70] sm:%s352]
                %376 = vst [vmem:[%s360 + $0x38] sm:%s352] %v375
                %v377 = vld [vmem:[%s359 + $0x80] sm:%s352]
                %378 = vst [vmem:[%s360 + $0x40] sm:%s352] %v377
                %v379 = vld [vmem:[%s359 + $0x90] sm:%s352]
                %380 = vst [vmem:[%s360 + $0x48] sm:%s352] %v379
                %v381 = vld [vmem:[%s359 + $0xa0] sm:%s352]
                %382 = vst [vmem:[%s360 + $0x50] sm:%s352] %v381
                %v383 = vld [vmem:[%s359 + $0xb0] sm:%s352]
                %384 = vst [vmem:[%s360 + $0x58] sm:%s352] %v383
                %v385 = vld [vmem:[%s359 + $0xc0] sm:%s352]
                %386 = vst [vmem:[%s360 + $0x60] sm:%s352] %v385
                %v387 = vld [vmem:[%s359 + $0xd0] sm:%s352]
                %388 = vst [vmem:[%s360 + $0x68] sm:%s352] %v387
                %v389 = vld [vmem:[%s359 + $0xe0] sm:%s352]
                %390 = vst [vmem:[%s360 + $0x70] sm:%s352] %v389
                %v391 = vld [vmem:[%s359 + $0xf0] sm:%s352]
                %392 = vst [vmem:[%s360 + $0x78] sm:%s352] %v391
              $region57: #{model_forward.17} parent=51 // loop_footer
                %s358 = sadd.s32 1, %s354
              $region58: #{model_forward.17} parent=51 // loop_footer_branch
                %353 = sbr.rel target = $region54
              $region59: #{model_forward.17} parent=51 // loop_exit
                _
            $region52: #{model_forward.17} parent=43 // pred_fallthru
              _
          $region44: #{model_forward.17} parent=39 // pred_fallthru
            _
          %437 = vnop
        $region40: #{model_forward.17} parent=27 // pred_fallthru
          _
        // Predicated region
        $region75: #{model_forward.17} parent=27 // pred_check
          %p438 = pneg %p115
        $region76: #{model_forward.17} parent=27 // pred_check_branch
          %440 = sbr.rel (%p438) target = $region78
        $region77: #{model_forward.17} parent=27 // pred_region
          %s441 = sand.u32 %s105, 1
          %s442 = sand.u32 %s105, 1
          %s443 = smul.addr %s442, 128
          %s444 = scalar_lea.vmem [#allocation3], %s443
          %s445 = smul.u32 16, %s17
          %s446 = smul.addr %s445, 2
          %s447 = smul.addr %s446, 8
          %s448 = scalar_lea.vmem %s3, %s447
          // Predicated region
          $region79: #{model_forward.17} parent=77 // pred_check
            _
          $region80: #{model_forward.17} parent=77 // pred_check_branch
            %450 = sbr.rel (0) target = $region82
          $region81: #{model_forward.17} parent=77 // pred_region
            // Predicated region
            $region83: #{model_forward.17} parent=81 // pred_check
              _
            $region84: #{model_forward.17} parent=81 // pred_check_branch
              %452 = sbr.rel (0) target = $region86
            $region85: #{model_forward.17} parent=81 // pred_region
              // Predicated region
              $region98: #{model_forward.17} parent=85 // pred_check
                _
              $region99: #{model_forward.17} parent=85 // pred_check_branch
                %498 = sbr.rel (0) target = $region101
              $region100: #{model_forward.17} parent=85 // pred_region
                loop: start=0, step=1, limit=1
                $region102: #{model_forward.17} parent=100 // loop_pre_header
                  _
                $region103: #{model_forward.17} parent=100 // loop_header
                  %s500 = sphi 0, %s504
                  %p501 = scmp.ge.s32.totalorder %s500, 1
                  %s505 = sphi %s448, %s448
                  %s506 = sphi %s444, %s444
                $region104: #{model_forward.17} parent=100 // loop_header_branch
                  %503 = sbr.rel (%p501) target = $region108
                $region105: #{model_forward.17} parent=100 // loop_body
                  %v507 = vld [vmem:[%s505] sm:$0xff]
                  %508 = vst [vmem:[%s506] sm:$0xff] %v507
                  %v509 = vld [vmem:[%s505 + $0x10] sm:$0xff]
                  %510 = vst [vmem:[%s506 + $0x8] sm:$0xff] %v509
                  %v511 = vld [vmem:[%s505 + $0x20] sm:$0xff]
                  %512 = vst [vmem:[%s506 + $0x10] sm:$0xff] %v511
                  %v513 = vld [vmem:[%s505 + $0x30] sm:$0xff]
                  %514 = vst [vmem:[%s506 + $0x18] sm:$0xff] %v513
                  %v515 = vld [vmem:[%s505 + $0x40] sm:$0xff]
                  %516 = vst [vmem:[%s506 + $0x20] sm:$0xff] %v515
                  %v517 = vld [vmem:[%s505 + $0x50] sm:$0xff]
                  %518 = vst [vmem:[%s506 + $0x28] sm:$0xff] %v517
                  %v519 = vld [vmem:[%s505 + $0x60] sm:$0xff]
                  %520 = vst [vmem:[%s506 + $0x30] sm:$0xff] %v519
                  %v521 = vld [vmem:[%s505 + $0x70] sm:$0xff]
                  %522 = vst [vmem:[%s506 + $0x38] sm:$0xff] %v521
                  %v523 = vld [vmem:[%s505 + $0x80] sm:$0xff]
                  %524 = vst [vmem:[%s506 + $0x40] sm:$0xff] %v523
                  %v525 = vld [vmem:[%s505 + $0x90] sm:$0xff]
                  %526 = vst [vmem:[%s506 + $0x48] sm:$0xff] %v525
                  %v527 = vld [vmem:[%s505 + $0xa0] sm:$0xff]
                  %528 = vst [vmem:[%s506 + $0x50] sm:$0xff] %v527
                  %v529 = vld [vmem:[%s505 + $0xb0] sm:$0xff]
                  %530 = vst [vmem:[%s506 + $0x58] sm:$0xff] %v529
                  %v531 = vld [vmem:[%s505 + $0xc0] sm:$0xff]
                  %532 = vst [vmem:[%s506 + $0x60] sm:$0xff] %v531
                  %v533 = vld [vmem:[%s505 + $0xd0] sm:$0xff]
                  %534 = vst [vmem:[%s506 + $0x68] sm:$0xff] %v533
                  %v535 = vld [vmem:[%s505 + $0xe0] sm:$0xff]
                  %536 = vst [vmem:[%s506 + $0x70] sm:$0xff] %v535
                  %v537 = vld [vmem:[%s505 + $0xf0] sm:$0xff]
                  %538 = vst [vmem:[%s506 + $0x78] sm:$0xff] %v537
                $region106: #{model_forward.17} parent=100 // loop_footer
                  %s504 = sadd.s32 1, %s500
                $region107: #{model_forward.17} parent=100 // loop_footer_branch
                  %499 = sbr.rel target = $region103
                $region108: #{model_forward.17} parent=100 // loop_exit
                  _
              $region101: #{model_forward.17} parent=85 // pred_fallthru
                _
              // Predicated region
              $region109: #{model_forward.17} parent=85 // pred_check
                _
              $region110: #{model_forward.17} parent=85 // pred_check_branch
                %540 = sbr.rel target = $region112
              $region111: #{model_forward.17} parent=85 // pred_region
                _
              $region112: #{model_forward.17} parent=85 // pred_fallthru
                _
            $region86: #{model_forward.17} parent=81 // pred_fallthru
              _
            // Predicated region
            $region87: #{model_forward.17} parent=81 // pred_check
              _
            $region88: #{model_forward.17} parent=81 // pred_check_branch
              %454 = sbr.rel target = $region90
            $region89: #{model_forward.17} parent=81 // pred_region
              %s456 = ssub.s32 256, 1
              loop: start=0, step=1, limit=1
              $region91: #{model_forward.17} parent=89 // loop_pre_header
                _
              $region92: #{model_forward.17} parent=89 // loop_header
                %s458 = sphi 0, %s462
                %p459 = scmp.ge.s32.totalorder %s458, 1
                %s463 = sphi %s448, %s448
                %s464 = sphi %s444, %s444
              $region93: #{model_forward.17} parent=89 // loop_header_branch
                %461 = sbr.rel (%p459) target = $region97
              $region94: #{model_forward.17} parent=89 // loop_body
                %v465 = vld [vmem:[%s463] sm:%s456]
                %466 = vst [vmem:[%s464] sm:%s456] %v465
                %v467 = vld [vmem:[%s463 + $0x10] sm:%s456]
                %468 = vst [vmem:[%s464 + $0x8] sm:%s456] %v467
                %v469 = vld [vmem:[%s463 + $0x20] sm:%s456]
                %470 = vst [vmem:[%s464 + $0x10] sm:%s456] %v469
                %v471 = vld [vmem:[%s463 + $0x30] sm:%s456]
                %472 = vst [vmem:[%s464 + $0x18] sm:%s456] %v471
                %v473 = vld [vmem:[%s463 + $0x40] sm:%s456]
                %474 = vst [vmem:[%s464 + $0x20] sm:%s456] %v473
                %v475 = vld [vmem:[%s463 + $0x50] sm:%s456]
                %476 = vst [vmem:[%s464 + $0x28] sm:%s456] %v475
                %v477 = vld [vmem:[%s463 + $0x60] sm:%s456]
                %478 = vst [vmem:[%s464 + $0x30] sm:%s456] %v477
                %v479 = vld [vmem:[%s463 + $0x70] sm:%s456]
                %480 = vst [vmem:[%s464 + $0x38] sm:%s456] %v479
                %v481 = vld [vmem:[%s463 + $0x80] sm:%s456]
                %482 = vst [vmem:[%s464 + $0x40] sm:%s456] %v481
                %v483 = vld [vmem:[%s463 + $0x90] sm:%s456]
                %484 = vst [vmem:[%s464 + $0x48] sm:%s456] %v483
                %v485 = vld [vmem:[%s463 + $0xa0] sm:%s456]
                %486 = vst [vmem:[%s464 + $0x50] sm:%s456] %v485
                %v487 = vld [vmem:[%s463 + $0xb0] sm:%s456]
                %488 = vst [vmem:[%s464 + $0x58] sm:%s456] %v487
                %v489 = vld [vmem:[%s463 + $0xc0] sm:%s456]
                %490 = vst [vmem:[%s464 + $0x60] sm:%s456] %v489
                %v491 = vld [vmem:[%s463 + $0xd0] sm:%s456]
                %492 = vst [vmem:[%s464 + $0x68] sm:%s456] %v491
                %v493 = vld [vmem:[%s463 + $0xe0] sm:%s456]
                %494 = vst [vmem:[%s464 + $0x70] sm:%s456] %v493
                %v495 = vld [vmem:[%s463 + $0xf0] sm:%s456]
                %496 = vst [vmem:[%s464 + $0x78] sm:%s456] %v495
              $region95: #{model_forward.17} parent=89 // loop_footer
                %s462 = sadd.s32 1, %s458
              $region96: #{model_forward.17} parent=89 // loop_footer_branch
                %457 = sbr.rel target = $region92
              $region97: #{model_forward.17} parent=89 // loop_exit
                _
            $region90: #{model_forward.17} parent=81 // pred_fallthru
              _
          $region82: #{model_forward.17} parent=77 // pred_fallthru
            _
          %541 = vnop
        $region78: #{model_forward.17} parent=27 // pred_fallthru
          _
      $region28: #{model_forward.17} parent=5 // pred_fallthru
        _
      %p542 = scmp.le.s32.totalorder 1, %s17
      %p543 = scmp.lt.s32.totalorder %s17, 5
      %p544 = pnand %p542, %p543
      %p545 = pneg %p544
      // Predicated region
      $region113: #{model_forward.17} parent=5 // pred_check
        _
      $region114: #{model_forward.17} parent=5 // pred_check_branch
        %547 = sbr.rel (%p544) target = $region116
      $region115: #{model_forward.17} parent=5 // pred_region
        %s548 = ssub.s32 %s17, 1
        %s549 = sand.u32 %s82, 1
        %s550 = sand.u32 %s82, 1
        %s551 = smul.addr %s550, 128
        %s552 = scalar_lea.vmem [#allocation2], %s551
        // Predicated region
        $region117: #{model_forward.17} parent=115 // pred_check
          %p553 = pneg %p95
        $region118: #{model_forward.17} parent=115 // pred_check_branch
          %555 = sbr.rel (%p553) target = $region120
        $region119: #{model_forward.17} parent=115 // pred_region
          _
        $region120: #{model_forward.17} parent=115 // pred_fallthru
          _
        %s556 = sand.u32 %s108, 1
        %s557 = sand.u32 %s108, 1
        %s558 = smul.addr %s557, 128
        %s559 = scalar_lea.vmem [#allocation3], %s558
        // Predicated region
        $region121: #{model_forward.17} parent=115 // pred_check
          %p560 = pneg %p121
        $region122: #{model_forward.17} parent=115 // pred_check_branch
          %562 = sbr.rel (%p560) target = $region124
        $region123: #{model_forward.17} parent=115 // pred_region
          _
        $region124: #{model_forward.17} parent=115 // pred_fallthru
          _
        %s563 = smul.u32 16, %s22
        %p564 = scmp.lt.s32.totalorder %s563, 63
        %s565 = scalar_select %p564, %s563, 63
        %s566 = smul.addr %s565, 8
        %s567 = scalar_lea.vmem %s0, %s566
        %p568 = pneg %p43
        %p569 = pneg %p40
        %s570 = smul.u32 16, %s22
        %p571 = scmp.lt.s32.totalorder %s570, 63
        %s572 = scalar_select %p571, %s570, 63
        %s573 = smul.addr %s572, 8
        %s574 = scalar_lea.vmem %s1, %s573
        %p575 = pneg %p69
        %p576 = pneg %p66
        %s577 = sand.u32 %s82, 1
        %s578 = sand.u32 %s82, 1
        %s579 = smul.addr %s578, 128
        %s580 = scalar_lea.vmem [#allocation2], %s579
        %p581 = pneg %p95
        %p582 = pneg %p92
        %s583 = sand.u32 %s108, 1
        %s584 = sand.u32 %s108, 1
        %s585 = smul.addr %s584, 128
        %s586 = scalar_lea.vmem [#allocation3], %s585
        %p587 = pneg %p121
        %p588 = pneg %p118
        %p589 = pneg %p142
        %p590 = pneg %p139
        %p591 = pneg %p163
        %p592 = pneg %p160
        %p593 = pneg %p184
        %p594 = pneg %p181
        %p595 = pneg %p210
        %p596 = pneg %p207
        %s597 = smul.u32 16, %s22
        %p598 = scmp.lt.s32.totalorder %s597, 63
        %s599 = scalar_select %p598, %s597, 63
        %s600 = smul.addr %s599, 8
        %s601 = scalar_lea.vmem %s7, %s600
        %p602 = pneg %p236
        %p603 = pneg %p233
        %s604 = smul.u32 16, %s22
        %p605 = scmp.lt.s32.totalorder %s604, 63
        %s606 = scalar_select %p605, %s604, 63
        %s607 = smul.addr %s606, 8
        %s608 = scalar_lea.vmem %s8, %s607
        %p609 = pneg %p262
        %p610 = pneg %p259
        %s611 = smul.u32 16, %s22
        %p612 = scmp.lt.s32.totalorder %s611, 63
        %s613 = scalar_select %p612, %s611, 63
        %s614 = smul.addr %s613, 8
        %s615 = scalar_lea.vmem %s9, %s614
        %p616 = pneg %p288
        %p617 = pneg %p285
        %s618 = smul.u32 16, %s22
        %p619 = scmp.lt.s32.totalorder %s618, 63
        %s620 = scalar_select %p619, %s618, 63
        %s621 = smul.addr %s620, 8
        %s622 = scalar_lea.vmem %s10, %s621
        %s623 = smul.u32 16, %s22
        %p624 = scmp.lt.s32.totalorder %s623, 63
        %s625 = scalar_select %p624, %s623, 63
        %s626 = smul.addr %s625, 8
        %s627 = scalar_lea.vmem %s0, %s626
        %s628 = smul.u32 16, %s22
        %s629 = smul.u32 16, %s22
        %p630 = scmp.lt.s32.totalorder %s629, 63
        %s631 = scalar_select %p630, %s629, 63
        %s632 = smul.addr %s631, 8
        %s633 = scalar_lea.vmem %s1, %s632
        %s634 = smul.u32 16, %s22
        %s635 = smul.u32 16, %s22
        %s636 = smul.u32 16, %s22
        %s637 = smul.u32 16, %s22
        %p638 = scmp.lt.s32.totalorder %s637, 63
        %s639 = scalar_select %p638, %s637, 63
        %s640 = smul.addr %s639, 8
        %s641 = scalar_lea.vmem %s7, %s640
        %s642 = smul.u32 16, %s22
        %s643 = smul.u32 16, %s22
        %p644 = scmp.lt.s32.totalorder %s643, 63
        %s645 = scalar_select %p644, %s643, 63
        %s646 = smul.addr %s645, 8
        %s647 = scalar_lea.vmem %s8, %s646
        %s648 = smul.u32 16, %s22
        %s649 = smul.u32 16, %s22
        %p650 = scmp.lt.s32.totalorder %s649, 63
        %s651 = scalar_select %p650, %s649, 63
        %s652 = smul.addr %s651, 8
        %s653 = scalar_lea.vmem %s9, %s652
        %s654 = smul.u32 16, %s22
        %s655 = smul.u32 16, %s22
        %p656 = scmp.lt.s32.totalorder %s655, 63
        %s657 = scalar_select %p656, %s655, 63
        %s658 = smul.addr %s657, 8
        %s659 = scalar_lea.vmem %s10, %s658
        %s660 = smul.u32 16, %s22
        %v661 = vld [vmem:[%s4] sm:$0x1]
        %v662 = vld [vmem:[%s4 + $0x1] sm:$0x1]
        %v663 = vld [vmem:[%s627] sm:$0xff]
        %v664 = vld [vmem:[%s627 + $0x8] sm:$0xff]
        %v665 = vld [vmem:[%s627 + $0x10] sm:$0xff]
        %v666 = vld [vmem:[%s627 + $0x18] sm:$0xff]
        %v667 = vld [vmem:[%s627 + $0x20] sm:$0xff]
        %v668 = vld [vmem:[%s627 + $0x28] sm:$0xff]
        %v669 = vld [vmem:[%s627 + $0x30] sm:$0xff]
        %v670 = vld [vmem:[%s627 + $0x38] sm:$0xff]
        %v671 = vld [vmem:[%s627 + $0x40] sm:$0xff]
        %v672 = vld [vmem:[%s627 + $0x48] sm:$0xff]
        %v673 = vld [vmem:[%s627 + $0x50] sm:$0xff]
        %v674 = vld [vmem:[%s627 + $0x58] sm:$0xff]
        %v675 = vld [vmem:[%s627 + $0x60] sm:$0xff]
        %v676 = vld [vmem:[%s627 + $0x68] sm:$0xff]
        %v677 = vld [vmem:[%s627 + $0x70] sm:$0xff]
        %v678 = vld [vmem:[%s627 + $0x78] sm:$0xff]
        %v679 = vlaneseq
        %v680 = vshrl.u32 %v679, 7
        %v681 = vsub.s32 0, %v680
        %v682 = vrot.slane %v661, %v681
        %v683 = vsub.f32 %v663, %v682
        %v684 = vsub.f32 %v664, %v682
        %v685 = vsub.f32 %v665, %v682
        %v686 = vsub.f32 %v666, %v682
        %v687 = vsub.f32 %v667, %v682
        %v688 = vsub.f32 %v668, %v682
        %v689 = vsub.f32 %v669, %v682
        %v690 = vsub.f32 %v670, %v682
        %v691 = vsub.f32 %v671, %v682
        %v692 = vsub.f32 %v672, %v682
        %v693 = vsub.f32 %v673, %v682
        %v694 = vsub.f32 %v674, %v682
        %v695 = vsub.f32 %v675, %v682
        %v696 = vsub.f32 %v676, %v682
        %v697 = vsub.f32 %v677, %v682
        %v698 = vsub.f32 %v678, %v682
        %v699 = vlaneseq
        %v700 = vshrl.u32 %v699, 7
        %v701 = vsub.s32 0, %v700
        %v702 = vrot.slane %v662, %v701
        %v703 = vmul.f32 %v683, %v702
        %v704 = vmul.f32 %v684, %v702
        %v705 = vmul.f32 %v685, %v702
        %v706 = vmul.f32 %v686, %v702
        %v707 = vmul.f32 %v687, %v702
        %v708 = vmul.f32 %v688, %v702
        %v709 = vmul.f32 %v689, %v702
        %v710 = vmul.f32 %v690, %v702
        %v711 = vmul.f32 %v691, %v702
        %v712 = vmul.f32 %v692, %v702
        %v713 = vmul.f32 %v693, %v702
        %v714 = vmul.f32 %v694, %v702
        %v715 = vmul.f32 %v695, %v702
        %v716 = vmul.f32 %v696, %v702
        %v717 = vmul.f32 %v697, %v702
        %v718 = vmul.f32 %v698, %v702
        %v719 = vld [vmem:[%s5] sm:$0x1]
        %v721 = vlaneseq
        %v722 = vshrl.u32 %v721, 7
        %v723 = vsub.s32 0, %v722
        %v724 = vrot.slane %v719, %v723
        %v726 = vmul.f32 %v703, %v724
        %v727 = vmul.f32 %v704, %v724
        %v728 = vmul.f32 %v705, %v724
        %v729 = vmul.f32 %v706, %v724
        %v730 = vmul.f32 %v707, %v724
        %v731 = vmul.f32 %v708, %v724
        %v732 = vmul.f32 %v709, %v724
        %v733 = vmul.f32 %v710, %v724
        %v734 = vmul.f32 %v711, %v724
        %v735 = vmul.f32 %v712, %v724
        %v736 = vmul.f32 %v713, %v724
        %v737 = vmul.f32 %v714, %v724
        %v738 = vmul.f32 %v715, %v724
        %v739 = vmul.f32 %v716, %v724
        %v740 = vmul.f32 %v717, %v724
        %v741 = vmul.f32 %v718, %v724
        %v742 = vld [vmem:[%s6] sm:$0x1]
        %v744 = vlaneseq
        %v745 = vshrl.u32 %v744, 7
        %v746 = vsub.s32 0, %v745
        %v747 = vrot.slane %v742, %v746
        %v749 = vadd.f32 %v726, %v747
        %v750 = vadd.f32 %v727, %v747
        %v751 = vadd.f32 %v728, %v747
        %v752 = vadd.f32 %v729, %v747
        %v753 = vadd.f32 %v730, %v747
        %v754 = vadd.f32 %v731, %v747
        %v755 = vadd.f32 %v732, %v747
        %v756 = vadd.f32 %v733, %v747
        %v757 = vadd.f32 %v734, %v747
        %v758 = vadd.f32 %v735, %v747
        %v759 = vadd.f32 %v736, %v747
        %v760 = vadd.f32 %v737, %v747
        %v761 = vadd.f32 %v738, %v747
        %v762 = vadd.f32 %v739, %v747
        %v763 = vadd.f32 %v740, %v747
        %v764 = vadd.f32 %v741, %v747
        %v765 = vld [vmem:[%s633] sm:$0xff]
        %v766 = vld [vmem:[%s633 + $0x8] sm:$0xff]
        %v767 = vld [vmem:[%s633 + $0x10] sm:$0xff]
        %v768 = vld [vmem:[%s633 + $0x18] sm:$0xff]
        %v769 = vld [vmem:[%s633 + $0x20] sm:$0xff]
        %v770 = vld [vmem:[%s633 + $0x28] sm:$0xff]
        %v771 = vld [vmem:[%s633 + $0x30] sm:$0xff]
        %v772 = vld [vmem:[%s633 + $0x38] sm:$0xff]
        %v773 = vld [vmem:[%s633 + $0x40] sm:$0xff]
        %v774 = vld [vmem:[%s633 + $0x48] sm:$0xff]
        %v775 = vld [vmem:[%s633 + $0x50] sm:$0xff]
        %v776 = vld [vmem:[%s633 + $0x58] sm:$0xff]
        %v777 = vld [vmem:[%s633 + $0x60] sm:$0xff]
        %v778 = vld [vmem:[%s633 + $0x68] sm:$0xff]
        %v779 = vld [vmem:[%s633 + $0x70] sm:$0xff]
        %v780 = vld [vmem:[%s633 + $0x78] sm:$0xff]
        %v781 = vmax.f32 %v749, 0.0
        %v782 = vmax.f32 %v750, 0.0
        %v783 = vmax.f32 %v751, 0.0
        %v784 = vmax.f32 %v752, 0.0
        %v785 = vmax.f32 %v753, 0.0
        %v786 = vmax.f32 %v754, 0.0
        %v787 = vmax.f32 %v755, 0.0
        %v788 = vmax.f32 %v756, 0.0
        %v789 = vmax.f32 %v757, 0.0
        %v790 = vmax.f32 %v758, 0.0
        %v791 = vmax.f32 %v759, 0.0
        %v792 = vmax.f32 %v760, 0.0
        %v793 = vmax.f32 %v761, 0.0
        %v794 = vmax.f32 %v762, 0.0
        %v795 = vmax.f32 %v763, 0.0
        %v796 = vmax.f32 %v764, 0.0
        %v797 = vadd.f32 %v765, %v781
        %v798 = vadd.f32 %v766, %v782
        %v799 = vadd.f32 %v767, %v783
        %v800 = vadd.f32 %v768, %v784
        %v801 = vadd.f32 %v769, %v785
        %v802 = vadd.f32 %v770, %v786
        %v803 = vadd.f32 %v771, %v787
        %v804 = vadd.f32 %v772, %v788
        %v805 = vadd.f32 %v773, %v789
        %v806 = vadd.f32 %v774, %v790
        %v807 = vadd.f32 %v775, %v791
        %v808 = vadd.f32 %v776, %v792
        %v809 = vadd.f32 %v777, %v793
        %v810 = vadd.f32 %v778, %v794
        %v811 = vadd.f32 %v779, %v795
        %v812 = vadd.f32 %v780, %v796
        %v813 = vxor.u32 %v797, 2147483648
        %v814 = vxor.u32 %v798, 2147483648
        %v815 = vxor.u32 %v799, 2147483648
        %v816 = vxor.u32 %v800, 2147483648
        %v817 = vxor.u32 %v801, 2147483648
        %v818 = vxor.u32 %v802, 2147483648
        %v819 = vxor.u32 %v803, 2147483648
        %v820 = vxor.u32 %v804, 2147483648
        %v821 = vxor.u32 %v805, 2147483648
        %v822 = vxor.u32 %v806, 2147483648
        %v823 = vxor.u32 %v807, 2147483648
        %v824 = vxor.u32 %v808, 2147483648
        %v825 = vxor.u32 %v809, 2147483648
        %v826 = vxor.u32 %v810, 2147483648
        %v827 = vxor.u32 %v811, 2147483648
        %v828 = vxor.u32 %v812, 2147483648
        %v829 = vmul.f32 %v813, 1.442695
        %v830 = vpow.pop %v829
        %v831 = vmul.f32 %v814, 1.442695
        %v832 = vpow.pop %v831
        %v833 = vmul.f32 %v815, 1.442695
        %v834 = vpow.pop %v833
        %v835 = vmul.f32 %v816, 1.442695
        %v836 = vpow.pop %v835
        %v837 = vmul.f32 %v817, 1.442695
        %v838 = vpow.pop %v837
        %v839 = vmul.f32 %v818, 1.442695
        %v840 = vpow.pop %v839
        %v841 = vmul.f32 %v819, 1.442695
        %v842 = vpow.pop %v841
        %v843 = vmul.f32 %v820, 1.442695
        %v844 = vpow.pop %v843
        %v845 = vmul.f32 %v821, 1.442695
        %v846 = vpow.pop %v845
        %v847 = vmul.f32 %v822, 1.442695
        %v848 = vpow.pop %v847
        %v849 = vmul.f32 %v823, 1.442695
        %v850 = vpow.pop %v849
        %v851 = vmul.f32 %v824, 1.442695
        %v852 = vpow.pop %v851
        %v853 = vmul.f32 %v825, 1.442695
        %v854 = vpow.pop %v853
        %v855 = vmul.f32 %v826, 1.442695
        %v856 = vpow.pop %v855
        %v857 = vmul.f32 %v827, 1.442695
        %v858 = vpow.pop %v857
        %v859 = vmul.f32 %v828, 1.442695
        %v860 = vpow.pop %v859
        %v861 = vadd.f32 %v830, 1.0
        %v862 = vadd.f32 %v832, 1.0
        %v863 = vadd.f32 %v834, 1.0
        %v864 = vadd.f32 %v836, 1.0
        %v865 = vadd.f32 %v838, 1.0
        %v866 = vadd.f32 %v840, 1.0
        %v867 = vadd.f32 %v842, 1.0
        %v868 = vadd.f32 %v844, 1.0
        %v869 = vadd.f32 %v846, 1.0
        %v870 = vadd.f32 %v848, 1.0
        %v871 = vadd.f32 %v850, 1.0
        %v872 = vadd.f32 %v852, 1.0
        %v873 = vadd.f32 %v854, 1.0
        %v874 = vadd.f32 %v856, 1.0
        %v875 = vadd.f32 %v858, 1.0
        %v876 = vadd.f32 %v860, 1.0
        %v877 = vrcp.pop %v861
        %v878 = vmul.f32 1.0, %v877
        %v879 = vrcp.pop %v862
        %v880 = vmul.f32 1.0, %v879
        %v881 = vrcp.pop %v863
        %v882 = vmul.f32 1.0, %v881
        %v883 = vrcp.pop %v864
        %v884 = vmul.f32 1.0, %v883
        %v885 = vrcp.pop %v865
        %v886 = vmul.f32 1.0, %v885
        %v887 = vrcp.pop %v866
        %v888 = vmul.f32 1.0, %v887
        %v889 = vrcp.pop %v867
        %v890 = vmul.f32 1.0, %v889
        %v891 = vrcp.pop %v868
        %v892 = vmul.f32 1.0, %v891
        %v893 = vrcp.pop %v869
        %v894 = vmul.f32 1.0, %v893
        %v895 = vrcp.pop %v870
        %v896 = vmul.f32 1.0, %v895
        %v897 = vrcp.pop %v871
        %v898 = vmul.f32 1.0, %v897
        %v899 = vrcp.pop %v872
        %v900 = vmul.f32 1.0, %v899
        %v901 = vrcp.pop %v873
        %v902 = vmul.f32 1.0, %v901
        %v903 = vrcp.pop %v874
        %v904 = vmul.f32 1.0, %v903
        %v905 = vrcp.pop %v875
        %v906 = vmul.f32 1.0, %v905
        %v907 = vrcp.pop %v876
        %v908 = vmul.f32 1.0, %v907
        %909 = vst [vmem:[%s641] sm:$0xff] %v797
        %910 = vst [vmem:[%s641 + $0x8] sm:$0xff] %v798
        %911 = vst [vmem:[%s641 + $0x10] sm:$0xff] %v799
        %912 = vst [vmem:[%s641 + $0x18] sm:$0xff] %v800
        %913 = vst [vmem:[%s641 + $0x20] sm:$0xff] %v801
        %914 = vst [vmem:[%s641 + $0x28] sm:$0xff] %v802
        %915 = vst [vmem:[%s641 + $0x30] sm:$0xff] %v803
        %916 = vst [vmem:[%s641 + $0x38] sm:$0xff] %v804
        %917 = vst [vmem:[%s641 + $0x40] sm:$0xff] %v805
        %918 = vst [vmem:[%s641 + $0x48] sm:$0xff] %v806
        %919 = vst [vmem:[%s641 + $0x50] sm:$0xff] %v807
        %920 = vst [vmem:[%s641 + $0x58] sm:$0xff] %v808
        %921 = vst [vmem:[%s641 + $0x60] sm:$0xff] %v809
        %922 = vst [vmem:[%s641 + $0x68] sm:$0xff] %v810
        %923 = vst [vmem:[%s641 + $0x70] sm:$0xff] %v811
        %924 = vst [vmem:[%s641 + $0x78] sm:$0xff] %v812
        %925 = vst [vmem:[%s647] sm:$0xff] %v878
        %926 = vst [vmem:[%s647 + $0x8] sm:$0xff] %v880
        %927 = vst [vmem:[%s647 + $0x10] sm:$0xff] %v882
        %928 = vst [vmem:[%s647 + $0x18] sm:$0xff] %v884
        %929 = vst [vmem:[%s647 + $0x20] sm:$0xff] %v886
        %930 = vst [vmem:[%s647 + $0x28] sm:$0xff] %v888
        %931 = vst [vmem:[%s647 + $0x30] sm:$0xff] %v890
        %932 = vst [vmem:[%s647 + $0x38] sm:$0xff] %v892
        %933 = vst [vmem:[%s647 + $0x40] sm:$0xff] %v894
        %934 = vst [vmem:[%s647 + $0x48] sm:$0xff] %v896
        %935 = vst [vmem:[%s647 + $0x50] sm:$0xff] %v898
        %936 = vst [vmem:[%s647 + $0x58] sm:$0xff] %v900
        %937 = vst [vmem:[%s647 + $0x60] sm:$0xff] %v902
        %938 = vst [vmem:[%s647 + $0x68] sm:$0xff] %v904
        %939 = vst [vmem:[%s647 + $0x70] sm:$0xff] %v906
        %940 = vst [vmem:[%s647 + $0x78] sm:$0xff] %v908
        %v941 = vld [vmem:[%s552] sm:$0xff]
        %v942 = vld [vmem:[%s552 + $0x8] sm:$0xff]
        %v943 = vld [vmem:[%s552 + $0x10] sm:$0xff]
        %v944 = vld [vmem:[%s552 + $0x18] sm:$0xff]
        %v945 = vld [vmem:[%s552 + $0x20] sm:$0xff]
        %v946 = vld [vmem:[%s552 + $0x28] sm:$0xff]
        %v947 = vld [vmem:[%s552 + $0x30] sm:$0xff]
        %v948 = vld [vmem:[%s552 + $0x38] sm:$0xff]
        %v949 = vld [vmem:[%s552 + $0x40] sm:$0xff]
        %v950 = vld [vmem:[%s552 + $0x48] sm:$0xff]
        %v951 = vld [vmem:[%s552 + $0x50] sm:$0xff]
        %v952 = vld [vmem:[%s552 + $0x58] sm:$0xff]
        %v953 = vld [vmem:[%s552 + $0x60] sm:$0xff]
        %v954 = vld [vmem:[%s552 + $0x68] sm:$0xff]
        %v955 = vld [vmem:[%s552 + $0x70] sm:$0xff]
        %v956 = vld [vmem:[%s552 + $0x78] sm:$0xff]
        %v957 = vmul.f32 %v878, %v941
        %v958 = vmul.f32 %v880, %v942
        %v959 = vmul.f32 %v882, %v943
        %v960 = vmul.f32 %v884, %v944
        %v961 = vmul.f32 %v886, %v945
        %v962 = vmul.f32 %v888, %v946
        %v963 = vmul.f32 %v890, %v947
        %v964 = vmul.f32 %v892, %v948
        %v965 = vmul.f32 %v894, %v949
        %v966 = vmul.f32 %v896, %v950
        %v967 = vmul.f32 %v898, %v951
        %v968 = vmul.f32 %v900, %v952
        %v969 = vmul.f32 %v902, %v953
        %v970 = vmul.f32 %v904, %v954
        %v971 = vmul.f32 %v906, %v955
        %v972 = vmul.f32 %v908, %v956
        %973 = vst [vmem:[%s653] sm:$0xff] %v957
        %974 = vst [vmem:[%s653 + $0x8] sm:$0xff] %v958
        %975 = vst [vmem:[%s653 + $0x10] sm:$0xff] %v959
        %976 = vst [vmem:[%s653 + $0x18] sm:$0xff] %v960
        %977 = vst [vmem:[%s653 + $0x20] sm:$0xff] %v961
        %978 = vst [vmem:[%s653 + $0x28] sm:$0xff] %v962
        %979 = vst [vmem:[%s653 + $0x30] sm:$0xff] %v963
        %980 = vst [vmem:[%s653 + $0x38] sm:$0xff] %v964
        %981 = vst [vmem:[%s653 + $0x40] sm:$0xff] %v965
        %982 = vst [vmem:[%s653 + $0x48] sm:$0xff] %v966
        %983 = vst [vmem:[%s653 + $0x50] sm:$0xff] %v967
        %984 = vst [vmem:[%s653 + $0x58] sm:$0xff] %v968
        %985 = vst [vmem:[%s653 + $0x60] sm:$0xff] %v969
        %986 = vst [vmem:[%s653 + $0x68] sm:$0xff] %v970
        %987 = vst [vmem:[%s653 + $0x70] sm:$0xff] %v971
        %988 = vst [vmem:[%s653 + $0x78] sm:$0xff] %v972
        %v989 = vld [vmem:[%s559] sm:$0xff]
        %v990 = vld [vmem:[%s559 + $0x8] sm:$0xff]
        %v991 = vld [vmem:[%s559 + $0x10] sm:$0xff]
        %v992 = vld [vmem:[%s559 + $0x18] sm:$0xff]
        %v993 = vld [vmem:[%s559 + $0x20] sm:$0xff]
        %v994 = vld [vmem:[%s559 + $0x28] sm:$0xff]
        %v995 = vld [vmem:[%s559 + $0x30] sm:$0xff]
        %v996 = vld [vmem:[%s559 + $0x38] sm:$0xff]
        %v997 = vld [vmem:[%s559 + $0x40] sm:$0xff]
        %v998 = vld [vmem:[%s559 + $0x48] sm:$0xff]
        %v999 = vld [vmem:[%s559 + $0x50] sm:$0xff]
        %v1000 = vld [vmem:[%s559 + $0x58] sm:$0xff]
        %v1001 = vld [vmem:[%s559 + $0x60] sm:$0xff]
        %v1002 = vld [vmem:[%s559 + $0x68] sm:$0xff]
        %v1003 = vld [vmem:[%s559 + $0x70] sm:$0xff]
        %v1004 = vld [vmem:[%s559 + $0x78] sm:$0xff]
        %v1005 = vmul.f32 %v878, %v989
        %v1006 = vmul.f32 %v880, %v990
        %v1007 = vmul.f32 %v882, %v991
        %v1008 = vmul.f32 %v884, %v992
        %v1009 = vmul.f32 %v886, %v993
        %v1010 = vmul.f32 %v888, %v994
        %v1011 = vmul.f32 %v890, %v995
        %v1012 = vmul.f32 %v892, %v996
        %v1013 = vmul.f32 %v894, %v997
        %v1014 = vmul.f32 %v896, %v998
        %v1015 = vmul.f32 %v898, %v999
        %v1016 = vmul.f32 %v900, %v1000
        %v1017 = vmul.f32 %v902, %v1001
        %v1018 = vmul.f32 %v904, %v1002
        %v1019 = vmul.f32 %v906, %v1003
        %v1020 = vmul.f32 %v908, %v1004
        %1021 = vst [vmem:[%s659] sm:$0xff] %v1005
        %1022 = vst [vmem:[%s659 + $0x8] sm:$0xff] %v1006
        %1023 = vst [vmem:[%s659 + $0x10] sm:$0xff] %v1007
        %1024 = vst [vmem:[%s659 + $0x18] sm:$0xff] %v1008
        %1025 = vst [vmem:[%s659 + $0x20] sm:$0xff] %v1009
        %1026 = vst [vmem:[%s659 + $0x28] sm:$0xff] %v1010
        %1027 = vst [vmem:[%s659 + $0x30] sm:$0xff] %v1011
        %1028 = vst [vmem:[%s659 + $0x38] sm:$0xff] %v1012
        %1029 = vst [vmem:[%s659 + $0x40] sm:$0xff] %v1013
        %1030 = vst [vmem:[%s659 + $0x48] sm:$0xff] %v1014
        %1031 = vst [vmem:[%s659 + $0x50] sm:$0xff] %v1015
        %1032 = vst [vmem:[%s659 + $0x58] sm:$0xff] %v1016
        %1033 = vst [vmem:[%s659 + $0x60] sm:$0xff] %v1017
        %1034 = vst [vmem:[%s659 + $0x68] sm:$0xff] %v1018
        %1035 = vst [vmem:[%s659 + $0x70] sm:$0xff] %v1019
        %1036 = vst [vmem:[%s659 + $0x78] sm:$0xff] %v1020
        %s1037 = smul.u32 16, %s22
        %p1038 = scmp.lt.s32.totalorder %s1037, 63
        %s1039 = scalar_select %p1038, %s1037, 63
        %s1040 = smul.addr %s1039, 8
        %s1041 = scalar_lea.vmem %s7, %s1040
        %s1042 = smul.u32 16, %s22
        %p1043 = scmp.lt.s32.totalorder %s1042, 63
        %s1044 = scalar_select %p1043, %s1042, 63
        %s1045 = smul.addr %s1044, 8
        %s1046 = scalar_lea.vmem %s8, %s1045
        %s1047 = smul.u32 16, %s22
        %p1048 = scmp.lt.s32.totalorder %s1047, 63
        %s1049 = scalar_select %p1048, %s1047, 63
        %s1050 = smul.addr %s1049, 8
        %s1051 = scalar_lea.vmem %s9, %s1050
        %s1052 = smul.u32 16, %s22
        %p1053 = scmp.lt.s32.totalorder %s1052, 63
        %s1054 = scalar_select %p1053, %s1052, 63
        %s1055 = smul.addr %s1054, 8
        %s1056 = scalar_lea.vmem %s10, %s1055
        // Predicated region
        $region125: #{model_forward.17} parent=115 // pred_check
          %p1057 = pneg %p207
        $region126: #{model_forward.17} parent=115 // pred_check_branch
          %1059 = sbr.rel (%p1057) target = $region128
        $region127: #{model_forward.17} parent=115 // pred_region
          %s1060 = smul.u32 16, %s22
        $region128: #{model_forward.17} parent=115 // pred_fallthru
          _
        // Predicated region
        $region129: #{model_forward.17} parent=115 // pred_check
          %p1061 = pneg %p233
        $region130: #{model_forward.17} parent=115 // pred_check_branch
          %1063 = sbr.rel (%p1061) target = $region132
        $region131: #{model_forward.17} parent=115 // pred_region
          %s1064 = smul.u32 16, %s22
        $region132: #{model_forward.17} parent=115 // pred_fallthru
          _
        // Predicated region
        $region133: #{model_forward.17} parent=115 // pred_check
          %p1065 = pneg %p259
        $region134: #{model_forward.17} parent=115 // pred_check_branch
          %1067 = sbr.rel (%p1065) target = $region136
        $region135: #{model_forward.17} parent=115 // pred_region
          %s1068 = smul.u32 16, %s22
        $region136: #{model_forward.17} parent=115 // pred_fallthru
          _
        // Predicated region
        $region137: #{model_forward.17} parent=115 // pred_check
          %p1069 = pneg %p285
        $region138: #{model_forward.17} parent=115 // pred_check_branch
          %1071 = sbr.rel (%p1069) target = $region140
        $region139: #{model_forward.17} parent=115 // pred_region
          %s1072 = smul.u32 16, %s22
        $region140: #{model_forward.17} parent=115 // pred_fallthru
          _
      $region116: #{model_forward.17} parent=5 // pred_fallthru
        _
      %p1073 = scmp.le.s32.totalorder 2, %s17
      // Predicated region
      $region141: #{model_forward.17} parent=5 // pred_check
        %p1074 = pneg %p1073
      $region142: #{model_forward.17} parent=5 // pred_check_branch
        %1076 = sbr.rel (%p1074) target = $region144
      $region143: #{model_forward.17} parent=5 // pred_region
        %s1077 = ssub.s32 %s17, 2
        // Predicated region
        $region145: #{model_forward.17} parent=143 // pred_check
          %p1078 = pneg %p213
        $region146: #{model_forward.17} parent=143 // pred_check_branch
          %1080 = sbr.rel (%p1078) target = $region148
        $region147: #{model_forward.17} parent=143 // pred_region
          %s1081 = smul.u32 16, %s23
          %p1082 = scmp.lt.s32.totalorder %s1081, 63
          %s1083 = scalar_select %p1082, %s1081, 63
          %s1084 = smul.addr %s1083, 8
          %s1085 = scalar_lea.vmem %s7, %s1084
        $region148: #{model_forward.17} parent=143 // pred_fallthru
          _
        // Predicated region
        $region149: #{model_forward.17} parent=143 // pred_check
          %p1086 = pneg %p239
        $region150: #{model_forward.17} parent=143 // pred_check_branch
          %1088 = sbr.rel (%p1086) target = $region152
        $region151: #{model_forward.17} parent=143 // pred_region
          %s1089 = smul.u32 16, %s23
          %p1090 = scmp.lt.s32.totalorder %s1089, 63
          %s1091 = scalar_select %p1090, %s1089, 63
          %s1092 = smul.addr %s1091, 8
          %s1093 = scalar_lea.vmem %s8, %s1092
        $region152: #{model_forward.17} parent=143 // pred_fallthru
          _
        // Predicated region
        $region153: #{model_forward.17} parent=143 // pred_check
          %p1094 = pneg %p265
        $region154: #{model_forward.17} parent=143 // pred_check_branch
          %1096 = sbr.rel (%p1094) target = $region156
        $region155: #{model_forward.17} parent=143 // pred_region
          %s1097 = smul.u32 16, %s23
          %p1098 = scmp.lt.s32.totalorder %s1097, 63
          %s1099 = scalar_select %p1098, %s1097, 63
          %s1100 = smul.addr %s1099, 8
          %s1101 = scalar_lea.vmem %s9, %s1100
        $region156: #{model_forward.17} parent=143 // pred_fallthru
          _
        // Predicated region
        $region157: #{model_forward.17} parent=143 // pred_check
          %p1102 = pneg %p291
        $region158: #{model_forward.17} parent=143 // pred_check_branch
          %1104 = sbr.rel (%p1102) target = $region160
        $region159: #{model_forward.17} parent=143 // pred_region
          %s1105 = smul.u32 16, %s23
          %p1106 = scmp.lt.s32.totalorder %s1105, 63
          %s1107 = scalar_select %p1106, %s1105, 63
          %s1108 = smul.addr %s1107, 8
          %s1109 = scalar_lea.vmem %s10, %s1108
        $region160: #{model_forward.17} parent=143 // pred_fallthru
          _
      $region144: #{model_forward.17} parent=5 // pred_fallthru
        _
    $region6: #{model_forward.17} parent=1 // loop_footer
      %s21 = sadd.s32 1, %s17
    $region7: #{model_forward.17} parent=1 // loop_footer_branch
      %16 = sbr.rel target = $region3
    $region8: #{model_forward.17} parent=1 // loop_exit
      _

// kernel: model_forward.16
$region0: #{model_forward.16}
  #allocation0 [shape = 'u32[]', space=smem, size = 0x4, offset = 0x4, fixed_abs, tag = 'smem constant byte address 0x4 - core index']
  #allocation1 [shape = 'u32[144,128]{1,0:T(1,128)}', space=vmem, size = 0x12000, scoped, tag = 'internal scratch']
  %s0 = inlined_call_operand.vmem [shape: f32[512,128], index: 0, kind: input, shape index: {}]
  %s1 = inlined_call_operand.vmem [shape: f32[512,256], index: 1, kind: input, shape index: {}]
  %s2 = inlined_call_operand.vmem [shape: f32[512,256], index: 2, kind: input, shape index: {}]
  %s3 = inlined_call_operand.vmem [shape: bf16[128,128], index: 3, kind: input, shape index: {}]
  %s4 = inlined_call_operand.vmem [shape: f32[1,128], index: 4, kind: input, shape index: {}]
  %s5 = inlined_call_operand.vmem [shape: f32[512,128], index: 5, kind: output, shape index: {0}]
  %s6 = inlined_call_operand.vmem [shape: f32[2,128], index: 6, kind: output, shape index: {1}]
  %7 = xla_tuple %s5, %s6
  %s8 = sld [smem:[#allocation0]]
  $region145: #{model_forward.16} parent=0
    _
  %s10 = ssub.s32 1, %s8
  %s11 = scalar_select 0, %s10, %s8
  $region1: #{model_forward.16} parent=0
    #allocation2 [shape = 'u8[131072]{0}', space=vmem, size = 0x20000, scoped, tag = 'input window, operand 1']
    #allocation3 [shape = 'u8[131072]{0}', space=vmem, size = 0x20000, scoped, tag = 'input window, operand 2']
    loop: start=0, step=1, limit=6
    $region2: #{model_forward.16} parent=1 // loop_pre_header
      _
    $region3: #{model_forward.16} parent=1 // loop_header
      %s13 = sphi 0, %s17
      %p14 = scmp.ge.s32.totalorder %s13, 6
      %s23 = sphi 0, %s25
      %s26 = sphi 0, %s23
      %s27 = sphi 0, %s26
      %s43 = sphi 0, %s27
      %s49 = sphi 0, %s51
      %s52 = sphi 0, %s49
      %s53 = sphi 0, %s52
      %s69 = sphi 0, %s53
      %s75 = sphi 0, %s77
      %s78 = sphi 0, %s75
      %s79 = sphi 0, %s78
      %s95 = sphi 0, %s79
      %s99 = sphi 0, %s99
      %s101 = sphi 0, %s99
      %s102 = sphi 0, %s101
      %s116 = sphi 0, %s102
      %s120 = sphi 0, %s120
      %s122 = sphi 0, %s120
      %s123 = sphi 0, %s122
      %s137 = sphi 0, %s123
      %s143 = sphi 0, %s145
      %s146 = sphi 0, %s143
      %s147 = sphi 0, %s146
      %s163 = sphi 0, %s147
      %s167 = sphi 0, %s167
      %s169 = sphi 0, %s167
      %s170 = sphi 0, %s169
      %s184 = sphi 0, %s170
    $region4: #{model_forward.16} parent=1 // loop_header_branch
      %16 = sbr.rel (%p14) target = $region8
    $region5: #{model_forward.16} parent=1 // loop_body
      %s18 = ssub.s32 %s13, 1
      %s19 = ssub.s32 %s13, 2
      %s20 = sadd.s32 %s13, 1
      %s21 = ssub.s32 %s13, %s20
      %p22 = scmp.eq.s32.totalorder %s21, 0
      %s24 = sadd.s32 %s23, 1
      %s25 = scalar_select %p22, %s23, %s24
      %p28 = pneg %p22
      %p29 = scmp.eq.s32.totalorder %s13, 3
      %p30 = por %p28, %p29
      %p31 = scmp.ne.s32.totalorder %s23, %s26
      %p32 = scmp.eq.s32.totalorder %s13, 0
      %p33 = por %p31, %p32
      %p34 = scmp.ne.s32.totalorder %s23, %s26
      %p35 = scmp.eq.s32.totalorder %s18, 3
      %p36 = por %p34, %p35
      %p37 = scmp.ne.s32.totalorder %s26, %s27
      %p38 = scmp.eq.s32.totalorder %s18, 0
      %p39 = por %p37, %p38
      %p40 = scmp.ne.s32.totalorder %s26, %s27
      %p41 = scmp.eq.s32.totalorder %s19, 3
      %p42 = por %p40, %p41
      %p44 = scmp.ne.s32.totalorder %s27, %s43
      %p45 = scmp.eq.s32.totalorder %s19, 0
      %p46 = por %p44, %p45
      %s47 = ssub.s32 %s13, %s20
      %p48 = scmp.eq.s32.totalorder %s47, 0
      %s50 = sadd.s32 %s49, 1
      %s51 = scalar_select %p48, %s49, %s50
      %p54 = pneg %p48
      %p55 = scmp.eq.s32.totalorder %s13, 3
      %p56 = por %p54, %p55
      %p57 = scmp.ne.s32.totalorder %s49, %s52
      %p58 = scmp.eq.s32.totalorder %s13, 0
      %p59 = por %p57, %p58
      %p60 = scmp.ne.s32.totalorder %s49, %s52
      %p61 = scmp.eq.s32.totalorder %s18, 3
      %p62 = por %p60, %p61
      %p63 = scmp.ne.s32.totalorder %s52, %s53
      %p64 = scmp.eq.s32.totalorder %s18, 0
      %p65 = por %p63, %p64
      %p66 = scmp.ne.s32.totalorder %s52, %s53
      %p67 = scmp.eq.s32.totalorder %s19, 3
      %p68 = por %p66, %p67
      %p70 = scmp.ne.s32.totalorder %s53, %s69
      %p71 = scmp.eq.s32.totalorder %s19, 0
      %p72 = por %p70, %p71
      %s73 = ssub.s32 %s13, %s20
      %p74 = scmp.eq.s32.totalorder %s73, 0
      %s76 = sadd.s32 %s75, 1
      %s77 = scalar_select %p74, %s75, %s76
      %p80 = pneg %p74
      %p81 = scmp.eq.s32.totalorder %s13, 3
      %p82 = por %p80, %p81
      %p83 = scmp.ne.s32.totalorder %s75, %s78
      %p84 = scmp.eq.s32.totalorder %s13, 0
      %p85 = por %p83, %p84
      %p86 = scmp.ne.s32.totalorder %s75, %s78
      %p87 = scmp.eq.s32.totalorder %s18, 3
      %p88 = por %p86, %p87
      %p89 = scmp.ne.s32.totalorder %s78, %s79
      %p90 = scmp.eq.s32.totalorder %s18, 0
      %p91 = por %p89, %p90
      %p92 = scmp.ne.s32.totalorder %s78, %s79
      %p93 = scmp.eq.s32.totalorder %s19, 3
      %p94 = por %p92, %p93
      %p96 = scmp.ne.s32.totalorder %s79, %s95
      %p97 = scmp.eq.s32.totalorder %s19, 0
      %p98 = por %p96, %p97
      %s100 = sadd.s32 %s99, 1
      %p103 = scmp.eq.s32.totalorder %s13, 3
      %p104 = scmp.ne.s32.totalorder %s99, %s101
      %p105 = scmp.eq.s32.totalorder %s13, 0
      %p106 = por %p104, %p105
      %p107 = scmp.ne.s32.totalorder %s99, %s101
      %p108 = scmp.eq.s32.totalorder %s18, 3
      %p109 = por %p107, %p108
      %p110 = scmp.ne.s32.totalorder %s101, %s102
      %p111 = scmp.eq.s32.totalorder %s18, 0
      %p112 = por %p110, %p111
      %p113 = scmp.ne.s32.totalorder %s101, %s102
      %p114 = scmp.eq.s32.totalorder %s19, 3
      %p115 = por %p113, %p114
      %p117 = scmp.ne.s32.totalorder %s102, %s116
      %p118 = scmp.eq.s32.totalorder %s19, 0
      %p119 = por %p117, %p118
      %s121 = sadd.s32 %s120, 1
      %p124 = scmp.eq.s32.totalorder %s13, 3
      %p125 = scmp.ne.s32.totalorder %s120, %s122
      %p126 = scmp.eq.s32.totalorder %s13, 0
      %p127 = por %p125, %p126
      %p128 = scmp.ne.s32.totalorder %s120, %s122
      %p129 = scmp.eq.s32.totalorder %s18, 3
      %p130 = por %p128, %p129
      %p131 = scmp.ne.s32.totalorder %s122, %s123
      %p132 = scmp.eq.s32.totalorder %s18, 0
      %p133 = por %p131, %p132
      %p134 = scmp.ne.s32.totalorder %s122, %s123
      %p135 = scmp.eq.s32.totalorder %s19, 3
      %p136 = por %p134, %p135
      %p138 = scmp.ne.s32.totalorder %s123, %s137
      %p139 = scmp.eq.s32.totalorder %s19, 0
      %p140 = por %p138, %p139
      %s141 = ssub.s32 %s13, %s20
      %p142 = scmp.eq.s32.totalorder %s141, 0
      %s144 = sadd.s32 %s143, 1
      %s145 = scalar_select %p142, %s143, %s144
      %p148 = pneg %p142
      %p149 = scmp.eq.s32.totalorder %s13, 3
      %p150 = por %p148, %p149
      %p151 = scmp.ne.s32.totalorder %s143, %s146
      %p152 = scmp.eq.s32.totalorder %s13, 0
      %p153 = por %p151, %p152
      %p154 = scmp.ne.s32.totalorder %s143, %s146
      %p155 = scmp.eq.s32.totalorder %s18, 3
      %p156 = por %p154, %p155
      %p157 = scmp.ne.s32.totalorder %s146, %s147
      %p158 = scmp.eq.s32.totalorder %s18, 0
      %p159 = por %p157, %p158
      %p160 = scmp.ne.s32.totalorder %s146, %s147
      %p161 = scmp.eq.s32.totalorder %s19, 3
      %p162 = por %p160, %p161
      %p164 = scmp.ne.s32.totalorder %s147, %s163
      %p165 = scmp.eq.s32.totalorder %s19, 0
      %p166 = por %p164, %p165
      %s168 = sadd.s32 %s167, 1
      %p171 = scmp.eq.s32.totalorder %s13, 3
      %p172 = scmp.ne.s32.totalorder %s167, %s169
      %p173 = scmp.eq.s32.totalorder %s13, 0
      %p174 = por %p172, %p173
      %p175 = scmp.ne.s32.totalorder %s167, %s169
      %p176 = scmp.eq.s32.totalorder %s18, 3
      %p177 = por %p175, %p176
      %p178 = scmp.ne.s32.totalorder %s169, %s170
      %p179 = scmp.eq.s32.totalorder %s18, 0
      %p180 = por %p178, %p179
      %p181 = scmp.ne.s32.totalorder %s169, %s170
      %p182 = scmp.eq.s32.totalorder %s19, 3
      %p183 = por %p181, %p182
      %p185 = scmp.ne.s32.totalorder %s170, %s184
      %p186 = scmp.eq.s32.totalorder %s19, 0
      %p187 = por %p185, %p186
      %p188 = scmp.le.s32.totalorder 1, %s13
      %p189 = scmp.lt.s32.totalorder %s13, 5
      %p190 = pnand %p188, %p189
      %p191 = pneg %p190
      // Predicated region
      $region9: #{model_forward.16} parent=5 // pred_check
        _
      $region10: #{model_forward.16} parent=5 // pred_check_branch
        %193 = sbr.rel (%p190) target = $region12
      $region11: #{model_forward.16} parent=5 // pred_region
        %s194 = ssub.s32 %s13, 1
        // Predicated region
        $region13: #{model_forward.16} parent=11 // pred_check
          %p195 = pneg %p112
        $region14: #{model_forward.16} parent=11 // pred_check_branch
          %197 = sbr.rel (%p195) target = $region16
        $region15: #{model_forward.16} parent=11 // pred_region
          _
        $region16: #{model_forward.16} parent=11 // pred_fallthru
          _
        // Predicated region
        $region17: #{model_forward.16} parent=11 // pred_check
          %p198 = pneg %p133
        $region18: #{model_forward.16} parent=11 // pred_check_branch
          %200 = sbr.rel (%p198) target = $region20
        $region19: #{model_forward.16} parent=11 // pred_region
          _
        $region20: #{model_forward.16} parent=11 // pred_fallthru
          _
      $region12: #{model_forward.16} parent=5 // pred_fallthru
        _
      %p201 = scmp.lt.s32.totalorder %s13, 4
      // Predicated region
      $region21: #{model_forward.16} parent=5 // pred_check
        %p202 = pneg %p201
      $region22: #{model_forward.16} parent=5 // pred_check_branch
        %204 = sbr.rel (%p202) target = $region24
      $region23: #{model_forward.16} parent=5 // pred_region
        // Predicated region
        $region25: #{model_forward.16} parent=23 // pred_check
          %p205 = pneg %p33
        $region26: #{model_forward.16} parent=23 // pred_check_branch
          %207 = sbr.rel (%p205) target = $region28
        $region27: #{model_forward.16} parent=23 // pred_region
          %s208 = smul.u32 16, %s13
          %p209 = scmp.lt.s32.totalorder %s208, 63
          %s210 = scalar_select %p209, %s208, 63
          %s211 = smul.addr %s210, 8
          %s212 = scalar_lea.vmem %s0, %s211
          %s213 = smul.u32 16, %s13
        $region28: #{model_forward.16} parent=23 // pred_fallthru
          _
        // Predicated region
        $region29: #{model_forward.16} parent=23 // pred_check
          %p214 = pneg %p59
        $region30: #{model_forward.16} parent=23 // pred_check_branch
          %216 = sbr.rel (%p214) target = $region32
        $region31: #{model_forward.16} parent=23 // pred_region
          %s217 = sand.u32 %s49, 1
          %s218 = sand.u32 %s49, 1
          %s219 = smul.addr %s218, 128
          %s220 = scalar_lea.vmem [#allocation2], %s219
          %s221 = smul.u32 16, %s13
          %s222 = smul.addr %s221, 2
          %s223 = sadd.s32 1, %s222
          %s224 = smul.addr %s223, 8
          %s225 = scalar_lea.vmem %s1, %s224
          // Predicated region
          $region33: #{model_forward.16} parent=31 // pred_check
            _
          $region34: #{model_forward.16} parent=31 // pred_check_branch
            %227 = sbr.rel (0) target = $region36
          $region35: #{model_forward.16} parent=31 // pred_region
            // Predicated region
            $region37: #{model_forward.16} parent=35 // pred_check
              _
            $region38: #{model_forward.16} parent=35 // pred_check_branch
              %229 = sbr.rel (0) target = $region40
            $region39: #{model_forward.16} parent=35 // pred_region
              // Predicated region
              $region52: #{model_forward.16} parent=39 // pred_check
                _
              $region53: #{model_forward.16} parent=39 // pred_check_branch
                %275 = sbr.rel (0) target = $region55
              $region54: #{model_forward.16} parent=39 // pred_region
                loop: start=0, step=1, limit=1
                $region56: #{model_forward.16} parent=54 // loop_pre_header
                  _
                $region57: #{model_forward.16} parent=54 // loop_header
                  %s277 = sphi 0, %s281
                  %p278 = scmp.ge.s32.totalorder %s277, 1
                  %s282 = sphi %s225, %s225
                  %s283 = sphi %s220, %s220
                $region58: #{model_forward.16} parent=54 // loop_header_branch
                  %280 = sbr.rel (%p278) target = $region62
                $region59: #{model_forward.16} parent=54 // loop_body
                  %v284 = vld [vmem:[%s282] sm:$0xff]
                  %285 = vst [vmem:[%s283] sm:$0xff] %v284
                  %v286 = vld [vmem:[%s282 + $0x10] sm:$0xff]
                  %287 = vst [vmem:[%s283 + $0x8] sm:$0xff] %v286
                  %v288 = vld [vmem:[%s282 + $0x20] sm:$0xff]
                  %289 = vst [vmem:[%s283 + $0x10] sm:$0xff] %v288
                  %v290 = vld [vmem:[%s282 + $0x30] sm:$0xff]
                  %291 = vst [vmem:[%s283 + $0x18] sm:$0xff] %v290
                  %v292 = vld [vmem:[%s282 + $0x40] sm:$0xff]
                  %293 = vst [vmem:[%s283 + $0x20] sm:$0xff] %v292
                  %v294 = vld [vmem:[%s282 + $0x50] sm:$0xff]
                  %295 = vst [vmem:[%s283 + $0x28] sm:$0xff] %v294
                  %v296 = vld [vmem:[%s282 + $0x60] sm:$0xff]
                  %297 = vst [vmem:[%s283 + $0x30] sm:$0xff] %v296
                  %v298 = vld [vmem:[%s282 + $0x70] sm:$0xff]
                  %299 = vst [vmem:[%s283 + $0x38] sm:$0xff] %v298
                  %v300 = vld [vmem:[%s282 + $0x80] sm:$0xff]
                  %301 = vst [vmem:[%s283 + $0x40] sm:$0xff] %v300
                  %v302 = vld [vmem:[%s282 + $0x90] sm:$0xff]
                  %303 = vst [vmem:[%s283 + $0x48] sm:$0xff] %v302
                  %v304 = vld [vmem:[%s282 + $0xa0] sm:$0xff]
                  %305 = vst [vmem:[%s283 + $0x50] sm:$0xff] %v304
                  %v306 = vld [vmem:[%s282 + $0xb0] sm:$0xff]
                  %307 = vst [vmem:[%s283 + $0x58] sm:$0xff] %v306
                  %v308 = vld [vmem:[%s282 + $0xc0] sm:$0xff]
                  %309 = vst [vmem:[%s283 + $0x60] sm:$0xff] %v308
                  %v310 = vld [vmem:[%s282 + $0xd0] sm:$0xff]
                  %311 = vst [vmem:[%s283 + $0x68] sm:$0xff] %v310
                  %v312 = vld [vmem:[%s282 + $0xe0] sm:$0xff]
                  %313 = vst [vmem:[%s283 + $0x70] sm:$0xff] %v312
                  %v314 = vld [vmem:[%s282 + $0xf0] sm:$0xff]
                  %315 = vst [vmem:[%s283 + $0x78] sm:$0xff] %v314
                $region60: #{model_forward.16} parent=54 // loop_footer
                  %s281 = sadd.s32 1, %s277
                $region61: #{model_forward.16} parent=54 // loop_footer_branch
                  %276 = sbr.rel target = $region57
                $region62: #{model_forward.16} parent=54 // loop_exit
                  _
              $region55: #{model_forward.16} parent=39 // pred_fallthru
                _
              // Predicated region
              $region63: #{model_forward.16} parent=39 // pred_check
                _
              $region64: #{model_forward.16} parent=39 // pred_check_branch
                %317 = sbr.rel target = $region66
              $region65: #{model_forward.16} parent=39 // pred_region
                _
              $region66: #{model_forward.16} parent=39 // pred_fallthru
                _
            $region40: #{model_forward.16} parent=35 // pred_fallthru
              _
            // Predicated region
            $region41: #{model_forward.16} parent=35 // pred_check
              _
            $region42: #{model_forward.16} parent=35 // pred_check_branch
              %231 = sbr.rel target = $region44
            $region43: #{model_forward.16} parent=35 // pred_region
              %s233 = ssub.s32 256, 1
              loop: start=0, step=1, limit=1
              $region45: #{model_forward.16} parent=43 // loop_pre_header
                _
              $region46: #{model_forward.16} parent=43 // loop_header
                %s235 = sphi 0, %s239
                %p236 = scmp.ge.s32.totalorder %s235, 1
                %s240 = sphi %s225, %s225
                %s241 = sphi %s220, %s220
              $region47: #{model_forward.16} parent=43 // loop_header_branch
                %238 = sbr.rel (%p236) target = $region51
              $region48: #{model_forward.16} parent=43 // loop_body
                %v242 = vld [vmem:[%s240] sm:%s233]
                %243 = vst [vmem:[%s241] sm:%s233] %v242
                %v244 = vld [vmem:[%s240 + $0x10] sm:%s233]
                %245 = vst [vmem:[%s241 + $0x8] sm:%s233] %v244
                %v246 = vld [vmem:[%s240 + $0x20] sm:%s233]
                %247 = vst [vmem:[%s241 + $0x10] sm:%s233] %v246
                %v248 = vld [vmem:[%s240 + $0x30] sm:%s233]
                %249 = vst [vmem:[%s241 + $0x18] sm:%s233] %v248
                %v250 = vld [vmem:[%s240 + $0x40] sm:%s233]
                %251 = vst [vmem:[%s241 + $0x20] sm:%s233] %v250
                %v252 = vld [vmem:[%s240 + $0x50] sm:%s233]
                %253 = vst [vmem:[%s241 + $0x28] sm:%s233] %v252
                %v254 = vld [vmem:[%s240 + $0x60] sm:%s233]
                %255 = vst [vmem:[%s241 + $0x30] sm:%s233] %v254
                %v256 = vld [vmem:[%s240 + $0x70] sm:%s233]
                %257 = vst [vmem:[%s241 + $0x38] sm:%s233] %v256
                %v258 = vld [vmem:[%s240 + $0x80] sm:%s233]
                %259 = vst [vmem:[%s241 + $0x40] sm:%s233] %v258
                %v260 = vld [vmem:[%s240 + $0x90] sm:%s233]
                %261 = vst [vmem:[%s241 + $0x48] sm:%s233] %v260
                %v262 = vld [vmem:[%s240 + $0xa0] sm:%s233]
                %263 = vst [vmem:[%s241 + $0x50] sm:%s233] %v262
                %v264 = vld [vmem:[%s240 + $0xb0] sm:%s233]
                %265 = vst [vmem:[%s241 + $0x58] sm:%s233] %v264
                %v266 = vld [vmem:[%s240 + $0xc0] sm:%s233]
                %267 = vst [vmem:[%s241 + $0x60] sm:%s233] %v266
                %v268 = vld [vmem:[%s240 + $0xd0] sm:%s233]
                %269 = vst [vmem:[%s241 + $0x68] sm:%s233] %v268
                %v270 = vld [vmem:[%s240 + $0xe0] sm:%s233]
                %271 = vst [vmem:[%s241 + $0x70] sm:%s233] %v270
                %v272 = vld [vmem:[%s240 + $0xf0] sm:%s233]
                %273 = vst [vmem:[%s241 + $0x78] sm:%s233] %v272
              $region49: #{model_forward.16} parent=43 // loop_footer
                %s239 = sadd.s32 1, %s235
              $region50: #{model_forward.16} parent=43 // loop_footer_branch
                %234 = sbr.rel target = $region46
              $region51: #{model_forward.16} parent=43 // loop_exit
                _
            $region44: #{model_forward.16} parent=35 // pred_fallthru
              _
          $region36: #{model_forward.16} parent=31 // pred_fallthru
            _
          %318 = vnop
        $region32: #{model_forward.16} parent=23 // pred_fallthru
          _
        // Predicated region
        $region67: #{model_forward.16} parent=23 // pred_check
          %p319 = pneg %p85
        $region68: #{model_forward.16} parent=23 // pred_check_branch
          %321 = sbr.rel (%p319) target = $region70
        $region69: #{model_forward.16} parent=23 // pred_region
          %s322 = sand.u32 %s75, 1
          %s323 = sand.u32 %s75, 1
          %s324 = smul.addr %s323, 128
          %s325 = scalar_lea.vmem [#allocation3], %s324
          %s326 = smul.u32 16, %s13
          %s327 = smul.addr %s326, 2
          %s328 = sadd.s32 1, %s327
          %s329 = smul.addr %s328, 8
          %s330 = scalar_lea.vmem %s2, %s329
          // Predicated region
          $region71: #{model_forward.16} parent=69 // pred_check
            _
          $region72: #{model_forward.16} parent=69 // pred_check_branch
            %332 = sbr.rel (0) target = $region74
          $region73: #{model_forward.16} parent=69 // pred_region
            // Predicated region
            $region75: #{model_forward.16} parent=73 // pred_check
              _
            $region76: #{model_forward.16} parent=73 // pred_check_branch
              %334 = sbr.rel (0) target = $region78
            $region77: #{model_forward.16} parent=73 // pred_region
              // Predicated region
              $region90: #{model_forward.16} parent=77 // pred_check
                _
              $region91: #{model_forward.16} parent=77 // pred_check_branch
                %380 = sbr.rel (0) target = $region93
              $region92: #{model_forward.16} parent=77 // pred_region
                loop: start=0, step=1, limit=1
                $region94: #{model_forward.16} parent=92 // loop_pre_header
                  _
                $region95: #{model_forward.16} parent=92 // loop_header
                  %s382 = sphi 0, %s386
                  %p383 = scmp.ge.s32.totalorder %s382, 1
                  %s387 = sphi %s330, %s330
                  %s388 = sphi %s325, %s325
                $region96: #{model_forward.16} parent=92 // loop_header_branch
                  %385 = sbr.rel (%p383) target = $region100
                $region97: #{model_forward.16} parent=92 // loop_body
                  %v389 = vld [vmem:[%s387] sm:$0xff]
                  %390 = vst [vmem:[%s388] sm:$0xff] %v389
                  %v391 = vld [vmem:[%s387 + $0x10] sm:$0xff]
                  %392 = vst [vmem:[%s388 + $0x8] sm:$0xff] %v391
                  %v393 = vld [vmem:[%s387 + $0x20] sm:$0xff]
                  %394 = vst [vmem:[%s388 + $0x10] sm:$0xff] %v393
                  %v395 = vld [vmem:[%s387 + $0x30] sm:$0xff]
                  %396 = vst [vmem:[%s388 + $0x18] sm:$0xff] %v395
                  %v397 = vld [vmem:[%s387 + $0x40] sm:$0xff]
                  %398 = vst [vmem:[%s388 + $0x20] sm:$0xff] %v397
                  %v399 = vld [vmem:[%s387 + $0x50] sm:$0xff]
                  %400 = vst [vmem:[%s388 + $0x28] sm:$0xff] %v399
                  %v401 = vld [vmem:[%s387 + $0x60] sm:$0xff]
                  %402 = vst [vmem:[%s388 + $0x30] sm:$0xff] %v401
                  %v403 = vld [vmem:[%s387 + $0x70] sm:$0xff]
                  %404 = vst [vmem:[%s388 + $0x38] sm:$0xff] %v403
                  %v405 = vld [vmem:[%s387 + $0x80] sm:$0xff]
                  %406 = vst [vmem:[%s388 + $0x40] sm:$0xff] %v405
                  %v407 = vld [vmem:[%s387 + $0x90] sm:$0xff]
                  %408 = vst [vmem:[%s388 + $0x48] sm:$0xff] %v407
                  %v409 = vld [vmem:[%s387 + $0xa0] sm:$0xff]
                  %410 = vst [vmem:[%s388 + $0x50] sm:$0xff] %v409
                  %v411 = vld [vmem:[%s387 + $0xb0] sm:$0xff]
                  %412 = vst [vmem:[%s388 + $0x58] sm:$0xff] %v411
                  %v413 = vld [vmem:[%s387 + $0xc0] sm:$0xff]
                  %414 = vst [vmem:[%s388 + $0x60] sm:$0xff] %v413
                  %v415 = vld [vmem:[%s387 + $0xd0] sm:$0xff]
                  %416 = vst [vmem:[%s388 + $0x68] sm:$0xff] %v415
                  %v417 = vld [vmem:[%s387 + $0xe0] sm:$0xff]
                  %418 = vst [vmem:[%s388 + $0x70] sm:$0xff] %v417
                  %v419 = vld [vmem:[%s387 + $0xf0] sm:$0xff]
                  %420 = vst [vmem:[%s388 + $0x78] sm:$0xff] %v419
                $region98: #{model_forward.16} parent=92 // loop_footer
                  %s386 = sadd.s32 1, %s382
                $region99: #{model_forward.16} parent=92 // loop_footer_branch
                  %381 = sbr.rel target = $region95
                $region100: #{model_forward.16} parent=92 // loop_exit
                  _
              $region93: #{model_forward.16} parent=77 // pred_fallthru
                _
              // Predicated region
              $region101: #{model_forward.16} parent=77 // pred_check
                _
              $region102: #{model_forward.16} parent=77 // pred_check_branch
                %422 = sbr.rel target = $region104
              $region103: #{model_forward.16} parent=77 // pred_region
                _
              $region104: #{model_forward.16} parent=77 // pred_fallthru
                _
            $region78: #{model_forward.16} parent=73 // pred_fallthru
              _
            // Predicated region
            $region79: #{model_forward.16} parent=73 // pred_check
              _
            $region80: #{model_forward.16} parent=73 // pred_check_branch
              %336 = sbr.rel target = $region82
            $region81: #{model_forward.16} parent=73 // pred_region
              %s338 = ssub.s32 256, 1
              loop: start=0, step=1, limit=1
              $region83: #{model_forward.16} parent=81 // loop_pre_header
                _
              $region84: #{model_forward.16} parent=81 // loop_header
                %s340 = sphi 0, %s344
                %p341 = scmp.ge.s32.totalorder %s340, 1
                %s345 = sphi %s330, %s330
                %s346 = sphi %s325, %s325
              $region85: #{model_forward.16} parent=81 // loop_header_branch
                %343 = sbr.rel (%p341) target = $region89
              $region86: #{model_forward.16} parent=81 // loop_body
                %v347 = vld [vmem:[%s345] sm:%s338]
                %348 = vst [vmem:[%s346] sm:%s338] %v347
                %v349 = vld [vmem:[%s345 + $0x10] sm:%s338]
                %350 = vst [vmem:[%s346 + $0x8] sm:%s338] %v349
                %v351 = vld [vmem:[%s345 + $0x20] sm:%s338]
                %352 = vst [vmem:[%s346 + $0x10] sm:%s338] %v351
                %v353 = vld [vmem:[%s345 + $0x30] sm:%s338]
                %354 = vst [vmem:[%s346 + $0x18] sm:%s338] %v353
                %v355 = vld [vmem:[%s345 + $0x40] sm:%s338]
                %356 = vst [vmem:[%s346 + $0x20] sm:%s338] %v355
                %v357 = vld [vmem:[%s345 + $0x50] sm:%s338]
                %358 = vst [vmem:[%s346 + $0x28] sm:%s338] %v357
                %v359 = vld [vmem:[%s345 + $0x60] sm:%s338]
                %360 = vst [vmem:[%s346 + $0x30] sm:%s338] %v359
                %v361 = vld [vmem:[%s345 + $0x70] sm:%s338]
                %362 = vst [vmem:[%s346 + $0x38] sm:%s338] %v361
                %v363 = vld [vmem:[%s345 + $0x80] sm:%s338]
                %364 = vst [vmem:[%s346 + $0x40] sm:%s338] %v363
                %v365 = vld [vmem:[%s345 + $0x90] sm:%s338]
                %366 = vst [vmem:[%s346 + $0x48] sm:%s338] %v365
                %v367 = vld [vmem:[%s345 + $0xa0] sm:%s338]
                %368 = vst [vmem:[%s346 + $0x50] sm:%s338] %v367
                %v369 = vld [vmem:[%s345 + $0xb0] sm:%s338]
                %370 = vst [vmem:[%s346 + $0x58] sm:%s338] %v369
                %v371 = vld [vmem:[%s345 + $0xc0] sm:%s338]
                %372 = vst [vmem:[%s346 + $0x60] sm:%s338] %v371
                %v373 = vld [vmem:[%s345 + $0xd0] sm:%s338]
                %374 = vst [vmem:[%s346 + $0x68] sm:%s338] %v373
                %v375 = vld [vmem:[%s345 + $0xe0] sm:%s338]
                %376 = vst [vmem:[%s346 + $0x70] sm:%s338] %v375
                %v377 = vld [vmem:[%s345 + $0xf0] sm:%s338]
                %378 = vst [vmem:[%s346 + $0x78] sm:%s338] %v377
              $region87: #{model_forward.16} parent=81 // loop_footer
                %s344 = sadd.s32 1, %s340
              $region88: #{model_forward.16} parent=81 // loop_footer_branch
                %339 = sbr.rel target = $region84
              $region89: #{model_forward.16} parent=81 // loop_exit
                _
            $region82: #{model_forward.16} parent=73 // pred_fallthru
              _
          $region74: #{model_forward.16} parent=69 // pred_fallthru
            _
          %423 = vnop
        $region70: #{model_forward.16} parent=23 // pred_fallthru
          _
      $region24: #{model_forward.16} parent=5 // pred_fallthru
        _
      %p424 = scmp.le.s32.totalorder 1, %s13
      %p425 = scmp.lt.s32.totalorder %s13, 5
      %p426 = pnand %p424, %p425
      %p427 = pneg %p426
      // Predicated region
      $region105: #{model_forward.16} parent=5 // pred_check
        _
      $region106: #{model_forward.16} parent=5 // pred_check_branch
        %429 = sbr.rel (%p426) target = $region108
      $region107: #{model_forward.16} parent=5 // pred_region
        %s430 = ssub.s32 %s13, 1
        %s431 = sand.u32 %s52, 1
        %s432 = sand.u32 %s52, 1
        %s433 = smul.addr %s432, 128
        %s434 = scalar_lea.vmem [#allocation2], %s433
        // Predicated region
        $region109: #{model_forward.16} parent=107 // pred_check
          %p435 = pneg %p65
        $region110: #{model_forward.16} parent=107 // pred_check_branch
          %437 = sbr.rel (%p435) target = $region112
        $region111: #{model_forward.16} parent=107 // pred_region
          _
        $region112: #{model_forward.16} parent=107 // pred_fallthru
          _
        %s438 = sand.u32 %s78, 1
        %s439 = sand.u32 %s78, 1
        %s440 = smul.addr %s439, 128
        %s441 = scalar_lea.vmem [#allocation3], %s440
        // Predicated region
        $region113: #{model_forward.16} parent=107 // pred_check
          %p442 = pneg %p91
        $region114: #{model_forward.16} parent=107 // pred_check_branch
          %444 = sbr.rel (%p442) target = $region116
        $region115: #{model_forward.16} parent=107 // pred_region
          _
        $region116: #{model_forward.16} parent=107 // pred_fallthru
          _
        %s445 = smul.u32 16, %s18
        %p446 = scmp.lt.s32.totalorder %s445, 63
        %s447 = scalar_select %p446, %s445, 63
        %s448 = smul.addr %s447, 8
        %s449 = scalar_lea.vmem %s0, %s448
        %p450 = pneg %p39
        %p451 = pneg %p36
        %s452 = sand.u32 %s52, 1
        %s453 = sand.u32 %s52, 1
        %s454 = smul.addr %s453, 128
        %s455 = scalar_lea.vmem [#allocation2], %s454
        %p456 = pneg %p65
        %p457 = pneg %p62
        %s458 = sand.u32 %s78, 1
        %s459 = sand.u32 %s78, 1
        %s460 = smul.addr %s459, 128
        %s461 = scalar_lea.vmem [#allocation3], %s460
        %p462 = pneg %p91
        %p463 = pneg %p88
        %p464 = pneg %p112
        %p465 = pneg %p109
        %p466 = pneg %p133
        %p467 = pneg %p130
        %p468 = pneg %p159
        %p469 = pneg %p156
        %s470 = smul.u32 16, %s18
        %p471 = scmp.lt.s32.totalorder %s470, 63
        %s472 = scalar_select %p471, %s470, 63
        %s473 = smul.addr %s472, 8
        %s474 = scalar_lea.vmem %s5, %s473
        %p475 = pneg %p180
        %p476 = pneg %p177
        %s477 = smul.u32 16, %s18
        %p478 = scmp.lt.s32.totalorder %s477, 63
        %s479 = scalar_select %p478, %s477, 63
        %s480 = smul.addr %s479, 8
        %s481 = scalar_lea.vmem %s0, %s480
        %s482 = smul.u32 16, %s18
        %s483 = smul.u32 16, %s18
        %s484 = smul.u32 16, %s18
        %s485 = smul.u32 16, %s18
        %p486 = scmp.lt.s32.totalorder %s485, 63
        %s487 = scalar_select %p486, %s485, 63
        %s488 = smul.addr %s487, 8
        %s489 = scalar_lea.vmem %s5, %s488
        %s490 = smul.u32 16, %s18
        %v492 = vld [vmem:[%s481] sm:$0xff]
        %v493 = vld [vmem:[%s481 + $0x8] sm:$0xff]
        %v494 = vld [vmem:[%s481 + $0x10] sm:$0xff]
        %v495 = vld [vmem:[%s481 + $0x18] sm:$0xff]
        %v496 = vld [vmem:[%s481 + $0x20] sm:$0xff]
        %v497 = vld [vmem:[%s481 + $0x28] sm:$0xff]
        %v498 = vld [vmem:[%s481 + $0x30] sm:$0xff]
        %v499 = vld [vmem:[%s481 + $0x38] sm:$0xff]
        %v500 = vld [vmem:[%s481 + $0x40] sm:$0xff]
        %v501 = vld [vmem:[%s481 + $0x48] sm:$0xff]
        %v502 = vld [vmem:[%s481 + $0x50] sm:$0xff]
        %v503 = vld [vmem:[%s481 + $0x58] sm:$0xff]
        %v504 = vld [vmem:[%s481 + $0x60] sm:$0xff]
        %v505 = vld [vmem:[%s481 + $0x68] sm:$0xff]
        %v506 = vld [vmem:[%s481 + $0x70] sm:$0xff]
        %v507 = vld [vmem:[%s481 + $0x78] sm:$0xff]
        %v508 = vpack.c.bf16 %v493, %v492
        %v509 = vpack.c.bf16 %v495, %v494
        %v510 = vpack.c.bf16 %v497, %v496
        %v511 = vpack.c.bf16 %v499, %v498
        %v512 = vpack.c.bf16 %v501, %v500
        %v513 = vpack.c.bf16 %v503, %v502
        %v514 = vpack.c.bf16 %v505, %v504
        %v515 = vpack.c.bf16 %v507, %v506
        %v516 = vld [vmem:[%s3] sm:$0xf]
        %v517 = vld [vmem:[%s3 + $0x4] sm:$0xf]
        %v518 = vld [vmem:[%s3 + $0x8] sm:$0xf]
        %v519 = vld [vmem:[%s3 + $0xc] sm:$0xf]
        %v520 = vld [vmem:[%s3 + $0x10] sm:$0xf]
        %v521 = vld [vmem:[%s3 + $0x14] sm:$0xf]
        %v522 = vld [vmem:[%s3 + $0x18] sm:$0xf]
        %v523 = vld [vmem:[%s3 + $0x1c] sm:$0xf]
        %v524 = vld [vmem:[%s3 + $0x20] sm:$0xf]
        %v525 = vld [vmem:[%s3 + $0x24] sm:$0xf]
        %v526 = vld [vmem:[%s3 + $0x28] sm:$0xf]
        %v527 = vld [vmem:[%s3 + $0x2c] sm:$0xf]
        %v528 = vld [vmem:[%s3 + $0x30] sm:$0xf]
        %v529 = vld [vmem:[%s3 + $0x34] sm:$0xf]
        %v530 = vld [vmem:[%s3 + $0x38] sm:$0xf]
        %v531 = vld [vmem:[%s3 + $0x3c] sm:$0xf]
        %v532 = vld [vmem:[%s4] sm:$0x1]
        %v534 = vlaneseq
        %v535 = vshrl.u32 %v534, 7
        %v536 = vsub.s32 0, %v535
        %v537 = vrot.slane %v532, %v536
        %v555 = vunpack.c.l.b16 %v516
        %v556 = vunpack.c.l.b16 %v517
        %v557 = vunpack.c.l.b16 %v518
        %v558 = vunpack.c.l.b16 %v519
        %v559 = vunpack.c.l.b16 %v520
        %v560 = vunpack.c.l.b16 %v521
        %v561 = vunpack.c.l.b16 %v522
        %v562 = vunpack.c.l.b16 %v523
        %v563 = vunpack.c.l.b16 %v524
        %v564 = vunpack.c.l.b16 %v525
        %v565 = vunpack.c.l.b16 %v526
        %v566 = vunpack.c.l.b16 %v527
        %v567 = vunpack.c.l.b16 %v528
        %v568 = vunpack.c.l.b16 %v529
        %v569 = vunpack.c.l.b16 %v530
        %v570 = vunpack.c.l.b16 %v531
        %v571 = vpack.c.b16 %v556, %v555
        %v572 = vpack.c.b16 %v558, %v557
        %v573 = vpack.c.b16 %v560, %v559
        %v574 = vpack.c.b16 %v562, %v561
        %v575 = vpack.c.b16 %v564, %v563
        %v576 = vpack.c.b16 %v566, %v565
        %v577 = vpack.c.b16 %v568, %v567
        %v578 = vpack.c.b16 %v570, %v569
        %587 = vmatprep.subr.bf16.mxu0 0
        %588 = vmatpush1.bf16.msra.mxu0 %v578
        %589 = vmatprep.subr.bf16.mxu0 0
        %590 = vmatpush1.bf16.msra.mxu0 %v577
        %591 = vmatprep.subr.bf16.mxu0 0
        %592 = vmatpush1.bf16.msra.mxu0 %v576
        %593 = vmatprep.subr.bf16.mxu0 0
        %594 = vmatpush1.bf16.msra.mxu0 %v575
        %595 = vmatprep.subr.bf16.mxu0 0
        %596 = vmatpush1.bf16.msra.mxu0 %v574
        %597 = vmatprep.subr.bf16.mxu0 0
        %598 = vmatpush1.bf16.msra.mxu0 %v573
        %599 = vmatprep.subr.bf16.mxu0 0
        %600 = vmatpush1.bf16.msra.mxu0 %v572
        %601 = vmatprep.subr.bf16.mxu0 0
        %602 = vmatpush1.bf16.msra.mxu0 %v571
        %603 = vmatprep.subr.bf16.mxu0 0
        %604 = vmatpush2.bf16.msra.mxu0 0
        %605 = vmatprep.subr.bf16.mxu0 0
        %606 = vmatpush2.bf16.msra.mxu0 0
        %607 = vmatprep.subr.bf16.mxu0 0
        %608 = vmatpush2.bf16.msra.mxu0 0
        %609 = vmatprep.subr.bf16.mxu0 0
        %610 = vmatpush2.bf16.msra.mxu0 0
        %611 = vmatprep.subr.bf16.mxu0 0
        %612 = vmatpush2.bf16.msra.mxu0 0
        %613 = vmatprep.subr.bf16.mxu0 0
        %614 = vmatpush2.bf16.msra.mxu0 0
        %615 = vmatprep.subr.bf16.mxu0 0
        %616 = vmatpush2.bf16.msra.mxu0 0
        %617 = vmatprep.subr.bf16.mxu0 0
        %618 = vmatpush2.bf16.msra.mxu0 0
        %619 = vmatprep.mubr.bf16.mxu0 0
        %620 = vmatmul.mubr.bf16.gmra.mxu0 %v508
        %v621 = vpop.f32.mrf.mxu0
        %v622 = vadd.f32 %v537, %v621
        %v623 = vpop.f32.mrf.mxu0
        %v624 = vpop.f32.mrf.mxu0
        %v625 = vadd.f32 %v537, %v624
        %v626 = vpop.f32.mrf.mxu0
        %627 = vmatprep.mubr.bf16.mxu0 0
        %628 = vmatmul.mubr.bf16.gmra.mxu0 %v509
        %v629 = vpop.f32.mrf.mxu0
        %v630 = vadd.f32 %v537, %v629
        %v631 = vpop.f32.mrf.mxu0
        %v632 = vpop.f32.mrf.mxu0
        %v633 = vadd.f32 %v537, %v632
        %v634 = vpop.f32.mrf.mxu0
        %635 = vmatprep.mubr.bf16.mxu0 0
        %636 = vmatmul.mubr.bf16.gmra.mxu0 %v510
        %v637 = vpop.f32.mrf.mxu0
        %v638 = vadd.f32 %v537, %v637
        %v639 = vpop.f32.mrf.mxu0
        %v640 = vpop.f32.mrf.mxu0
        %v641 = vadd.f32 %v537, %v640
        %v642 = vpop.f32.mrf.mxu0
        %643 = vmatprep.mubr.bf16.mxu0 0
        %644 = vmatmul.mubr.bf16.gmra.mxu0 %v511
        %v645 = vpop.f32.mrf.mxu0
        %v646 = vadd.f32 %v537, %v645
        %v647 = vpop.f32.mrf.mxu0
        %v648 = vpop.f32.mrf.mxu0
        %v649 = vadd.f32 %v537, %v648
        %v650 = vpop.f32.mrf.mxu0
        %651 = vmatprep.mubr.bf16.mxu0 0
        %652 = vmatmul.mubr.bf16.gmra.mxu0 %v512
        %v653 = vpop.f32.mrf.mxu0
        %v654 = vadd.f32 %v537, %v653
        %v655 = vpop.f32.mrf.mxu0
        %v656 = vpop.f32.mrf.mxu0
        %v657 = vadd.f32 %v537, %v656
        %v658 = vpop.f32.mrf.mxu0
        %659 = vmatprep.mubr.bf16.mxu0 0
        %660 = vmatmul.mubr.bf16.gmra.mxu0 %v513
        %v661 = vpop.f32.mrf.mxu0
        %v662 = vadd.f32 %v537, %v661
        %v663 = vpop.f32.mrf.mxu0
        %v664 = vpop.f32.mrf.mxu0
        %v665 = vadd.f32 %v537, %v664
        %v666 = vpop.f32.mrf.mxu0
        %667 = vmatprep.mubr.bf16.mxu0 0
        %668 = vmatmul.mubr.bf16.gmra.mxu0 %v514
        %v669 = vpop.f32.mrf.mxu0
        %v670 = vadd.f32 %v537, %v669
        %v671 = vpop.f32.mrf.mxu0
        %v672 = vpop.f32.mrf.mxu0
        %v673 = vadd.f32 %v537, %v672
        %v674 = vpop.f32.mrf.mxu0
        %675 = vmatprep.mubr.bf16.mxu0 0
        %676 = vmatmul.mubr.bf16.gmra.mxu0 %v515
        %v677 = vpop.f32.mrf.mxu0
        %v678 = vadd.f32 %v537, %v677
        %v679 = vpop.f32.mrf.mxu0
        %v680 = vpop.f32.mrf.mxu0
        %v681 = vadd.f32 %v537, %v680
        %v682 = vpop.f32.mrf.mxu0
        %683 = vdwg.mxu0
        %v684 = vld [vmem:[%s434] sm:$0xff]
        %v685 = vld [vmem:[%s434 + $0x8] sm:$0xff]
        %v686 = vld [vmem:[%s434 + $0x10] sm:$0xff]
        %v687 = vld [vmem:[%s434 + $0x18] sm:$0xff]
        %v688 = vld [vmem:[%s434 + $0x20] sm:$0xff]
        %v689 = vld [vmem:[%s434 + $0x28] sm:$0xff]
        %v690 = vld [vmem:[%s434 + $0x30] sm:$0xff]
        %v691 = vld [vmem:[%s434 + $0x38] sm:$0xff]
        %v692 = vld [vmem:[%s434 + $0x40] sm:$0xff]
        %v693 = vld [vmem:[%s434 + $0x48] sm:$0xff]
        %v694 = vld [vmem:[%s434 + $0x50] sm:$0xff]
        %v695 = vld [vmem:[%s434 + $0x58] sm:$0xff]
        %v696 = vld [vmem:[%s434 + $0x60] sm:$0xff]
        %v697 = vld [vmem:[%s434 + $0x68] sm:$0xff]
        %v698 = vld [vmem:[%s434 + $0x70] sm:$0xff]
        %v699 = vld [vmem:[%s434 + $0x78] sm:$0xff]
        %v700 = vld [vmem:[%s441] sm:$0xff]
        %v701 = vld [vmem:[%s441 + $0x8] sm:$0xff]
        %v702 = vld [vmem:[%s441 + $0x10] sm:$0xff]
        %v703 = vld [vmem:[%s441 + $0x18] sm:$0xff]
        %v704 = vld [vmem:[%s441 + $0x20] sm:$0xff]
        %v705 = vld [vmem:[%s441 + $0x28] sm:$0xff]
        %v706 = vld [vmem:[%s441 + $0x30] sm:$0xff]
        %v707 = vld [vmem:[%s441 + $0x38] sm:$0xff]
        %v708 = vld [vmem:[%s441 + $0x40] sm:$0xff]
        %v709 = vld [vmem:[%s441 + $0x48] sm:$0xff]
        %v710 = vld [vmem:[%s441 + $0x50] sm:$0xff]
        %v711 = vld [vmem:[%s441 + $0x58] sm:$0xff]
        %v712 = vld [vmem:[%s441 + $0x60] sm:$0xff]
        %v713 = vld [vmem:[%s441 + $0x68] sm:$0xff]
        %v714 = vld [vmem:[%s441 + $0x70] sm:$0xff]
        %v715 = vld [vmem:[%s441 + $0x78] sm:$0xff]
        %v716 = vadd.f32 %v684, %v700
        %v717 = vadd.f32 %v685, %v701
        %v718 = vadd.f32 %v686, %v702
        %v719 = vadd.f32 %v687, %v703
        %v720 = vadd.f32 %v688, %v704
        %v721 = vadd.f32 %v689, %v705
        %v722 = vadd.f32 %v690, %v706
        %v723 = vadd.f32 %v691, %v707
        %v724 = vadd.f32 %v692, %v708
        %v725 = vadd.f32 %v693, %v709
        %v726 = vadd.f32 %v694, %v710
        %v727 = vadd.f32 %v695, %v711
        %v728 = vadd.f32 %v696, %v712
        %v729 = vadd.f32 %v697, %v713
        %v730 = vadd.f32 %v698, %v714
        %v731 = vadd.f32 %v699, %v715
        %v732 = vadd.f32 %v716, %v622
        %v733 = vadd.f32 %v717, %v625
        %v734 = vadd.f32 %v718, %v630
        %v735 = vadd.f32 %v719, %v633
        %v736 = vadd.f32 %v720, %v638
        %v737 = vadd.f32 %v721, %v641
        %v738 = vadd.f32 %v722, %v646
        %v739 = vadd.f32 %v723, %v649
        %v740 = vadd.f32 %v724, %v654
        %v741 = vadd.f32 %v725, %v657
        %v742 = vadd.f32 %v726, %v662
        %v743 = vadd.f32 %v727, %v665
        %v744 = vadd.f32 %v728, %v670
        %v745 = vadd.f32 %v729, %v673
        %v746 = vadd.f32 %v730, %v678
        %v747 = vadd.f32 %v731, %v681
        %748 = vst [vmem:[%s489] sm:$0xff] %v732
        %749 = vst [vmem:[%s489 + $0x8] sm:$0xff] %v733
        %750 = vst [vmem:[%s489 + $0x10] sm:$0xff] %v734
        %751 = vst [vmem:[%s489 + $0x18] sm:$0xff] %v735
        %752 = vst [vmem:[%s489 + $0x20] sm:$0xff] %v736
        %753 = vst [vmem:[%s489 + $0x28] sm:$0xff] %v737
        %754 = vst [vmem:[%s489 + $0x30] sm:$0xff] %v738
        %755 = vst [vmem:[%s489 + $0x38] sm:$0xff] %v739
        %756 = vst [vmem:[%s489 + $0x40] sm:$0xff] %v740
        %757 = vst [vmem:[%s489 + $0x48] sm:$0xff] %v741
        %758 = vst [vmem:[%s489 + $0x50] sm:$0xff] %v742
        %759 = vst [vmem:[%s489 + $0x58] sm:$0xff] %v743
        %760 = vst [vmem:[%s489 + $0x60] sm:$0xff] %v744
        %761 = vst [vmem:[%s489 + $0x68] sm:$0xff] %v745
        %762 = vst [vmem:[%s489 + $0x70] sm:$0xff] %v746
        %763 = vst [vmem:[%s489 + $0x78] sm:$0xff] %v747
        %p764 = scmp.eq.s32.totalorder %s18, 0
        // Predicated region
        $region117: #{model_forward.16} parent=107 // pred_check
          %p765 = pneg %p764
        $region118: #{model_forward.16} parent=107 // pred_check_branch
          %767 = sbr.rel (%p765) target = $region120
        $region119: #{model_forward.16} parent=107 // pred_region
          %768 = vst [vmem:[%s6] sm:$0x3] 0.0
        $region120: #{model_forward.16} parent=107 // pred_fallthru
          _
        %v769 = vld [vmem:[%s6] sm:$0x1]
        %v770 = vadd.f32 %v732, %v733
        %v771 = vadd.f32 %v770, %v734
        %v772 = vadd.f32 %v771, %v735
        %v773 = vadd.f32 %v772, %v736
        %v774 = vadd.f32 %v773, %v737
        %v775 = vadd.f32 %v774, %v738
        %v776 = vadd.f32 %v775, %v739
        %v777 = vadd.f32 %v776, %v740
        %v778 = vadd.f32 %v777, %v741
        %v779 = vadd.f32 %v778, %v742
        %v780 = vadd.f32 %v779, %v743
        %v781 = vadd.f32 %v780, %v744
        %v782 = vadd.f32 %v781, %v745
        %v783 = vadd.f32 %v782, %v746
        %v784 = vadd.f32 %v783, %v747
        %v785 = vrot.slane %v784, 4
        %v786 = vadd.f32 %v784, %v785
        %v787 = vrot.slane %v786, 2
        %v788 = vadd.f32 %v786, %v787
        %v789 = vrot.slane %v788, 1
        %v790 = vadd.f32 %v788, %v789
        %v791 = vadd.f32 %v769, %v790
        %792 = vst [vmem:[%s6] sm:$0x1] %v791
        %v793 = vld [vmem:[%s6 + $0x1] sm:$0x1]
        %v794 = vmul.f32 %v732, %v732
        %v795 = vmul.f32 %v733, %v733
        %v796 = vmul.f32 %v734, %v734
        %v797 = vmul.f32 %v735, %v735
        %v798 = vmul.f32 %v736, %v736
        %v799 = vmul.f32 %v737, %v737
        %v800 = vmul.f32 %v738, %v738
        %v801 = vmul.f32 %v739, %v739
        %v802 = vmul.f32 %v740, %v740
        %v803 = vmul.f32 %v741, %v741
        %v804 = vmul.f32 %v742, %v742
        %v805 = vmul.f32 %v743, %v743
        %v806 = vmul.f32 %v744, %v744
        %v807 = vmul.f32 %v745, %v745
        %v808 = vmul.f32 %v746, %v746
        %v809 = vmul.f32 %v747, %v747
        %v810 = vadd.f32 %v794, %v795
        %v811 = vadd.f32 %v810, %v796
        %v812 = vadd.f32 %v811, %v797
        %v813 = vadd.f32 %v812, %v798
        %v814 = vadd.f32 %v813, %v799
        %v815 = vadd.f32 %v814, %v800
        %v816 = vadd.f32 %v815, %v801
        %v817 = vadd.f32 %v816, %v802
        %v818 = vadd.f32 %v817, %v803
        %v819 = vadd.f32 %v818, %v804
        %v820 = vadd.f32 %v819, %v805
        %v821 = vadd.f32 %v820, %v806
        %v822 = vadd.f32 %v821, %v807
        %v823 = vadd.f32 %v822, %v808
        %v824 = vadd.f32 %v823, %v809
        %v825 = vrot.slane %v824, 4
        %v826 = vadd.f32 %v824, %v825
        %v827 = vrot.slane %v826, 2
        %v828 = vadd.f32 %v826, %v827
        %v829 = vrot.slane %v828, 1
        %v830 = vadd.f32 %v828, %v829
        %v831 = vadd.f32 %v793, %v830
        %832 = vst [vmem:[%s6 + $0x1] sm:$0x1] %v831
        %p833 = scmp.eq.s32.totalorder %s18, 3
        // Predicated region
        $region121: #{model_forward.16} parent=107 // pred_check
          %p834 = pneg %p833
        $region122: #{model_forward.16} parent=107 // pred_check_branch
          %836 = sbr.rel (%p834) target = $region124
        $region123: #{model_forward.16} parent=107 // pred_region
          %v837 = vld [vmem:[%s6] sm:$0x1]
          %v838 = vld [vmem:[%s6 + $0x1] sm:$0x1]
          %v839 = vmul.f32 %v837, 0.001953125
          %v840 = vmul.f32 %v838, 0.001953125
          %v841 = vmul.f32 %v839, %v839
          %v842 = vsub.f32 %v840, %v841
          %843 = vst [vmem:[%s6] sm:$0x1] %v839
          %v844 = vadd.f32 %v842, 1e-05
          %v845 = vrsqrt.pop %v844
          %846 = vst [vmem:[%s6 + $0x1] sm:$0x1] %v845
        $region124: #{model_forward.16} parent=107 // pred_fallthru
          _
        %s847 = smul.u32 16, %s18
        %p848 = scmp.lt.s32.totalorder %s847, 63
        %s849 = scalar_select %p848, %s847, 63
        %s850 = smul.addr %s849, 8
        %s851 = scalar_lea.vmem %s5, %s850
        // Predicated region
        $region125: #{model_forward.16} parent=107 // pred_check
          %p852 = pneg %p156
        $region126: #{model_forward.16} parent=107 // pred_check_branch
          %854 = sbr.rel (%p852) target = $region128
        $region127: #{model_forward.16} parent=107 // pred_region
          %s855 = smul.u32 16, %s18
        $region128: #{model_forward.16} parent=107 // pred_fallthru
          _
        // Predicated region
        $region129: #{model_forward.16} parent=107 // pred_check
          %p856 = pneg %p177
        $region130: #{model_forward.16} parent=107 // pred_check_branch
          %858 = sbr.rel (%p856) target = $region132
        $region131: #{model_forward.16} parent=107 // pred_region
          _
        $region132: #{model_forward.16} parent=107 // pred_fallthru
          _
        // Predicated region
        $region133: #{model_forward.16} parent=107 // pred_check
          %p859 = pneg %p177
        $region134: #{model_forward.16} parent=107 // pred_check_branch
          %861 = sbr.rel (%p859) target = $region136
        $region135: #{model_forward.16} parent=107 // pred_region
          _
        $region136: #{model_forward.16} parent=107 // pred_fallthru
          _
      $region108: #{model_forward.16} parent=5 // pred_fallthru
        _
      %p862 = scmp.le.s32.totalorder 2, %s13
      // Predicated region
      $region137: #{model_forward.16} parent=5 // pred_check
        %p863 = pneg %p862
      $region138: #{model_forward.16} parent=5 // pred_check_branch
        %865 = sbr.rel (%p863) target = $region140
      $region139: #{model_forward.16} parent=5 // pred_region
        %s866 = ssub.s32 %s13, 2
        // Predicated region
        $region141: #{model_forward.16} parent=139 // pred_check
          %p867 = pneg %p162
        $region142: #{model_forward.16} parent=139 // pred_check_branch
          %869 = sbr.rel (%p867) target = $region144
        $region143: #{model_forward.16} parent=139 // pred_region
          %s870 = smul.u32 16, %s19
          %p871 = scmp.lt.s32.totalorder %s870, 63
          %s872 = scalar_select %p871, %s870, 63
          %s873 = smul.addr %s872, 8
          %s874 = scalar_lea.vmem %s5, %s873
        $region144: #{model_forward.16} parent=139 // pred_fallthru
          _
      $region140: #{model_forward.16} parent=5 // pred_fallthru
        _
    $region6: #{model_forward.16} parent=1 // loop_footer
      %s17 = sadd.s32 1, %s13
    $region7: #{model_forward.16} parent=1 // loop_footer_branch
      %12 = sbr.rel target = $region3
    $region8: #{model_forward.16} parent=1 // loop_exit
      _

// kernel: model_forward.18
$region0: #{model_forward.18}
  #allocation0 [shape = 'u32[]', space=smem, size = 0x4, offset = 0x4, fixed_abs, tag = 'smem constant byte address 0x4 - core index']
  #allocation1 [shape = 'u32[144,128]{1,0:T(1,128)}', space=vmem, size = 0x12000, scoped, tag = 'internal scratch']
  %s0 = inlined_call_operand.vmem [shape: f32[256,640], index: 0, kind: input, shape index: {}]
  %s1 = inlined_call_operand.vmem [shape: f32[256,128], index: 1, kind: input, shape index: {}]
  %s2 = inlined_call_operand.vmem [shape: f32[256,128], index: 2, kind: input, shape index: {}]
  %s3 = inlined_call_operand.vmem [shape: f32[256,128], index: 3, kind: input, shape index: {}]
  %s4 = inlined_call_operand.vmem [shape: f32[256,128], index: 4, kind: input, shape index: {}]
  %s5 = inlined_call_operand.vmem [shape: f32[256,128], index: 5, kind: output, shape index: {0}]
  %s6 = inlined_call_operand.vmem [shape: f32[2,128], index: 6, kind: output, shape index: {1}]
  %7 = xla_tuple %s5, %s6
  %s8 = sld [smem:[#allocation0]]
  $region107: #{model_forward.18} parent=0
    _
  %s10 = ssub.s32 1, %s8
  %s11 = scalar_select 0, %s10, %s8
  $region1: #{model_forward.18} parent=0
    #allocation2 [shape = 'u8[131072]{0}', space=vmem, size = 0x20000, scoped, tag = 'input window, operand 0']
    loop: start=0, step=1, limit=4
    $region2: #{model_forward.18} parent=1 // loop_pre_header
      _
    $region3: #{model_forward.18} parent=1 // loop_header
      %s13 = sphi 0, %s17
      %p14 = scmp.ge.s32.totalorder %s13, 4
      %s23 = sphi 0, %s25
      %s26 = sphi 0, %s23
      %s27 = sphi 0, %s26
      %s43 = sphi 0, %s27
      %s49 = sphi 0, %s51
      %s52 = sphi 0, %s49
      %s53 = sphi 0, %s52
      %s69 = sphi 0, %s53
      %s75 = sphi 0, %s77
      %s78 = sphi 0, %s75
      %s79 = sphi 0, %s78
      %s95 = sphi 0, %s79
      %s101 = sphi 0, %s103
      %s104 = sphi 0, %s101
      %s105 = sphi 0, %s104
      %s121 = sphi 0, %s105
      %s127 = sphi 0, %s129
      %s130 = sphi 0, %s127
      %s131 = sphi 0, %s130
      %s147 = sphi 0, %s131
      %s153 = sphi 0, %s155
      %s156 = sphi 0, %s153
      %s157 = sphi 0, %s156
      %s173 = sphi 0, %s157
      %s177 = sphi 0, %s177
      %s179 = sphi 0, %s177
      %s180 = sphi 0, %s179
      %s194 = sphi 0, %s180
    $region4: #{model_forward.18} parent=1 // loop_header_branch
      %16 = sbr.rel (%p14) target = $region8
    $region5: #{model_forward.18} parent=1 // loop_body
      %s18 = ssub.s32 %s13, 1
      %s19 = ssub.s32 %s13, 2
      %s20 = sadd.s32 %s13, 1
      %s21 = ssub.s32 %s13, %s20
      %p22 = scmp.eq.s32.totalorder %s21, 0
      %s24 = sadd.s32 %s23, 1
      %s25 = scalar_select %p22, %s23, %s24
      %p28 = pneg %p22
      %p29 = scmp.eq.s32.totalorder %s13, 1
      %p30 = por %p28, %p29
      %p31 = scmp.ne.s32.totalorder %s23, %s26
      %p32 = scmp.eq.s32.totalorder %s13, 0
      %p33 = por %p31, %p32
      %p34 = scmp.ne.s32.totalorder %s23, %s26
      %p35 = scmp.eq.s32.totalorder %s18, 1
      %p36 = por %p34, %p35
      %p37 = scmp.ne.s32.totalorder %s26, %s27
      %p38 = scmp.eq.s32.totalorder %s18, 0
      %p39 = por %p37, %p38
      %p40 = scmp.ne.s32.totalorder %s26, %s27
      %p41 = scmp.eq.s32.totalorder %s19, 1
      %p42 = por %p40, %p41
      %p44 = scmp.ne.s32.totalorder %s27, %s43
      %p45 = scmp.eq.s32.totalorder %s19, 0
      %p46 = por %p44, %p45
      %s47 = ssub.s32 %s13, %s20
      %p48 = scmp.eq.s32.totalorder %s47, 0
      %s50 = sadd.s32 %s49, 1
      %s51 = scalar_select %p48, %s49, %s50
      %p54 = pneg %p48
      %p55 = scmp.eq.s32.totalorder %s13, 1
      %p56 = por %p54, %p55
      %p57 = scmp.ne.s32.totalorder %s49, %s52
      %p58 = scmp.eq.s32.totalorder %s13, 0
      %p59 = por %p57, %p58
      %p60 = scmp.ne.s32.totalorder %s49, %s52
      %p61 = scmp.eq.s32.totalorder %s18, 1
      %p62 = por %p60, %p61
      %p63 = scmp.ne.s32.totalorder %s52, %s53
      %p64 = scmp.eq.s32.totalorder %s18, 0
      %p65 = por %p63, %p64
      %p66 = scmp.ne.s32.totalorder %s52, %s53
      %p67 = scmp.eq.s32.totalorder %s19, 1
      %p68 = por %p66, %p67
      %p70 = scmp.ne.s32.totalorder %s53, %s69
      %p71 = scmp.eq.s32.totalorder %s19, 0
      %p72 = por %p70, %p71
      %s73 = ssub.s32 %s13, %s20
      %p74 = scmp.eq.s32.totalorder %s73, 0
      %s76 = sadd.s32 %s75, 1
      %s77 = scalar_select %p74, %s75, %s76
      %p80 = pneg %p74
      %p81 = scmp.eq.s32.totalorder %s13, 1
      %p82 = por %p80, %p81
      %p83 = scmp.ne.s32.totalorder %s75, %s78
      %p84 = scmp.eq.s32.totalorder %s13, 0
      %p85 = por %p83, %p84
      %p86 = scmp.ne.s32.totalorder %s75, %s78
      %p87 = scmp.eq.s32.totalorder %s18, 1
      %p88 = por %p86, %p87
      %p89 = scmp.ne.s32.totalorder %s78, %s79
      %p90 = scmp.eq.s32.totalorder %s18, 0
      %p91 = por %p89, %p90
      %p92 = scmp.ne.s32.totalorder %s78, %s79
      %p93 = scmp.eq.s32.totalorder %s19, 1
      %p94 = por %p92, %p93
      %p96 = scmp.ne.s32.totalorder %s79, %s95
      %p97 = scmp.eq.s32.totalorder %s19, 0
      %p98 = por %p96, %p97
      %s99 = ssub.s32 %s13, %s20
      %p100 = scmp.eq.s32.totalorder %s99, 0
      %s102 = sadd.s32 %s101, 1
      %s103 = scalar_select %p100, %s101, %s102
      %p106 = pneg %p100
      %p107 = scmp.eq.s32.totalorder %s13, 1
      %p108 = por %p106, %p107
      %p109 = scmp.ne.s32.totalorder %s101, %s104
      %p110 = scmp.eq.s32.totalorder %s13, 0
      %p111 = por %p109, %p110
      %p112 = scmp.ne.s32.totalorder %s101, %s104
      %p113 = scmp.eq.s32.totalorder %s18, 1
      %p114 = por %p112, %p113
      %p115 = scmp.ne.s32.totalorder %s104, %s105
      %p116 = scmp.eq.s32.totalorder %s18, 0
      %p117 = por %p115, %p116
      %p118 = scmp.ne.s32.totalorder %s104, %s105
      %p119 = scmp.eq.s32.totalorder %s19, 1
      %p120 = por %p118, %p119
      %p122 = scmp.ne.s32.totalorder %s105, %s121
      %p123 = scmp.eq.s32.totalorder %s19, 0
      %p124 = por %p122, %p123
      %s125 = ssub.s32 %s13, %s20
      %p126 = scmp.eq.s32.totalorder %s125, 0
      %s128 = sadd.s32 %s127, 1
      %s129 = scalar_select %p126, %s127, %s128
      %p132 = pneg %p126
      %p133 = scmp.eq.s32.totalorder %s13, 1
      %p134 = por %p132, %p133
      %p135 = scmp.ne.s32.totalorder %s127, %s130
      %p136 = scmp.eq.s32.totalorder %s13, 0
      %p137 = por %p135, %p136
      %p138 = scmp.ne.s32.totalorder %s127, %s130
      %p139 = scmp.eq.s32.totalorder %s18, 1
      %p140 = por %p138, %p139
      %p141 = scmp.ne.s32.totalorder %s130, %s131
      %p142 = scmp.eq.s32.totalorder %s18, 0
      %p143 = por %p141, %p142
      %p144 = scmp.ne.s32.totalorder %s130, %s131
      %p145 = scmp.eq.s32.totalorder %s19, 1
      %p146 = por %p144, %p145
      %p148 = scmp.ne.s32.totalorder %s131, %s147
      %p149 = scmp.eq.s32.totalorder %s19, 0
      %p150 = por %p148, %p149
      %s151 = ssub.s32 %s13, %s20
      %p152 = scmp.eq.s32.totalorder %s151, 0
      %s154 = sadd.s32 %s153, 1
      %s155 = scalar_select %p152, %s153, %s154
      %p158 = pneg %p152
      %p159 = scmp.eq.s32.totalorder %s13, 1
      %p160 = por %p158, %p159
      %p161 = scmp.ne.s32.totalorder %s153, %s156
      %p162 = scmp.eq.s32.totalorder %s13, 0
      %p163 = por %p161, %p162
      %p164 = scmp.ne.s32.totalorder %s153, %s156
      %p165 = scmp.eq.s32.totalorder %s18, 1
      %p166 = por %p164, %p165
      %p167 = scmp.ne.s32.totalorder %s156, %s157
      %p168 = scmp.eq.s32.totalorder %s18, 0
      %p169 = por %p167, %p168
      %p170 = scmp.ne.s32.totalorder %s156, %s157
      %p171 = scmp.eq.s32.totalorder %s19, 1
      %p172 = por %p170, %p171
      %p174 = scmp.ne.s32.totalorder %s157, %s173
      %p175 = scmp.eq.s32.totalorder %s19, 0
      %p176 = por %p174, %p175
      %s178 = sadd.s32 %s177, 1
      %p181 = scmp.eq.s32.totalorder %s13, 1
      %p182 = scmp.ne.s32.totalorder %s177, %s179
      %p183 = scmp.eq.s32.totalorder %s13, 0
      %p184 = por %p182, %p183
      %p185 = scmp.ne.s32.totalorder %s177, %s179
      %p186 = scmp.eq.s32.totalorder %s18, 1
      %p187 = por %p185, %p186
      %p188 = scmp.ne.s32.totalorder %s179, %s180
      %p189 = scmp.eq.s32.totalorder %s18, 0
      %p190 = por %p188, %p189
      %p191 = scmp.ne.s32.totalorder %s179, %s180
      %p192 = scmp.eq.s32.totalorder %s19, 1
      %p193 = por %p191, %p192
      %p195 = scmp.ne.s32.totalorder %s180, %s194
      %p196 = scmp.eq.s32.totalorder %s19, 0
      %p197 = por %p195, %p196
      %p198 = scmp.le.s32.totalorder 1, %s13
      %p199 = scmp.lt.s32.totalorder %s13, 3
      %p200 = pnand %p198, %p199
      %p201 = pneg %p200
      // Predicated region
      $region9: #{model_forward.18} parent=5 // pred_check
        _
      $region10: #{model_forward.18} parent=5 // pred_check_branch
        %203 = sbr.rel (%p200) target = $region12
      $region11: #{model_forward.18} parent=5 // pred_region
        %s204 = ssub.s32 %s13, 1
      $region12: #{model_forward.18} parent=5 // pred_fallthru
        _
      %p205 = scmp.lt.s32.totalorder %s13, 2
      // Predicated region
      $region13: #{model_forward.18} parent=5 // pred_check
        %p206 = pneg %p205
      $region14: #{model_forward.18} parent=5 // pred_check_branch
        %208 = sbr.rel (%p206) target = $region16
      $region15: #{model_forward.18} parent=5 // pred_region
        // Predicated region
        $region17: #{model_forward.18} parent=15 // pred_check
          %p209 = pneg %p33
        $region18: #{model_forward.18} parent=15 // pred_check_branch
          %211 = sbr.rel (%p209) target = $region20
        $region19: #{model_forward.18} parent=15 // pred_region
          %s212 = sand.u32 %s23, 1
          %s213 = sand.u32 %s23, 1
          %s214 = smul.addr %s213, 128
          %s215 = scalar_lea.vmem [#allocation2], %s214
          %s216 = smul.u32 16, %s13
          %s217 = smul.addr %s216, 5
          %s218 = smul.addr %s217, 8
          %s219 = scalar_lea.vmem %s0, %s218
          // Predicated region
          $region21: #{model_forward.18} parent=19 // pred_check
            _
          $region22: #{model_forward.18} parent=19 // pred_check_branch
            %221 = sbr.rel (0) target = $region24
          $region23: #{model_forward.18} parent=19 // pred_region
            // Predicated region
            $region25: #{model_forward.18} parent=23 // pred_check
              _
            $region26: #{model_forward.18} parent=23 // pred_check_branch
              %223 = sbr.rel (0) target = $region28
            $region27: #{model_forward.18} parent=23 // pred_region
              // Predicated region
              $region40: #{model_forward.18} parent=27 // pred_check
                _
              $region41: #{model_forward.18} parent=27 // pred_check_branch
                %269 = sbr.rel (0) target = $region43
              $region42: #{model_forward.18} parent=27 // pred_region
                loop: start=0, step=1, limit=1
                $region44: #{model_forward.18} parent=42 // loop_pre_header
                  _
                $region45: #{model_forward.18} parent=42 // loop_header
                  %s271 = sphi 0, %s275
                  %p272 = scmp.ge.s32.totalorder %s271, 1
                  %s276 = sphi %s219, %s219
                  %s277 = sphi %s215, %s215
                $region46: #{model_forward.18} parent=42 // loop_header_branch
                  %274 = sbr.rel (%p272) target = $region50
                $region47: #{model_forward.18} parent=42 // loop_body
                  %v278 = vld [vmem:[%s276] sm:$0xff]
                  %279 = vst [vmem:[%s277] sm:$0xff] %v278
                  %v280 = vld [vmem:[%s276 + $0x28] sm:$0xff]
                  %281 = vst [vmem:[%s277 + $0x8] sm:$0xff] %v280
                  %v282 = vld [vmem:[%s276 + $0x50] sm:$0xff]
                  %283 = vst [vmem:[%s277 + $0x10] sm:$0xff] %v282
                  %v284 = vld [vmem:[%s276 + $0x78] sm:$0xff]
                  %285 = vst [vmem:[%s277 + $0x18] sm:$0xff] %v284
                  %v286 = vld [vmem:[%s276 + $0xa0] sm:$0xff]
                  %287 = vst [vmem:[%s277 + $0x20] sm:$0xff] %v286
                  %v288 = vld [vmem:[%s276 + $0xc8] sm:$0xff]
                  %289 = vst [vmem:[%s277 + $0x28] sm:$0xff] %v288
                  %v290 = vld [vmem:[%s276 + $0xf0] sm:$0xff]
                  %291 = vst [vmem:[%s277 + $0x30] sm:$0xff] %v290
                  %v292 = vld [vmem:[%s276 + $0x118] sm:$0xff]
                  %293 = vst [vmem:[%s277 + $0x38] sm:$0xff] %v292
                  %v294 = vld [vmem:[%s276 + $0x140] sm:$0xff]
                  %295 = vst [vmem:[%s277 + $0x40] sm:$0xff] %v294
                  %v296 = vld [vmem:[%s276 + $0x168] sm:$0xff]
                  %297 = vst [vmem:[%s277 + $0x48] sm:$0xff] %v296
                  %v298 = vld [vmem:[%s276 + $0x190] sm:$0xff]
                  %299 = vst [vmem:[%s277 + $0x50] sm:$0xff] %v298
                  %v300 = vld [vmem:[%s276 + $0x1b8] sm:$0xff]
                  %301 = vst [vmem:[%s277 + $0x58] sm:$0xff] %v300
                  %v302 = vld [vmem:[%s276 + $0x1e0] sm:$0xff]
                  %303 = vst [vmem:[%s277 + $0x60] sm:$0xff] %v302
                  %v304 = vld [vmem:[%s276 + $0x208] sm:$0xff]
                  %305 = vst [vmem:[%s277 + $0x68] sm:$0xff] %v304
                  %v306 = vld [vmem:[%s276 + $0x230] sm:$0xff]
                  %307 = vst [vmem:[%s277 + $0x70] sm:$0xff] %v306
                  %v308 = vld [vmem:[%s276 + $0x258] sm:$0xff]
                  %309 = vst [vmem:[%s277 + $0x78] sm:$0xff] %v308
                $region48: #{model_forward.18} parent=42 // loop_footer
                  %s275 = sadd.s32 1, %s271
                $region49: #{model_forward.18} parent=42 // loop_footer_branch
                  %270 = sbr.rel target = $region45
                $region50: #{model_forward.18} parent=42 // loop_exit
                  _
              $region43: #{model_forward.18} parent=27 // pred_fallthru
                _
              // Predicated region
              $region51: #{model_forward.18} parent=27 // pred_check
                _
              $region52: #{model_forward.18} parent=27 // pred_check_branch
                %311 = sbr.rel target = $region54
              $region53: #{model_forward.18} parent=27 // pred_region
                _
              $region54: #{model_forward.18} parent=27 // pred_fallthru
                _
            $region28: #{model_forward.18} parent=23 // pred_fallthru
              _
            // Predicated region
            $region29: #{model_forward.18} parent=23 // pred_check
              _
            $region30: #{model_forward.18} parent=23 // pred_check_branch
              %225 = sbr.rel target = $region32
            $region31: #{model_forward.18} parent=23 // pred_region
              %s227 = ssub.s32 256, 1
              loop: start=0, step=1, limit=1
              $region33: #{model_forward.18} parent=31 // loop_pre_header
                _
              $region34: #{model_forward.18} parent=31 // loop_header
                %s229 = sphi 0, %s233
                %p230 = scmp.ge.s32.totalorder %s229, 1
                %s234 = sphi %s219, %s219
                %s235 = sphi %s215, %s215
              $region35: #{model_forward.18} parent=31 // loop_header_branch
                %232 = sbr.rel (%p230) target = $region39
              $region36: #{model_forward.18} parent=31 // loop_body
                %v236 = vld [vmem:[%s234] sm:%s227]
                %237 = vst [vmem:[%s235] sm:%s227] %v236
                %v238 = vld [vmem:[%s234 + $0x28] sm:%s227]
                %239 = vst [vmem:[%s235 + $0x8] sm:%s227] %v238
                %v240 = vld [vmem:[%s234 + $0x50] sm:%s227]
                %241 = vst [vmem:[%s235 + $0x10] sm:%s227] %v240
                %v242 = vld [vmem:[%s234 + $0x78] sm:%s227]
                %243 = vst [vmem:[%s235 + $0x18] sm:%s227] %v242
                %v244 = vld [vmem:[%s234 + $0xa0] sm:%s227]
                %245 = vst [vmem:[%s235 + $0x20] sm:%s227] %v244
                %v246 = vld [vmem:[%s234 + $0xc8] sm:%s227]
                %247 = vst [vmem:[%s235 + $0x28] sm:%s227] %v246
                %v248 = vld [vmem:[%s234 + $0xf0] sm:%s227]
                %249 = vst [vmem:[%s235 + $0x30] sm:%s227] %v248
                %v250 = vld [vmem:[%s234 + $0x118] sm:%s227]
                %251 = vst [vmem:[%s235 + $0x38] sm:%s227] %v250
                %v252 = vld [vmem:[%s234 + $0x140] sm:%s227]
                %253 = vst [vmem:[%s235 + $0x40] sm:%s227] %v252
                %v254 = vld [vmem:[%s234 + $0x168] sm:%s227]
                %255 = vst [vmem:[%s235 + $0x48] sm:%s227] %v254
                %v256 = vld [vmem:[%s234 + $0x190] sm:%s227]
                %257 = vst [vmem:[%s235 + $0x50] sm:%s227] %v256
                %v258 = vld [vmem:[%s234 + $0x1b8] sm:%s227]
                %259 = vst [vmem:[%s235 + $0x58] sm:%s227] %v258
                %v260 = vld [vmem:[%s234 + $0x1e0] sm:%s227]
                %261 = vst [vmem:[%s235 + $0x60] sm:%s227] %v260
                %v262 = vld [vmem:[%s234 + $0x208] sm:%s227]
                %263 = vst [vmem:[%s235 + $0x68] sm:%s227] %v262
                %v264 = vld [vmem:[%s234 + $0x230] sm:%s227]
                %265 = vst [vmem:[%s235 + $0x70] sm:%s227] %v264
                %v266 = vld [vmem:[%s234 + $0x258] sm:%s227]
                %267 = vst [vmem:[%s235 + $0x78] sm:%s227] %v266
              $region37: #{model_forward.18} parent=31 // loop_footer
                %s233 = sadd.s32 1, %s229
              $region38: #{model_forward.18} parent=31 // loop_footer_branch
                %228 = sbr.rel target = $region34
              $region39: #{model_forward.18} parent=31 // loop_exit
                _
            $region32: #{model_forward.18} parent=23 // pred_fallthru
              _
          $region24: #{model_forward.18} parent=19 // pred_fallthru
            _
          %312 = vnop
        $region20: #{model_forward.18} parent=15 // pred_fallthru
          _
        // Predicated region
        $region55: #{model_forward.18} parent=15 // pred_check
          %p313 = pneg %p59
        $region56: #{model_forward.18} parent=15 // pred_check_branch
          %315 = sbr.rel (%p313) target = $region58
        $region57: #{model_forward.18} parent=15 // pred_region
          %s316 = smul.u32 16, %s13
          %p317 = scmp.lt.s32.totalorder %s316, 31
          %s318 = scalar_select %p317, %s316, 31
          %s319 = smul.addr %s318, 8
          %s320 = scalar_lea.vmem %s1, %s319
          %s321 = smul.u32 16, %s13
        $region58: #{model_forward.18} parent=15 // pred_fallthru
          _
        // Predicated region
        $region59: #{model_forward.18} parent=15 // pred_check
          %p322 = pneg %p85
        $region60: #{model_forward.18} parent=15 // pred_check_branch
          %324 = sbr.rel (%p322) target = $region62
        $region61: #{model_forward.18} parent=15 // pred_region
          %s325 = smul.u32 16, %s13
          %p326 = scmp.lt.s32.totalorder %s325, 31
          %s327 = scalar_select %p326, %s325, 31
          %s328 = smul.addr %s327, 8
          %s329 = scalar_lea.vmem %s2, %s328
          %s330 = smul.u32 16, %s13
        $region62: #{model_forward.18} parent=15 // pred_fallthru
          _
        // Predicated region
        $region63: #{model_forward.18} parent=15 // pred_check
          %p331 = pneg %p111
        $region64: #{model_forward.18} parent=15 // pred_check_branch
          %333 = sbr.rel (%p331) target = $region66
        $region65: #{model_forward.18} parent=15 // pred_region
          %s334 = smul.u32 16, %s13
          %p335 = scmp.lt.s32.totalorder %s334, 31
          %s336 = scalar_select %p335, %s334, 31
          %s337 = smul.addr %s336, 8
          %s338 = scalar_lea.vmem %s3, %s337
          %s339 = smul.u32 16, %s13
        $region66: #{model_forward.18} parent=15 // pred_fallthru
          _
        // Predicated region
        $region67: #{model_forward.18} parent=15 // pred_check
          %p340 = pneg %p137
        $region68: #{model_forward.18} parent=15 // pred_check_branch
          %342 = sbr.rel (%p340) target = $region70
        $region69: #{model_forward.18} parent=15 // pred_region
          %s343 = smul.u32 16, %s13
          %p344 = scmp.lt.s32.totalorder %s343, 31
          %s345 = scalar_select %p344, %s343, 31
          %s346 = smul.addr %s345, 8
          %s347 = scalar_lea.vmem %s4, %s346
          %s348 = smul.u32 16, %s13
        $region70: #{model_forward.18} parent=15 // pred_fallthru
          _
      $region16: #{model_forward.18} parent=5 // pred_fallthru
        _
      %p349 = scmp.le.s32.totalorder 1, %s13
      %p350 = scmp.lt.s32.totalorder %s13, 3
      %p351 = pnand %p349, %p350
      %p352 = pneg %p351
      // Predicated region
      $region71: #{model_forward.18} parent=5 // pred_check
        _
      $region72: #{model_forward.18} parent=5 // pred_check_branch
        %354 = sbr.rel (%p351) target = $region74
      $region73: #{model_forward.18} parent=5 // pred_region
        %s355 = ssub.s32 %s13, 1
        %s356 = sand.u32 %s26, 1
        %s357 = sand.u32 %s26, 1
        %s358 = smul.addr %s357, 128
        %s359 = scalar_lea.vmem [#allocation2], %s358
        // Predicated region
        $region75: #{model_forward.18} parent=73 // pred_check
          %p360 = pneg %p39
        $region76: #{model_forward.18} parent=73 // pred_check_branch
          %362 = sbr.rel (%p360) target = $region78
        $region77: #{model_forward.18} parent=73 // pred_region
          _
        $region78: #{model_forward.18} parent=73 // pred_fallthru
          _
        %s363 = sand.u32 %s26, 1
        %s364 = sand.u32 %s26, 1
        %s365 = smul.addr %s364, 128
        %s366 = scalar_lea.vmem [#allocation2], %s365
        %p367 = pneg %p39
        %p368 = pneg %p36
        %s369 = smul.u32 16, %s18
        %p370 = scmp.lt.s32.totalorder %s369, 31
        %s371 = scalar_select %p370, %s369, 31
        %s372 = smul.addr %s371, 8
        %s373 = scalar_lea.vmem %s1, %s372
        %p374 = pneg %p65
        %p375 = pneg %p62
        %s376 = smul.u32 16, %s18
        %p377 = scmp.lt.s32.totalorder %s376, 31
        %s378 = scalar_select %p377, %s376, 31
        %s379 = smul.addr %s378, 8
        %s380 = scalar_lea.vmem %s2, %s379
        %p381 = pneg %p91
        %p382 = pneg %p88
        %s383 = smul.u32 16, %s18
        %p384 = scmp.lt.s32.totalorder %s383, 31
        %s385 = scalar_select %p384, %s383, 31
        %s386 = smul.addr %s385, 8
        %s387 = scalar_lea.vmem %s3, %s386
        %p388 = pneg %p117
        %p389 = pneg %p114
        %s390 = smul.u32 16, %s18
        %p391 = scmp.lt.s32.totalorder %s390, 31
        %s392 = scalar_select %p391, %s390, 31
        %s393 = smul.addr %s392, 8
        %s394 = scalar_lea.vmem %s4, %s393
        %p395 = pneg %p143
        %p396 = pneg %p140
        %p397 = pneg %p169
        %p398 = pneg %p166
        %s399 = smul.u32 16, %s18
        %p400 = scmp.lt.s32.totalorder %s399, 31
        %s401 = scalar_select %p400, %s399, 31
        %s402 = smul.addr %s401, 8
        %s403 = scalar_lea.vmem %s5, %s402
        %p404 = pneg %p190
        %p405 = pneg %p187
        %s406 = smul.u32 16, %s18
        %s407 = smul.u32 16, %s18
        %p408 = scmp.lt.s32.totalorder %s407, 31
        %s409 = scalar_select %p408, %s407, 31
        %s410 = smul.addr %s409, 8
        %s411 = scalar_lea.vmem %s1, %s410
        %s412 = smul.u32 16, %s18
        %s413 = smul.u32 16, %s18
        %p414 = scmp.lt.s32.totalorder %s413, 31
        %s415 = scalar_select %p414, %s413, 31
        %s416 = smul.addr %s415, 8
        %s417 = scalar_lea.vmem %s2, %s416
        %s418 = smul.u32 16, %s18
        %s419 = smul.u32 16, %s18
        %p420 = scmp.lt.s32.totalorder %s419, 31
        %s421 = scalar_select %p420, %s419, 31
        %s422 = smul.addr %s421, 8
        %s423 = scalar_lea.vmem %s3, %s422
        %s424 = smul.u32 16, %s18
        %s425 = smul.u32 16, %s18
        %p426 = scmp.lt.s32.totalorder %s425, 31
        %s427 = scalar_select %p426, %s425, 31
        %s428 = smul.addr %s427, 8
        %s429 = scalar_lea.vmem %s4, %s428
        %s430 = smul.u32 16, %s18
        %s431 = smul.u32 16, %s18
        %p432 = scmp.lt.s32.totalorder %s431, 31
        %s433 = scalar_select %p432, %s431, 31
        %s434 = smul.addr %s433, 8
        %s435 = scalar_lea.vmem %s5, %s434
        %s436 = smul.u32 16, %s18
        %v437 = vld [vmem:[%s411] sm:$0xff]
        %v438 = vld [vmem:[%s411 + $0x8] sm:$0xff]
        %v439 = vld [vmem:[%s411 + $0x10] sm:$0xff]
        %v440 = vld [vmem:[%s411 + $0x18] sm:$0xff]
        %v441 = vld [vmem:[%s411 + $0x20] sm:$0xff]
        %v442 = vld [vmem:[%s411 + $0x28] sm:$0xff]
        %v443 = vld [vmem:[%s411 + $0x30] sm:$0xff]
        %v444 = vld [vmem:[%s411 + $0x38] sm:$0xff]
        %v445 = vld [vmem:[%s411 + $0x40] sm:$0xff]
        %v446 = vld [vmem:[%s411 + $0x48] sm:$0xff]
        %v447 = vld [vmem:[%s411 + $0x50] sm:$0xff]
        %v448 = vld [vmem:[%s411 + $0x58] sm:$0xff]
        %v449 = vld [vmem:[%s411 + $0x60] sm:$0xff]
        %v450 = vld [vmem:[%s411 + $0x68] sm:$0xff]
        %v451 = vld [vmem:[%s411 + $0x70] sm:$0xff]
        %v452 = vld [vmem:[%s411 + $0x78] sm:$0xff]
        %v453 = vld [vmem:[%s417] sm:$0xff]
        %v454 = vld [vmem:[%s417 + $0x8] sm:$0xff]
        %v455 = vld [vmem:[%s417 + $0x10] sm:$0xff]
        %v456 = vld [vmem:[%s417 + $0x18] sm:$0xff]
        %v457 = vld [vmem:[%s417 + $0x20] sm:$0xff]
        %v458 = vld [vmem:[%s417 + $0x28] sm:$0xff]
        %v459 = vld [vmem:[%s417 + $0x30] sm:$0xff]
        %v460 = vld [vmem:[%s417 + $0x38] sm:$0xff]
        %v461 = vld [vmem:[%s417 + $0x40] sm:$0xff]
        %v462 = vld [vmem:[%s417 + $0x48] sm:$0xff]
        %v463 = vld [vmem:[%s417 + $0x50] sm:$0xff]
        %v464 = vld [vmem:[%s417 + $0x58] sm:$0xff]
        %v465 = vld [vmem:[%s417 + $0x60] sm:$0xff]
        %v466 = vld [vmem:[%s417 + $0x68] sm:$0xff]
        %v467 = vld [vmem:[%s417 + $0x70] sm:$0xff]
        %v468 = vld [vmem:[%s417 + $0x78] sm:$0xff]
        %v469 = vadd.f32 %v453, 1e-06
        %v470 = vadd.f32 %v454, 1e-06
        %v471 = vadd.f32 %v455, 1e-06
        %v472 = vadd.f32 %v456, 1e-06
        %v473 = vadd.f32 %v457, 1e-06
        %v474 = vadd.f32 %v458, 1e-06
        %v475 = vadd.f32 %v459, 1e-06
        %v476 = vadd.f32 %v460, 1e-06
        %v477 = vadd.f32 %v461, 1e-06
        %v478 = vadd.f32 %v462, 1e-06
        %v479 = vadd.f32 %v463, 1e-06
        %v480 = vadd.f32 %v464, 1e-06
        %v481 = vadd.f32 %v465, 1e-06
        %v482 = vadd.f32 %v466, 1e-06
        %v483 = vadd.f32 %v467, 1e-06
        %v484 = vadd.f32 %v468, 1e-06
        %v485 = vrcp.pop %v469
        %v486 = vrcp.pop %v470
        %v487 = vrcp.pop %v471
        %v488 = vrcp.pop %v472
        %v489 = vrcp.pop %v473
        %v490 = vrcp.pop %v474
        %v491 = vrcp.pop %v475
        %v492 = vrcp.pop %v476
        %v493 = vrcp.pop %v477
        %v494 = vrcp.pop %v478
        %v495 = vrcp.pop %v479
        %v496 = vrcp.pop %v480
        %v497 = vrcp.pop %v481
        %v498 = vrcp.pop %v482
        %v499 = vrcp.pop %v483
        %v500 = vrcp.pop %v484
        %v501 = vmul.f32 %v437, %v485
        %v502 = vmul.f32 %v438, %v486
        %v503 = vmul.f32 %v439, %v487
        %v504 = vmul.f32 %v440, %v488
        %v505 = vmul.f32 %v441, %v489
        %v506 = vmul.f32 %v442, %v490
        %v507 = vmul.f32 %v443, %v491
        %v508 = vmul.f32 %v444, %v492
        %v509 = vmul.f32 %v445, %v493
        %v510 = vmul.f32 %v446, %v494
        %v511 = vmul.f32 %v447, %v495
        %v512 = vmul.f32 %v448, %v496
        %v513 = vmul.f32 %v449, %v497
        %v514 = vmul.f32 %v450, %v498
        %v515 = vmul.f32 %v451, %v499
        %v516 = vmul.f32 %v452, %v500
        %v517 = vld [vmem:[%s423] sm:$0xff]
        %v518 = vld [vmem:[%s423 + $0x8] sm:$0xff]
        %v519 = vld [vmem:[%s423 + $0x10] sm:$0xff]
        %v520 = vld [vmem:[%s423 + $0x18] sm:$0xff]
        %v521 = vld [vmem:[%s423 + $0x20] sm:$0xff]
        %v522 = vld [vmem:[%s423 + $0x28] sm:$0xff]
        %v523 = vld [vmem:[%s423 + $0x30] sm:$0xff]
        %v524 = vld [vmem:[%s423 + $0x38] sm:$0xff]
        %v525 = vld [vmem:[%s423 + $0x40] sm:$0xff]
        %v526 = vld [vmem:[%s423 + $0x48] sm:$0xff]
        %v527 = vld [vmem:[%s423 + $0x50] sm:$0xff]
        %v528 = vld [vmem:[%s423 + $0x58] sm:$0xff]
        %v529 = vld [vmem:[%s423 + $0x60] sm:$0xff]
        %v530 = vld [vmem:[%s423 + $0x68] sm:$0xff]
        %v531 = vld [vmem:[%s423 + $0x70] sm:$0xff]
        %v532 = vld [vmem:[%s423 + $0x78] sm:$0xff]
        %v533 = vld [vmem:[%s429] sm:$0xff]
        %v534 = vld [vmem:[%s429 + $0x8] sm:$0xff]
        %v535 = vld [vmem:[%s429 + $0x10] sm:$0xff]
        %v536 = vld [vmem:[%s429 + $0x18] sm:$0xff]
        %v537 = vld [vmem:[%s429 + $0x20] sm:$0xff]
        %v538 = vld [vmem:[%s429 + $0x28] sm:$0xff]
        %v539 = vld [vmem:[%s429 + $0x30] sm:$0xff]
        %v540 = vld [vmem:[%s429 + $0x38] sm:$0xff]
        %v541 = vld [vmem:[%s429 + $0x40] sm:$0xff]
        %v542 = vld [vmem:[%s429 + $0x48] sm:$0xff]
        %v543 = vld [vmem:[%s429 + $0x50] sm:$0xff]
        %v544 = vld [vmem:[%s429 + $0x58] sm:$0xff]
        %v545 = vld [vmem:[%s429 + $0x60] sm:$0xff]
        %v546 = vld [vmem:[%s429 + $0x68] sm:$0xff]
        %v547 = vld [vmem:[%s429 + $0x70] sm:$0xff]
        %v548 = vld [vmem:[%s429 + $0x78] sm:$0xff]
        %v549 = vadd.f32 %v533, 1e-06
        %v550 = vadd.f32 %v534, 1e-06
        %v551 = vadd.f32 %v535, 1e-06
        %v552 = vadd.f32 %v536, 1e-06
        %v553 = vadd.f32 %v537, 1e-06
        %v554 = vadd.f32 %v538, 1e-06
        %v555 = vadd.f32 %v539, 1e-06
        %v556 = vadd.f32 %v540, 1e-06
        %v557 = vadd.f32 %v541, 1e-06
        %v558 = vadd.f32 %v542, 1e-06
        %v559 = vadd.f32 %v543, 1e-06
        %v560 = vadd.f32 %v544, 1e-06
        %v561 = vadd.f32 %v545, 1e-06
        %v562 = vadd.f32 %v546, 1e-06
        %v563 = vadd.f32 %v547, 1e-06
        %v564 = vadd.f32 %v548, 1e-06
        %v565 = vrcp.pop %v549
        %v566 = vrcp.pop %v550
        %v567 = vrcp.pop %v551
        %v568 = vrcp.pop %v552
        %v569 = vrcp.pop %v553
        %v570 = vrcp.pop %v554
        %v571 = vrcp.pop %v555
        %v572 = vrcp.pop %v556
        %v573 = vrcp.pop %v557
        %v574 = vrcp.pop %v558
        %v575 = vrcp.pop %v559
        %v576 = vrcp.pop %v560
        %v577 = vrcp.pop %v561
        %v578 = vrcp.pop %v562
        %v579 = vrcp.pop %v563
        %v580 = vrcp.pop %v564
        %v581 = vmul.f32 %v517, %v565
        %v582 = vmul.f32 %v518, %v566
        %v583 = vmul.f32 %v519, %v567
        %v584 = vmul.f32 %v520, %v568
        %v585 = vmul.f32 %v521, %v569
        %v586 = vmul.f32 %v522, %v570
        %v587 = vmul.f32 %v523, %v571
        %v588 = vmul.f32 %v524, %v572
        %v589 = vmul.f32 %v525, %v573
        %v590 = vmul.f32 %v526, %v574
        %v591 = vmul.f32 %v527, %v575
        %v592 = vmul.f32 %v528, %v576
        %v593 = vmul.f32 %v529, %v577
        %v594 = vmul.f32 %v530, %v578
        %v595 = vmul.f32 %v531, %v579
        %v596 = vmul.f32 %v532, %v580
        %v597 = vld [vmem:[%s359] sm:$0xff]
        %v598 = vld [vmem:[%s359 + $0x8] sm:$0xff]
        %v599 = vld [vmem:[%s359 + $0x10] sm:$0xff]
        %v600 = vld [vmem:[%s359 + $0x18] sm:$0xff]
        %v601 = vld [vmem:[%s359 + $0x20] sm:$0xff]
        %v602 = vld [vmem:[%s359 + $0x28] sm:$0xff]
        %v603 = vld [vmem:[%s359 + $0x30] sm:$0xff]
        %v604 = vld [vmem:[%s359 + $0x38] sm:$0xff]
        %v605 = vld [vmem:[%s359 + $0x40] sm:$0xff]
        %v606 = vld [vmem:[%s359 + $0x48] sm:$0xff]
        %v607 = vld [vmem:[%s359 + $0x50] sm:$0xff]
        %v608 = vld [vmem:[%s359 + $0x58] sm:$0xff]
        %v609 = vld [vmem:[%s359 + $0x60] sm:$0xff]
        %v610 = vld [vmem:[%s359 + $0x68] sm:$0xff]
        %v611 = vld [vmem:[%s359 + $0x70] sm:$0xff]
        %v612 = vld [vmem:[%s359 + $0x78] sm:$0xff]
        %v613 = vadd.f32 %v597, %v501
        %v614 = vadd.f32 %v598, %v502
        %v615 = vadd.f32 %v599, %v503
        %v616 = vadd.f32 %v600, %v504
        %v617 = vadd.f32 %v601, %v505
        %v618 = vadd.f32 %v602, %v506
        %v619 = vadd.f32 %v603, %v507
        %v620 = vadd.f32 %v604, %v508
        %v621 = vadd.f32 %v605, %v509
        %v622 = vadd.f32 %v606, %v510
        %v623 = vadd.f32 %v607, %v511
        %v624 = vadd.f32 %v608, %v512
        %v625 = vadd.f32 %v609, %v513
        %v626 = vadd.f32 %v610, %v514
        %v627 = vadd.f32 %v611, %v515
        %v628 = vadd.f32 %v612, %v516
        %v629 = vadd.f32 %v613, %v581
        %v630 = vadd.f32 %v614, %v582
        %v631 = vadd.f32 %v615, %v583
        %v632 = vadd.f32 %v616, %v584
        %v633 = vadd.f32 %v617, %v585
        %v634 = vadd.f32 %v618, %v586
        %v635 = vadd.f32 %v619, %v587
        %v636 = vadd.f32 %v620, %v588
        %v637 = vadd.f32 %v621, %v589
        %v638 = vadd.f32 %v622, %v590
        %v639 = vadd.f32 %v623, %v591
        %v640 = vadd.f32 %v624, %v592
        %v641 = vadd.f32 %v625, %v593
        %v642 = vadd.f32 %v626, %v594
        %v643 = vadd.f32 %v627, %v595
        %v644 = vadd.f32 %v628, %v596
        %645 = vst [vmem:[%s435] sm:$0xff] %v629
        %646 = vst [vmem:[%s435 + $0x8] sm:$0xff] %v630
        %647 = vst [vmem:[%s435 + $0x10] sm:$0xff] %v631
        %648 = vst [vmem:[%s435 + $0x18] sm:$0xff] %v632
        %649 = vst [vmem:[%s435 + $0x20] sm:$0xff] %v633
        %650 = vst [vmem:[%s435 + $0x28] sm:$0xff] %v634
        %651 = vst [vmem:[%s435 + $0x30] sm:$0xff] %v635
        %652 = vst [vmem:[%s435 + $0x38] sm:$0xff] %v636
        %653 = vst [vmem:[%s435 + $0x40] sm:$0xff] %v637
        %654 = vst [vmem:[%s435 + $0x48] sm:$0xff] %v638
        %655 = vst [vmem:[%s435 + $0x50] sm:$0xff] %v639
        %656 = vst [vmem:[%s435 + $0x58] sm:$0xff] %v640
        %657 = vst [vmem:[%s435 + $0x60] sm:$0xff] %v641
        %658 = vst [vmem:[%s435 + $0x68] sm:$0xff] %v642
        %659 = vst [vmem:[%s435 + $0x70] sm:$0xff] %v643
        %660 = vst [vmem:[%s435 + $0x78] sm:$0xff] %v644
        %p661 = scmp.eq.s32.totalorder %s18, 0
        // Predicated region
        $region79: #{model_forward.18} parent=73 // pred_check
          %p662 = pneg %p661
        $region80: #{model_forward.18} parent=73 // pred_check_branch
          %664 = sbr.rel (%p662) target = $region82
        $region81: #{model_forward.18} parent=73 // pred_region
          %665 = vst [vmem:[%s6] sm:$0x3] 0.0
        $region82: #{model_forward.18} parent=73 // pred_fallthru
          _
        %v666 = vld [vmem:[%s6] sm:$0x1]
        %v667 = vadd.f32 %v629, %v630
        %v668 = vadd.f32 %v667, %v631
        %v669 = vadd.f32 %v668, %v632
        %v670 = vadd.f32 %v669, %v633
        %v671 = vadd.f32 %v670, %v634
        %v672 = vadd.f32 %v671, %v635
        %v673 = vadd.f32 %v672, %v636
        %v674 = vadd.f32 %v673, %v637
        %v675 = vadd.f32 %v674, %v638
        %v676 = vadd.f32 %v675, %v639
        %v677 = vadd.f32 %v676, %v640
        %v678 = vadd.f32 %v677, %v641
        %v679 = vadd.f32 %v678, %v642
        %v680 = vadd.f32 %v679, %v643
        %v681 = vadd.f32 %v680, %v644
        %v682 = vrot.slane %v681, 4
        %v683 = vadd.f32 %v681, %v682
        %v684 = vrot.slane %v683, 2
        %v685 = vadd.f32 %v683, %v684
        %v686 = vrot.slane %v685, 1
        %v687 = vadd.f32 %v685, %v686
        %v688 = vadd.f32 %v666, %v687
        %689 = vst [vmem:[%s6] sm:$0x1] %v688
        %v690 = vld [vmem:[%s6 + $0x1] sm:$0x1]
        %v691 = vmul.f32 %v629, %v629
        %v692 = vmul.f32 %v630, %v630
        %v693 = vmul.f32 %v631, %v631
        %v694 = vmul.f32 %v632, %v632
        %v695 = vmul.f32 %v633, %v633
        %v696 = vmul.f32 %v634, %v634
        %v697 = vmul.f32 %v635, %v635
        %v698 = vmul.f32 %v636, %v636
        %v699 = vmul.f32 %v637, %v637
        %v700 = vmul.f32 %v638, %v638
        %v701 = vmul.f32 %v639, %v639
        %v702 = vmul.f32 %v640, %v640
        %v703 = vmul.f32 %v641, %v641
        %v704 = vmul.f32 %v642, %v642
        %v705 = vmul.f32 %v643, %v643
        %v706 = vmul.f32 %v644, %v644
        %v707 = vadd.f32 %v691, %v692
        %v708 = vadd.f32 %v707, %v693
        %v709 = vadd.f32 %v708, %v694
        %v710 = vadd.f32 %v709, %v695
        %v711 = vadd.f32 %v710, %v696
        %v712 = vadd.f32 %v711, %v697
        %v713 = vadd.f32 %v712, %v698
        %v714 = vadd.f32 %v713, %v699
        %v715 = vadd.f32 %v714, %v700
        %v716 = vadd.f32 %v715, %v701
        %v717 = vadd.f32 %v716, %v702
        %v718 = vadd.f32 %v717, %v703
        %v719 = vadd.f32 %v718, %v704
        %v720 = vadd.f32 %v719, %v705
        %v721 = vadd.f32 %v720, %v706
        %v722 = vrot.slane %v721, 4
        %v723 = vadd.f32 %v721, %v722
        %v724 = vrot.slane %v723, 2
        %v725 = vadd.f32 %v723, %v724
        %v726 = vrot.slane %v725, 1
        %v727 = vadd.f32 %v725, %v726
        %v728 = vadd.f32 %v690, %v727
        %729 = vst [vmem:[%s6 + $0x1] sm:$0x1] %v728
        %p730 = scmp.eq.s32.totalorder %s18, 1
        // Predicated region
        $region83: #{model_forward.18} parent=73 // pred_check
          %p731 = pneg %p730
        $region84: #{model_forward.18} parent=73 // pred_check_branch
          %733 = sbr.rel (%p731) target = $region86
        $region85: #{model_forward.18} parent=73 // pred_region
          %v734 = vld [vmem:[%s6] sm:$0x1]
          %v735 = vld [vmem:[%s6 + $0x1] sm:$0x1]
          %v736 = vmul.f32 %v734, 0.00390625
          %v737 = vmul.f32 %v735, 0.00390625
          %v738 = vmul.f32 %v736, %v736
          %v739 = vsub.f32 %v737, %v738
          %740 = vst [vmem:[%s6] sm:$0x1] %v736
          %v741 = vadd.f32 %v739, 1e-05
          %v742 = vrsqrt.pop %v741
          %743 = vst [vmem:[%s6 + $0x1] sm:$0x1] %v742
        $region86: #{model_forward.18} parent=73 // pred_fallthru
          _
        %s744 = smul.u32 16, %s18
        %p745 = scmp.lt.s32.totalorder %s744, 31
        %s746 = scalar_select %p745, %s744, 31
        %s747 = smul.addr %s746, 8
        %s748 = scalar_lea.vmem %s5, %s747
        // Predicated region
        $region87: #{model_forward.18} parent=73 // pred_check
          %p749 = pneg %p166
        $region88: #{model_forward.18} parent=73 // pred_check_branch
          %751 = sbr.rel (%p749) target = $region90
        $region89: #{model_forward.18} parent=73 // pred_region
          %s752 = smul.u32 16, %s18
        $region90: #{model_forward.18} parent=73 // pred_fallthru
          _
        // Predicated region
        $region91: #{model_forward.18} parent=73 // pred_check
          %p753 = pneg %p187
        $region92: #{model_forward.18} parent=73 // pred_check_branch
          %755 = sbr.rel (%p753) target = $region94
        $region93: #{model_forward.18} parent=73 // pred_region
          _
        $region94: #{model_forward.18} parent=73 // pred_fallthru
          _
        // Predicated region
        $region95: #{model_forward.18} parent=73 // pred_check
          %p756 = pneg %p187
        $region96: #{model_forward.18} parent=73 // pred_check_branch
          %758 = sbr.rel (%p756) target = $region98
        $region97: #{model_forward.18} parent=73 // pred_region
          _
        $region98: #{model_forward.18} parent=73 // pred_fallthru
          _
      $region74: #{model_forward.18} parent=5 // pred_fallthru
        _
      %p759 = scmp.le.s32.totalorder 2, %s13
      // Predicated region
      $region99: #{model_forward.18} parent=5 // pred_check
        %p760 = pneg %p759
      $region100: #{model_forward.18} parent=5 // pred_check_branch
        %762 = sbr.rel (%p760) target = $region102
      $region101: #{model_forward.18} parent=5 // pred_region
        %s763 = ssub.s32 %s13, 2
        // Predicated region
        $region103: #{model_forward.18} parent=101 // pred_check
          %p764 = pneg %p172
        $region104: #{model_forward.18} parent=101 // pred_check_branch
          %766 = sbr.rel (%p764) target = $region106
        $region105: #{model_forward.18} parent=101 // pred_region
          %s767 = smul.u32 16, %s19
          %p768 = scmp.lt.s32.totalorder %s767, 31
          %s769 = scalar_select %p768, %s767, 31
          %s770 = smul.addr %s769, 8
          %s771 = scalar_lea.vmem %s5, %s770
        $region106: #{model_forward.18} parent=101 // pred_fallthru
          _
      $region102: #{model_forward.18} parent=5 // pred_fallthru
        _
    $region6: #{model_forward.18} parent=1 // loop_footer
      %s17 = sadd.s32 1, %s13
    $region7: #{model_forward.18} parent=1 // loop_footer_branch
      %12 = sbr.rel target = $region3
    $region8: #{model_forward.18} parent=1 // loop_exit
      _

// kernel: model_forward.19
$region0: #{model_forward.19}
  #allocation0 [shape = 'u32[]', space=smem, size = 0x4, offset = 0x4, fixed_abs, tag = 'smem constant byte address 0x4 - core index']
  #allocation1 [shape = 'u32[144,128]{1,0:T(1,128)}', space=vmem, size = 0x12000, scoped, tag = 'internal scratch']
  %s0 = inlined_call_operand.vmem [shape: f32[256,128], index: 0, kind: input, shape index: {}]
  %s1 = inlined_call_operand.vmem [shape: f32[256,128], index: 1, kind: input, shape index: {}]
  %s2 = inlined_call_operand.vmem [shape: f32[2,128], index: 2, kind: input, shape index: {}]
  %s3 = inlined_call_operand.vmem [shape: f32[1,128], index: 3, kind: input, shape index: {}]
  %s4 = inlined_call_operand.vmem [shape: f32[1,128], index: 4, kind: input, shape index: {}]
  %s5 = inlined_call_operand.vmem [shape: f32[256,128], index: 5, kind: output, shape index: {}]
  %s6 = sld [smem:[#allocation0]]
  $region53: #{model_forward.19} parent=0
    _
  %s8 = ssub.s32 1, %s6
  %s9 = scalar_select 0, %s8, %s6
  loop: start=0, step=1, limit=4
  $region2: #{model_forward.19} parent=0 // loop_pre_header
    _
  $region3: #{model_forward.19} parent=0 // loop_header
    %s11 = sphi 0, %s15
    %p12 = scmp.ge.s32.totalorder %s11, 4
    %s21 = sphi 0, %s23
    %s24 = sphi 0, %s21
    %s25 = sphi 0, %s24
    %s41 = sphi 0, %s25
    %s47 = sphi 0, %s49
    %s50 = sphi 0, %s47
    %s51 = sphi 0, %s50
    %s67 = sphi 0, %s51
    %s71 = sphi 0, %s71
    %s73 = sphi 0, %s71
    %s74 = sphi 0, %s73
    %s88 = sphi 0, %s74
    %s92 = sphi 0, %s92
    %s94 = sphi 0, %s92
    %s95 = sphi 0, %s94
    %s109 = sphi 0, %s95
    %s113 = sphi 0, %s113
    %s115 = sphi 0, %s113
    %s116 = sphi 0, %s115
    %s130 = sphi 0, %s116
    %s136 = sphi 0, %s138
    %s139 = sphi 0, %s136
    %s140 = sphi 0, %s139
    %s156 = sphi 0, %s140
  $region4: #{model_forward.19} parent=0 // loop_header_branch
    %14 = sbr.rel (%p12) target = $region8
  $region5: #{model_forward.19} parent=0 // loop_body
    %s16 = ssub.s32 %s11, 1
    %s17 = ssub.s32 %s11, 2
    %s18 = sadd.s32 %s11, 1
    %s19 = ssub.s32 %s11, %s18
    %p20 = scmp.eq.s32.totalorder %s19, 0
    %s22 = sadd.s32 %s21, 1
    %s23 = scalar_select %p20, %s21, %s22
    %p26 = pneg %p20
    %p27 = scmp.eq.s32.totalorder %s11, 1
    %p28 = por %p26, %p27
    %p29 = scmp.ne.s32.totalorder %s21, %s24
    %p30 = scmp.eq.s32.totalorder %s11, 0
    %p31 = por %p29, %p30
    %p32 = scmp.ne.s32.totalorder %s21, %s24
    %p33 = scmp.eq.s32.totalorder %s16, 1
    %p34 = por %p32, %p33
    %p35 = scmp.ne.s32.totalorder %s24, %s25
    %p36 = scmp.eq.s32.totalorder %s16, 0
    %p37 = por %p35, %p36
    %p38 = scmp.ne.s32.totalorder %s24, %s25
    %p39 = scmp.eq.s32.totalorder %s17, 1
    %p40 = por %p38, %p39
    %p42 = scmp.ne.s32.totalorder %s25, %s41
    %p43 = scmp.eq.s32.totalorder %s17, 0
    %p44 = por %p42, %p43
    %s45 = ssub.s32 %s11, %s18
    %p46 = scmp.eq.s32.totalorder %s45, 0
    %s48 = sadd.s32 %s47, 1
    %s49 = scalar_select %p46, %s47, %s48
    %p52 = pneg %p46
    %p53 = scmp.eq.s32.totalorder %s11, 1
    %p54 = por %p52, %p53
    %p55 = scmp.ne.s32.totalorder %s47, %s50
    %p56 = scmp.eq.s32.totalorder %s11, 0
    %p57 = por %p55, %p56
    %p58 = scmp.ne.s32.totalorder %s47, %s50
    %p59 = scmp.eq.s32.totalorder %s16, 1
    %p60 = por %p58, %p59
    %p61 = scmp.ne.s32.totalorder %s50, %s51
    %p62 = scmp.eq.s32.totalorder %s16, 0
    %p63 = por %p61, %p62
    %p64 = scmp.ne.s32.totalorder %s50, %s51
    %p65 = scmp.eq.s32.totalorder %s17, 1
    %p66 = por %p64, %p65
    %p68 = scmp.ne.s32.totalorder %s51, %s67
    %p69 = scmp.eq.s32.totalorder %s17, 0
    %p70 = por %p68, %p69
    %s72 = sadd.s32 %s71, 1
    %p75 = scmp.eq.s32.totalorder %s11, 1
    %p76 = scmp.ne.s32.totalorder %s71, %s73
    %p77 = scmp.eq.s32.totalorder %s11, 0
    %p78 = por %p76, %p77
    %p79 = scmp.ne.s32.totalorder %s71, %s73
    %p80 = scmp.eq.s32.totalorder %s16, 1
    %p81 = por %p79, %p80
    %p82 = scmp.ne.s32.totalorder %s73, %s74
    %p83 = scmp.eq.s32.totalorder %s16, 0
    %p84 = por %p82, %p83
    %p85 = scmp.ne.s32.totalorder %s73, %s74
    %p86 = scmp.eq.s32.totalorder %s17, 1
    %p87 = por %p85, %p86
    %p89 = scmp.ne.s32.totalorder %s74, %s88
    %p90 = scmp.eq.s32.totalorder %s17, 0
    %p91 = por %p89, %p90
    %s93 = sadd.s32 %s92, 1
    %p96 = scmp.eq.s32.totalorder %s11, 1
    %p97 = scmp.ne.s32.totalorder %s92, %s94
    %p98 = scmp.eq.s32.totalorder %s11, 0
    %p99 = por %p97, %p98
    %p100 = scmp.ne.s32.totalorder %s92, %s94
    %p101 = scmp.eq.s32.totalorder %s16, 1
    %p102 = por %p100, %p101
    %p103 = scmp.ne.s32.totalorder %s94, %s95
    %p104 = scmp.eq.s32.totalorder %s16, 0
    %p105 = por %p103, %p104
    %p106 = scmp.ne.s32.totalorder %s94, %s95
    %p107 = scmp.eq.s32.totalorder %s17, 1
    %p108 = por %p106, %p107
    %p110 = scmp.ne.s32.totalorder %s95, %s109
    %p111 = scmp.eq.s32.totalorder %s17, 0
    %p112 = por %p110, %p111
    %s114 = sadd.s32 %s113, 1
    %p117 = scmp.eq.s32.totalorder %s11, 1
    %p118 = scmp.ne.s32.totalorder %s113, %s115
    %p119 = scmp.eq.s32.totalorder %s11, 0
    %p120 = por %p118, %p119
    %p121 = scmp.ne.s32.totalorder %s113, %s115
    %p122 = scmp.eq.s32.totalorder %s16, 1
    %p123 = por %p121, %p122
    %p124 = scmp.ne.s32.totalorder %s115, %s116
    %p125 = scmp.eq.s32.totalorder %s16, 0
    %p126 = por %p124, %p125
    %p127 = scmp.ne.s32.totalorder %s115, %s116
    %p128 = scmp.eq.s32.totalorder %s17, 1
    %p129 = por %p127, %p128
    %p131 = scmp.ne.s32.totalorder %s116, %s130
    %p132 = scmp.eq.s32.totalorder %s17, 0
    %p133 = por %p131, %p132
    %s134 = ssub.s32 %s11, %s18
    %p135 = scmp.eq.s32.totalorder %s134, 0
    %s137 = sadd.s32 %s136, 1
    %s138 = scalar_select %p135, %s136, %s137
    %p141 = pneg %p135
    %p142 = scmp.eq.s32.totalorder %s11, 1
    %p143 = por %p141, %p142
    %p144 = scmp.ne.s32.totalorder %s136, %s139
    %p145 = scmp.eq.s32.totalorder %s11, 0
    %p146 = por %p144, %p145
    %p147 = scmp.ne.s32.totalorder %s136, %s139
    %p148 = scmp.eq.s32.totalorder %s16, 1
    %p149 = por %p147, %p148
    %p150 = scmp.ne.s32.totalorder %s139, %s140
    %p151 = scmp.eq.s32.totalorder %s16, 0
    %p152 = por %p150, %p151
    %p153 = scmp.ne.s32.totalorder %s139, %s140
    %p154 = scmp.eq.s32.totalorder %s17, 1
    %p155 = por %p153, %p154
    %p157 = scmp.ne.s32.totalorder %s140, %s156
    %p158 = scmp.eq.s32.totalorder %s17, 0
    %p159 = por %p157, %p158
    %p160 = scmp.le.s32.totalorder 1, %s11
    %p161 = scmp.lt.s32.totalorder %s11, 3
    %p162 = pnand %p160, %p161
    %p163 = pneg %p162
    // Predicated region
    $region9: #{model_forward.19} parent=5 // pred_check
      _
    $region10: #{model_forward.19} parent=5 // pred_check_branch
      %165 = sbr.rel (%p162) target = $region12
    $region11: #{model_forward.19} parent=5 // pred_region
      %s166 = ssub.s32 %s11, 1
      // Predicated region
      $region13: #{model_forward.19} parent=11 // pred_check
        %p167 = pneg %p84
      $region14: #{model_forward.19} parent=11 // pred_check_branch
        %169 = sbr.rel (%p167) target = $region16
      $region15: #{model_forward.19} parent=11 // pred_region
        _
      $region16: #{model_forward.19} parent=11 // pred_fallthru
        _
      // Predicated region
      $region17: #{model_forward.19} parent=11 // pred_check
        %p170 = pneg %p105
      $region18: #{model_forward.19} parent=11 // pred_check_branch
        %172 = sbr.rel (%p170) target = $region20
      $region19: #{model_forward.19} parent=11 // pred_region
        _
      $region20: #{model_forward.19} parent=11 // pred_fallthru
        _
      // Predicated region
      $region21: #{model_forward.19} parent=11 // pred_check
        %p173 = pneg %p126
      $region22: #{model_forward.19} parent=11 // pred_check_branch
        %175 = sbr.rel (%p173) target = $region24
      $region23: #{model_forward.19} parent=11 // pred_region
        _
      $region24: #{model_forward.19} parent=11 // pred_fallthru
        _
    $region12: #{model_forward.19} parent=5 // pred_fallthru
      _
    %p176 = scmp.lt.s32.totalorder %s11, 2
    // Predicated region
    $region25: #{model_forward.19} parent=5 // pred_check
      %p177 = pneg %p176
    $region26: #{model_forward.19} parent=5 // pred_check_branch
      %179 = sbr.rel (%p177) target = $region28
    $region27: #{model_forward.19} parent=5 // pred_region
      // Predicated region
      $region29: #{model_forward.19} parent=27 // pred_check
        %p180 = pneg %p31
      $region30: #{model_forward.19} parent=27 // pred_check_branch
        %182 = sbr.rel (%p180) target = $region32
      $region31: #{model_forward.19} parent=27 // pred_region
        %s183 = smul.u32 16, %s11
        %p184 = scmp.lt.s32.totalorder %s183, 31
        %s185 = scalar_select %p184, %s183, 31
        %s186 = smul.addr %s185, 8
        %s187 = scalar_lea.vmem %s0, %s186
        %s188 = smul.u32 16, %s11
      $region32: #{model_forward.19} parent=27 // pred_fallthru
        _
      // Predicated region
      $region33: #{model_forward.19} parent=27 // pred_check
        %p189 = pneg %p57
      $region34: #{model_forward.19} parent=27 // pred_check_branch
        %191 = sbr.rel (%p189) target = $region36
      $region35: #{model_forward.19} parent=27 // pred_region
        %s192 = smul.u32 16, %s11
        %p193 = scmp.lt.s32.totalorder %s192, 31
        %s194 = scalar_select %p193, %s192, 31
        %s195 = smul.addr %s194, 8
        %s196 = scalar_lea.vmem %s1, %s195
        %s197 = smul.u32 16, %s11
      $region36: #{model_forward.19} parent=27 // pred_fallthru
        _
    $region28: #{model_forward.19} parent=5 // pred_fallthru
      _
    %p198 = scmp.le.s32.totalorder 1, %s11
    %p199 = scmp.lt.s32.totalorder %s11, 3
    %p200 = pnand %p198, %p199
    %p201 = pneg %p200
    // Predicated region
    $region37: #{model_forward.19} parent=5 // pred_check
      _
    $region38: #{model_forward.19} parent=5 // pred_check_branch
      %203 = sbr.rel (%p200) target = $region40
    $region39: #{model_forward.19} parent=5 // pred_region
      %s204 = ssub.s32 %s11, 1
      %s205 = smul.u32 16, %s16
      %p206 = scmp.lt.s32.totalorder %s205, 31
      %s207 = scalar_select %p206, %s205, 31
      %s208 = smul.addr %s207, 8
      %s209 = scalar_lea.vmem %s0, %s208
      %p210 = pneg %p37
      %p211 = pneg %p34
      %s212 = smul.u32 16, %s16
      %p213 = scmp.lt.s32.totalorder %s212, 31
      %s214 = scalar_select %p213, %s212, 31
      %s215 = smul.addr %s214, 8
      %s216 = scalar_lea.vmem %s1, %s215
      %p217 = pneg %p63
      %p218 = pneg %p60
      %p219 = pneg %p84
      %p220 = pneg %p81
      %p221 = pneg %p105
      %p222 = pneg %p102
      %p223 = pneg %p126
      %p224 = pneg %p123
      %p225 = pneg %p152
      %p226 = pneg %p149
      %s227 = smul.u32 16, %s16
      %p228 = scmp.lt.s32.totalorder %s227, 31
      %s229 = scalar_select %p228, %s227, 31
      %s230 = smul.addr %s229, 8
      %s231 = scalar_lea.vmem %s5, %s230
      %s232 = smul.u32 16, %s16
      %p233 = scmp.lt.s32.totalorder %s232, 31
      %s234 = scalar_select %p233, %s232, 31
      %s235 = smul.addr %s234, 8
      %s236 = scalar_lea.vmem %s0, %s235
      %s237 = smul.u32 16, %s16
      %s238 = smul.u32 16, %s16
      %p239 = scmp.lt.s32.totalorder %s238, 31
      %s240 = scalar_select %p239, %s238, 31
      %s241 = smul.addr %s240, 8
      %s242 = scalar_lea.vmem %s1, %s241
      %s243 = smul.u32 16, %s16
      %s244 = smul.u32 16, %s16
      %p245 = scmp.lt.s32.totalorder %s244, 31
      %s246 = scalar_select %p245, %s244, 31
      %s247 = smul.addr %s246, 8
      %s248 = scalar_lea.vmem %s5, %s247
      %s249 = smul.u32 16, %s16
      %v250 = vld [vmem:[%s2] sm:$0x1]
      %v251 = vld [vmem:[%s2 + $0x1] sm:$0x1]
      %v252 = vld [vmem:[%s236] sm:$0xff]
      %v253 = vld [vmem:[%s236 + $0x8] sm:$0xff]
      %v254 = vld [vmem:[%s236 + $0x10] sm:$0xff]
      %v255 = vld [vmem:[%s236 + $0x18] sm:$0xff]
      %v256 = vld [vmem:[%s236 + $0x20] sm:$0xff]
      %v257 = vld [vmem:[%s236 + $0x28] sm:$0xff]
      %v258 = vld [vmem:[%s236 + $0x30] sm:$0xff]
      %v259 = vld [vmem:[%s236 + $0x38] sm:$0xff]
      %v260 = vld [vmem:[%s236 + $0x40] sm:$0xff]
      %v261 = vld [vmem:[%s236 + $0x48] sm:$0xff]
      %v262 = vld [vmem:[%s236 + $0x50] sm:$0xff]
      %v263 = vld [vmem:[%s236 + $0x58] sm:$0xff]
      %v264 = vld [vmem:[%s236 + $0x60] sm:$0xff]
      %v265 = vld [vmem:[%s236 + $0x68] sm:$0xff]
      %v266 = vld [vmem:[%s236 + $0x70] sm:$0xff]
      %v267 = vld [vmem:[%s236 + $0x78] sm:$0xff]
      %v268 = vlaneseq
      %v269 = vshrl.u32 %v268, 7
      %v270 = vsub.s32 0, %v269
      %v271 = vrot.slane %v250, %v270
      %v272 = vsub.f32 %v252, %v271
      %v273 = vsub.f32 %v253, %v271
      %v274 = vsub.f32 %v254, %v271
      %v275 = vsub.f32 %v255, %v271
      %v276 = vsub.f32 %v256, %v271
      %v277 = vsub.f32 %v257, %v271
      %v278 = vsub.f32 %v258, %v271
      %v279 = vsub.f32 %v259, %v271
      %v280 = vsub.f32 %v260, %v271
      %v281 = vsub.f32 %v261, %v271
      %v282 = vsub.f32 %v262, %v271
      %v283 = vsub.f32 %v263, %v271
      %v284 = vsub.f32 %v264, %v271
      %v285 = vsub.f32 %v265, %v271
      %v286 = vsub.f32 %v266, %v271
      %v287 = vsub.f32 %v267, %v271
      %v288 = vlaneseq
      %v289 = vshrl.u32 %v288, 7
      %v290 = vsub.s32 0, %v289
      %v291 = vrot.slane %v251, %v290
      %v292 = vmul.f32 %v272, %v291
      %v293 = vmul.f32 %v273, %v291
      %v294 = vmul.f32 %v274, %v291
      %v295 = vmul.f32 %v275, %v291
      %v296 = vmul.f32 %v276, %v291
      %v297 = vmul.f32 %v277, %v291
      %v298 = vmul.f32 %v278, %v291
      %v299 = vmul.f32 %v279, %v291
      %v300 = vmul.f32 %v280, %v291
      %v301 = vmul.f32 %v281, %v291
      %v302 = vmul.f32 %v282, %v291
      %v303 = vmul.f32 %v283, %v291
      %v304 = vmul.f32 %v284, %v291
      %v305 = vmul.f32 %v285, %v291
      %v306 = vmul.f32 %v286, %v291
      %v307 = vmul.f32 %v287, %v291
      %v308 = vld [vmem:[%s3] sm:$0x1]
      %v310 = vlaneseq
      %v311 = vshrl.u32 %v310, 7
      %v312 = vsub.s32 0, %v311
      %v313 = vrot.slane %v308, %v312
      %v315 = vmul.f32 %v292, %v313
      %v316 = vmul.f32 %v293, %v313
      %v317 = vmul.f32 %v294, %v313
      %v318 = vmul.f32 %v295, %v313
      %v319 = vmul.f32 %v296, %v313
      %v320 = vmul.f32 %v297, %v313
      %v321 = vmul.f32 %v298, %v313
      %v322 = vmul.f32 %v299, %v313
      %v323 = vmul.f32 %v300, %v313
      %v324 = vmul.f32 %v301, %v313
      %v325 = vmul.f32 %v302, %v313
      %v326 = vmul.f32 %v303, %v313
      %v327 = vmul.f32 %v304, %v313
      %v328 = vmul.f32 %v305, %v313
      %v329 = vmul.f32 %v306, %v313
      %v330 = vmul.f32 %v307, %v313
      %v331 = vld [vmem:[%s4] sm:$0x1]
      %v333 = vlaneseq
      %v334 = vshrl.u32 %v333, 7
      %v335 = vsub.s32 0, %v334
      %v336 = vrot.slane %v331, %v335
      %v338 = vadd.f32 %v315, %v336
      %v339 = vadd.f32 %v316, %v336
      %v340 = vadd.f32 %v317, %v336
      %v341 = vadd.f32 %v318, %v336
      %v342 = vadd.f32 %v319, %v336
      %v343 = vadd.f32 %v320, %v336
      %v344 = vadd.f32 %v321, %v336
      %v345 = vadd.f32 %v322, %v336
      %v346 = vadd.f32 %v323, %v336
      %v347 = vadd.f32 %v324, %v336
      %v348 = vadd.f32 %v325, %v336
      %v349 = vadd.f32 %v326, %v336
      %v350 = vadd.f32 %v327, %v336
      %v351 = vadd.f32 %v328, %v336
      %v352 = vadd.f32 %v329, %v336
      %v353 = vadd.f32 %v330, %v336
      %v354 = vld [vmem:[%s242] sm:$0xff]
      %v355 = vld [vmem:[%s242 + $0x8] sm:$0xff]
      %v356 = vld [vmem:[%s242 + $0x10] sm:$0xff]
      %v357 = vld [vmem:[%s242 + $0x18] sm:$0xff]
      %v358 = vld [vmem:[%s242 + $0x20] sm:$0xff]
      %v359 = vld [vmem:[%s242 + $0x28] sm:$0xff]
      %v360 = vld [vmem:[%s242 + $0x30] sm:$0xff]
      %v361 = vld [vmem:[%s242 + $0x38] sm:$0xff]
      %v362 = vld [vmem:[%s242 + $0x40] sm:$0xff]
      %v363 = vld [vmem:[%s242 + $0x48] sm:$0xff]
      %v364 = vld [vmem:[%s242 + $0x50] sm:$0xff]
      %v365 = vld [vmem:[%s242 + $0x58] sm:$0xff]
      %v366 = vld [vmem:[%s242 + $0x60] sm:$0xff]
      %v367 = vld [vmem:[%s242 + $0x68] sm:$0xff]
      %v368 = vld [vmem:[%s242 + $0x70] sm:$0xff]
      %v369 = vld [vmem:[%s242 + $0x78] sm:$0xff]
      %v370 = vmax.f32 %v338, 0.0
      %v371 = vmax.f32 %v339, 0.0
      %v372 = vmax.f32 %v340, 0.0
      %v373 = vmax.f32 %v341, 0.0
      %v374 = vmax.f32 %v342, 0.0
      %v375 = vmax.f32 %v343, 0.0
      %v376 = vmax.f32 %v344, 0.0
      %v377 = vmax.f32 %v345, 0.0
      %v378 = vmax.f32 %v346, 0.0
      %v379 = vmax.f32 %v347, 0.0
      %v380 = vmax.f32 %v348, 0.0
      %v381 = vmax.f32 %v349, 0.0
      %v382 = vmax.f32 %v350, 0.0
      %v383 = vmax.f32 %v351, 0.0
      %v384 = vmax.f32 %v352, 0.0
      %v385 = vmax.f32 %v353, 0.0
      %v386 = vadd.f32 %v354, %v370
      %v387 = vadd.f32 %v355, %v371
      %v388 = vadd.f32 %v356, %v372
      %v389 = vadd.f32 %v357, %v373
      %v390 = vadd.f32 %v358, %v374
      %v391 = vadd.f32 %v359, %v375
      %v392 = vadd.f32 %v360, %v376
      %v393 = vadd.f32 %v361, %v377
      %v394 = vadd.f32 %v362, %v378
      %v395 = vadd.f32 %v363, %v379
      %v396 = vadd.f32 %v364, %v380
      %v397 = vadd.f32 %v365, %v381
      %v398 = vadd.f32 %v366, %v382
      %v399 = vadd.f32 %v367, %v383
      %v400 = vadd.f32 %v368, %v384
      %v401 = vadd.f32 %v369, %v385
      %402 = vst [vmem:[%s248] sm:$0xff] %v386
      %403 = vst [vmem:[%s248 + $0x8] sm:$0xff] %v387
      %404 = vst [vmem:[%s248 + $0x10] sm:$0xff] %v388
      %405 = vst [vmem:[%s248 + $0x18] sm:$0xff] %v389
      %406 = vst [vmem:[%s248 + $0x20] sm:$0xff] %v390
      %407 = vst [vmem:[%s248 + $0x28] sm:$0xff] %v391
      %408 = vst [vmem:[%s248 + $0x30] sm:$0xff] %v392
      %409 = vst [vmem:[%s248 + $0x38] sm:$0xff] %v393
      %410 = vst [vmem:[%s248 + $0x40] sm:$0xff] %v394
      %411 = vst [vmem:[%s248 + $0x48] sm:$0xff] %v395
      %412 = vst [vmem:[%s248 + $0x50] sm:$0xff] %v396
      %413 = vst [vmem:[%s248 + $0x58] sm:$0xff] %v397
      %414 = vst [vmem:[%s248 + $0x60] sm:$0xff] %v398
      %415 = vst [vmem:[%s248 + $0x68] sm:$0xff] %v399
      %416 = vst [vmem:[%s248 + $0x70] sm:$0xff] %v400
      %417 = vst [vmem:[%s248 + $0x78] sm:$0xff] %v401
      %s418 = smul.u32 16, %s16
      %p419 = scmp.lt.s32.totalorder %s418, 31
      %s420 = scalar_select %p419, %s418, 31
      %s421 = smul.addr %s420, 8
      %s422 = scalar_lea.vmem %s5, %s421
      // Predicated region
      $region41: #{model_forward.19} parent=39 // pred_check
        %p423 = pneg %p149
      $region42: #{model_forward.19} parent=39 // pred_check_branch
        %425 = sbr.rel (%p423) target = $region44
      $region43: #{model_forward.19} parent=39 // pred_region
        %s426 = smul.u32 16, %s16
      $region44: #{model_forward.19} parent=39 // pred_fallthru
        _
    $region40: #{model_forward.19} parent=5 // pred_fallthru
      _
    %p427 = scmp.le.s32.totalorder 2, %s11
    // Predicated region
    $region45: #{model_forward.19} parent=5 // pred_check
      %p428 = pneg %p427
    $region46: #{model_forward.19} parent=5 // pred_check_branch
      %430 = sbr.rel (%p428) target = $region48
    $region47: #{model_forward.19} parent=5 // pred_region
      %s431 = ssub.s32 %s11, 2
      // Predicated region
      $region49: #{model_forward.19} parent=47 // pred_check
        %p432 = pneg %p155
      $region50: #{model_forward.19} parent=47 // pred_check_branch
        %434 = sbr.rel (%p432) target = $region52
      $region51: #{model_forward.19} parent=47 // pred_region
        %s435 = smul.u32 16, %s17
        %p436 = scmp.lt.s32.totalorder %s435, 31
        %s437 = scalar_select %p436, %s435, 31
        %s438 = smul.addr %s437, 8
        %s439 = scalar_lea.vmem %s5, %s438
      $region52: #{model_forward.19} parent=47 // pred_fallthru
        _
    $region48: #{model_forward.19} parent=5 // pred_fallthru
      _
  $region6: #{model_forward.19} parent=0 // loop_footer
    %s15 = sadd.s32 1, %s11
  $region7: #{model_forward.19} parent=0 // loop_footer_branch
    %10 = sbr.rel target = $region3
  $region8: #{model_forward.19} parent=0 // loop_exit
    _

// kernel: model_forward.25
$region0: #{model_forward.25}
  #allocation0 [shape = 'u32[]', space=smem, size = 0x4, offset = 0x4, fixed_abs, tag = 'smem constant byte address 0x4 - core index']
  #allocation1 [shape = 'u32[144,128]{1,0:T(1,128)}', space=vmem, size = 0x12000, scoped, tag = 'internal scratch']
  #allocation2 [shape = 'f32[1,1]{1,0:T(1,128)S(1)}', space=vmem, size = 0x200, scoped, tag = 'scoped memory for model_forward.25']
  %s0 = inlined_call_operand.vmem [shape: f32[512,384], index: 0, kind: input, shape index: {}]
  %s1 = inlined_call_operand.vmem [shape: bf16[384,128], index: 1, kind: input, shape index: {}]
  %s2 = inlined_call_operand.vmem [shape: f32[1,128], index: 2, kind: input, shape index: {}]
  %s3 = inlined_call_operand.vmem [shape: bf16[128,1], index: 3, kind: input, shape index: {}]
  %s4 = inlined_call_operand.<no memory space> [shape: f32[1,1], index: 4, kind: input, shape index: {}]
  %s5 = inlined_call_operand.vmem [shape: f32[512,1], index: 5, kind: output, shape index: {}]
  %s6 = sld [smem:[#allocation0]]
  $region53: #{model_forward.25} parent=0
    _
  %s8 = ssub.s32 1, %s6
  %s9 = scalar_select 0, %s8, %s6
  %v10 = vstv %s4
  %11 = vst [vmem:[#allocation2] sm:$0x1] %v10
  loop: start=0, step=1, limit=6
  $region2: #{model_forward.25} parent=0 // loop_pre_header
    _
  $region3: #{model_forward.25} parent=0 // loop_header
    %s13 = sphi 0, %s17
    %p14 = scmp.ge.s32.totalorder %s13, 6
    %s23 = sphi 0, %s25
    %s26 = sphi 0, %s23
    %s27 = sphi 0, %s26
    %s43 = sphi 0, %s27
    %s47 = sphi 0, %s47
    %s49 = sphi 0, %s47
    %s50 = sphi 0, %s49
    %s64 = sphi 0, %s50
    %s68 = sphi 0, %s68
    %s70 = sphi 0, %s68
    %s71 = sphi 0, %s70
    %s85 = sphi 0, %s71
    %s89 = sphi 0, %s89
    %s91 = sphi 0, %s89
    %s92 = sphi 0, %s91
    %s106 = sphi 0, %s92
    %s110 = sphi 0, %s110
    %s112 = sphi 0, %s110
    %s113 = sphi 0, %s112
    %s127 = sphi 0, %s113
    %s133 = sphi 0, %s135
    %s136 = sphi 0, %s133
    %s137 = sphi 0, %s136
    %s153 = sphi 0, %s137
  $region4: #{model_forward.25} parent=0 // loop_header_branch
    %16 = sbr.rel (%p14) target = $region8
  $region5: #{model_forward.25} parent=0 // loop_body
    %s18 = ssub.s32 %s13, 1
    %s19 = ssub.s32 %s13, 2
    %s20 = sadd.s32 %s13, 1
    %s21 = ssub.s32 %s13, %s20
    %p22 = scmp.eq.s32.totalorder %s21, 0
    %s24 = sadd.s32 %s23, 1
    %s25 = scalar_select %p22, %s23, %s24
    %p28 = pneg %p22
    %p29 = scmp.eq.s32.totalorder %s13, 3
    %p30 = por %p28, %p29
    %p31 = scmp.ne.s32.totalorder %s23, %s26
    %p32 = scmp.eq.s32.totalorder %s13, 0
    %p33 = por %p31, %p32
    %p34 = scmp.ne.s32.totalorder %s23, %s26
    %p35 = scmp.eq.s32.totalorder %s18, 3
    %p36 = por %p34, %p35
    %p37 = scmp.ne.s32.totalorder %s26, %s27
    %p38 = scmp.eq.s32.totalorder %s18, 0
    %p39 = por %p37, %p38
    %p40 = scmp.ne.s32.totalorder %s26, %s27
    %p41 = scmp.eq.s32.totalorder %s19, 3
    %p42 = por %p40, %p41
    %p44 = scmp.ne.s32.totalorder %s27, %s43
    %p45 = scmp.eq.s32.totalorder %s19, 0
    %p46 = por %p44, %p45
    %s48 = sadd.s32 %s47, 1
    %p51 = scmp.eq.s32.totalorder %s13, 3
    %p52 = scmp.ne.s32.totalorder %s47, %s49
    %p53 = scmp.eq.s32.totalorder %s13, 0
    %p54 = por %p52, %p53
    %p55 = scmp.ne.s32.totalorder %s47, %s49
    %p56 = scmp.eq.s32.totalorder %s18, 3
    %p57 = por %p55, %p56
    %p58 = scmp.ne.s32.totalorder %s49, %s50
    %p59 = scmp.eq.s32.totalorder %s18, 0
    %p60 = por %p58, %p59
    %p61 = scmp.ne.s32.totalorder %s49, %s50
    %p62 = scmp.eq.s32.totalorder %s19, 3
    %p63 = por %p61, %p62
    %p65 = scmp.ne.s32.totalorder %s50, %s64
    %p66 = scmp.eq.s32.totalorder %s19, 0
    %p67 = por %p65, %p66
    %s69 = sadd.s32 %s68, 1
    %p72 = scmp.eq.s32.totalorder %s13, 3
    %p73 = scmp.ne.s32.totalorder %s68, %s70
    %p74 = scmp.eq.s32.totalorder %s13, 0
    %p75 = por %p73, %p74
    %p76 = scmp.ne.s32.totalorder %s68, %s70
    %p77 = scmp.eq.s32.totalorder %s18, 3
    %p78 = por %p76, %p77
    %p79 = scmp.ne.s32.totalorder %s70, %s71
    %p80 = scmp.eq.s32.totalorder %s18, 0
    %p81 = por %p79, %p80
    %p82 = scmp.ne.s32.totalorder %s70, %s71
    %p83 = scmp.eq.s32.totalorder %s19, 3
    %p84 = por %p82, %p83
    %p86 = scmp.ne.s32.totalorder %s71, %s85
    %p87 = scmp.eq.s32.totalorder %s19, 0
    %p88 = por %p86, %p87
    %s90 = sadd.s32 %s89, 1
    %p93 = scmp.eq.s32.totalorder %s13, 3
    %p94 = scmp.ne.s32.totalorder %s89, %s91
    %p95 = scmp.eq.s32.totalorder %s13, 0
    %p96 = por %p94, %p95
    %p97 = scmp.ne.s32.totalorder %s89, %s91
    %p98 = scmp.eq.s32.totalorder %s18, 3
    %p99 = por %p97, %p98
    %p100 = scmp.ne.s32.totalorder %s91, %s92
    %p101 = scmp.eq.s32.totalorder %s18, 0
    %p102 = por %p100, %p101
    %p103 = scmp.ne.s32.totalorder %s91, %s92
    %p104 = scmp.eq.s32.totalorder %s19, 3
    %p105 = por %p103, %p104
    %p107 = scmp.ne.s32.totalorder %s92, %s106
    %p108 = scmp.eq.s32.totalorder %s19, 0
    %p109 = por %p107, %p108
    %s111 = sadd.s32 %s110, 1
    %p114 = scmp.eq.s32.totalorder %s13, 3
    %p115 = scmp.ne.s32.totalorder %s110, %s112
    %p116 = scmp.eq.s32.totalorder %s13, 0
    %p117 = por %p115, %p116
    %p118 = scmp.ne.s32.totalorder %s110, %s112
    %p119 = scmp.eq.s32.totalorder %s18, 3
    %p120 = por %p118, %p119
    %p121 = scmp.ne.s32.totalorder %s112, %s113
    %p122 = scmp.eq.s32.totalorder %s18, 0
    %p123 = por %p121, %p122
    %p124 = scmp.ne.s32.totalorder %s112, %s113
    %p125 = scmp.eq.s32.totalorder %s19, 3
    %p126 = por %p124, %p125
    %p128 = scmp.ne.s32.totalorder %s113, %s127
    %p129 = scmp.eq.s32.totalorder %s19, 0
    %p130 = por %p128, %p129
    %s131 = ssub.s32 %s13, %s20
    %p132 = scmp.eq.s32.totalorder %s131, 0
    %s134 = sadd.s32 %s133, 1
    %s135 = scalar_select %p132, %s133, %s134
    %p138 = pneg %p132
    %p139 = scmp.eq.s32.totalorder %s13, 3
    %p140 = por %p138, %p139
    %p141 = scmp.ne.s32.totalorder %s133, %s136
    %p142 = scmp.eq.s32.totalorder %s13, 0
    %p143 = por %p141, %p142
    %p144 = scmp.ne.s32.totalorder %s133, %s136
    %p145 = scmp.eq.s32.totalorder %s18, 3
    %p146 = por %p144, %p145
    %p147 = scmp.ne.s32.totalorder %s136, %s137
    %p148 = scmp.eq.s32.totalorder %s18, 0
    %p149 = por %p147, %p148
    %p150 = scmp.ne.s32.totalorder %s136, %s137
    %p151 = scmp.eq.s32.totalorder %s19, 3
    %p152 = por %p150, %p151
    %p154 = scmp.ne.s32.totalorder %s137, %s153
    %p155 = scmp.eq.s32.totalorder %s19, 0
    %p156 = por %p154, %p155
    %p157 = scmp.le.s32.totalorder 1, %s13
    %p158 = scmp.lt.s32.totalorder %s13, 5
    %p159 = pnand %p157, %p158
    %p160 = pneg %p159
    // Predicated region
    $region9: #{model_forward.25} parent=5 // pred_check
      _
    $region10: #{model_forward.25} parent=5 // pred_check_branch
      %162 = sbr.rel (%p159) target = $region12
    $region11: #{model_forward.25} parent=5 // pred_region
      %s163 = ssub.s32 %s13, 1
      // Predicated region
      $region13: #{model_forward.25} parent=11 // pred_check
        %p164 = pneg %p60
      $region14: #{model_forward.25} parent=11 // pred_check_branch
        %166 = sbr.rel (%p164) target = $region16
      $region15: #{model_forward.25} parent=11 // pred_region
        _
      $region16: #{model_forward.25} parent=11 // pred_fallthru
        _
      // Predicated region
      $region17: #{model_forward.25} parent=11 // pred_check
        %p167 = pneg %p81
      $region18: #{model_forward.25} parent=11 // pred_check_branch
        %169 = sbr.rel (%p167) target = $region20
      $region19: #{model_forward.25} parent=11 // pred_region
        _
      $region20: #{model_forward.25} parent=11 // pred_fallthru
        _
      // Predicated region
      $region21: #{model_forward.25} parent=11 // pred_check
        %p170 = pneg %p102
      $region22: #{model_forward.25} parent=11 // pred_check_branch
        %172 = sbr.rel (%p170) target = $region24
      $region23: #{model_forward.25} parent=11 // pred_region
        _
      $region24: #{model_forward.25} parent=11 // pred_fallthru
        _
      // Predicated region
      $region25: #{model_forward.25} parent=11 // pred_check
        %p173 = pneg %p123
      $region26: #{model_forward.25} parent=11 // pred_check_branch
        %175 = sbr.rel (%p173) target = $region28
      $region27: #{model_forward.25} parent=11 // pred_region
        _
      $region28: #{model_forward.25} parent=11 // pred_fallthru
        _
    $region12: #{model_forward.25} parent=5 // pred_fallthru
      _
    %p176 = scmp.lt.s32.totalorder %s13, 4
    // Predicated region
    $region29: #{model_forward.25} parent=5 // pred_check
      %p177 = pneg %p176
    $region30: #{model_forward.25} parent=5 // pred_check_branch
      %179 = sbr.rel (%p177) target = $region32
    $region31: #{model_forward.25} parent=5 // pred_region
      // Predicated region
      $region33: #{model_forward.25} parent=31 // pred_check
        %p180 = pneg %p33
      $region34: #{model_forward.25} parent=31 // pred_check_branch
        %182 = sbr.rel (%p180) target = $region36
      $region35: #{model_forward.25} parent=31 // pred_region
        %s183 = smul.u32 16, %s13
        %p184 = scmp.lt.s32.totalorder %s183, 63
        %s185 = scalar_select %p184, %s183, 63
        %s186 = smul.addr %s185, 3
        %s187 = smul.addr %s186, 8
        %s188 = scalar_lea.vmem %s0, %s187
        %s189 = smul.u32 16, %s13
      $region36: #{model_forward.25} parent=31 // pred_fallthru
        _
    $region32: #{model_forward.25} parent=5 // pred_fallthru
      _
    %p190 = scmp.le.s32.totalorder 1, %s13
    %p191 = scmp.lt.s32.totalorder %s13, 5
    %p192 = pnand %p190, %p191
    %p193 = pneg %p192
    // Predicated region
    $region37: #{model_forward.25} parent=5 // pred_check
      _
    $region38: #{model_forward.25} parent=5 // pred_check_branch
      %195 = sbr.rel (%p192) target = $region40
    $region39: #{model_forward.25} parent=5 // pred_region
      %s196 = ssub.s32 %s13, 1
      %s197 = smul.u32 16, %s18
      %p198 = scmp.lt.s32.totalorder %s197, 63
      %s199 = scalar_select %p198, %s197, 63
      %s200 = smul.addr %s199, 3
      %s201 = smul.addr %s200, 8
      %s202 = scalar_lea.vmem %s0, %s201
      %p203 = pneg %p39
      %p204 = pneg %p36
      %p205 = pneg %p60
      %p206 = pneg %p57
      %p207 = pneg %p81
      %p208 = pneg %p78
      %p209 = pneg %p102
      %p210 = pneg %p99
      %p211 = pneg %p123
      %p212 = pneg %p120
      %p213 = pneg %p149
      %p214 = pneg %p146
      %s215 = smul.u32 16, %s18
      %p216 = scmp.lt.s32.totalorder %s215, 63
      %s217 = scalar_select %p216, %s215, 63
      %s218 = smul.addr %s217, 8
      %s219 = scalar_lea.vmem %s5, %s218
      %s220 = smul.u32 16, %s18
      %p221 = scmp.lt.s32.totalorder %s220, 63
      %s222 = scalar_select %p221, %s220, 63
      %s223 = smul.addr %s222, 3
      %s224 = smul.addr %s223, 8
      %s225 = scalar_lea.vmem %s0, %s224
      %s226 = smul.u32 16, %s18
      %s227 = smul.u32 16, %s18
      %p228 = scmp.lt.s32.totalorder %s227, 63
      %s229 = scalar_select %p228, %s227, 63
      %s230 = smul.addr %s229, 8
      %s231 = scalar_lea.vmem %s5, %s230
      %s232 = smul.u32 16, %s18
      %v234 = vld [vmem:[%s225] sm:$0xff]
      %v235 = vld [vmem:[%s225 + $0x8] sm:$0xff]
      %v236 = vld [vmem:[%s225 + $0x10] sm:$0xff]
      %v237 = vld [vmem:[%s225 + $0x18] sm:$0xff]
      %v238 = vld [vmem:[%s225 + $0x20] sm:$0xff]
      %v239 = vld [vmem:[%s225 + $0x28] sm:$0xff]
      %v240 = vld [vmem:[%s225 + $0x30] sm:$0xff]
      %v241 = vld [vmem:[%s225 + $0x38] sm:$0xff]
      %v242 = vld [vmem:[%s225 + $0x40] sm:$0xff]
      %v243 = vld [vmem:[%s225 + $0x48] sm:$0xff]
      %v244 = vld [vmem:[%s225 + $0x50] sm:$0xff]
      %v245 = vld [vmem:[%s225 + $0x58] sm:$0xff]
      %v246 = vld [vmem:[%s225 + $0x60] sm:$0xff]
      %v247 = vld [vmem:[%s225 + $0x68] sm:$0xff]
      %v248 = vld [vmem:[%s225 + $0x70] sm:$0xff]
      %v249 = vld [vmem:[%s225 + $0x78] sm:$0xff]
      %v250 = vld [vmem:[%s225 + $0x80] sm:$0xff]
      %v251 = vld [vmem:[%s225 + $0x88] sm:$0xff]
      %v252 = vld [vmem:[%s225 + $0x90] sm:$0xff]
      %v253 = vld [vmem:[%s225 + $0x98] sm:$0xff]
      %v254 = vld [vmem:[%s225 + $0xa0] sm:$0xff]
      %v255 = vld [vmem:[%s225 + $0xa8] sm:$0xff]
      %v256 = vld [vmem:[%s225 + $0xb0] sm:$0xff]
      %v257 = vld [vmem:[%s225 + $0xb8] sm:$0xff]
      %v258 = vld [vmem:[%s225 + $0xc0] sm:$0xff]
      %v259 = vld [vmem:[%s225 + $0xc8] sm:$0xff]
      %v260 = vld [vmem:[%s225 + $0xd0] sm:$0xff]
      %v261 = vld [vmem:[%s225 + $0xd8] sm:$0xff]
      %v262 = vld [vmem:[%s225 + $0xe0] sm:$0xff]
      %v263 = vld [vmem:[%s225 + $0xe8] sm:$0xff]
      %v264 = vld [vmem:[%s225 + $0xf0] sm:$0xff]
      %v265 = vld [vmem:[%s225 + $0xf8] sm:$0xff]
      %v266 = vld [vmem:[%s225 + $0x100] sm:$0xff]
      %v267 = vld [vmem:[%s225 + $0x108] sm:$0xff]
      %v268 = vld [vmem:[%s225 + $0x110] sm:$0xff]
      %v269 = vld [vmem:[%s225 + $0x118] sm:$0xff]
      %v270 = vld [vmem:[%s225 + $0x120] sm:$0xff]
      %v271 = vld [vmem:[%s225 + $0x128] sm:$0xff]
      %v272 = vld [vmem:[%s225 + $0x130] sm:$0xff]
      %v273 = vld [vmem:[%s225 + $0x138] sm:$0xff]
      %v274 = vld [vmem:[%s225 + $0x140] sm:$0xff]
      %v275 = vld [vmem:[%s225 + $0x148] sm:$0xff]
      %v276 = vld [vmem:[%s225 + $0x150] sm:$0xff]
      %v277 = vld [vmem:[%s225 + $0x158] sm:$0xff]
      %v278 = vld [vmem:[%s225 + $0x160] sm:$0xff]
      %v279 = vld [vmem:[%s225 + $0x168] sm:$0xff]
      %v280 = vld [vmem:[%s225 + $0x170] sm:$0xff]
      %v281 = vld [vmem:[%s225 + $0x178] sm:$0xff]
      %v282 = vpack.c.bf16 %v237, %v234
      %v283 = vpack.c.bf16 %v238, %v235
      %v284 = vpack.c.bf16 %v239, %v236
      %v285 = vpack.c.bf16 %v243, %v240
      %v286 = vpack.c.bf16 %v244, %v241
      %v287 = vpack.c.bf16 %v245, %v242
      %v288 = vpack.c.bf16 %v249, %v246
      %v289 = vpack.c.bf16 %v250, %v247
      %v290 = vpack.c.bf16 %v251, %v248
      %v291 = vpack.c.bf16 %v255, %v252
      %v292 = vpack.c.bf16 %v256, %v253
      %v293 = vpack.c.bf16 %v257, %v254
      %v294 = vpack.c.bf16 %v261, %v258
      %v295 = vpack.c.bf16 %v262, %v259
      %v296 = vpack.c.bf16 %v263, %v260
      %v297 = vpack.c.bf16 %v267, %v264
      %v298 = vpack.c.bf16 %v268, %v265
      %v299 = vpack.c.bf16 %v269, %v266
      %v300 = vpack.c.bf16 %v273, %v270
      %v301 = vpack.c.bf16 %v274, %v271
      %v302 = vpack.c.bf16 %v275, %v272
      %v303 = vpack.c.bf16 %v279, %v276
      %v304 = vpack.c.bf16 %v280, %v277
      %v305 = vpack.c.bf16 %v281, %v278
      %v306 = vld [vmem:[%s1] sm:$0xf]
      %v307 = vld [vmem:[%s1 + $0x4] sm:$0xf]
      %v308 = vld [vmem:[%s1 + $0x8] sm:$0xf]
      %v309 = vld [vmem:[%s1 + $0xc] sm:$0xf]
      %v310 = vld [vmem:[%s1 + $0x10] sm:$0xf]
      %v311 = vld [vmem:[%s1 + $0x14] sm:$0xf]
      %v312 = vld [vmem:[%s1 + $0x18] sm:$0xf]
      %v313 = vld [vmem:[%s1 + $0x1c] sm:$0xf]
      %v314 = vld [vmem:[%s1 + $0x20] sm:$0xf]
      %v315 = vld [vmem:[%s1 + $0x24] sm:$0xf]
      %v316 = vld [vmem:[%s1 + $0x28] sm:$0xf]
      %v317 = vld [vmem:[%s1 + $0x2c] sm:$0xf]
      %v318 = vld [vmem:[%s1 + $0x30] sm:$0xf]
      %v319 = vld [vmem:[%s1 + $0x34] sm:$0xf]
      %v320 = vld [vmem:[%s1 + $0x38] sm:$0xf]
      %v321 = vld [vmem:[%s1 + $0x3c] sm:$0xf]
      %v322 = vld [vmem:[%s1 + $0x40] sm:$0xf]
      %v323 = vld [vmem:[%s1 + $0x44] sm:$0xf]
      %v324 = vld [vmem:[%s1 + $0x48] sm:$0xf]
      %v325 = vld [vmem:[%s1 + $0x4c] sm:$0xf]
      %v326 = vld [vmem:[%s1 + $0x50] sm:$0xf]
      %v327 = vld [vmem:[%s1 + $0x54] sm:$0xf]
      %v328 = vld [vmem:[%s1 + $0x58] sm:$0xf]
      %v329 = vld [vmem:[%s1 + $0x5c] sm:$0xf]
      %v330 = vld [vmem:[%s1 + $0x60] sm:$0xf]
      %v331 = vld [vmem:[%s1 + $0x64] sm:$0xf]
      %v332 = vld [vmem:[%s1 + $0x68] sm:$0xf]
      %v333 = vld [vmem:[%s1 + $0x6c] sm:$0xf]
      %v334 = vld [vmem:[%s1 + $0x70] sm:$0xf]
      %v335 = vld [vmem:[%s1 + $0x74] sm:$0xf]
      %v336 = vld [vmem:[%s1 + $0x78] sm:$0xf]
      %v337 = vld [vmem:[%s1 + $0x7c] sm:$0xf]
      %v338 = vld [vmem:[%s1 + $0x80] sm:$0xf]
      %v339 = vld [vmem:[%s1 + $0x84] sm:$0xf]
      %v340 = vld [vmem:[%s1 + $0x88] sm:$0xf]
      %v341 = vld [vmem:[%s1 + $0x8c] sm:$0xf]
      %v342 = vld [vmem:[%s1 + $0x90] sm:$0xf]
      %v343 = vld [vmem:[%s1 + $0x94] sm:$0xf]
      %v344 = vld [vmem:[%s1 + $0x98] sm:$0xf]
      %v345 = vld [vmem:[%s1 + $0x9c] sm:$0xf]
      %v346 = vld [vmem:[%s1 + $0xa0] sm:$0xf]
      %v347 = vld [vmem:[%s1 + $0xa4] sm:$0xf]
      %v348 = vld [vmem:[%s1 + $0xa8] sm:$0xf]
      %v349 = vld [vmem:[%s1 + $0xac] sm:$0xf]
      %v350 = vld [vmem:[%s1 + $0xb0] sm:$0xf]
      %v351 = vld [vmem:[%s1 + $0xb4] sm:$0xf]
      %v352 = vld [vmem:[%s1 + $0xb8] sm:$0xf]
      %v353 = vld [vmem:[%s1 + $0xbc] sm:$0xf]
      %v354 = vld [vmem:[%s2] sm:$0x1]
      %v356 = vlaneseq
      %v357 = vshrl.u32 %v356, 7
      %v358 = vsub.s32 0, %v357
      %v359 = vrot.slane %v354, %v358
      %v409 = vunpack.c.l.b16 %v306
      %v410 = vunpack.c.l.b16 %v307
      %v411 = vunpack.c.l.b16 %v308
      %v412 = vunpack.c.l.b16 %v309
      %v413 = vunpack.c.l.b16 %v310
      %v414 = vunpack.c.l.b16 %v311
      %v415 = vunpack.c.l.b16 %v312
      %v416 = vunpack.c.l.b16 %v313
      %v417 = vunpack.c.l.b16 %v314
      %v418 = vunpack.c.l.b16 %v315
      %v419 = vunpack.c.l.b16 %v316
      %v420 = vunpack.c.l.b16 %v317
      %v421 = vunpack.c.l.b16 %v318
      %v422 = vunpack.c.l.b16 %v319
      %v423 = vunpack.c.l.b16 %v320
      %v424 = vunpack.c.l.b16 %v321
      %v425 = vunpack.c.l.b16 %v322
      %v426 = vunpack.c.l.b16 %v323
      %v427 = vunpack.c.l.b16 %v324
      %v428 = vunpack.c.l.b16 %v325
      %v429 = vunpack.c.l.b16 %v326
      %v430 = vunpack.c.l.b16 %v327
      %v431 = vunpack.c.l.b16 %v328
      %v432 = vunpack.c.l.b16 %v329
      %v433 = vunpack.c.l.b16 %v330
      %v434 = vunpack.c.l.b16 %v331
      %v435 = vunpack.c.l.b16 %v332
      %v436 = vunpack.c.l.b16 %v333
      %v437 = vunpack.c.l.b16 %v334
      %v438 = vunpack.c.l.b16 %v335
      %v439 = vunpack.c.l.b16 %v336
      %v440 = vunpack.c.l.b16 %v337
      %v441 = vunpack.c.l.b16 %v338
      %v442 = vunpack.c.l.b16 %v339
      %v443 = vunpack.c.l.b16 %v340
      %v444 = vunpack.c.l.b16 %v341
      %v445 = vunpack.c.l.b16 %v342
      %v446 = vunpack.c.l.b16 %v343
      %v447 = vunpack.c.l.b16 %v344
      %v448 = vunpack.c.l.b16 %v345
      %v449 = vunpack.c.l.b16 %v346
      %v450 = vunpack.c.l.b16 %v347
      %v451 = vunpack.c.l.b16 %v348
      %v452 = vunpack.c.l.b16 %v349
      %v453 = vunpack.c.l.b16 %v350
      %v454 = vunpack.c.l.b16 %v351
      %v455 = vunpack.c.l.b16 %v352
      %v456 = vunpack.c.l.b16 %v353
      %v457 = vpack.c.b16 %v410, %v409
      %v458 = vpack.c.b16 %v412, %v411
      %v459 = vpack.c.b16 %v414, %v413
      %v460 = vpack.c.b16 %v416, %v415
      %v461 = vpack.c.b16 %v418, %v417
      %v462 = vpack.c.b16 %v420, %v419
      %v463 = vpack.c.b16 %v422, %v421
      %v464 = vpack.c.b16 %v424, %v423
      %v465 = vpack.c.b16 %v426, %v425
      %v466 = vpack.c.b16 %v428, %v427
      %v467 = vpack.c.b16 %v430, %v429
      %v468 = vpack.c.b16 %v432, %v431
      %v469 = vpack.c.b16 %v434, %v433
      %v470 = vpack.c.b16 %v436, %v435
      %v471 = vpack.c.b16 %v438, %v437
      %v472 = vpack.c.b16 %v440, %v439
      %v473 = vpack.c.b16 %v442, %v441
      %v474 = vpack.c.b16 %v444, %v443
      %v475 = vpack.c.b16 %v446, %v445
      %v476 = vpack.c.b16 %v448, %v447
      %v477 = vpack.c.b16 %v450, %v449
      %v478 = vpack.c.b16 %v452, %v451
      %v479 = vpack.c.b16 %v454, %v453
      %v480 = vpack.c.b16 %v456, %v455
      %505 = vmatprep.subr.bf16.mxu0 0
      %506 = vmatpush1.bf16.msra.mxu0 %v464
      %507 = vmatprep.subr.bf16.mxu0 0
      %508 = vmatpush1.bf16.msra.mxu0 %v463
      %509 = vmatprep.subr.bf16.mxu0 0
      %510 = vmatpush1.bf16.msra.mxu0 %v462
      %511 = vmatprep.subr.bf16.mxu0 0
      %512 = vmatpush1.bf16.msra.mxu0 %v461
      %513 = vmatprep.subr.bf16.mxu0 0
      %514 = vmatpush1.bf16.msra.mxu0 %v460
      %515 = vmatprep.subr.bf16.mxu0 0
      %516 = vmatpush1.bf16.msra.mxu0 %v459
      %517 = vmatprep.subr.bf16.mxu0 0
      %518 = vmatpush1.bf16.msra.mxu0 %v458
      %519 = vmatprep.subr.bf16.mxu0 0
      %520 = vmatpush1.bf16.msra.mxu0 %v457
      %521 = vmatprep.subr.bf16.mxu0 0
      %522 = vmatpush2.bf16.msra.mxu0 %v472
      %523 = vmatprep.subr.bf16.mxu0 0
      %524 = vmatpush2.bf16.msra.mxu0 %v471
      %525 = vmatprep.subr.bf16.mxu0 0
      %526 = vmatpush2.bf16.msra.mxu0 %v470
      %527 = vmatprep.subr.bf16.mxu0 0
      %528 = vmatpush2.bf16.msra.mxu0 %v469
      %529 = vmatprep.subr.bf16.mxu0 0
      %530 = vmatpush2.bf16.msra.mxu0 %v468
      %531 = vmatprep.subr.bf16.mxu0 0
      %532 = vmatpush2.bf16.msra.mxu0 %v467
      %533 = vmatprep.subr.bf16.mxu0 0
      %534 = vmatpush2.bf16.msra.mxu0 %v466
      %535 = vmatprep.subr.bf16.mxu0 0
      %536 = vmatpush2.bf16.msra.mxu0 %v465
      %537 = vmatprep.mubr.bf16.mxu0 %v283
      %538 = vmatmul.mubr.bf16.gmra.mxu0 %v282
      %v539 = vpop.f32.mrf.mxu0
      %v540 = vadd.f32 %v359, %v539
      %v541 = vpop.f32.mrf.mxu0
      %v542 = vpop.f32.mrf.mxu0
      %v543 = vadd.f32 %v359, %v542
      %v544 = vpop.f32.mrf.mxu0
      %545 = vmatprep.mubr.bf16.mxu0 %v286
      %546 = vmatmul.mubr.bf16.gmra.mxu0 %v285
      %v547 = vpop.f32.mrf.mxu0
      %v548 = vadd.f32 %v359, %v547
      %v549 = vpop.f32.mrf.mxu0
      %v550 = vpop.f32.mrf.mxu0
      %v551 = vadd.f32 %v359, %v550
      %v552 = vpop.f32.mrf.mxu0
      %553 = vmatprep.mubr.bf16.mxu0 %v289
      %554 = vmatmul.mubr.bf16.gmra.mxu0 %v288
      %v555 = vpop.f32.mrf.mxu0
      %v556 = vadd.f32 %v359, %v555
      %v557 = vpop.f32.mrf.mxu0
      %v558 = vpop.f32.mrf.mxu0
      %v559 = vadd.f32 %v359, %v558
      %v560 = vpop.f32.mrf.mxu0
      %561 = vmatprep.mubr.bf16.mxu0 %v292
      %562 = vmatmul.mubr.bf16.gmra.mxu0 %v291
      %v563 = vpop.f32.mrf.mxu0
      %v564 = vadd.f32 %v359, %v563
      %v565 = vpop.f32.mrf.mxu0
      %v566 = vpop.f32.mrf.mxu0
      %v567 = vadd.f32 %v359, %v566
      %v568 = vpop.f32.mrf.mxu0
      %569 = vmatprep.mubr.bf16.mxu0 %v295
      %570 = vmatmul.mubr.bf16.gmra.mxu0 %v294
      %v571 = vpop.f32.mrf.mxu0
      %v572 = vadd.f32 %v359, %v571
      %v573 = vpop.f32.mrf.mxu0
      %v574 = vpop.f32.mrf.mxu0
      %v575 = vadd.f32 %v359, %v574
      %v576 = vpop.f32.mrf.mxu0
      %577 = vmatprep.mubr.bf16.mxu0 %v298
      %578 = vmatmul.mubr.bf16.gmra.mxu0 %v297
      %v579 = vpop.f32.mrf.mxu0
      %v580 = vadd.f32 %v359, %v579
      %v581 = vpop.f32.mrf.mxu0
      %v582 = vpop.f32.mrf.mxu0
      %v583 = vadd.f32 %v359, %v582
      %v584 = vpop.f32.mrf.mxu0
      %585 = vmatprep.mubr.bf16.mxu0 %v301
      %586 = vmatmul.mubr.bf16.gmra.mxu0 %v300
      %v587 = vpop.f32.mrf.mxu0
      %v588 = vadd.f32 %v359, %v587
      %v589 = vpop.f32.mrf.mxu0
      %v590 = vpop.f32.mrf.mxu0
      %v591 = vadd.f32 %v359, %v590
      %v592 = vpop.f32.mrf.mxu0
      %593 = vmatprep.mubr.bf16.mxu0 %v304
      %594 = vmatmul.mubr.bf16.gmra.mxu0 %v303
      %v595 = vpop.f32.mrf.mxu0
      %v596 = vadd.f32 %v359, %v595
      %v597 = vpop.f32.mrf.mxu0
      %v598 = vpop.f32.mrf.mxu0
      %v599 = vadd.f32 %v359, %v598
      %v600 = vpop.f32.mrf.mxu0
      %601 = vdwg.mxu0
      %602 = vmatprep.subr.bf16.mxu0 0
      %603 = vmatpush1.bf16.msra.mxu0 %v480
      %604 = vmatprep.subr.bf16.mxu0 0
      %605 = vmatpush1.bf16.msra.mxu0 %v479
      %606 = vmatprep.subr.bf16.mxu0 0
      %607 = vmatpush1.bf16.msra.mxu0 %v478
      %608 = vmatprep.subr.bf16.mxu0 0
      %609 = vmatpush1.bf16.msra.mxu0 %v477
      %610 = vmatprep.subr.bf16.mxu0 0
      %611 = vmatpush1.bf16.msra.mxu0 %v476
      %612 = vmatprep.subr.bf16.mxu0 0
      %613 = vmatpush1.bf16.msra.mxu0 %v475
      %614 = vmatprep.subr.bf16.mxu0 0
      %615 = vmatpush1.bf16.msra.mxu0 %v474
      %616 = vmatprep.subr.bf16.mxu0 0
      %617 = vmatpush1.bf16.msra.mxu0 %v473
      %618 = vmatprep.subr.bf16.mxu0 0
      %619 = vmatpush2.bf16.msra.mxu0 0
      %620 = vmatprep.subr.bf16.mxu0 0
      %621 = vmatpush2.bf16.msra.mxu0 0
      %622 = vmatprep.subr.bf16.mxu0 0
      %623 = vmatpush2.bf16.msra.mxu0 0
      %624 = vmatprep.subr.bf16.mxu0 0
      %625 = vmatpush2.bf16.msra.mxu0 0
      %626 = vmatprep.subr.bf16.mxu0 0
      %627 = vmatpush2.bf16.msra.mxu0 0
      %628 = vmatprep.subr.bf16.mxu0 0
      %629 = vmatpush2.bf16.msra.mxu0 0
      %630 = vmatprep.subr.bf16.mxu0 0
      %631 = vmatpush2.bf16.msra.mxu0 0
      %632 = vmatprep.subr.bf16.mxu0 0
      %633 = vmatpush2.bf16.msra.mxu0 0
      %634 = vmatprep.mubr.bf16.mxu0 0
      %635 = vmatmul.mubr.bf16.gmra.mxu0 %v284
      %v636 = vpop.f32.mrf.mxu0
      %v637 = vadd.f32 %v540, %v636
      %v638 = vpop.f32.mrf.mxu0
      %v639 = vpop.f32.mrf.mxu0
      %v640 = vadd.f32 %v543, %v639
      %v641 = vpop.f32.mrf.mxu0
      %642 = vmatprep.mubr.bf16.mxu0 0
      %643 = vmatmul.mubr.bf16.gmra.mxu0 %v287
      %v644 = vpop.f32.mrf.mxu0
      %v645 = vadd.f32 %v548, %v644
      %v646 = vpop.f32.mrf.mxu0
      %v647 = vpop.f32.mrf.mxu0
      %v648 = vadd.f32 %v551, %v647
      %v649 = vpop.f32.mrf.mxu0
      %650 = vmatprep.mubr.bf16.mxu0 0
      %651 = vmatmul.mubr.bf16.gmra.mxu0 %v290
      %v652 = vpop.f32.mrf.mxu0
      %v653 = vadd.f32 %v556, %v652
      %v654 = vpop.f32.mrf.mxu0
      %v655 = vpop.f32.mrf.mxu0
      %v656 = vadd.f32 %v559, %v655
      %v657 = vpop.f32.mrf.mxu0
      %658 = vmatprep.mubr.bf16.mxu0 0
      %659 = vmatmul.mubr.bf16.gmra.mxu0 %v293
      %v660 = vpop.f32.mrf.mxu0
      %v661 = vadd.f32 %v564, %v660
      %v662 = vpop.f32.mrf.mxu0
      %v663 = vpop.f32.mrf.mxu0
      %v664 = vadd.f32 %v567, %v663
      %v665 = vpop.f32.mrf.mxu0
      %666 = vmatprep.mubr.bf16.mxu0 0
      %667 = vmatmul.mubr.bf16.gmra.mxu0 %v296
      %v668 = vpop.f32.mrf.mxu0
      %v669 = vadd.f32 %v572, %v668
      %v670 = vpop.f32.mrf.mxu0
      %v671 = vpop.f32.mrf.mxu0
      %v672 = vadd.f32 %v575, %v671
      %v673 = vpop.f32.mrf.mxu0
      %674 = vmatprep.mubr.bf16.mxu0 0
      %675 = vmatmul.mubr.bf16.gmra.mxu0 %v299
      %v676 = vpop.f32.mrf.mxu0
      %v677 = vadd.f32 %v580, %v676
      %v678 = vpop.f32.mrf.mxu0
      %v679 = vpop.f32.mrf.mxu0
      %v680 = vadd.f32 %v583, %v679
      %v681 = vpop.f32.mrf.mxu0
      %682 = vmatprep.mubr.bf16.mxu0 0
      %683 = vmatmul.mubr.bf16.gmra.mxu0 %v302
      %v684 = vpop.f32.mrf.mxu0
      %v685 = vadd.f32 %v588, %v684
      %v686 = vpop.f32.mrf.mxu0
      %v687 = vpop.f32.mrf.mxu0
      %v688 = vadd.f32 %v591, %v687
      %v689 = vpop.f32.mrf.mxu0
      %690 = vmatprep.mubr.bf16.mxu0 0
      %691 = vmatmul.mubr.bf16.gmra.mxu0 %v305
      %v692 = vpop.f32.mrf.mxu0
      %v693 = vadd.f32 %v596, %v692
      %v694 = vpop.f32.mrf.mxu0
      %v695 = vpop.f32.mrf.mxu0
      %v696 = vadd.f32 %v599, %v695
      %v697 = vpop.f32.mrf.mxu0
      %698 = vdwg.mxu0
      %v699 = vmax.f32 %v637, 0.0
      %v700 = vmax.f32 %v640, 0.0
      %v701 = vmax.f32 %v645, 0.0
      %v702 = vmax.f32 %v648, 0.0
      %v703 = vmax.f32 %v653, 0.0
      %v704 = vmax.f32 %v656, 0.0
      %v705 = vmax.f32 %v661, 0.0
      %v706 = vmax.f32 %v664, 0.0
      %v707 = vmax.f32 %v669, 0.0
      %v708 = vmax.f32 %v672, 0.0
      %v709 = vmax.f32 %v677, 0.0
      %v710 = vmax.f32 %v680, 0.0
      %v711 = vmax.f32 %v685, 0.0
      %v712 = vmax.f32 %v688, 0.0
      %v713 = vmax.f32 %v693, 0.0
      %v714 = vmax.f32 %v696, 0.0
      %v715 = vpack.c.bf16 %v700, %v699
      %v716 = vpack.c.bf16 %v702, %v701
      %v717 = vpack.c.bf16 %v704, %v703
      %v718 = vpack.c.bf16 %v706, %v705
      %v719 = vpack.c.bf16 %v708, %v707
      %v720 = vpack.c.bf16 %v710, %v709
      %v721 = vpack.c.bf16 %v712, %v711
      %v722 = vpack.c.bf16 %v714, %v713
      %v723 = vld [vmem:[%s3] sm:$0xf]
      %v724 = vld [vmem:[%s3 + $0x4] sm:$0xf]
      %v725 = vld [vmem:[%s3 + $0x8] sm:$0xf]
      %v726 = vld [vmem:[%s3 + $0xc] sm:$0xf]
      %v727 = vld [vmem:[%s3 + $0x10] sm:$0xf]
      %v728 = vld [vmem:[%s3 + $0x14] sm:$0xf]
      %v729 = vld [vmem:[%s3 + $0x18] sm:$0xf]
      %v730 = vld [vmem:[%s3 + $0x1c] sm:$0xf]
      %v731 = vld [vmem:[%s3 + $0x20] sm:$0xf]
      %v732 = vld [vmem:[%s3 + $0x24] sm:$0xf]
      %v733 = vld [vmem:[%s3 + $0x28] sm:$0xf]
      %v734 = vld [vmem:[%s3 + $0x2c] sm:$0xf]
      %v735 = vld [vmem:[%s3 + $0x30] sm:$0xf]
      %v736 = vld [vmem:[%s3 + $0x34] sm:$0xf]
      %v737 = vld [vmem:[%s3 + $0x38] sm:$0xf]
      %v738 = vld [vmem:[%s3 + $0x3c] sm:$0xf]
      %v739 = vld [vmem:[#allocation2] sm:$0x1]
      %v741 = vlaneseq
      %v742 = vshrl.u32 %v741, 7
      %v743 = vsub.s32 0, %v742
      %v744 = vrot.slane %v739, %v743
      %v762 = vunpack.c.l.b16 %v723
      %v763 = vunpack.c.l.b16 %v724
      %v764 = vunpack.c.l.b16 %v725
      %v765 = vunpack.c.l.b16 %v726
      %v766 = vunpack.c.l.b16 %v727
      %v767 = vunpack.c.l.b16 %v728
      %v768 = vunpack.c.l.b16 %v729
      %v769 = vunpack.c.l.b16 %v730
      %v770 = vunpack.c.l.b16 %v731
      %v771 = vunpack.c.l.b16 %v732
      %v772 = vunpack.c.l.b16 %v733
      %v773 = vunpack.c.l.b16 %v734
      %v774 = vunpack.c.l.b16 %v735
      %v775 = vunpack.c.l.b16 %v736
      %v776 = vunpack.c.l.b16 %v737
      %v777 = vunpack.c.l.b16 %v738
      %v778 = vpack.c.b16 %v763, %v762
      %v779 = vpack.c.b16 %v765, %v764
      %v780 = vpack.c.b16 %v767, %v766
      %v781 = vpack.c.b16 %v769, %v768
      %v782 = vpack.c.b16 %v771, %v770
      %v783 = vpack.c.b16 %v773, %v772
      %v784 = vpack.c.b16 %v775, %v774
      %v785 = vpack.c.b16 %v777, %v776
      %794 = vmatprep.subr.bf16.mxu0 0
      %795 = vmatpush1.bf16.msra.mxu0 %v785
      %796 = vmatprep.subr.bf16.mxu0 0
      %797 = vmatpush1.bf16.msra.mxu0 %v784
      %798 = vmatprep.subr.bf16.mxu0 0
      %799 = vmatpush1.bf16.msra.mxu0 %v783
      %800 = vmatprep.subr.bf16.mxu0 0
      %801 = vmatpush1.bf16.msra.mxu0 %v782
      %802 = vmatprep.subr.bf16.mxu0 0
      %803 = vmatpush1.bf16.msra.mxu0 %v781
      %804 = vmatprep.subr.bf16.mxu0 0
      %805 = vmatpush1.bf16.msra.mxu0 %v780
      %806 = vmatprep.subr.bf16.mxu0 0
      %807 = vmatpush1.bf16.msra.mxu0 %v779
      %808 = vmatprep.subr.bf16.mxu0 0
      %809 = vmatpush1.bf16.msra.mxu0 %v778
      %810 = vmatprep.subr.bf16.mxu0 0
      %811 = vmatpush2.bf16.msra.mxu0 0
      %812 = vmatprep.subr.bf16.mxu0 0
      %813 = vmatpush2.bf16.msra.mxu0 0
      %814 = vmatprep.subr.bf16.mxu0 0
      %815 = vmatpush2.bf16.msra.mxu0 0
      %816 = vmatprep.subr.bf16.mxu0 0
      %817 = vmatpush2.bf16.msra.mxu0 0
      %818 = vmatprep.subr.bf16.mxu0 0
      %819 = vmatpush2.bf16.msra.mxu0 0
      %820 = vmatprep.subr.bf16.mxu0 0
      %821 = vmatpush2.bf16.msra.mxu0 0
      %822 = vmatprep.subr.bf16.mxu0 0
      %823 = vmatpush2.bf16.msra.mxu0 0
      %824 = vmatprep.subr.bf16.mxu0 0
      %825 = vmatpush2.bf16.msra.mxu0 0
      %826 = vmatprep.mubr.bf16.mxu0 0
      %827 = vmatmul.mubr.bf16.gmra.mxu0 %v715
      %v828 = vpop.f32.mrf.mxu0
      %v829 = vadd.f32 %v744, %v828
      %v830 = vpop.f32.mrf.mxu0
      %v831 = vpop.f32.mrf.mxu0
      %v832 = vadd.f32 %v744, %v831
      %v833 = vpop.f32.mrf.mxu0
      %834 = vmatprep.mubr.bf16.mxu0 0
      %835 = vmatmul.mubr.bf16.gmra.mxu0 %v716
      %v836 = vpop.f32.mrf.mxu0
      %v837 = vadd.f32 %v744, %v836
      %v838 = vpop.f32.mrf.mxu0
      %v839 = vpop.f32.mrf.mxu0
      %v840 = vadd.f32 %v744, %v839
      %v841 = vpop.f32.mrf.mxu0
      %842 = vmatprep.mubr.bf16.mxu0 0
      %843 = vmatmul.mubr.bf16.gmra.mxu0 %v717
      %v844 = vpop.f32.mrf.mxu0
      %v845 = vadd.f32 %v744, %v844
      %v846 = vpop.f32.mrf.mxu0
      %v847 = vpop.f32.mrf.mxu0
      %v848 = vadd.f32 %v744, %v847
      %v849 = vpop.f32.mrf.mxu0
      %850 = vmatprep.mubr.bf16.mxu0 0
      %851 = vmatmul.mubr.bf16.gmra.mxu0 %v718
      %v852 = vpop.f32.mrf.mxu0
      %v853 = vadd.f32 %v744, %v852
      %v854 = vpop.f32.mrf.mxu0
      %v855 = vpop.f32.mrf.mxu0
      %v856 = vadd.f32 %v744, %v855
      %v857 = vpop.f32.mrf.mxu0
      %858 = vmatprep.mubr.bf16.mxu0 0
      %859 = vmatmul.mubr.bf16.gmra.mxu0 %v719
      %v860 = vpop.f32.mrf.mxu0
      %v861 = vadd.f32 %v744, %v860
      %v862 = vpop.f32.mrf.mxu0
      %v863 = vpop.f32.mrf.mxu0
      %v864 = vadd.f32 %v744, %v863
      %v865 = vpop.f32.mrf.mxu0
      %866 = vmatprep.mubr.bf16.mxu0 0
      %867 = vmatmul.mubr.bf16.gmra.mxu0 %v720
      %v868 = vpop.f32.mrf.mxu0
      %v869 = vadd.f32 %v744, %v868
      %v870 = vpop.f32.mrf.mxu0
      %v871 = vpop.f32.mrf.mxu0
      %v872 = vadd.f32 %v744, %v871
      %v873 = vpop.f32.mrf.mxu0
      %874 = vmatprep.mubr.bf16.mxu0 0
      %875 = vmatmul.mubr.bf16.gmra.mxu0 %v721
      %v876 = vpop.f32.mrf.mxu0
      %v877 = vadd.f32 %v744, %v876
      %v878 = vpop.f32.mrf.mxu0
      %v879 = vpop.f32.mrf.mxu0
      %v880 = vadd.f32 %v744, %v879
      %v881 = vpop.f32.mrf.mxu0
      %882 = vmatprep.mubr.bf16.mxu0 0
      %883 = vmatmul.mubr.bf16.gmra.mxu0 %v722
      %v884 = vpop.f32.mrf.mxu0
      %v885 = vadd.f32 %v744, %v884
      %v886 = vpop.f32.mrf.mxu0
      %v887 = vpop.f32.mrf.mxu0
      %v888 = vadd.f32 %v744, %v887
      %v889 = vpop.f32.mrf.mxu0
      %890 = vdwg.mxu0
      %vm891 = vcmask 7168
      %892 = vst.msk [vmem:[%s231] sm:$0xff] %vm891, %v829
      %893 = vst.msk [vmem:[%s231 + $0x8] sm:$0xff] %vm891, %v832
      %894 = vst.msk [vmem:[%s231 + $0x10] sm:$0xff] %vm891, %v837
      %895 = vst.msk [vmem:[%s231 + $0x18] sm:$0xff] %vm891, %v840
      %896 = vst.msk [vmem:[%s231 + $0x20] sm:$0xff] %vm891, %v845
      %897 = vst.msk [vmem:[%s231 + $0x28] sm:$0xff] %vm891, %v848
      %898 = vst.msk [vmem:[%s231 + $0x30] sm:$0xff] %vm891, %v853
      %899 = vst.msk [vmem:[%s231 + $0x38] sm:$0xff] %vm891, %v856
      %900 = vst.msk [vmem:[%s231 + $0x40] sm:$0xff] %vm891, %v861
      %901 = vst.msk [vmem:[%s231 + $0x48] sm:$0xff] %vm891, %v864
      %902 = vst.msk [vmem:[%s231 + $0x50] sm:$0xff] %vm891, %v869
      %903 = vst.msk [vmem:[%s231 + $0x58] sm:$0xff] %vm891, %v872
      %904 = vst.msk [vmem:[%s231 + $0x60] sm:$0xff] %vm891, %v877
      %905 = vst.msk [vmem:[%s231 + $0x68] sm:$0xff] %vm891, %v880
      %906 = vst.msk [vmem:[%s231 + $0x70] sm:$0xff] %vm891, %v885
      %907 = vst.msk [vmem:[%s231 + $0x78] sm:$0xff] %vm891, %v888
      %s908 = smul.u32 16, %s18
      %p909 = scmp.lt.s32.totalorder %s908, 63
      %s910 = scalar_select %p909, %s908, 63
      %s911 = smul.addr %s910, 8
      %s912 = scalar_lea.vmem %s5, %s911
      // Predicated region
      $region41: #{model_forward.25} parent=39 // pred_check
        %p913 = pneg %p146
      $region42: #{model_forward.25} parent=39 // pred_check_branch
        %915 = sbr.rel (%p913) target = $region44
      $region43: #{model_forward.25} parent=39 // pred_region
        %s916 = smul.u32 16, %s18
      $region44: #{model_forward.25} parent=39 // pred_fallthru
        _
    $region40: #{model_forward.25} parent=5 // pred_fallthru
      _
    %p917 = scmp.le.s32.totalorder 2, %s13
    // Predicated region
    $region45: #{model_forward.25} parent=5 // pred_check
      %p918 = pneg %p917
    $region46: #{model_forward.25} parent=5 // pred_check_branch
      %920 = sbr.rel (%p918) target = $region48
    $region47: #{model_forward.25} parent=5 // pred_region
      %s921 = ssub.s32 %s13, 2
      // Predicated region
      $region49: #{model_forward.25} parent=47 // pred_check
        %p922 = pneg %p152
      $region50: #{model_forward.25} parent=47 // pred_check_branch
        %924 = sbr.rel (%p922) target = $region52
      $region51: #{model_forward.25} parent=47 // pred_region
        %s925 = smul.u32 16, %s19
        %p926 = scmp.lt.s32.totalorder %s925, 63
        %s927 = scalar_select %p926, %s925, 63
        %s928 = smul.addr %s927, 8
        %s929 = scalar_lea.vmem %s5, %s928
      $region52: #{model_forward.25} parent=47 // pred_fallthru
        _
    $region48: #{model_forward.25} parent=5 // pred_fallthru
      _
  $region6: #{model_forward.25} parent=0 // loop_footer
    %s17 = sadd.s32 1, %s13
  $region7: #{model_forward.25} parent=0 // loop_footer_branch
    %12 = sbr.rel target = $region3
  $region8: #{model_forward.25} parent=0 // loop_exit
    _

</llo_original>
